<compile_context>
chip_gen: v7x
topology: tpu7x:2x2x1
jax: 0.10.0
libtpu: 0.0.40
codegen_flags: <defaults>
</compile_context>

<pallas_src>
import jax
import jax.numpy as jnp
from jax import lax
from jax.experimental import pallas as pl
from jax.experimental.pallas import tpu as pltpu

N_LAYERS = 8
L_BLK = 4                      # layers processed per grid step
N_BLOCKS = N_LAYERS // L_BLK   # grid size (2) -> one slice per TensorCore on v7x
LANDMARKS = 17                 # N (forced by the 256->17 head + residual add)
IN_FEATURES = 512
OUT_FEATURES = 512
HIDDEN = 256
COORD_DIM = 3


def _structure_attention_kernel(
    conv_ref,    # SMEM (9,) f32        : Conv1d(8,1,1) weights [0:8], bias at [8]
    feat_ref,    # VMEM (17, 512) bf16  : concatenated landmark features (resident)
    coord_ref,   # VMEM (17, 3) f32     : landmark coordinates (resident)
    fc_ref,      # VMEM (1, 512, L_BLK*512) bf16 : FC weights of this block, concat on out dim
    w1a_ref,     # VMEM (1, L_BLK, 512, 256) bf16 : Linear(515,256) weight, feature rows
    w1b_ref,     # VMEM (8, 3, 256) f32 : Linear(515,256) weight, coord rows (resident)
    b1_ref,      # VMEM (8, 1, 256) f32 (resident)
    w2_ref,      # VMEM (8, 256, 17) f32 (resident)
    b2_ref,      # VMEM (8, 1, 17) f32 (resident)
    out_ref,     # VMEM (1, 17, 512) f32 : partial conv-weighted sum of this block's layers
    fslab_ref,   # VMEM scratch (17, L_BLK*512) f32
):
    g = pl.program_id(0)
    feat16 = feat_ref[...]                      # (17, 512) bf16
    coords = coord_ref[...]                     # (17, 3)   f32

    # f_input for all L_BLK layers in a single wide MXU pass:
    #   fslab[:, l*512:(l+1)*512] == relu(features @ FC[g*L_BLK + l])
    fslab_ref[...] = jnp.maximum(
        jnp.dot(feat16, fc_ref[0], preferred_element_type=jnp.float32), 0.0)

    acc = jnp.zeros((LANDMARKS, OUT_FEATURES), jnp.float32)
    for l in range(L_BLK):                      # static unroll over in-block layers
        layer = g * L_BLK + l
        f_l = fslab_ref[:, l * OUT_FEATURES:(l + 1) * OUT_FEATURES]   # (17, 512) f32

        # Linear(515, 256) split into feature part (bf16 on MXU) + coord part (f32).
        h1 = jnp.dot(f_l.astype(jnp.bfloat16), w1a_ref[0, l],
                     preferred_element_type=jnp.float32)
        h1 = h1 + jnp.dot(coords, w1b_ref[layer],
                          preferred_element_type=jnp.float32)
        h1 = jnp.tanh(h1 + b1_ref[layer])                              # (17, 256)

        # Linear(256, 17)
        logits = jnp.dot(h1, w2_ref[layer],
                         preferred_element_type=jnp.float32) + b2_ref[layer]  # (17, 17)

        # softmax over the node axis == softmax(logits.T, dim=1) in PyTorch,
        # done over axis 0 so no transpose is needed.
        z = logits - jnp.max(logits, axis=0, keepdims=True)
        e = jnp.exp(z)
        p = e * pl.reciprocal(jnp.sum(e, axis=0, keepdims=True), approx=True)

        # Fold this layer's Conv1d(8,1,1) weight into the (17,17) attention
        # (much cheaper than scaling the (17,512) h_prime).
        p = p * conv_ref[layer]

        # h_prime = attention @ f_input, contracting the node axis of both operands.
        acc = acc + lax.dot_general(
            p, f_l, dimension_numbers=(((0,), (0,)), ((), ())),
            preferred_element_type=jnp.float32)

    out_ref[0] = acc


@jax.jit
def _fused_forward(feats, coords, kp):
    """feats: (17, 512) f32, coords: (17, 3) f32, kp: prepared kernel params."""
    feats16 = feats.astype(jnp.bfloat16)
    partials = pl.pallas_call(
        _structure_attention_kernel,
        out_shape=jax.ShapeDtypeStruct((N_BLOCKS, LANDMARKS, OUT_FEATURES),
                                       jnp.float32),
        grid_spec=pltpu.PrefetchScalarGridSpec(
            num_scalar_prefetch=0,
            grid=(N_BLOCKS,),
            in_specs=[
                pl.BlockSpec(memory_space=pltpu.MemorySpace.SMEM),          # conv params
                pl.BlockSpec((LANDMARKS, IN_FEATURES), lambda g: (0, 0)),   # features
                pl.BlockSpec((LANDMARKS, COORD_DIM), lambda g: (0, 0)),     # coords
                pl.BlockSpec((1, IN_FEATURES, L_BLK * OUT_FEATURES),
                             lambda g: (g, 0, 0)),                          # FC slab (streamed)
                pl.BlockSpec((1, L_BLK, OUT_FEATURES, HIDDEN),
                             lambda g: (g, 0, 0, 0)),                       # W1a (streamed)
                pl.BlockSpec((N_LAYERS, COORD_DIM, HIDDEN),
                             lambda g: (0, 0, 0)),                          # W1b (resident)
                pl.BlockSpec((N_LAYERS, 1, HIDDEN), lambda g: (0, 0, 0)),   # B1  (resident)
                pl.BlockSpec((N_LAYERS, HIDDEN, LANDMARKS),
                             lambda g: (0, 0, 0)),                          # W2  (resident)
                pl.BlockSpec((N_LAYERS, 1, LANDMARKS), lambda g: (0, 0, 0)),# B2  (resident)
            ],
            out_specs=pl.BlockSpec((1, LANDMARKS, OUT_FEATURES),
                                   lambda g: (g, 0, 0)),
            scratch_shapes=[pltpu.VMEM((LANDMARKS, L_BLK * OUT_FEATURES),
                                       jnp.float32)],
        ),
        compiler_params=pltpu.CompilerParams(
            dimension_semantics=("parallel",)),   # layer halves -> both TCs on v7x
    )(kp["conv_params"], feats16, coords, kp["fc_slab"], kp["w1a"],
      kp["w1b"], kp["b1"], kp["w2"], kp["b2"])

    # Conv1d bias + ReLU + residual on the summed per-core partials
    # (tiny (17,512) elementwise epilogue; kept outside so the grid is parallel).
    conv_b = kp["conv_params"][N_LAYERS]
    return jnp.maximum(jnp.sum(partials, axis=0) + conv_b, 0.0) + feats


def init_params(key):
    """Deterministic synthetic f32 parameters matching the module's shapes."""
    keys = jax.random.split(key, 6)

    def xavier(k, shape, gain=1.0):
        fan_in, fan_out = shape[-2], shape[-1]
        bound = gain * jnp.sqrt(6.0 / (fan_in + fan_out))
        return jax.random.uniform(k, shape, jnp.float32, -bound, bound)

    FC = xavier(keys[0], (N_LAYERS, IN_FEATURES, OUT_FEATURES), gain=1.414)
    W1 = xavier(keys[1], (N_LAYERS, IN_FEATURES + COORD_DIM, HIDDEN))
    B1 = jax.random.uniform(keys[2], (N_LAYERS, 1, HIDDEN), jnp.float32,
                            -0.04, 0.04)
    W2 = xavier(keys[3], (N_LAYERS, HIDDEN, LANDMARKS))
    B2 = jax.random.uniform(keys[4], (N_LAYERS, 1, LANDMARKS), jnp.float32,
                            -0.06, 0.06)
    conv_w = jax.random.uniform(keys[5], (N_LAYERS,), jnp.float32, -0.35, 0.35)
    conv_b = jnp.full((1,), 0.01, jnp.float32)
    conv_params = jnp.concatenate([conv_w, conv_b], axis=0)          # (9,)
    return dict(FC=FC, W1=W1, B1=B1, W2=W2, B2=B2, conv_params=conv_params)


def prepare_kernel_params(params):
    """One-time repack of the f32 module params into the kernel layout.

    Done once outside the per-call path so the bf16 cast / reshuffle is not
    paid in HBM traffic on every forward pass.
    """
    FC = params["FC"]                         # (8, 512, 512) f32
    W1 = params["W1"]                         # (8, 515, 256) f32
    fc_slab = (FC.reshape(N_BLOCKS, L_BLK, IN_FEATURES, OUT_FEATURES)
                 .transpose(0, 2, 1, 3)
                 .reshape(N_BLOCKS, IN_FEATURES, L_BLK * OUT_FEATURES)
                 .astype(jnp.bfloat16))       # (2, 512, 2048) bf16
    w1a = (W1[:, :IN_FEATURES, :]
             .reshape(N_BLOCKS, L_BLK, IN_FEATURES, HIDDEN)
             .astype(jnp.bfloat16))           # (2, 4, 512, 256) bf16
    return dict(
        fc_slab=fc_slab,
        w1a=w1a,
        w1b=W1[:, IN_FEATURES:, :],           # (8, 3, 256) f32
        b1=params["B1"],
        w2=params["W2"],
        b2=params["B2"],
        conv_params=params["conv_params"],
    )


def structure_attention_net_forward(Xs_list, ROIs_b, adj, kernel_params,
                                    landmark_num=LANDMARKS):
    """Mirrors structure_attention_net.forward (adj is unused, as in PyTorch)."""
    del adj
    feats = jnp.concatenate([x.reshape(1, -1) for x in Xs_list], axis=0)  # (17,512)
    out = _fused_forward(feats.astype(jnp.float32),
                         ROIs_b.astype(jnp.float32), kernel_params)
    Xs_out = [out[i].reshape(1, -1, 1, 1, 1) for i in range(landmark_num)]
    ROIs_t = ROIs_b
    attention = 0
    return Xs_out, ROIs_t, attention


def _reference_forward_f32(feats, coords, params):
    """Pure-JAX f32 reference of the PyTorch forward."""
    FC, W1, B1, W2, B2 = (params["FC"], params["W1"], params["B1"],
                          params["W2"], params["B2"])
    conv_w = params["conv_params"][:N_LAYERS]
    conv_b = params["conv_params"][N_LAYERS]
    outs = []
    for i in range(N_LAYERS):
        f_input = jax.nn.relu(feats @ FC[i])
        f_cat = jnp.concatenate([f_input, coords], axis=1)            # (17, 515)
        h1 = jnp.tanh(f_cat @ W1[i] + B1[i])
        logits = h1 @ W2[i] + B2[i]                                   # (17, 17)
        att = jax.nn.softmax(logits.T, axis=1)
        outs.append(att @ f_input)
    stacked = jnp.stack(outs, axis=1)                                 # (17, 8, 512)
    conv = jnp.einsum("nlc,l->nc", stacked, conv_w) + conv_b
    return jax.nn.relu(conv) + feats


def _reference_forward_bf16(feats, coords, params):
    """Reference that rounds FC / W1a / features to bf16 exactly like the kernel
    (f32 accumulation everywhere) — validates the kernel math tightly."""
    FCq = params["FC"].astype(jnp.bfloat16)
    W1 = params["W1"]
    W1aq = W1[:, :IN_FEATURES, :].astype(jnp.bfloat16)
    W1b = W1[:, IN_FEATURES:, :]
    B1, W2, B2 = params["B1"], params["W2"], params["B2"]
    conv_w = params["conv_params"][:N_LAYERS]
    conv_b = params["conv_params"][N_LAYERS]
    featq = feats.astype(jnp.bfloat16)
    outs = []
    for i in range(N_LAYERS):
        f_input = jax.nn.relu(
            jnp.dot(featq, FCq[i], preferred_element_type=jnp.float32))
        h1 = jnp.dot(f_input.astype(jnp.bfloat16), W1aq[i],
                     preferred_element_type=jnp.float32)
        h1 = jnp.tanh(h1 + coords @ W1b[i] + B1[i])
        logits = h1 @ W2[i] + B2[i]
        att = jax.nn.softmax(logits.T, axis=1)
        outs.append(att @ f_input)
    stacked = jnp.stack(outs, axis=1)
    conv = jnp.einsum("nlc,l->nc", stacked, conv_w) + conv_b
    return jax.nn.relu(conv) + feats


if __name__ == "__main__":
    key = jax.random.PRNGKey(0)
    k_params, k_x, k_roi = jax.random.split(key, 3)

    params = init_params(k_params)
    kernel_params = prepare_kernel_params(params)

    # Inputs: 17 per-landmark feature tensors (each flattens to 512 elements),
    # landmark coordinates (17, 3), and an (unused) adjacency matrix.
    x_all = jax.random.normal(k_x, (LANDMARKS, 1, 8, 4, 4, 4), jnp.float32)
    Xs = [x_all[i] for i in range(LANDMARKS)]
    ROIs_b = jax.random.normal(k_roi, (LANDMARKS, COORD_DIM), jnp.float32)
    adj = jnp.ones((LANDMARKS, LANDMARKS), jnp.float32)

    Xs_out, ROIs_t, attention = structure_attention_net_forward(
        Xs, ROIs_b, adj, kernel_params, landmark_num=LANDMARKS)
    out_mat = jnp.concatenate([x.reshape(1, -1) for x in Xs_out], axis=0)
    out_mat = jax.block_until_ready(out_mat)
    assert out_mat.shape == (LANDMARKS, OUT_FEATURES)

    feats = jnp.concatenate([x.reshape(1, -1) for x in Xs], axis=0)

    # 1) Tight check against a reference using identical bf16 weight rounding.
    ref_bf16 = _reference_forward_bf16(feats, ROIs_b, params)
    err_bf16 = float(jnp.max(jnp.abs(out_mat - ref_bf16)))
    assert jnp.allclose(out_mat, ref_bf16, rtol=5e-3, atol=5e-3), err_bf16

    # 2) Looser check against the exact f32 PyTorch-equivalent forward
    #    (documents the deliberate bf16 weight-storage precision trade-off).
    ref_f32 = _reference_forward_f32(feats, ROIs_b, params)
    err_f32 = float(jnp.max(jnp.abs(out_mat - ref_f32)))
    assert jnp.allclose(out_mat, ref_f32, rtol=6e-2, atol=6e-2), err_f32

    print("KERNEL_OK")
</pallas_src>

<mosaic_0001>
module attributes {stable_mosaic.version = 11 : i64} {
  func.func @_structure_attention_kernel(%arg0: i32, %arg1: memref<9xf32, #tpu.memory_space<smem>>, %arg2: memref<17x512xbf16, #tpu.memory_space<vmem>>, %arg3: memref<17x3xf32, #tpu.memory_space<vmem>>, %arg4: memref<1x512x2048xbf16, #tpu.memory_space<vmem>>, %arg5: memref<1x4x512x256xbf16, #tpu.memory_space<vmem>>, %arg6: memref<8x3x256xf32, #tpu.memory_space<vmem>>, %arg7: memref<8x1x256xf32, #tpu.memory_space<vmem>>, %arg8: memref<8x256x17xf32, #tpu.memory_space<vmem>>, %arg9: memref<8x1x17xf32, #tpu.memory_space<vmem>>, %arg10: memref<1x17x512xf32, #tpu.memory_space<vmem>>, %arg11: memref<17x2048xf32, #tpu.memory_space<vmem>>) attributes {dimension_semantics = [#tpu.dimension_semantics<parallel>], iteration_bounds = array<i64: 2>, scalar_prefetch = 0 : i64, scratch_operands = 1 : i64, tpu.core_type = #tpu.core_type<tc>, window_params = [{transform_indices = @transform_0, window_bounds = array<i64: 9>}, {pipeline_mode = #tpu.pipeline_mode<synchronous>, transform_indices = @transform_1, window_bounds = array<i64: 17, 512>}, {pipeline_mode = #tpu.pipeline_mode<synchronous>, transform_indices = @transform_2, window_bounds = array<i64: 17, 3>}, {transform_indices = @transform_3, window_bounds = array<i64: 1, 512, 2048>}, {transform_indices = @transform_4, window_bounds = array<i64: 1, 4, 512, 256>}, {pipeline_mode = #tpu.pipeline_mode<synchronous>, transform_indices = @transform_5, window_bounds = array<i64: 8, 3, 256>}, {pipeline_mode = #tpu.pipeline_mode<synchronous>, transform_indices = @transform_6, window_bounds = array<i64: 8, 1, 256>}, {pipeline_mode = #tpu.pipeline_mode<synchronous>, transform_indices = @transform_7, window_bounds = array<i64: 8, 256, 17>}, {pipeline_mode = #tpu.pipeline_mode<synchronous>, transform_indices = @transform_8, window_bounds = array<i64: 8, 1, 17>}, {transform_indices = @transform_9, window_bounds = array<i64: 1, 17, 512>}]} {
    %c0 = arith.constant 0 : index
    %c0_0 = arith.constant 0 : index
    %0 = vector.load %arg2[%c0, %c0_0] : memref<17x512xbf16, #tpu.memory_space<vmem>>, vector<17x512xbf16>
    %c0_1 = arith.constant 0 : index
    %c0_2 = arith.constant 0 : index
    %1 = vector.load %arg3[%c0_1, %c0_2] : memref<17x3xf32, #tpu.memory_space<vmem>>, vector<17x3xf32>
    %c0_3 = arith.constant 0 : index
    %c0_4 = arith.constant 0 : index
    %c0_5 = arith.constant 0 : index
    %2 = vector.load %arg4[%c0_3, %c0_4, %c0_5] : memref<1x512x2048xbf16, #tpu.memory_space<vmem>>, vector<1x512x2048xbf16>
    %3 = vector.shape_cast %2 : vector<1x512x2048xbf16> to vector<512x2048xbf16>
    %cst = arith.constant dense<0.000000e+00> : vector<17x2048xf32>
    %4 = tpu.matmul %0, %3, %cst {dimension_numbers = #tpu.dot_dimension_numbers<[1], [0], [0], [1], [0, 0, 1, 1], [], []>} : vector<17x512xbf16>, vector<512x2048xbf16>, vector<17x2048xf32> -> vector<17x2048xf32>
    %cst_6 = arith.constant 0.000000e+00 : f32
    %5 = vector.broadcast %cst_6 : f32 to vector<17x2048xf32>
    %6 = arith.maximumf %4, %5 : vector<17x2048xf32>
    %c0_7 = arith.constant 0 : index
    %c0_8 = arith.constant 0 : index
    %7 = vector.load %arg11[%c0_7, %c0_8] : memref<17x2048xf32, #tpu.memory_space<vmem>>, vector<17x2048xf32>
    tpu.vector_store %arg11[%c0_7, %c0_8], %6 {strides = array<i32>} : memref<17x2048xf32, #tpu.memory_space<vmem>>, vector<17x2048xf32>,
    %cst_9 = arith.constant 0.000000e+00 : f32
    %8 = vector.broadcast %cst_9 : f32 to vector<17x512xf32>
    %c4_i32 = arith.constant 4 : i32
    %9 = arith.muli %arg0, %c4_i32 : i32
    %c0_i32 = arith.constant 0 : i32
    %10 = arith.addi %9, %c0_i32 : i32
    %c0_10 = arith.constant 0 : index
    %c0_11 = arith.constant 0 : index
    %11 = vector.load %arg11[%c0_10, %c0_11] : memref<17x2048xf32, #tpu.memory_space<vmem>>, vector<17x512xf32>
    %12 = arith.truncf %11 : vector<17x512xf32> to vector<17x512xbf16>
    %c0_12 = arith.constant 0 : index
    %c0_13 = arith.constant 0 : index
    %c0_14 = arith.constant 0 : index
    %c0_15 = arith.constant 0 : index
    %13 = vector.load %arg5[%c0_12, %c0_13, %c0_14, %c0_15] : memref<1x4x512x256xbf16, #tpu.memory_space<vmem>>, vector<1x1x512x256xbf16>
    %14 = vector.shape_cast %13 : vector<1x1x512x256xbf16> to vector<512x256xbf16>
    %cst_16 = arith.constant dense<0.000000e+00> : vector<17x256xf32>
    %15 = tpu.matmul %12, %14, %cst_16 {dimension_numbers = #tpu.dot_dimension_numbers<[1], [0], [0], [1], [0, 0, 1, 1], [], []>} : vector<17x512xbf16>, vector<512x256xbf16>, vector<17x256xf32> -> vector<17x256xf32>
    %16 = arith.index_cast %10 : i32 to index
    %c0_17 = arith.constant 0 : index
    %c0_18 = arith.constant 0 : index
    %17 = vector.load %arg6[%16, %c0_17, %c0_18] : memref<8x3x256xf32, #tpu.memory_space<vmem>>, vector<1x3x256xf32>
    %18 = vector.shape_cast %17 : vector<1x3x256xf32> to vector<3x256xf32>
    %cst_19 = arith.constant dense<0.000000e+00> : vector<17x256xf32>
    %19 = tpu.matmul %1, %18, %cst_19 {dimension_numbers = #tpu.dot_dimension_numbers<[1], [0], [0], [1], [0, 0, 1, 1], [], []>} : vector<17x3xf32>, vector<3x256xf32>, vector<17x256xf32> -> vector<17x256xf32>
    %20 = arith.addf %15, %19 : vector<17x256xf32>
    %21 = arith.index_cast %10 : i32 to index
    %c0_20 = arith.constant 0 : index
    %c0_21 = arith.constant 0 : index
    %22 = vector.load %arg7[%21, %c0_20, %c0_21] : memref<8x1x256xf32, #tpu.memory_space<vmem>>, vector<1x1x256xf32>
    %23 = vector.shape_cast %22 : vector<1x1x256xf32> to vector<1x256xf32>
    %24 = vector.broadcast %23 : vector<1x256xf32> to vector<17x256xf32>
    %25 = arith.addf %20, %24 : vector<17x256xf32>
    %26 = math.tanh %25 : vector<17x256xf32>
    %27 = arith.index_cast %10 : i32 to index
    %c0_22 = arith.constant 0 : index
    %c0_23 = arith.constant 0 : index
    %28 = vector.load %arg8[%27, %c0_22, %c0_23] : memref<8x256x17xf32, #tpu.memory_space<vmem>>, vector<1x256x17xf32>
    %29 = vector.shape_cast %28 : vector<1x256x17xf32> to vector<256x17xf32>
    %cst_24 = arith.constant dense<0.000000e+00> : vector<17x17xf32>
    %30 = tpu.matmul %26, %29, %cst_24 {dimension_numbers = #tpu.dot_dimension_numbers<[1], [0], [0], [1], [0, 0, 1, 1], [], []>} : vector<17x256xf32>, vector<256x17xf32>, vector<17x17xf32> -> vector<17x17xf32>
    %31 = arith.index_cast %10 : i32 to index
    %c0_25 = arith.constant 0 : index
    %c0_26 = arith.constant 0 : index
    %32 = vector.load %arg9[%31, %c0_25, %c0_26] : memref<8x1x17xf32, #tpu.memory_space<vmem>>, vector<1x1x17xf32>
    %33 = vector.shape_cast %32 : vector<1x1x17xf32> to vector<1x17xf32>
    %34 = vector.broadcast %33 : vector<1x17xf32> to vector<17x17xf32>
    %35 = arith.addf %30, %34 : vector<17x17xf32>
    %cst_27 = arith.constant dense<0xFF800000> : vector<17xf32>
    %36 = vector.multi_reduction <maximumf>, %35, %cst_27 [0] : vector<17x17xf32> to vector<17xf32>
    %37 = vector.shape_cast %36 : vector<17xf32> to vector<1x17xf32>
    %38 = vector.broadcast %37 : vector<1x17xf32> to vector<17x17xf32>
    %39 = arith.subf %35, %38 : vector<17x17xf32>
    %40 = math.exp %39 : vector<17x17xf32>
    %cst_28 = arith.constant dense<0.000000e+00> : vector<17xf32>
    %41 = vector.multi_reduction <add>, %40, %cst_28 [0] : vector<17x17xf32> to vector<17xf32>
    %42 = vector.shape_cast %41 : vector<17xf32> to vector<1x17xf32>
    %43 = tpu.reciprocal %42 {approx = true} : vector<1x17xf32> -> vector<1x17xf32>
    %44 = vector.broadcast %43 : vector<1x17xf32> to vector<17x17xf32>
    %45 = arith.mulf %40, %44 : vector<17x17xf32>
    %46 = arith.index_cast %10 : i32 to index
    %47 = memref.load %arg1[%46] : memref<9xf32, #tpu.memory_space<smem>>
    %48 = vector.broadcast %47 : f32 to vector<17x17xf32>
    %49 = arith.mulf %45, %48 : vector<17x17xf32>
    %cst_29 = arith.constant dense<0.000000e+00> : vector<17x512xf32>
    %50 = tpu.matmul %49, %11, %cst_29 {dimension_numbers = #tpu.dot_dimension_numbers<[0], [0], [1], [1], [0, 1, 1, 1], [], []>} : vector<17x17xf32>, vector<17x512xf32>, vector<17x512xf32> -> vector<17x512xf32>
    %51 = arith.addf %8, %50 : vector<17x512xf32>
    %c4_i32_30 = arith.constant 4 : i32
    %52 = arith.muli %arg0, %c4_i32_30 : i32
    %c1_i32 = arith.constant 1 : i32
    %53 = arith.addi %52, %c1_i32 : i32
    %c0_31 = arith.constant 0 : index
    %c512 = arith.constant 512 : index
    %54 = vector.load %arg11[%c0_31, %c512] : memref<17x2048xf32, #tpu.memory_space<vmem>>, vector<17x512xf32>
    %55 = arith.truncf %54 : vector<17x512xf32> to vector<17x512xbf16>
    %c0_32 = arith.constant 0 : index
    %c1 = arith.constant 1 : index
    %c0_33 = arith.constant 0 : index
    %c0_34 = arith.constant 0 : index
    %56 = vector.load %arg5[%c0_32, %c1, %c0_33, %c0_34] : memref<1x4x512x256xbf16, #tpu.memory_space<vmem>>, vector<1x1x512x256xbf16>
    %57 = vector.shape_cast %56 : vector<1x1x512x256xbf16> to vector<512x256xbf16>
    %cst_35 = arith.constant dense<0.000000e+00> : vector<17x256xf32>
    %58 = tpu.matmul %55, %57, %cst_35 {dimension_numbers = #tpu.dot_dimension_numbers<[1], [0], [0], [1], [0, 0, 1, 1], [], []>} : vector<17x512xbf16>, vector<512x256xbf16>, vector<17x256xf32> -> vector<17x256xf32>
    %59 = arith.index_cast %53 : i32 to index
    %c0_36 = arith.constant 0 : index
    %c0_37 = arith.constant 0 : index
    %60 = vector.load %arg6[%59, %c0_36, %c0_37] : memref<8x3x256xf32, #tpu.memory_space<vmem>>, vector<1x3x256xf32>
    %61 = vector.shape_cast %60 : vector<1x3x256xf32> to vector<3x256xf32>
    %cst_38 = arith.constant dense<0.000000e+00> : vector<17x256xf32>
    %62 = tpu.matmul %1, %61, %cst_38 {dimension_numbers = #tpu.dot_dimension_numbers<[1], [0], [0], [1], [0, 0, 1, 1], [], []>} : vector<17x3xf32>, vector<3x256xf32>, vector<17x256xf32> -> vector<17x256xf32>
    %63 = arith.addf %58, %62 : vector<17x256xf32>
    %64 = arith.index_cast %53 : i32 to index
    %c0_39 = arith.constant 0 : index
    %c0_40 = arith.constant 0 : index
    %65 = vector.load %arg7[%64, %c0_39, %c0_40] : memref<8x1x256xf32, #tpu.memory_space<vmem>>, vector<1x1x256xf32>
    %66 = vector.shape_cast %65 : vector<1x1x256xf32> to vector<1x256xf32>
    %67 = vector.broadcast %66 : vector<1x256xf32> to vector<17x256xf32>
    %68 = arith.addf %63, %67 : vector<17x256xf32>
    %69 = math.tanh %68 : vector<17x256xf32>
    %70 = arith.index_cast %53 : i32 to index
    %c0_41 = arith.constant 0 : index
    %c0_42 = arith.constant 0 : index
    %71 = vector.load %arg8[%70, %c0_41, %c0_42] : memref<8x256x17xf32, #tpu.memory_space<vmem>>, vector<1x256x17xf32>
    %72 = vector.shape_cast %71 : vector<1x256x17xf32> to vector<256x17xf32>
    %cst_43 = arith.constant dense<0.000000e+00> : vector<17x17xf32>
    %73 = tpu.matmul %69, %72, %cst_43 {dimension_numbers = #tpu.dot_dimension_numbers<[1], [0], [0], [1], [0, 0, 1, 1], [], []>} : vector<17x256xf32>, vector<256x17xf32>, vector<17x17xf32> -> vector<17x17xf32>
    %74 = arith.index_cast %53 : i32 to index
    %c0_44 = arith.constant 0 : index
    %c0_45 = arith.constant 0 : index
    %75 = vector.load %arg9[%74, %c0_44, %c0_45] : memref<8x1x17xf32, #tpu.memory_space<vmem>>, vector<1x1x17xf32>
    %76 = vector.shape_cast %75 : vector<1x1x17xf32> to vector<1x17xf32>
    %77 = vector.broadcast %76 : vector<1x17xf32> to vector<17x17xf32>
    %78 = arith.addf %73, %77 : vector<17x17xf32>
    %cst_46 = arith.constant dense<0xFF800000> : vector<17xf32>
    %79 = vector.multi_reduction <maximumf>, %78, %cst_46 [0] : vector<17x17xf32> to vector<17xf32>
    %80 = vector.shape_cast %79 : vector<17xf32> to vector<1x17xf32>
    %81 = vector.broadcast %80 : vector<1x17xf32> to vector<17x17xf32>
    %82 = arith.subf %78, %81 : vector<17x17xf32>
    %83 = math.exp %82 : vector<17x17xf32>
    %cst_47 = arith.constant dense<0.000000e+00> : vector<17xf32>
    %84 = vector.multi_reduction <add>, %83, %cst_47 [0] : vector<17x17xf32> to vector<17xf32>
    %85 = vector.shape_cast %84 : vector<17xf32> to vector<1x17xf32>
    %86 = tpu.reciprocal %85 {approx = true} : vector<1x17xf32> -> vector<1x17xf32>
    %87 = vector.broadcast %86 : vector<1x17xf32> to vector<17x17xf32>
    %88 = arith.mulf %83, %87 : vector<17x17xf32>
    %89 = arith.index_cast %53 : i32 to index
    %90 = memref.load %arg1[%89] : memref<9xf32, #tpu.memory_space<smem>>
    %91 = vector.broadcast %90 : f32 to vector<17x17xf32>
    %92 = arith.mulf %88, %91 : vector<17x17xf32>
    %cst_48 = arith.constant dense<0.000000e+00> : vector<17x512xf32>
    %93 = tpu.matmul %92, %54, %cst_48 {dimension_numbers = #tpu.dot_dimension_numbers<[0], [0], [1], [1], [0, 1, 1, 1], [], []>} : vector<17x17xf32>, vector<17x512xf32>, vector<17x512xf32> -> vector<17x512xf32>
    %94 = arith.addf %51, %93 : vector<17x512xf32>
    %c4_i32_49 = arith.constant 4 : i32
    %95 = arith.muli %arg0, %c4_i32_49 : i32
    %c2_i32 = arith.constant 2 : i32
    %96 = arith.addi %95, %c2_i32 : i32
    %c0_50 = arith.constant 0 : index
    %c1024 = arith.constant 1024 : index
    %97 = vector.load %arg11[%c0_50, %c1024] : memref<17x2048xf32, #tpu.memory_space<vmem>>, vector<17x512xf32>
    %98 = arith.truncf %97 : vector<17x512xf32> to vector<17x512xbf16>
    %c0_51 = arith.constant 0 : index
    %c2 = arith.constant 2 : index
    %c0_52 = arith.constant 0 : index
    %c0_53 = arith.constant 0 : index
    %99 = vector.load %arg5[%c0_51, %c2, %c0_52, %c0_53] : memref<1x4x512x256xbf16, #tpu.memory_space<vmem>>, vector<1x1x512x256xbf16>
    %100 = vector.shape_cast %99 : vector<1x1x512x256xbf16> to vector<512x256xbf16>
    %cst_54 = arith.constant dense<0.000000e+00> : vector<17x256xf32>
    %101 = tpu.matmul %98, %100, %cst_54 {dimension_numbers = #tpu.dot_dimension_numbers<[1], [0], [0], [1], [0, 0, 1, 1], [], []>} : vector<17x512xbf16>, vector<512x256xbf16>, vector<17x256xf32> -> vector<17x256xf32>
    %102 = arith.index_cast %96 : i32 to index
    %c0_55 = arith.constant 0 : index
    %c0_56 = arith.constant 0 : index
    %103 = vector.load %arg6[%102, %c0_55, %c0_56] : memref<8x3x256xf32, #tpu.memory_space<vmem>>, vector<1x3x256xf32>
    %104 = vector.shape_cast %103 : vector<1x3x256xf32> to vector<3x256xf32>
    %cst_57 = arith.constant dense<0.000000e+00> : vector<17x256xf32>
    %105 = tpu.matmul %1, %104, %cst_57 {dimension_numbers = #tpu.dot_dimension_numbers<[1], [0], [0], [1], [0, 0, 1, 1], [], []>} : vector<17x3xf32>, vector<3x256xf32>, vector<17x256xf32> -> vector<17x256xf32>
    %106 = arith.addf %101, %105 : vector<17x256xf32>
    %107 = arith.index_cast %96 : i32 to index
    %c0_58 = arith.constant 0 : index
    %c0_59 = arith.constant 0 : index
    %108 = vector.load %arg7[%107, %c0_58, %c0_59] : memref<8x1x256xf32, #tpu.memory_space<vmem>>, vector<1x1x256xf32>
    %109 = vector.shape_cast %108 : vector<1x1x256xf32> to vector<1x256xf32>
    %110 = vector.broadcast %109 : vector<1x256xf32> to vector<17x256xf32>
    %111 = arith.addf %106, %110 : vector<17x256xf32>
    %112 = math.tanh %111 : vector<17x256xf32>
    %113 = arith.index_cast %96 : i32 to index
    %c0_60 = arith.constant 0 : index
    %c0_61 = arith.constant 0 : index
    %114 = vector.load %arg8[%113, %c0_60, %c0_61] : memref<8x256x17xf32, #tpu.memory_space<vmem>>, vector<1x256x17xf32>
    %115 = vector.shape_cast %114 : vector<1x256x17xf32> to vector<256x17xf32>
    %cst_62 = arith.constant dense<0.000000e+00> : vector<17x17xf32>
    %116 = tpu.matmul %112, %115, %cst_62 {dimension_numbers = #tpu.dot_dimension_numbers<[1], [0], [0], [1], [0, 0, 1, 1], [], []>} : vector<17x256xf32>, vector<256x17xf32>, vector<17x17xf32> -> vector<17x17xf32>
    %117 = arith.index_cast %96 : i32 to index
    %c0_63 = arith.constant 0 : index
    %c0_64 = arith.constant 0 : index
    %118 = vector.load %arg9[%117, %c0_63, %c0_64] : memref<8x1x17xf32, #tpu.memory_space<vmem>>, vector<1x1x17xf32>
    %119 = vector.shape_cast %118 : vector<1x1x17xf32> to vector<1x17xf32>
    %120 = vector.broadcast %119 : vector<1x17xf32> to vector<17x17xf32>
    %121 = arith.addf %116, %120 : vector<17x17xf32>
    %cst_65 = arith.constant dense<0xFF800000> : vector<17xf32>
    %122 = vector.multi_reduction <maximumf>, %121, %cst_65 [0] : vector<17x17xf32> to vector<17xf32>
    %123 = vector.shape_cast %122 : vector<17xf32> to vector<1x17xf32>
    %124 = vector.broadcast %123 : vector<1x17xf32> to vector<17x17xf32>
    %125 = arith.subf %121, %124 : vector<17x17xf32>
    %126 = math.exp %125 : vector<17x17xf32>
    %cst_66 = arith.constant dense<0.000000e+00> : vector<17xf32>
    %127 = vector.multi_reduction <add>, %126, %cst_66 [0] : vector<17x17xf32> to vector<17xf32>
    %128 = vector.shape_cast %127 : vector<17xf32> to vector<1x17xf32>
    %129 = tpu.reciprocal %128 {approx = true} : vector<1x17xf32> -> vector<1x17xf32>
    %130 = vector.broadcast %129 : vector<1x17xf32> to vector<17x17xf32>
    %131 = arith.mulf %126, %130 : vector<17x17xf32>
    %132 = arith.index_cast %96 : i32 to index
    %133 = memref.load %arg1[%132] : memref<9xf32, #tpu.memory_space<smem>>
    %134 = vector.broadcast %133 : f32 to vector<17x17xf32>
    %135 = arith.mulf %131, %134 : vector<17x17xf32>
    %cst_67 = arith.constant dense<0.000000e+00> : vector<17x512xf32>
    %136 = tpu.matmul %135, %97, %cst_67 {dimension_numbers = #tpu.dot_dimension_numbers<[0], [0], [1], [1], [0, 1, 1, 1], [], []>} : vector<17x17xf32>, vector<17x512xf32>, vector<17x512xf32> -> vector<17x512xf32>
    %137 = arith.addf %94, %136 : vector<17x512xf32>
    %c4_i32_68 = arith.constant 4 : i32
    %138 = arith.muli %arg0, %c4_i32_68 : i32
    %c3_i32 = arith.constant 3 : i32
    %139 = arith.addi %138, %c3_i32 : i32
    %c0_69 = arith.constant 0 : index
    %c1536 = arith.constant 1536 : index
    %140 = vector.load %arg11[%c0_69, %c1536] : memref<17x2048xf32, #tpu.memory_space<vmem>>, vector<17x512xf32>
    %141 = arith.truncf %140 : vector<17x512xf32> to vector<17x512xbf16>
    %c0_70 = arith.constant 0 : index
    %c3 = arith.constant 3 : index
    %c0_71 = arith.constant 0 : index
    %c0_72 = arith.constant 0 : index
    %142 = vector.load %arg5[%c0_70, %c3, %c0_71, %c0_72] : memref<1x4x512x256xbf16, #tpu.memory_space<vmem>>, vector<1x1x512x256xbf16>
    %143 = vector.shape_cast %142 : vector<1x1x512x256xbf16> to vector<512x256xbf16>
    %cst_73 = arith.constant dense<0.000000e+00> : vector<17x256xf32>
    %144 = tpu.matmul %141, %143, %cst_73 {dimension_numbers = #tpu.dot_dimension_numbers<[1], [0], [0], [1], [0, 0, 1, 1], [], []>} : vector<17x512xbf16>, vector<512x256xbf16>, vector<17x256xf32> -> vector<17x256xf32>
    %145 = arith.index_cast %139 : i32 to index
    %c0_74 = arith.constant 0 : index
    %c0_75 = arith.constant 0 : index
    %146 = vector.load %arg6[%145, %c0_74, %c0_75] : memref<8x3x256xf32, #tpu.memory_space<vmem>>, vector<1x3x256xf32>
    %147 = vector.shape_cast %146 : vector<1x3x256xf32> to vector<3x256xf32>
    %cst_76 = arith.constant dense<0.000000e+00> : vector<17x256xf32>
    %148 = tpu.matmul %1, %147, %cst_76 {dimension_numbers = #tpu.dot_dimension_numbers<[1], [0], [0], [1], [0, 0, 1, 1], [], []>} : vector<17x3xf32>, vector<3x256xf32>, vector<17x256xf32> -> vector<17x256xf32>
    %149 = arith.addf %144, %148 : vector<17x256xf32>
    %150 = arith.index_cast %139 : i32 to index
    %c0_77 = arith.constant 0 : index
    %c0_78 = arith.constant 0 : index
    %151 = vector.load %arg7[%150, %c0_77, %c0_78] : memref<8x1x256xf32, #tpu.memory_space<vmem>>, vector<1x1x256xf32>
    %152 = vector.shape_cast %151 : vector<1x1x256xf32> to vector<1x256xf32>
    %153 = vector.broadcast %152 : vector<1x256xf32> to vector<17x256xf32>
    %154 = arith.addf %149, %153 : vector<17x256xf32>
    %155 = math.tanh %154 : vector<17x256xf32>
    %156 = arith.index_cast %139 : i32 to index
    %c0_79 = arith.constant 0 : index
    %c0_80 = arith.constant 0 : index
    %157 = vector.load %arg8[%156, %c0_79, %c0_80] : memref<8x256x17xf32, #tpu.memory_space<vmem>>, vector<1x256x17xf32>
    %158 = vector.shape_cast %157 : vector<1x256x17xf32> to vector<256x17xf32>
    %cst_81 = arith.constant dense<0.000000e+00> : vector<17x17xf32>
    %159 = tpu.matmul %155, %158, %cst_81 {dimension_numbers = #tpu.dot_dimension_numbers<[1], [0], [0], [1], [0, 0, 1, 1], [], []>} : vector<17x256xf32>, vector<256x17xf32>, vector<17x17xf32> -> vector<17x17xf32>
    %160 = arith.index_cast %139 : i32 to index
    %c0_82 = arith.constant 0 : index
    %c0_83 = arith.constant 0 : index
    %161 = vector.load %arg9[%160, %c0_82, %c0_83] : memref<8x1x17xf32, #tpu.memory_space<vmem>>, vector<1x1x17xf32>
    %162 = vector.shape_cast %161 : vector<1x1x17xf32> to vector<1x17xf32>
    %163 = vector.broadcast %162 : vector<1x17xf32> to vector<17x17xf32>
    %164 = arith.addf %159, %163 : vector<17x17xf32>
    %cst_84 = arith.constant dense<0xFF800000> : vector<17xf32>
    %165 = vector.multi_reduction <maximumf>, %164, %cst_84 [0] : vector<17x17xf32> to vector<17xf32>
    %166 = vector.shape_cast %165 : vector<17xf32> to vector<1x17xf32>
    %167 = vector.broadcast %166 : vector<1x17xf32> to vector<17x17xf32>
    %168 = arith.subf %164, %167 : vector<17x17xf32>
    %169 = math.exp %168 : vector<17x17xf32>
    %cst_85 = arith.constant dense<0.000000e+00> : vector<17xf32>
    %170 = vector.multi_reduction <add>, %169, %cst_85 [0] : vector<17x17xf32> to vector<17xf32>
    %171 = vector.shape_cast %170 : vector<17xf32> to vector<1x17xf32>
    %172 = tpu.reciprocal %171 {approx = true} : vector<1x17xf32> -> vector<1x17xf32>
    %173 = vector.broadcast %172 : vector<1x17xf32> to vector<17x17xf32>
    %174 = arith.mulf %169, %173 : vector<17x17xf32>
    %175 = arith.index_cast %139 : i32 to index
    %176 = memref.load %arg1[%175] : memref<9xf32, #tpu.memory_space<smem>>
    %177 = vector.broadcast %176 : f32 to vector<17x17xf32>
    %178 = arith.mulf %174, %177 : vector<17x17xf32>
    %cst_86 = arith.constant dense<0.000000e+00> : vector<17x512xf32>
    %179 = tpu.matmul %178, %140, %cst_86 {dimension_numbers = #tpu.dot_dimension_numbers<[0], [0], [1], [1], [0, 1, 1, 1], [], []>} : vector<17x17xf32>, vector<17x512xf32>, vector<17x512xf32> -> vector<17x512xf32>
    %180 = arith.addf %137, %179 : vector<17x512xf32>
    %c0_87 = arith.constant 0 : index
    %c0_88 = arith.constant 0 : index
    %c0_89 = arith.constant 0 : index
    %181 = vector.load %arg10[%c0_87, %c0_88, %c0_89] : memref<1x17x512xf32, #tpu.memory_space<vmem>>, vector<1x17x512xf32>
    %182 = vector.shape_cast %181 : vector<1x17x512xf32> to vector<17x512xf32>
    %183 = vector.shape_cast %180 : vector<17x512xf32> to vector<1x17x512xf32>
    tpu.vector_store %arg10[%c0_87, %c0_88, %c0_89], %183 {strides = array<i32>} : memref<1x17x512xf32, #tpu.memory_space<vmem>>, vector<1x17x512xf32>,
    return
  }
  func.func @transform_0(%arg0: i32) -> i32 {
    %c0_i32 = arith.constant 0 : i32
    %c0_i32_0 = arith.constant 0 : i32
    return %c0_i32 : i32
  }
  func.func @transform_1(%arg0: i32) -> (i32, i32) {
    %c0_i32 = arith.constant 0 : i32
    %c0_i32_0 = arith.constant 0 : i32
    %c0_i32_1 = arith.constant 0 : i32
    return %c0_i32, %c0_i32_0 : i32, i32
  }
  func.func @transform_2(%arg0: i32) -> (i32, i32) {
    %c0_i32 = arith.constant 0 : i32
    %c0_i32_0 = arith.constant 0 : i32
    %c0_i32_1 = arith.constant 0 : i32
    return %c0_i32, %c0_i32_0 : i32, i32
  }
  func.func @transform_3(%arg0: i32) -> (i32, i32, i32) {
    %c0_i32 = arith.constant 0 : i32
    %c0_i32_0 = arith.constant 0 : i32
    %c0_i32_1 = arith.constant 0 : i32
    return %arg0, %c0_i32, %c0_i32_0 : i32, i32, i32
  }
  func.func @transform_4(%arg0: i32) -> (i32, i32, i32, i32) {
    %c0_i32 = arith.constant 0 : i32
    %c0_i32_0 = arith.constant 0 : i32
    %c0_i32_1 = arith.constant 0 : i32
    %c0_i32_2 = arith.constant 0 : i32
    return %arg0, %c0_i32, %c0_i32_0, %c0_i32_1 : i32, i32, i32, i32
  }
  func.func @transform_5(%arg0: i32) -> (i32, i32, i32) {
    %c0_i32 = arith.constant 0 : i32
    %c0_i32_0 = arith.constant 0 : i32
    %c0_i32_1 = arith.constant 0 : i32
    %c0_i32_2 = arith.constant 0 : i32
    return %c0_i32, %c0_i32_0, %c0_i32_1 : i32, i32, i32
  }
  func.func @transform_6(%arg0: i32) -> (i32, i32, i32) {
    %c0_i32 = arith.constant 0 : i32
    %c0_i32_0 = arith.constant 0 : i32
    %c0_i32_1 = arith.constant 0 : i32
    %c0_i32_2 = arith.constant 0 : i32
    return %c0_i32, %c0_i32_0, %c0_i32_1 : i32, i32, i32
  }
  func.func @transform_7(%arg0: i32) -> (i32, i32, i32) {
    %c0_i32 = arith.constant 0 : i32
    %c0_i32_0 = arith.constant 0 : i32
    %c0_i32_1 = arith.constant 0 : i32
    %c0_i32_2 = arith.constant 0 : i32
    return %c0_i32, %c0_i32_0, %c0_i32_1 : i32, i32, i32
  }
  func.func @transform_8(%arg0: i32) -> (i32, i32, i32) {
    %c0_i32 = arith.constant 0 : i32
    %c0_i32_0 = arith.constant 0 : i32
    %c0_i32_1 = arith.constant 0 : i32
    %c0_i32_2 = arith.constant 0 : i32
    return %c0_i32, %c0_i32_0, %c0_i32_1 : i32, i32, i32
  }
  func.func @transform_9(%arg0: i32) -> (i32, i32, i32) {
    %c0_i32 = arith.constant 0 : i32
    %c0_i32_0 = arith.constant 0 : i32
    %c0_i32_1 = arith.constant 0 : i32
    return %arg0, %c0_i32, %c0_i32_0 : i32, i32, i32
  }
}

</mosaic_0001>

<llo_original>
// kernel: _fused_forward.1
$region0: #{_fused_forward.1}
  #allocation0 [shape = 'u32[]', space=smem, size = 0x4, offset = 0x4, fixed_abs, tag = 'smem constant byte address 0x4 - core index']
  #allocation1 [shape = 'u32[144,128]{1,0:T(1,128)}', space=vmem, size = 0x12000, scoped, tag = 'internal scratch']
  #allocation2 [shape = 'f32[17,2048]{1,0:T(8,128)}', space=vmem, size = 0x30000, scoped, tag = 'scratch operand']
  %s0 = inlined_call_operand.hbm [shape: f32[9], index: 0, kind: input, shape index: {}]
  %s1 = inlined_call_operand.vmem [shape: bf16[17,512], index: 1, kind: input, shape index: {}]
  %s2 = inlined_call_operand.vmem [shape: f32[17,3], index: 2, kind: input, shape index: {}]
  %s3 = inlined_call_operand.hbm [shape: bf16[2,512,2048], index: 3, kind: input, shape index: {}]
  %s4 = inlined_call_operand.hbm [shape: bf16[2,4,512,256], index: 4, kind: input, shape index: {}]
  %s5 = inlined_call_operand.vmem [shape: f32[8,3,256], index: 5, kind: input, shape index: {}]
  %s6 = inlined_call_operand.hbm [shape: f32[8,1,256], index: 6, kind: input, shape index: {}]
  %s7 = inlined_call_operand.vmem [shape: f32[8,256,17], index: 7, kind: input, shape index: {}]
  %s8 = inlined_call_operand.hbm [shape: f32[8,1,17], index: 8, kind: input, shape index: {}]
  %s9 = inlined_call_operand.vmem [shape: f32[2,17,512], index: 9, kind: output, shape index: {}]
  %s10 = sld [smem:[#allocation0]]
  $region89: #{_fused_forward.1} parent=0
    _
  %s12 = ssub.s32 1, %s10
  %s13 = scalar_select 0, %s12, %s10
  $region1: #{_fused_forward.1} parent=0
    #allocation3 [shape = 'u8[512]{0}', space=smem, size = 0x200, scoped, tag = 'input window, operand 0, single buffered']
    #allocation4 [shape = 's32[2]{0}', space=sflag, size = 0x8, scoped, tag = 'scoped memory for _fused_forward.1']
    #allocation5 [shape = 's32[2]{0}', space=sflag, size = 0x8, scoped, tag = 'scoped memory for _fused_forward.1']
    #allocation6 [shape = 'u8[4194304]{0}', space=vmem, size = 0x400000, scoped, tag = 'input window, operand 3']
    #allocation7 [shape = 'u8[2097152]{0}', space=vmem, size = 0x200000, scoped, tag = 'input window, operand 4']
    #allocation8 [shape = 's32[2]{0}', space=sflag, size = 0x8, scoped, tag = 'scoped memory for _fused_forward.1']
    #allocation9 [shape = 'u8[8192]{0}', space=vmem, size = 0x2000, scoped, tag = 'input window, operand 6, single buffered']
    #allocation10 [shape = 'u8[4096]{0}', space=vmem, size = 0x1000, scoped, tag = 'input window, operand 8, single buffered']
    #allocation11 [shape = 's32[1]{0}', space=sflag, size = 0x4, scoped, tag = 'scoped memory for _fused_forward.1']
    %14 = vsyncpa [#allocation5], 0
    %15 = vsyncpa [#allocation4], 0
    %s16 = scalar_lea.sflag [#allocation4], 1
    %17 = vsyncpa %s16, 0
    %18 = vsyncpa [#allocation8], 0
    %s19 = scalar_lea.sflag [#allocation8], 1
    %20 = vsyncpa %s19, 0
    %21 = vsyncpa [#allocation11], 0
    loop: start=0, step=1, limit=4
    $region2: #{_fused_forward.1} parent=1 // loop_pre_header
      _
    $region3: #{_fused_forward.1} parent=1 // loop_header
      %s23 = sphi 0, %s27
      %p24 = scmp.ge.s32.totalorder %s23, 4
      %s31 = sphi 0, %s31
      %s33 = sphi 0, %s31
      %s34 = sphi 0, %s33
      %s48 = sphi 0, %s34
      %s52 = sphi 0, %s52
      %s54 = sphi 0, %s52
      %s55 = sphi 0, %s54
      %s69 = sphi 0, %s55
      %s73 = sphi 0, %s73
      %s75 = sphi 0, %s73
      %s76 = sphi 0, %s75
      %s90 = sphi 0, %s76
      %s96 = sphi 0, %s98
      %s99 = sphi 0, %s96
      %s100 = sphi 0, %s99
      %s116 = sphi 0, %s100
      %s122 = sphi 0, %s124
      %s125 = sphi 0, %s122
      %s126 = sphi 0, %s125
      %s142 = sphi 0, %s126
      %s146 = sphi 0, %s146
      %s148 = sphi 0, %s146
      %s149 = sphi 0, %s148
      %s163 = sphi 0, %s149
      %s167 = sphi 0, %s167
      %s169 = sphi 0, %s167
      %s170 = sphi 0, %s169
      %s184 = sphi 0, %s170
      %s188 = sphi 0, %s188
      %s190 = sphi 0, %s188
      %s191 = sphi 0, %s190
      %s205 = sphi 0, %s191
      %s209 = sphi 0, %s209
      %s211 = sphi 0, %s209
      %s212 = sphi 0, %s211
      %s226 = sphi 0, %s212
      %s232 = sphi 0, %s234
      %s235 = sphi 0, %s232
      %s236 = sphi 0, %s235
      %s252 = sphi 0, %s236
    $region4: #{_fused_forward.1} parent=1 // loop_header_branch
      %26 = sbr.rel (%p24) target = $region8
    $region5: #{_fused_forward.1} parent=1 // loop_body
      %s28 = ssub.s32 %s23, 1
      %s29 = ssub.s32 %s23, 2
      %s30 = sadd.s32 %s23, 1
      %s32 = sadd.s32 %s31, 1
      %p35 = scmp.eq.s32.totalorder %s23, 1
      %p36 = scmp.ne.s32.totalorder %s31, %s33
      %p37 = scmp.eq.s32.totalorder %s23, 0
      %p38 = por %p36, %p37
      %p39 = scmp.ne.s32.totalorder %s31, %s33
      %p40 = scmp.eq.s32.totalorder %s28, 1
      %p41 = por %p39, %p40
      %p42 = scmp.ne.s32.totalorder %s33, %s34
      %p43 = scmp.eq.s32.totalorder %s28, 0
      %p44 = por %p42, %p43
      %p45 = scmp.ne.s32.totalorder %s33, %s34
      %p46 = scmp.eq.s32.totalorder %s29, 1
      %p47 = por %p45, %p46
      %p49 = scmp.ne.s32.totalorder %s34, %s48
      %p50 = scmp.eq.s32.totalorder %s29, 0
      %p51 = por %p49, %p50
      %s53 = sadd.s32 %s52, 1
      %p56 = scmp.eq.s32.totalorder %s23, 1
      %p57 = scmp.ne.s32.totalorder %s52, %s54
      %p58 = scmp.eq.s32.totalorder %s23, 0
      %p59 = por %p57, %p58
      %p60 = scmp.ne.s32.totalorder %s52, %s54
      %p61 = scmp.eq.s32.totalorder %s28, 1
      %p62 = por %p60, %p61
      %p63 = scmp.ne.s32.totalorder %s54, %s55
      %p64 = scmp.eq.s32.totalorder %s28, 0
      %p65 = por %p63, %p64
      %p66 = scmp.ne.s32.totalorder %s54, %s55
      %p67 = scmp.eq.s32.totalorder %s29, 1
      %p68 = por %p66, %p67
      %p70 = scmp.ne.s32.totalorder %s55, %s69
      %p71 = scmp.eq.s32.totalorder %s29, 0
      %p72 = por %p70, %p71
      %s74 = sadd.s32 %s73, 1
      %p77 = scmp.eq.s32.totalorder %s23, 1
      %p78 = scmp.ne.s32.totalorder %s73, %s75
      %p79 = scmp.eq.s32.totalorder %s23, 0
      %p80 = por %p78, %p79
      %p81 = scmp.ne.s32.totalorder %s73, %s75
      %p82 = scmp.eq.s32.totalorder %s28, 1
      %p83 = por %p81, %p82
      %p84 = scmp.ne.s32.totalorder %s75, %s76
      %p85 = scmp.eq.s32.totalorder %s28, 0
      %p86 = por %p84, %p85
      %p87 = scmp.ne.s32.totalorder %s75, %s76
      %p88 = scmp.eq.s32.totalorder %s29, 1
      %p89 = por %p87, %p88
      %p91 = scmp.ne.s32.totalorder %s76, %s90
      %p92 = scmp.eq.s32.totalorder %s29, 0
      %p93 = por %p91, %p92
      %s94 = ssub.s32 %s23, %s30
      %p95 = scmp.eq.s32.totalorder %s94, 0
      %s97 = sadd.s32 %s96, 1
      %s98 = scalar_select %p95, %s96, %s97
      %p101 = pneg %p95
      %p102 = scmp.eq.s32.totalorder %s23, 1
      %p103 = por %p101, %p102
      %p104 = scmp.ne.s32.totalorder %s96, %s99
      %p105 = scmp.eq.s32.totalorder %s23, 0
      %p106 = por %p104, %p105
      %p107 = scmp.ne.s32.totalorder %s96, %s99
      %p108 = scmp.eq.s32.totalorder %s28, 1
      %p109 = por %p107, %p108
      %p110 = scmp.ne.s32.totalorder %s99, %s100
      %p111 = scmp.eq.s32.totalorder %s28, 0
      %p112 = por %p110, %p111
      %p113 = scmp.ne.s32.totalorder %s99, %s100
      %p114 = scmp.eq.s32.totalorder %s29, 1
      %p115 = por %p113, %p114
      %p117 = scmp.ne.s32.totalorder %s100, %s116
      %p118 = scmp.eq.s32.totalorder %s29, 0
      %p119 = por %p117, %p118
      %s120 = ssub.s32 %s23, %s30
      %p121 = scmp.eq.s32.totalorder %s120, 0
      %s123 = sadd.s32 %s122, 1
      %s124 = scalar_select %p121, %s122, %s123
      %p127 = pneg %p121
      %p128 = scmp.eq.s32.totalorder %s23, 1
      %p129 = por %p127, %p128
      %p130 = scmp.ne.s32.totalorder %s122, %s125
      %p131 = scmp.eq.s32.totalorder %s23, 0
      %p132 = por %p130, %p131
      %p133 = scmp.ne.s32.totalorder %s122, %s125
      %p134 = scmp.eq.s32.totalorder %s28, 1
      %p135 = por %p133, %p134
      %p136 = scmp.ne.s32.totalorder %s125, %s126
      %p137 = scmp.eq.s32.totalorder %s28, 0
      %p138 = por %p136, %p137
      %p139 = scmp.ne.s32.totalorder %s125, %s126
      %p140 = scmp.eq.s32.totalorder %s29, 1
      %p141 = por %p139, %p140
      %p143 = scmp.ne.s32.totalorder %s126, %s142
      %p144 = scmp.eq.s32.totalorder %s29, 0
      %p145 = por %p143, %p144
      %s147 = sadd.s32 %s146, 1
      %p150 = scmp.eq.s32.totalorder %s23, 1
      %p151 = scmp.ne.s32.totalorder %s146, %s148
      %p152 = scmp.eq.s32.totalorder %s23, 0
      %p153 = por %p151, %p152
      %p154 = scmp.ne.s32.totalorder %s146, %s148
      %p155 = scmp.eq.s32.totalorder %s28, 1
      %p156 = por %p154, %p155
      %p157 = scmp.ne.s32.totalorder %s148, %s149
      %p158 = scmp.eq.s32.totalorder %s28, 0
      %p159 = por %p157, %p158
      %p160 = scmp.ne.s32.totalorder %s148, %s149
      %p161 = scmp.eq.s32.totalorder %s29, 1
      %p162 = por %p160, %p161
      %p164 = scmp.ne.s32.totalorder %s149, %s163
      %p165 = scmp.eq.s32.totalorder %s29, 0
      %p166 = por %p164, %p165
      %s168 = sadd.s32 %s167, 1
      %p171 = scmp.eq.s32.totalorder %s23, 1
      %p172 = scmp.ne.s32.totalorder %s167, %s169
      %p173 = scmp.eq.s32.totalorder %s23, 0
      %p174 = por %p172, %p173
      %p175 = scmp.ne.s32.totalorder %s167, %s169
      %p176 = scmp.eq.s32.totalorder %s28, 1
      %p177 = por %p175, %p176
      %p178 = scmp.ne.s32.totalorder %s169, %s170
      %p179 = scmp.eq.s32.totalorder %s28, 0
      %p180 = por %p178, %p179
      %p181 = scmp.ne.s32.totalorder %s169, %s170
      %p182 = scmp.eq.s32.totalorder %s29, 1
      %p183 = por %p181, %p182
      %p185 = scmp.ne.s32.totalorder %s170, %s184
      %p186 = scmp.eq.s32.totalorder %s29, 0
      %p187 = por %p185, %p186
      %s189 = sadd.s32 %s188, 1
      %p192 = scmp.eq.s32.totalorder %s23, 1
      %p193 = scmp.ne.s32.totalorder %s188, %s190
      %p194 = scmp.eq.s32.totalorder %s23, 0
      %p195 = por %p193, %p194
      %p196 = scmp.ne.s32.totalorder %s188, %s190
      %p197 = scmp.eq.s32.totalorder %s28, 1
      %p198 = por %p196, %p197
      %p199 = scmp.ne.s32.totalorder %s190, %s191
      %p200 = scmp.eq.s32.totalorder %s28, 0
      %p201 = por %p199, %p200
      %p202 = scmp.ne.s32.totalorder %s190, %s191
      %p203 = scmp.eq.s32.totalorder %s29, 1
      %p204 = por %p202, %p203
      %p206 = scmp.ne.s32.totalorder %s191, %s205
      %p207 = scmp.eq.s32.totalorder %s29, 0
      %p208 = por %p206, %p207
      %s210 = sadd.s32 %s209, 1
      %p213 = scmp.eq.s32.totalorder %s23, 1
      %p214 = scmp.ne.s32.totalorder %s209, %s211
      %p215 = scmp.eq.s32.totalorder %s23, 0
      %p216 = por %p214, %p215
      %p217 = scmp.ne.s32.totalorder %s209, %s211
      %p218 = scmp.eq.s32.totalorder %s28, 1
      %p219 = por %p217, %p218
      %p220 = scmp.ne.s32.totalorder %s211, %s212
      %p221 = scmp.eq.s32.totalorder %s28, 0
      %p222 = por %p220, %p221
      %p223 = scmp.ne.s32.totalorder %s211, %s212
      %p224 = scmp.eq.s32.totalorder %s29, 1
      %p225 = por %p223, %p224
      %p227 = scmp.ne.s32.totalorder %s212, %s226
      %p228 = scmp.eq.s32.totalorder %s29, 0
      %p229 = por %p227, %p228
      %s230 = ssub.s32 %s23, %s30
      %p231 = scmp.eq.s32.totalorder %s230, 0
      %s233 = sadd.s32 %s232, 1
      %s234 = scalar_select %p231, %s232, %s233
      %p237 = pneg %p231
      %p238 = scmp.eq.s32.totalorder %s23, 1
      %p239 = por %p237, %p238
      %p240 = scmp.ne.s32.totalorder %s232, %s235
      %p241 = scmp.eq.s32.totalorder %s23, 0
      %p242 = por %p240, %p241
      %p243 = scmp.ne.s32.totalorder %s232, %s235
      %p244 = scmp.eq.s32.totalorder %s28, 1
      %p245 = por %p243, %p244
      %p246 = scmp.ne.s32.totalorder %s235, %s236
      %p247 = scmp.eq.s32.totalorder %s28, 0
      %p248 = por %p246, %p247
      %p249 = scmp.ne.s32.totalorder %s235, %s236
      %p250 = scmp.eq.s32.totalorder %s29, 1
      %p251 = por %p249, %p250
      %p253 = scmp.ne.s32.totalorder %s236, %s252
      %p254 = scmp.eq.s32.totalorder %s29, 0
      %p255 = por %p253, %p254
      %p256 = scmp.le.s32.totalorder 1, %s23
      %p257 = scmp.lt.s32.totalorder %s23, 3
      %p258 = pnand %p256, %p257
      %p259 = pneg %p258
      // Predicated region
      $region9: #{_fused_forward.1} parent=5 // pred_check
        _
      $region10: #{_fused_forward.1} parent=5 // pred_check_branch
        %261 = sbr.rel (%p258) target = $region12
      $region11: #{_fused_forward.1} parent=5 // pred_region
        %s262 = ssub.s32 %s23, 1
        // Predicated region
        $region13: #{_fused_forward.1} parent=11 // pred_check
          %p263 = pneg %p44
        $region14: #{_fused_forward.1} parent=11 // pred_check_branch
          %265 = sbr.rel (%p263) target = $region16
        $region15: #{_fused_forward.1} parent=11 // pred_region
          %s267 = ssub.s32 16, 16
          %268 = vsyncadd [#allocation5], %s267
          %271 = dma.hbm_to_smem %s0, 16, [#allocation3], [#allocation5]
        $region16: #{_fused_forward.1} parent=11 // pred_fallthru
          _
        // Predicated region
        $region17: #{_fused_forward.1} parent=11 // pred_check
          %p272 = pneg %p65
        $region18: #{_fused_forward.1} parent=11 // pred_check_branch
          %274 = sbr.rel (%p272) target = $region20
        $region19: #{_fused_forward.1} parent=11 // pred_region
          _
        $region20: #{_fused_forward.1} parent=11 // pred_fallthru
          _
        // Predicated region
        $region21: #{_fused_forward.1} parent=11 // pred_check
          %p275 = pneg %p86
        $region22: #{_fused_forward.1} parent=11 // pred_check_branch
          %277 = sbr.rel (%p275) target = $region24
        $region23: #{_fused_forward.1} parent=11 // pred_region
          _
        $region24: #{_fused_forward.1} parent=11 // pred_fallthru
          _
        // Predicated region
        $region25: #{_fused_forward.1} parent=11 // pred_check
          %p278 = pneg %p159
        $region26: #{_fused_forward.1} parent=11 // pred_check_branch
          %280 = sbr.rel (%p278) target = $region28
        $region27: #{_fused_forward.1} parent=11 // pred_region
          _
        $region28: #{_fused_forward.1} parent=11 // pred_fallthru
          _
        // Predicated region
        $region29: #{_fused_forward.1} parent=11 // pred_check
          %p281 = pneg %p180
        $region30: #{_fused_forward.1} parent=11 // pred_check_branch
          %283 = sbr.rel (%p281) target = $region32
        $region31: #{_fused_forward.1} parent=11 // pred_region
          %s285 = ssub.s32 256, 256
          %286 = vsyncadd [#allocation8], %s285
          %s287 = sshll.u32 [#allocation9], 4
          %s288 = int_to_ptr.vmem [resolvable:$true] %s287
          %293 = dma.hbm_to_vmem [thread:$0]  %s6, 256, %s288, [#allocation8], 32, 32, 2
        $region32: #{_fused_forward.1} parent=11 // pred_fallthru
          _
        // Predicated region
        $region33: #{_fused_forward.1} parent=11 // pred_check
          %p294 = pneg %p201
        $region34: #{_fused_forward.1} parent=11 // pred_check_branch
          %296 = sbr.rel (%p294) target = $region36
        $region35: #{_fused_forward.1} parent=11 // pred_region
          _
        $region36: #{_fused_forward.1} parent=11 // pred_fallthru
          _
        // Predicated region
        $region37: #{_fused_forward.1} parent=11 // pred_check
          %p297 = pneg %p222
        $region38: #{_fused_forward.1} parent=11 // pred_check_branch
          %299 = sbr.rel (%p297) target = $region40
        $region39: #{_fused_forward.1} parent=11 // pred_region
          %s301 = ssub.s32 128, 128
          %302 = vsyncadd [#allocation11], %s301
          %s303 = sshll.u32 [#allocation10], 4
          %s304 = int_to_ptr.vmem [resolvable:$true] %s303
          %309 = dma.hbm_to_vmem [thread:$0]  %s8, 128, %s304, [#allocation11], 16, 16, 1
        $region40: #{_fused_forward.1} parent=11 // pred_fallthru
          _
      $region12: #{_fused_forward.1} parent=5 // pred_fallthru
        _
      %p310 = scmp.lt.s32.totalorder %s23, 2
      // Predicated region
      $region41: #{_fused_forward.1} parent=5 // pred_check
        %p311 = pneg %p310
      $region42: #{_fused_forward.1} parent=5 // pred_check_branch
        %313 = sbr.rel (%p311) target = $region44
      $region43: #{_fused_forward.1} parent=5 // pred_region
        // Predicated region
        $region45: #{_fused_forward.1} parent=43 // pred_check
          %p314 = pneg %p106
        $region46: #{_fused_forward.1} parent=43 // pred_check_branch
          %316 = sbr.rel (%p314) target = $region48
        $region47: #{_fused_forward.1} parent=43 // pred_region
          %s317 = sand.u32 %s96, 1
          %s318 = scalar_lea.sflag [#allocation4], %s317
          %s319 = sand.u32 %s96, 1
          %s320 = smul.addr %s319, 4096
          %s321 = scalar_lea.vmem [#allocation6], %s320
          %s323 = ssub.s32 65536, 65536
          %324 = vsyncadd %s318, %s323
          %s325 = smul.addr %s23, 1024
          %s326 = smul.addr %s325, 64
          %s327 = scalar_lea.hbm %s3, %s326
          %s328 = sshll.u32 %s321, 4
          %s329 = int_to_ptr.vmem [resolvable:$true] %s328
          %334 = dma.hbm_to_vmem [thread:$0]  %s327, 65536, %s329, %s318, 1024, 1024, 64
        $region48: #{_fused_forward.1} parent=43 // pred_fallthru
          _
        // Predicated region
        $region49: #{_fused_forward.1} parent=43 // pred_check
          %p335 = pneg %p132
        $region50: #{_fused_forward.1} parent=43 // pred_check_branch
          %337 = sbr.rel (%p335) target = $region52
        $region51: #{_fused_forward.1} parent=43 // pred_region
          %s338 = sand.u32 %s23, 1
          %s339 = scalar_lea.sflag [#allocation8], %s338
          %s340 = sand.u32 %s122, 1
          %s341 = smul.addr %s340, 2048
          %s342 = scalar_lea.vmem [#allocation7], %s341
          %s344 = ssub.s32 32768, 32768
          %345 = vsyncadd %s339, %s344
          %s346 = smul.addr %s23, 512
          %s347 = smul.addr %s346, 64
          %s348 = scalar_lea.hbm %s4, %s347
          %s349 = sshll.u32 %s342, 4
          %s350 = int_to_ptr.vmem [resolvable:$true] %s349
          %355 = dma.hbm_to_vmem [thread:$0]  %s348, 32768, %s350, %s339, 128, 128, 8
        $region52: #{_fused_forward.1} parent=43 // pred_fallthru
          _
      $region44: #{_fused_forward.1} parent=5 // pred_fallthru
        _
      %p356 = scmp.le.s32.totalorder 1, %s23
      %p357 = scmp.lt.s32.totalorder %s23, 3
      %p358 = pnand %p356, %p357
      %p359 = pneg %p358
      // Predicated region
      $region53: #{_fused_forward.1} parent=5 // pred_check
        _
      $region54: #{_fused_forward.1} parent=5 // pred_check_branch
        %361 = sbr.rel (%p358) target = $region56
      $region55: #{_fused_forward.1} parent=5 // pred_region
        %s362 = ssub.s32 %s23, 1
        // Predicated region
        $region57: #{_fused_forward.1} parent=55 // pred_check
          %p363 = pneg %p44
        $region58: #{_fused_forward.1} parent=55 // pred_check_branch
          %365 = sbr.rel (%p363) target = $region60
        $region59: #{_fused_forward.1} parent=55 // pred_region
          %366 = dma.done [#allocation5], 16
        $region60: #{_fused_forward.1} parent=55 // pred_fallthru
          _
        %s367 = sand.u32 %s99, 1
        %s368 = scalar_lea.sflag [#allocation4], %s367
        %s369 = sand.u32 %s99, 1
        %s370 = smul.addr %s369, 4096
        %s371 = scalar_lea.vmem [#allocation6], %s370
        // Predicated region
        $region61: #{_fused_forward.1} parent=55 // pred_check
          %p372 = pneg %p112
        $region62: #{_fused_forward.1} parent=55 // pred_check_branch
          %374 = sbr.rel (%p372) target = $region64
        $region63: #{_fused_forward.1} parent=55 // pred_region
          %375 = dma.done %s368, 65536
        $region64: #{_fused_forward.1} parent=55 // pred_fallthru
          _
        %s376 = sand.u32 %s28, 1
        %s377 = scalar_lea.sflag [#allocation8], %s376
        %s378 = sand.u32 %s125, 1
        %s379 = smul.addr %s378, 2048
        %s380 = scalar_lea.vmem [#allocation7], %s379
        // Predicated region
        $region65: #{_fused_forward.1} parent=55 // pred_check
          %p381 = pneg %p138
        $region66: #{_fused_forward.1} parent=55 // pred_check_branch
          %383 = sbr.rel (%p381) target = $region68
        $region67: #{_fused_forward.1} parent=55 // pred_region
          %384 = dma.done %s377, 32768
        $region68: #{_fused_forward.1} parent=55 // pred_fallthru
          _
        // Predicated region
        $region69: #{_fused_forward.1} parent=55 // pred_check
          %p385 = pneg %p180
        $region70: #{_fused_forward.1} parent=55 // pred_check_branch
          %387 = sbr.rel (%p385) target = $region72
        $region71: #{_fused_forward.1} parent=55 // pred_region
          %388 = dma.done [#allocation8], 256
        $region72: #{_fused_forward.1} parent=55 // pred_fallthru
          _
        // Predicated region
        $region73: #{_fused_forward.1} parent=55 // pred_check
          %p389 = pneg %p222
        $region74: #{_fused_forward.1} parent=55 // pred_check_branch
          %391 = sbr.rel (%p389) target = $region76
        $region75: #{_fused_forward.1} parent=55 // pred_region
          %392 = dma.done [#allocation11], 128
        $region76: #{_fused_forward.1} parent=55 // pred_fallthru
          _
        %393 = sfence
        %p394 = pneg %p44
        %p395 = pneg %p41
        %p396 = pneg %p65
        %p397 = pneg %p62
        %p398 = pneg %p86
        %p399 = pneg %p83
        %s400 = sand.u32 %s99, 1
        %s401 = scalar_lea.sflag [#allocation4], %s400
        %s402 = sand.u32 %s99, 1
        %s403 = smul.addr %s402, 4096
        %s404 = scalar_lea.vmem [#allocation6], %s403
        %p405 = pneg %p112
        %p406 = pneg %p109
        %s407 = sand.u32 %s28, 1
        %s408 = scalar_lea.sflag [#allocation8], %s407
        %s409 = sand.u32 %s125, 1
        %s410 = smul.addr %s409, 2048
        %s411 = scalar_lea.vmem [#allocation7], %s410
        %p412 = pneg %p138
        %p413 = pneg %p135
        %p414 = pneg %p159
        %p415 = pneg %p156
        %p416 = pneg %p180
        %p417 = pneg %p177
        %p418 = pneg %p201
        %p419 = pneg %p198
        %p420 = pneg %p222
        %p421 = pneg %p219
        %p422 = pneg %p248
        %p423 = pneg %p245
        %p424 = scmp.lt.s32.totalorder %s28, 1
        %s425 = scalar_select %p424, %s28, 1
        %s426 = smul.addr %s425, 12
        %s427 = smul.addr %s426, 8
        %s428 = scalar_lea.vmem %s9, %s427
        %p429 = scmp.lt.s32.totalorder %s28, 1
        %s430 = scalar_select %p429, %s28, 1
        %s431 = smul.addr %s430, 12
        %s432 = smul.addr %s431, 8
        %s433 = scalar_lea.vmem %s9, %s432
        %v434 = vld [vmem:[%s1] sm:$0xff]
        %v435 = vld [vmem:[%s1 + $0x8] sm:$0xff]
        %v436 = vld [vmem:[%s1 + $0x10] sm:$0xff]
        %v437 = vld [vmem:[%s1 + $0x18] sm:$0xff]
        %v438 = vld [vmem:[%s1 + $0x20] sm:$0x11]
        %v439 = vld [vmem:[%s1 + $0x28] sm:$0x11]
        %v440 = vld [vmem:[%s2] sm:$0xff]
        %v441 = vld [vmem:[%s2 + $0x8] sm:$0xff]
        %v442 = vld [vmem:[%s2 + $0x10] sm:$0x1]
        %v443 = vld [vmem:[%s371] sm:$0xff]
        %v444 = vld [vmem:[%s371 + $0x8] sm:$0xff]
        %v445 = vld [vmem:[%s371 + $0x10] sm:$0xff]
        %v446 = vld [vmem:[%s371 + $0x18] sm:$0xff]
        %v447 = vld [vmem:[%s371 + $0x20] sm:$0xff]
        %v448 = vld [vmem:[%s371 + $0x28] sm:$0xff]
        %v449 = vld [vmem:[%s371 + $0x30] sm:$0xff]
        %v450 = vld [vmem:[%s371 + $0x38] sm:$0xff]
        %v451 = vld [vmem:[%s371 + $0x40] sm:$0xff]
        %v452 = vld [vmem:[%s371 + $0x48] sm:$0xff]
        %v453 = vld [vmem:[%s371 + $0x50] sm:$0xff]
        %v454 = vld [vmem:[%s371 + $0x58] sm:$0xff]
        %v455 = vld [vmem:[%s371 + $0x60] sm:$0xff]
        %v456 = vld [vmem:[%s371 + $0x68] sm:$0xff]
        %v457 = vld [vmem:[%s371 + $0x70] sm:$0xff]
        %v458 = vld [vmem:[%s371 + $0x78] sm:$0xff]
        %v459 = vld [vmem:[%s371 + $0x80] sm:$0xff]
        %v460 = vld [vmem:[%s371 + $0x88] sm:$0xff]
        %v461 = vld [vmem:[%s371 + $0x90] sm:$0xff]
        %v462 = vld [vmem:[%s371 + $0x98] sm:$0xff]
        %v463 = vld [vmem:[%s371 + $0xa0] sm:$0xff]
        %v464 = vld [vmem:[%s371 + $0xa8] sm:$0xff]
        %v465 = vld [vmem:[%s371 + $0xb0] sm:$0xff]
        %v466 = vld [vmem:[%s371 + $0xb8] sm:$0xff]
        %v467 = vld [vmem:[%s371 + $0xc0] sm:$0xff]
        %v468 = vld [vmem:[%s371 + $0xc8] sm:$0xff]
        %v469 = vld [vmem:[%s371 + $0xd0] sm:$0xff]
        %v470 = vld [vmem:[%s371 + $0xd8] sm:$0xff]
        %v471 = vld [vmem:[%s371 + $0xe0] sm:$0xff]
        %v472 = vld [vmem:[%s371 + $0xe8] sm:$0xff]
        %v473 = vld [vmem:[%s371 + $0xf0] sm:$0xff]
        %v474 = vld [vmem:[%s371 + $0xf8] sm:$0xff]
        %v475 = vld [vmem:[%s371 + $0x100] sm:$0xff]
        %v476 = vld [vmem:[%s371 + $0x108] sm:$0xff]
        %v477 = vld [vmem:[%s371 + $0x110] sm:$0xff]
        %v478 = vld [vmem:[%s371 + $0x118] sm:$0xff]
        %v479 = vld [vmem:[%s371 + $0x120] sm:$0xff]
        %v480 = vld [vmem:[%s371 + $0x128] sm:$0xff]
        %v481 = vld [vmem:[%s371 + $0x130] sm:$0xff]
        %v482 = vld [vmem:[%s371 + $0x138] sm:$0xff]
        %v483 = vld [vmem:[%s371 + $0x140] sm:$0xff]
        %v484 = vld [vmem:[%s371 + $0x148] sm:$0xff]
        %v485 = vld [vmem:[%s371 + $0x150] sm:$0xff]
        %v486 = vld [vmem:[%s371 + $0x158] sm:$0xff]
        %v487 = vld [vmem:[%s371 + $0x160] sm:$0xff]
        %v488 = vld [vmem:[%s371 + $0x168] sm:$0xff]
        %v489 = vld [vmem:[%s371 + $0x170] sm:$0xff]
        %v490 = vld [vmem:[%s371 + $0x178] sm:$0xff]
        %v491 = vld [vmem:[%s371 + $0x180] sm:$0xff]
        %v492 = vld [vmem:[%s371 + $0x188] sm:$0xff]
        %v493 = vld [vmem:[%s371 + $0x190] sm:$0xff]
        %v494 = vld [vmem:[%s371 + $0x198] sm:$0xff]
        %v495 = vld [vmem:[%s371 + $0x1a0] sm:$0xff]
        %v496 = vld [vmem:[%s371 + $0x1a8] sm:$0xff]
        %v497 = vld [vmem:[%s371 + $0x1b0] sm:$0xff]
        %v498 = vld [vmem:[%s371 + $0x1b8] sm:$0xff]
        %v499 = vld [vmem:[%s371 + $0x1c0] sm:$0xff]
        %v500 = vld [vmem:[%s371 + $0x1c8] sm:$0xff]
        %v501 = vld [vmem:[%s371 + $0x1d0] sm:$0xff]
        %v502 = vld [vmem:[%s371 + $0x1d8] sm:$0xff]
        %v503 = vld [vmem:[%s371 + $0x1e0] sm:$0xff]
        %v504 = vld [vmem:[%s371 + $0x1e8] sm:$0xff]
        %v505 = vld [vmem:[%s371 + $0x1f0] sm:$0xff]
        %v506 = vld [vmem:[%s371 + $0x1f8] sm:$0xff]
        %v507 = vld [vmem:[%s371 + $0x200] sm:$0xff]
        %v508 = vld [vmem:[%s371 + $0x208] sm:$0xff]
        %v509 = vld [vmem:[%s371 + $0x210] sm:$0xff]
        %v510 = vld [vmem:[%s371 + $0x218] sm:$0xff]
        %v511 = vld [vmem:[%s371 + $0x220] sm:$0xff]
        %v512 = vld [vmem:[%s371 + $0x228] sm:$0xff]
        %v513 = vld [vmem:[%s371 + $0x230] sm:$0xff]
        %v514 = vld [vmem:[%s371 + $0x238] sm:$0xff]
        %v515 = vld [vmem:[%s371 + $0x240] sm:$0xff]
        %v516 = vld [vmem:[%s371 + $0x248] sm:$0xff]
        %v517 = vld [vmem:[%s371 + $0x250] sm:$0xff]
        %v518 = vld [vmem:[%s371 + $0x258] sm:$0xff]
        %v519 = vld [vmem:[%s371 + $0x260] sm:$0xff]
        %v520 = vld [vmem:[%s371 + $0x268] sm:$0xff]
        %v521 = vld [vmem:[%s371 + $0x270] sm:$0xff]
        %v522 = vld [vmem:[%s371 + $0x278] sm:$0xff]
        %v523 = vld [vmem:[%s371 + $0x280] sm:$0xff]
        %v524 = vld [vmem:[%s371 + $0x288] sm:$0xff]
        %v525 = vld [vmem:[%s371 + $0x290] sm:$0xff]
        %v526 = vld [vmem:[%s371 + $0x298] sm:$0xff]
        %v527 = vld [vmem:[%s371 + $0x2a0] sm:$0xff]
        %v528 = vld [vmem:[%s371 + $0x2a8] sm:$0xff]
        %v529 = vld [vmem:[%s371 + $0x2b0] sm:$0xff]
        %v530 = vld [vmem:[%s371 + $0x2b8] sm:$0xff]
        %v531 = vld [vmem:[%s371 + $0x2c0] sm:$0xff]
        %v532 = vld [vmem:[%s371 + $0x2c8] sm:$0xff]
        %v533 = vld [vmem:[%s371 + $0x2d0] sm:$0xff]
        %v534 = vld [vmem:[%s371 + $0x2d8] sm:$0xff]
        %v535 = vld [vmem:[%s371 + $0x2e0] sm:$0xff]
        %v536 = vld [vmem:[%s371 + $0x2e8] sm:$0xff]
        %v537 = vld [vmem:[%s371 + $0x2f0] sm:$0xff]
        %v538 = vld [vmem:[%s371 + $0x2f8] sm:$0xff]
        %v539 = vld [vmem:[%s371 + $0x300] sm:$0xff]
        %v540 = vld [vmem:[%s371 + $0x308] sm:$0xff]
        %v541 = vld [vmem:[%s371 + $0x310] sm:$0xff]
        %v542 = vld [vmem:[%s371 + $0x318] sm:$0xff]
        %v543 = vld [vmem:[%s371 + $0x320] sm:$0xff]
        %v544 = vld [vmem:[%s371 + $0x328] sm:$0xff]
        %v545 = vld [vmem:[%s371 + $0x330] sm:$0xff]
        %v546 = vld [vmem:[%s371 + $0x338] sm:$0xff]
        %v547 = vld [vmem:[%s371 + $0x340] sm:$0xff]
        %v548 = vld [vmem:[%s371 + $0x348] sm:$0xff]
        %v549 = vld [vmem:[%s371 + $0x350] sm:$0xff]
        %v550 = vld [vmem:[%s371 + $0x358] sm:$0xff]
        %v551 = vld [vmem:[%s371 + $0x360] sm:$0xff]
        %v552 = vld [vmem:[%s371 + $0x368] sm:$0xff]
        %v553 = vld [vmem:[%s371 + $0x370] sm:$0xff]
        %v554 = vld [vmem:[%s371 + $0x378] sm:$0xff]
        %v555 = vld [vmem:[%s371 + $0x380] sm:$0xff]
        %v556 = vld [vmem:[%s371 + $0x388] sm:$0xff]
        %v557 = vld [vmem:[%s371 + $0x390] sm:$0xff]
        %v558 = vld [vmem:[%s371 + $0x398] sm:$0xff]
        %v559 = vld [vmem:[%s371 + $0x3a0] sm:$0xff]
        %v560 = vld [vmem:[%s371 + $0x3a8] sm:$0xff]
        %v561 = vld [vmem:[%s371 + $0x3b0] sm:$0xff]
        %v562 = vld [vmem:[%s371 + $0x3b8] sm:$0xff]
        %v563 = vld [vmem:[%s371 + $0x3c0] sm:$0xff]
        %v564 = vld [vmem:[%s371 + $0x3c8] sm:$0xff]
        %v565 = vld [vmem:[%s371 + $0x3d0] sm:$0xff]
        %v566 = vld [vmem:[%s371 + $0x3d8] sm:$0xff]
        %v567 = vld [vmem:[%s371 + $0x3e0] sm:$0xff]
        %v568 = vld [vmem:[%s371 + $0x3e8] sm:$0xff]
        %v569 = vld [vmem:[%s371 + $0x3f0] sm:$0xff]
        %v570 = vld [vmem:[%s371 + $0x3f8] sm:$0xff]
        %v571 = vld [vmem:[%s371 + $0x400] sm:$0xff]
        %v572 = vld [vmem:[%s371 + $0x408] sm:$0xff]
        %v573 = vld [vmem:[%s371 + $0x410] sm:$0xff]
        %v574 = vld [vmem:[%s371 + $0x418] sm:$0xff]
        %v575 = vld [vmem:[%s371 + $0x420] sm:$0xff]
        %v576 = vld [vmem:[%s371 + $0x428] sm:$0xff]
        %v577 = vld [vmem:[%s371 + $0x430] sm:$0xff]
        %v578 = vld [vmem:[%s371 + $0x438] sm:$0xff]
        %v579 = vld [vmem:[%s371 + $0x440] sm:$0xff]
        %v580 = vld [vmem:[%s371 + $0x448] sm:$0xff]
        %v581 = vld [vmem:[%s371 + $0x450] sm:$0xff]
        %v582 = vld [vmem:[%s371 + $0x458] sm:$0xff]
        %v583 = vld [vmem:[%s371 + $0x460] sm:$0xff]
        %v584 = vld [vmem:[%s371 + $0x468] sm:$0xff]
        %v585 = vld [vmem:[%s371 + $0x470] sm:$0xff]
        %v586 = vld [vmem:[%s371 + $0x478] sm:$0xff]
        %v587 = vld [vmem:[%s371 + $0x480] sm:$0xff]
        %v588 = vld [vmem:[%s371 + $0x488] sm:$0xff]
        %v589 = vld [vmem:[%s371 + $0x490] sm:$0xff]
        %v590 = vld [vmem:[%s371 + $0x498] sm:$0xff]
        %v591 = vld [vmem:[%s371 + $0x4a0] sm:$0xff]
        %v592 = vld [vmem:[%s371 + $0x4a8] sm:$0xff]
        %v593 = vld [vmem:[%s371 + $0x4b0] sm:$0xff]
        %v594 = vld [vmem:[%s371 + $0x4b8] sm:$0xff]
        %v595 = vld [vmem:[%s371 + $0x4c0] sm:$0xff]
        %v596 = vld [vmem:[%s371 + $0x4c8] sm:$0xff]
        %v597 = vld [vmem:[%s371 + $0x4d0] sm:$0xff]
        %v598 = vld [vmem:[%s371 + $0x4d8] sm:$0xff]
        %v599 = vld [vmem:[%s371 + $0x4e0] sm:$0xff]
        %v600 = vld [vmem:[%s371 + $0x4e8] sm:$0xff]
        %v601 = vld [vmem:[%s371 + $0x4f0] sm:$0xff]
        %v602 = vld [vmem:[%s371 + $0x4f8] sm:$0xff]
        %v603 = vld [vmem:[%s371 + $0x500] sm:$0xff]
        %v604 = vld [vmem:[%s371 + $0x508] sm:$0xff]
        %v605 = vld [vmem:[%s371 + $0x510] sm:$0xff]
        %v606 = vld [vmem:[%s371 + $0x518] sm:$0xff]
        %v607 = vld [vmem:[%s371 + $0x520] sm:$0xff]
        %v608 = vld [vmem:[%s371 + $0x528] sm:$0xff]
        %v609 = vld [vmem:[%s371 + $0x530] sm:$0xff]
        %v610 = vld [vmem:[%s371 + $0x538] sm:$0xff]
        %v611 = vld [vmem:[%s371 + $0x540] sm:$0xff]
        %v612 = vld [vmem:[%s371 + $0x548] sm:$0xff]
        %v613 = vld [vmem:[%s371 + $0x550] sm:$0xff]
        %v614 = vld [vmem:[%s371 + $0x558] sm:$0xff]
        %v615 = vld [vmem:[%s371 + $0x560] sm:$0xff]
        %v616 = vld [vmem:[%s371 + $0x568] sm:$0xff]
        %v617 = vld [vmem:[%s371 + $0x570] sm:$0xff]
        %v618 = vld [vmem:[%s371 + $0x578] sm:$0xff]
        %v619 = vld [vmem:[%s371 + $0x580] sm:$0xff]
        %v620 = vld [vmem:[%s371 + $0x588] sm:$0xff]
        %v621 = vld [vmem:[%s371 + $0x590] sm:$0xff]
        %v622 = vld [vmem:[%s371 + $0x598] sm:$0xff]
        %v623 = vld [vmem:[%s371 + $0x5a0] sm:$0xff]
        %v624 = vld [vmem:[%s371 + $0x5a8] sm:$0xff]
        %v625 = vld [vmem:[%s371 + $0x5b0] sm:$0xff]
        %v626 = vld [vmem:[%s371 + $0x5b8] sm:$0xff]
        %v627 = vld [vmem:[%s371 + $0x5c0] sm:$0xff]
        %v628 = vld [vmem:[%s371 + $0x5c8] sm:$0xff]
        %v629 = vld [vmem:[%s371 + $0x5d0] sm:$0xff]
        %v630 = vld [vmem:[%s371 + $0x5d8] sm:$0xff]
        %v631 = vld [vmem:[%s371 + $0x5e0] sm:$0xff]
        %v632 = vld [vmem:[%s371 + $0x5e8] sm:$0xff]
        %v633 = vld [vmem:[%s371 + $0x5f0] sm:$0xff]
        %v634 = vld [vmem:[%s371 + $0x5f8] sm:$0xff]
        %v635 = vld [vmem:[%s371 + $0x600] sm:$0xff]
        %v636 = vld [vmem:[%s371 + $0x608] sm:$0xff]
        %v637 = vld [vmem:[%s371 + $0x610] sm:$0xff]
        %v638 = vld [vmem:[%s371 + $0x618] sm:$0xff]
        %v639 = vld [vmem:[%s371 + $0x620] sm:$0xff]
        %v640 = vld [vmem:[%s371 + $0x628] sm:$0xff]
        %v641 = vld [vmem:[%s371 + $0x630] sm:$0xff]
        %v642 = vld [vmem:[%s371 + $0x638] sm:$0xff]
        %v643 = vld [vmem:[%s371 + $0x640] sm:$0xff]
        %v644 = vld [vmem:[%s371 + $0x648] sm:$0xff]
        %v645 = vld [vmem:[%s371 + $0x650] sm:$0xff]
        %v646 = vld [vmem:[%s371 + $0x658] sm:$0xff]
        %v647 = vld [vmem:[%s371 + $0x660] sm:$0xff]
        %v648 = vld [vmem:[%s371 + $0x668] sm:$0xff]
        %v649 = vld [vmem:[%s371 + $0x670] sm:$0xff]
        %v650 = vld [vmem:[%s371 + $0x678] sm:$0xff]
        %v651 = vld [vmem:[%s371 + $0x680] sm:$0xff]
        %v652 = vld [vmem:[%s371 + $0x688] sm:$0xff]
        %v653 = vld [vmem:[%s371 + $0x690] sm:$0xff]
        %v654 = vld [vmem:[%s371 + $0x698] sm:$0xff]
        %v655 = vld [vmem:[%s371 + $0x6a0] sm:$0xff]
        %v656 = vld [vmem:[%s371 + $0x6a8] sm:$0xff]
        %v657 = vld [vmem:[%s371 + $0x6b0] sm:$0xff]
        %v658 = vld [vmem:[%s371 + $0x6b8] sm:$0xff]
        %v659 = vld [vmem:[%s371 + $0x6c0] sm:$0xff]
        %v660 = vld [vmem:[%s371 + $0x6c8] sm:$0xff]
        %v661 = vld [vmem:[%s371 + $0x6d0] sm:$0xff]
        %v662 = vld [vmem:[%s371 + $0x6d8] sm:$0xff]
        %v663 = vld [vmem:[%s371 + $0x6e0] sm:$0xff]
        %v664 = vld [vmem:[%s371 + $0x6e8] sm:$0xff]
        %v665 = vld [vmem:[%s371 + $0x6f0] sm:$0xff]
        %v666 = vld [vmem:[%s371 + $0x6f8] sm:$0xff]
        %v667 = vld [vmem:[%s371 + $0x700] sm:$0xff]
        %v668 = vld [vmem:[%s371 + $0x708] sm:$0xff]
        %v669 = vld [vmem:[%s371 + $0x710] sm:$0xff]
        %v670 = vld [vmem:[%s371 + $0x718] sm:$0xff]
        %v671 = vld [vmem:[%s371 + $0x720] sm:$0xff]
        %v672 = vld [vmem:[%s371 + $0x728] sm:$0xff]
        %v673 = vld [vmem:[%s371 + $0x730] sm:$0xff]
        %v674 = vld [vmem:[%s371 + $0x738] sm:$0xff]
        %v675 = vld [vmem:[%s371 + $0x740] sm:$0xff]
        %v676 = vld [vmem:[%s371 + $0x748] sm:$0xff]
        %v677 = vld [vmem:[%s371 + $0x750] sm:$0xff]
        %v678 = vld [vmem:[%s371 + $0x758] sm:$0xff]
        %v679 = vld [vmem:[%s371 + $0x760] sm:$0xff]
        %v680 = vld [vmem:[%s371 + $0x768] sm:$0xff]
        %v681 = vld [vmem:[%s371 + $0x770] sm:$0xff]
        %v682 = vld [vmem:[%s371 + $0x778] sm:$0xff]
        %v683 = vld [vmem:[%s371 + $0x780] sm:$0xff]
        %v684 = vld [vmem:[%s371 + $0x788] sm:$0xff]
        %v685 = vld [vmem:[%s371 + $0x790] sm:$0xff]
        %v686 = vld [vmem:[%s371 + $0x798] sm:$0xff]
        %v687 = vld [vmem:[%s371 + $0x7a0] sm:$0xff]
        %v688 = vld [vmem:[%s371 + $0x7a8] sm:$0xff]
        %v689 = vld [vmem:[%s371 + $0x7b0] sm:$0xff]
        %v690 = vld [vmem:[%s371 + $0x7b8] sm:$0xff]
        %v691 = vld [vmem:[%s371 + $0x7c0] sm:$0xff]
        %v692 = vld [vmem:[%s371 + $0x7c8] sm:$0xff]
        %v693 = vld [vmem:[%s371 + $0x7d0] sm:$0xff]
        %v694 = vld [vmem:[%s371 + $0x7d8] sm:$0xff]
        %v695 = vld [vmem:[%s371 + $0x7e0] sm:$0xff]
        %v696 = vld [vmem:[%s371 + $0x7e8] sm:$0xff]
        %v697 = vld [vmem:[%s371 + $0x7f0] sm:$0xff]
        %v698 = vld [vmem:[%s371 + $0x7f8] sm:$0xff]
        %v699 = vld [vmem:[%s371 + $0x800] sm:$0xff]
        %v700 = vld [vmem:[%s371 + $0x808] sm:$0xff]
        %v701 = vld [vmem:[%s371 + $0x810] sm:$0xff]
        %v702 = vld [vmem:[%s371 + $0x818] sm:$0xff]
        %v703 = vld [vmem:[%s371 + $0x820] sm:$0xff]
        %v704 = vld [vmem:[%s371 + $0x828] sm:$0xff]
        %v705 = vld [vmem:[%s371 + $0x830] sm:$0xff]
        %v706 = vld [vmem:[%s371 + $0x838] sm:$0xff]
        %v707 = vld [vmem:[%s371 + $0x840] sm:$0xff]
        %v708 = vld [vmem:[%s371 + $0x848] sm:$0xff]
        %v709 = vld [vmem:[%s371 + $0x850] sm:$0xff]
        %v710 = vld [vmem:[%s371 + $0x858] sm:$0xff]
        %v711 = vld [vmem:[%s371 + $0x860] sm:$0xff]
        %v712 = vld [vmem:[%s371 + $0x868] sm:$0xff]
        %v713 = vld [vmem:[%s371 + $0x870] sm:$0xff]
        %v714 = vld [vmem:[%s371 + $0x878] sm:$0xff]
        %v715 = vld [vmem:[%s371 + $0x880] sm:$0xff]
        %v716 = vld [vmem:[%s371 + $0x888] sm:$0xff]
        %v717 = vld [vmem:[%s371 + $0x890] sm:$0xff]
        %v718 = vld [vmem:[%s371 + $0x898] sm:$0xff]
        %v719 = vld [vmem:[%s371 + $0x8a0] sm:$0xff]
        %v720 = vld [vmem:[%s371 + $0x8a8] sm:$0xff]
        %v721 = vld [vmem:[%s371 + $0x8b0] sm:$0xff]
        %v722 = vld [vmem:[%s371 + $0x8b8] sm:$0xff]
        %v723 = vld [vmem:[%s371 + $0x8c0] sm:$0xff]
        %v724 = vld [vmem:[%s371 + $0x8c8] sm:$0xff]
        %v725 = vld [vmem:[%s371 + $0x8d0] sm:$0xff]
        %v726 = vld [vmem:[%s371 + $0x8d8] sm:$0xff]
        %v727 = vld [vmem:[%s371 + $0x8e0] sm:$0xff]
        %v728 = vld [vmem:[%s371 + $0x8e8] sm:$0xff]
        %v729 = vld [vmem:[%s371 + $0x8f0] sm:$0xff]
        %v730 = vld [vmem:[%s371 + $0x8f8] sm:$0xff]
        %v731 = vld [vmem:[%s371 + $0x900] sm:$0xff]
        %v732 = vld [vmem:[%s371 + $0x908] sm:$0xff]
        %v733 = vld [vmem:[%s371 + $0x910] sm:$0xff]
        %v734 = vld [vmem:[%s371 + $0x918] sm:$0xff]
        %v735 = vld [vmem:[%s371 + $0x920] sm:$0xff]
        %v736 = vld [vmem:[%s371 + $0x928] sm:$0xff]
        %v737 = vld [vmem:[%s371 + $0x930] sm:$0xff]
        %v738 = vld [vmem:[%s371 + $0x938] sm:$0xff]
        %v739 = vld [vmem:[%s371 + $0x940] sm:$0xff]
        %v740 = vld [vmem:[%s371 + $0x948] sm:$0xff]
        %v741 = vld [vmem:[%s371 + $0x950] sm:$0xff]
        %v742 = vld [vmem:[%s371 + $0x958] sm:$0xff]
        %v743 = vld [vmem:[%s371 + $0x960] sm:$0xff]
        %v744 = vld [vmem:[%s371 + $0x968] sm:$0xff]
        %v745 = vld [vmem:[%s371 + $0x970] sm:$0xff]
        %v746 = vld [vmem:[%s371 + $0x978] sm:$0xff]
        %v747 = vld [vmem:[%s371 + $0x980] sm:$0xff]
        %v748 = vld [vmem:[%s371 + $0x988] sm:$0xff]
        %v749 = vld [vmem:[%s371 + $0x990] sm:$0xff]
        %v750 = vld [vmem:[%s371 + $0x998] sm:$0xff]
        %v751 = vld [vmem:[%s371 + $0x9a0] sm:$0xff]
        %v752 = vld [vmem:[%s371 + $0x9a8] sm:$0xff]
        %v753 = vld [vmem:[%s371 + $0x9b0] sm:$0xff]
        %v754 = vld [vmem:[%s371 + $0x9b8] sm:$0xff]
        %v755 = vld [vmem:[%s371 + $0x9c0] sm:$0xff]
        %v756 = vld [vmem:[%s371 + $0x9c8] sm:$0xff]
        %v757 = vld [vmem:[%s371 + $0x9d0] sm:$0xff]
        %v758 = vld [vmem:[%s371 + $0x9d8] sm:$0xff]
        %v759 = vld [vmem:[%s371 + $0x9e0] sm:$0xff]
        %v760 = vld [vmem:[%s371 + $0x9e8] sm:$0xff]
        %v761 = vld [vmem:[%s371 + $0x9f0] sm:$0xff]
        %v762 = vld [vmem:[%s371 + $0x9f8] sm:$0xff]
        %v763 = vld [vmem:[%s371 + $0xa00] sm:$0xff]
        %v764 = vld [vmem:[%s371 + $0xa08] sm:$0xff]
        %v765 = vld [vmem:[%s371 + $0xa10] sm:$0xff]
        %v766 = vld [vmem:[%s371 + $0xa18] sm:$0xff]
        %v767 = vld [vmem:[%s371 + $0xa20] sm:$0xff]
        %v768 = vld [vmem:[%s371 + $0xa28] sm:$0xff]
        %v769 = vld [vmem:[%s371 + $0xa30] sm:$0xff]
        %v770 = vld [vmem:[%s371 + $0xa38] sm:$0xff]
        %v771 = vld [vmem:[%s371 + $0xa40] sm:$0xff]
        %v772 = vld [vmem:[%s371 + $0xa48] sm:$0xff]
        %v773 = vld [vmem:[%s371 + $0xa50] sm:$0xff]
        %v774 = vld [vmem:[%s371 + $0xa58] sm:$0xff]
        %v775 = vld [vmem:[%s371 + $0xa60] sm:$0xff]
        %v776 = vld [vmem:[%s371 + $0xa68] sm:$0xff]
        %v777 = vld [vmem:[%s371 + $0xa70] sm:$0xff]
        %v778 = vld [vmem:[%s371 + $0xa78] sm:$0xff]
        %v779 = vld [vmem:[%s371 + $0xa80] sm:$0xff]
        %v780 = vld [vmem:[%s371 + $0xa88] sm:$0xff]
        %v781 = vld [vmem:[%s371 + $0xa90] sm:$0xff]
        %v782 = vld [vmem:[%s371 + $0xa98] sm:$0xff]
        %v783 = vld [vmem:[%s371 + $0xaa0] sm:$0xff]
        %v784 = vld [vmem:[%s371 + $0xaa8] sm:$0xff]
        %v785 = vld [vmem:[%s371 + $0xab0] sm:$0xff]
        %v786 = vld [vmem:[%s371 + $0xab8] sm:$0xff]
        %v787 = vld [vmem:[%s371 + $0xac0] sm:$0xff]
        %v788 = vld [vmem:[%s371 + $0xac8] sm:$0xff]
        %v789 = vld [vmem:[%s371 + $0xad0] sm:$0xff]
        %v790 = vld [vmem:[%s371 + $0xad8] sm:$0xff]
        %v791 = vld [vmem:[%s371 + $0xae0] sm:$0xff]
        %v792 = vld [vmem:[%s371 + $0xae8] sm:$0xff]
        %v793 = vld [vmem:[%s371 + $0xaf0] sm:$0xff]
        %v794 = vld [vmem:[%s371 + $0xaf8] sm:$0xff]
        %v795 = vld [vmem:[%s371 + $0xb00] sm:$0xff]
        %v796 = vld [vmem:[%s371 + $0xb08] sm:$0xff]
        %v797 = vld [vmem:[%s371 + $0xb10] sm:$0xff]
        %v798 = vld [vmem:[%s371 + $0xb18] sm:$0xff]
        %v799 = vld [vmem:[%s371 + $0xb20] sm:$0xff]
        %v800 = vld [vmem:[%s371 + $0xb28] sm:$0xff]
        %v801 = vld [vmem:[%s371 + $0xb30] sm:$0xff]
        %v802 = vld [vmem:[%s371 + $0xb38] sm:$0xff]
        %v803 = vld [vmem:[%s371 + $0xb40] sm:$0xff]
        %v804 = vld [vmem:[%s371 + $0xb48] sm:$0xff]
        %v805 = vld [vmem:[%s371 + $0xb50] sm:$0xff]
        %v806 = vld [vmem:[%s371 + $0xb58] sm:$0xff]
        %v807 = vld [vmem:[%s371 + $0xb60] sm:$0xff]
        %v808 = vld [vmem:[%s371 + $0xb68] sm:$0xff]
        %v809 = vld [vmem:[%s371 + $0xb70] sm:$0xff]
        %v810 = vld [vmem:[%s371 + $0xb78] sm:$0xff]
        %v811 = vld [vmem:[%s371 + $0xb80] sm:$0xff]
        %v812 = vld [vmem:[%s371 + $0xb88] sm:$0xff]
        %v813 = vld [vmem:[%s371 + $0xb90] sm:$0xff]
        %v814 = vld [vmem:[%s371 + $0xb98] sm:$0xff]
        %v815 = vld [vmem:[%s371 + $0xba0] sm:$0xff]
        %v816 = vld [vmem:[%s371 + $0xba8] sm:$0xff]
        %v817 = vld [vmem:[%s371 + $0xbb0] sm:$0xff]
        %v818 = vld [vmem:[%s371 + $0xbb8] sm:$0xff]
        %v819 = vld [vmem:[%s371 + $0xbc0] sm:$0xff]
        %v820 = vld [vmem:[%s371 + $0xbc8] sm:$0xff]
        %v821 = vld [vmem:[%s371 + $0xbd0] sm:$0xff]
        %v822 = vld [vmem:[%s371 + $0xbd8] sm:$0xff]
        %v823 = vld [vmem:[%s371 + $0xbe0] sm:$0xff]
        %v824 = vld [vmem:[%s371 + $0xbe8] sm:$0xff]
        %v825 = vld [vmem:[%s371 + $0xbf0] sm:$0xff]
        %v826 = vld [vmem:[%s371 + $0xbf8] sm:$0xff]
        %v827 = vld [vmem:[%s371 + $0xc00] sm:$0xff]
        %v828 = vld [vmem:[%s371 + $0xc08] sm:$0xff]
        %v829 = vld [vmem:[%s371 + $0xc10] sm:$0xff]
        %v830 = vld [vmem:[%s371 + $0xc18] sm:$0xff]
        %v831 = vld [vmem:[%s371 + $0xc20] sm:$0xff]
        %v832 = vld [vmem:[%s371 + $0xc28] sm:$0xff]
        %v833 = vld [vmem:[%s371 + $0xc30] sm:$0xff]
        %v834 = vld [vmem:[%s371 + $0xc38] sm:$0xff]
        %v835 = vld [vmem:[%s371 + $0xc40] sm:$0xff]
        %v836 = vld [vmem:[%s371 + $0xc48] sm:$0xff]
        %v837 = vld [vmem:[%s371 + $0xc50] sm:$0xff]
        %v838 = vld [vmem:[%s371 + $0xc58] sm:$0xff]
        %v839 = vld [vmem:[%s371 + $0xc60] sm:$0xff]
        %v840 = vld [vmem:[%s371 + $0xc68] sm:$0xff]
        %v841 = vld [vmem:[%s371 + $0xc70] sm:$0xff]
        %v842 = vld [vmem:[%s371 + $0xc78] sm:$0xff]
        %v843 = vld [vmem:[%s371 + $0xc80] sm:$0xff]
        %v844 = vld [vmem:[%s371 + $0xc88] sm:$0xff]
        %v845 = vld [vmem:[%s371 + $0xc90] sm:$0xff]
        %v846 = vld [vmem:[%s371 + $0xc98] sm:$0xff]
        %v847 = vld [vmem:[%s371 + $0xca0] sm:$0xff]
        %v848 = vld [vmem:[%s371 + $0xca8] sm:$0xff]
        %v849 = vld [vmem:[%s371 + $0xcb0] sm:$0xff]
        %v850 = vld [vmem:[%s371 + $0xcb8] sm:$0xff]
        %v851 = vld [vmem:[%s371 + $0xcc0] sm:$0xff]
        %v852 = vld [vmem:[%s371 + $0xcc8] sm:$0xff]
        %v853 = vld [vmem:[%s371 + $0xcd0] sm:$0xff]
        %v854 = vld [vmem:[%s371 + $0xcd8] sm:$0xff]
        %v855 = vld [vmem:[%s371 + $0xce0] sm:$0xff]
        %v856 = vld [vmem:[%s371 + $0xce8] sm:$0xff]
        %v857 = vld [vmem:[%s371 + $0xcf0] sm:$0xff]
        %v858 = vld [vmem:[%s371 + $0xcf8] sm:$0xff]
        %v859 = vld [vmem:[%s371 + $0xd00] sm:$0xff]
        %v860 = vld [vmem:[%s371 + $0xd08] sm:$0xff]
        %v861 = vld [vmem:[%s371 + $0xd10] sm:$0xff]
        %v862 = vld [vmem:[%s371 + $0xd18] sm:$0xff]
        %v863 = vld [vmem:[%s371 + $0xd20] sm:$0xff]
        %v864 = vld [vmem:[%s371 + $0xd28] sm:$0xff]
        %v865 = vld [vmem:[%s371 + $0xd30] sm:$0xff]
        %v866 = vld [vmem:[%s371 + $0xd38] sm:$0xff]
        %v867 = vld [vmem:[%s371 + $0xd40] sm:$0xff]
        %v868 = vld [vmem:[%s371 + $0xd48] sm:$0xff]
        %v869 = vld [vmem:[%s371 + $0xd50] sm:$0xff]
        %v870 = vld [vmem:[%s371 + $0xd58] sm:$0xff]
        %v871 = vld [vmem:[%s371 + $0xd60] sm:$0xff]
        %v872 = vld [vmem:[%s371 + $0xd68] sm:$0xff]
        %v873 = vld [vmem:[%s371 + $0xd70] sm:$0xff]
        %v874 = vld [vmem:[%s371 + $0xd78] sm:$0xff]
        %v875 = vld [vmem:[%s371 + $0xd80] sm:$0xff]
        %v876 = vld [vmem:[%s371 + $0xd88] sm:$0xff]
        %v877 = vld [vmem:[%s371 + $0xd90] sm:$0xff]
        %v878 = vld [vmem:[%s371 + $0xd98] sm:$0xff]
        %v879 = vld [vmem:[%s371 + $0xda0] sm:$0xff]
        %v880 = vld [vmem:[%s371 + $0xda8] sm:$0xff]
        %v881 = vld [vmem:[%s371 + $0xdb0] sm:$0xff]
        %v882 = vld [vmem:[%s371 + $0xdb8] sm:$0xff]
        %v883 = vld [vmem:[%s371 + $0xdc0] sm:$0xff]
        %v884 = vld [vmem:[%s371 + $0xdc8] sm:$0xff]
        %v885 = vld [vmem:[%s371 + $0xdd0] sm:$0xff]
        %v886 = vld [vmem:[%s371 + $0xdd8] sm:$0xff]
        %v887 = vld [vmem:[%s371 + $0xde0] sm:$0xff]
        %v888 = vld [vmem:[%s371 + $0xde8] sm:$0xff]
        %v889 = vld [vmem:[%s371 + $0xdf0] sm:$0xff]
        %v890 = vld [vmem:[%s371 + $0xdf8] sm:$0xff]
        %v891 = vld [vmem:[%s371 + $0xe00] sm:$0xff]
        %v892 = vld [vmem:[%s371 + $0xe08] sm:$0xff]
        %v893 = vld [vmem:[%s371 + $0xe10] sm:$0xff]
        %v894 = vld [vmem:[%s371 + $0xe18] sm:$0xff]
        %v895 = vld [vmem:[%s371 + $0xe20] sm:$0xff]
        %v896 = vld [vmem:[%s371 + $0xe28] sm:$0xff]
        %v897 = vld [vmem:[%s371 + $0xe30] sm:$0xff]
        %v898 = vld [vmem:[%s371 + $0xe38] sm:$0xff]
        %v899 = vld [vmem:[%s371 + $0xe40] sm:$0xff]
        %v900 = vld [vmem:[%s371 + $0xe48] sm:$0xff]
        %v901 = vld [vmem:[%s371 + $0xe50] sm:$0xff]
        %v902 = vld [vmem:[%s371 + $0xe58] sm:$0xff]
        %v903 = vld [vmem:[%s371 + $0xe60] sm:$0xff]
        %v904 = vld [vmem:[%s371 + $0xe68] sm:$0xff]
        %v905 = vld [vmem:[%s371 + $0xe70] sm:$0xff]
        %v906 = vld [vmem:[%s371 + $0xe78] sm:$0xff]
        %v907 = vld [vmem:[%s371 + $0xe80] sm:$0xff]
        %v908 = vld [vmem:[%s371 + $0xe88] sm:$0xff]
        %v909 = vld [vmem:[%s371 + $0xe90] sm:$0xff]
        %v910 = vld [vmem:[%s371 + $0xe98] sm:$0xff]
        %v911 = vld [vmem:[%s371 + $0xea0] sm:$0xff]
        %v912 = vld [vmem:[%s371 + $0xea8] sm:$0xff]
        %v913 = vld [vmem:[%s371 + $0xeb0] sm:$0xff]
        %v914 = vld [vmem:[%s371 + $0xeb8] sm:$0xff]
        %v915 = vld [vmem:[%s371 + $0xec0] sm:$0xff]
        %v916 = vld [vmem:[%s371 + $0xec8] sm:$0xff]
        %v917 = vld [vmem:[%s371 + $0xed0] sm:$0xff]
        %v918 = vld [vmem:[%s371 + $0xed8] sm:$0xff]
        %v919 = vld [vmem:[%s371 + $0xee0] sm:$0xff]
        %v920 = vld [vmem:[%s371 + $0xee8] sm:$0xff]
        %v921 = vld [vmem:[%s371 + $0xef0] sm:$0xff]
        %v922 = vld [vmem:[%s371 + $0xef8] sm:$0xff]
        %v923 = vld [vmem:[%s371 + $0xf00] sm:$0xff]
        %v924 = vld [vmem:[%s371 + $0xf08] sm:$0xff]
        %v925 = vld [vmem:[%s371 + $0xf10] sm:$0xff]
        %v926 = vld [vmem:[%s371 + $0xf18] sm:$0xff]
        %v927 = vld [vmem:[%s371 + $0xf20] sm:$0xff]
        %v928 = vld [vmem:[%s371 + $0xf28] sm:$0xff]
        %v929 = vld [vmem:[%s371 + $0xf30] sm:$0xff]
        %v930 = vld [vmem:[%s371 + $0xf38] sm:$0xff]
        %v931 = vld [vmem:[%s371 + $0xf40] sm:$0xff]
        %v932 = vld [vmem:[%s371 + $0xf48] sm:$0xff]
        %v933 = vld [vmem:[%s371 + $0xf50] sm:$0xff]
        %v934 = vld [vmem:[%s371 + $0xf58] sm:$0xff]
        %v935 = vld [vmem:[%s371 + $0xf60] sm:$0xff]
        %v936 = vld [vmem:[%s371 + $0xf68] sm:$0xff]
        %v937 = vld [vmem:[%s371 + $0xf70] sm:$0xff]
        %v938 = vld [vmem:[%s371 + $0xf78] sm:$0xff]
        %v939 = vld [vmem:[%s371 + $0xf80] sm:$0xff]
        %v940 = vld [vmem:[%s371 + $0xf88] sm:$0xff]
        %v941 = vld [vmem:[%s371 + $0xf90] sm:$0xff]
        %v942 = vld [vmem:[%s371 + $0xf98] sm:$0xff]
        %v943 = vld [vmem:[%s371 + $0xfa0] sm:$0xff]
        %v944 = vld [vmem:[%s371 + $0xfa8] sm:$0xff]
        %v945 = vld [vmem:[%s371 + $0xfb0] sm:$0xff]
        %v946 = vld [vmem:[%s371 + $0xfb8] sm:$0xff]
        %v947 = vld [vmem:[%s371 + $0xfc0] sm:$0xff]
        %v948 = vld [vmem:[%s371 + $0xfc8] sm:$0xff]
        %v949 = vld [vmem:[%s371 + $0xfd0] sm:$0xff]
        %v950 = vld [vmem:[%s371 + $0xfd8] sm:$0xff]
        %v951 = vld [vmem:[%s371 + $0xfe0] sm:$0xff]
        %v952 = vld [vmem:[%s371 + $0xfe8] sm:$0xff]
        %v953 = vld [vmem:[%s371 + $0xff0] sm:$0xff]
        %v954 = vld [vmem:[%s371 + $0xff8] sm:$0xff]
        %v961 = vunpack.c.l.b16 %v434
        %v962 = vunpack.c.h.b16 %v434
        %v963 = vunpack.c.l.b16 %v435
        %v964 = vunpack.c.h.b16 %v435
        %v965 = vunpack.c.l.b16 %v436
        %v966 = vunpack.c.h.b16 %v436
        %v967 = vunpack.c.l.b16 %v437
        %v968 = vunpack.c.h.b16 %v437
        %v969 = vunpack.c.l.b16 %v438
        %v970 = vunpack.c.h.b16 %v438
        %v971 = vunpack.c.l.b16 %v439
        %v972 = vunpack.c.h.b16 %v439
        %v973 = vpack.c.b16 %v965, %v961
        %v974 = vpack.c.b16 %v966, %v962
        %v975 = vpack.c.b16 %v967, %v963
        %v976 = vpack.c.b16 %v968, %v964
        %v977 = vpack.c.b16 %v969, %v969
        %v978 = vpack.c.b16 %v970, %v970
        %v979 = vpack.c.b16 %v971, %v971
        %v980 = vpack.c.b16 %v972, %v972
        %v1501 = vunpack.c.l.b16 %v443
        %v1502 = vunpack.c.h.b16 %v443
        %v1503 = vunpack.c.l.b16 %v444
        %v1504 = vunpack.c.h.b16 %v444
        %v1505 = vunpack.c.l.b16 %v445
        %v1506 = vunpack.c.h.b16 %v445
        %v1507 = vunpack.c.l.b16 %v446
        %v1508 = vunpack.c.h.b16 %v446
        %v1509 = vunpack.c.l.b16 %v447
        %v1510 = vunpack.c.h.b16 %v447
        %v1511 = vunpack.c.l.b16 %v448
        %v1512 = vunpack.c.h.b16 %v448
        %v1513 = vunpack.c.l.b16 %v449
        %v1514 = vunpack.c.h.b16 %v449
        %v1515 = vunpack.c.l.b16 %v450
        %v1516 = vunpack.c.h.b16 %v450
        %v1517 = vunpack.c.l.b16 %v451
        %v1518 = vunpack.c.h.b16 %v451
        %v1519 = vunpack.c.l.b16 %v452
        %v1520 = vunpack.c.h.b16 %v452
        %v1521 = vunpack.c.l.b16 %v453
        %v1522 = vunpack.c.h.b16 %v453
        %v1523 = vunpack.c.l.b16 %v454
        %v1524 = vunpack.c.h.b16 %v454
        %v1525 = vunpack.c.l.b16 %v455
        %v1526 = vunpack.c.h.b16 %v455
        %v1527 = vunpack.c.l.b16 %v456
        %v1528 = vunpack.c.h.b16 %v456
        %v1529 = vunpack.c.l.b16 %v457
        %v1530 = vunpack.c.h.b16 %v457
        %v1531 = vunpack.c.l.b16 %v458
        %v1532 = vunpack.c.h.b16 %v458
        %v1533 = vunpack.c.l.b16 %v459
        %v1534 = vunpack.c.h.b16 %v459
        %v1535 = vunpack.c.l.b16 %v460
        %v1536 = vunpack.c.h.b16 %v460
        %v1537 = vunpack.c.l.b16 %v461
        %v1538 = vunpack.c.h.b16 %v461
        %v1539 = vunpack.c.l.b16 %v462
        %v1540 = vunpack.c.h.b16 %v462
        %v1541 = vunpack.c.l.b16 %v463
        %v1542 = vunpack.c.h.b16 %v463
        %v1543 = vunpack.c.l.b16 %v464
        %v1544 = vunpack.c.h.b16 %v464
        %v1545 = vunpack.c.l.b16 %v465
        %v1546 = vunpack.c.h.b16 %v465
        %v1547 = vunpack.c.l.b16 %v466
        %v1548 = vunpack.c.h.b16 %v466
        %v1549 = vunpack.c.l.b16 %v467
        %v1550 = vunpack.c.h.b16 %v467
        %v1551 = vunpack.c.l.b16 %v468
        %v1552 = vunpack.c.h.b16 %v468
        %v1553 = vunpack.c.l.b16 %v469
        %v1554 = vunpack.c.h.b16 %v469
        %v1555 = vunpack.c.l.b16 %v470
        %v1556 = vunpack.c.h.b16 %v470
        %v1557 = vunpack.c.l.b16 %v471
        %v1558 = vunpack.c.h.b16 %v471
        %v1559 = vunpack.c.l.b16 %v472
        %v1560 = vunpack.c.h.b16 %v472
        %v1561 = vunpack.c.l.b16 %v473
        %v1562 = vunpack.c.h.b16 %v473
        %v1563 = vunpack.c.l.b16 %v474
        %v1564 = vunpack.c.h.b16 %v474
        %v1565 = vunpack.c.l.b16 %v475
        %v1566 = vunpack.c.h.b16 %v475
        %v1567 = vunpack.c.l.b16 %v476
        %v1568 = vunpack.c.h.b16 %v476
        %v1569 = vunpack.c.l.b16 %v477
        %v1570 = vunpack.c.h.b16 %v477
        %v1571 = vunpack.c.l.b16 %v478
        %v1572 = vunpack.c.h.b16 %v478
        %v1573 = vunpack.c.l.b16 %v479
        %v1574 = vunpack.c.h.b16 %v479
        %v1575 = vunpack.c.l.b16 %v480
        %v1576 = vunpack.c.h.b16 %v480
        %v1577 = vunpack.c.l.b16 %v481
        %v1578 = vunpack.c.h.b16 %v481
        %v1579 = vunpack.c.l.b16 %v482
        %v1580 = vunpack.c.h.b16 %v482
        %v1581 = vunpack.c.l.b16 %v483
        %v1582 = vunpack.c.h.b16 %v483
        %v1583 = vunpack.c.l.b16 %v484
        %v1584 = vunpack.c.h.b16 %v484
        %v1585 = vunpack.c.l.b16 %v485
        %v1586 = vunpack.c.h.b16 %v485
        %v1587 = vunpack.c.l.b16 %v486
        %v1588 = vunpack.c.h.b16 %v486
        %v1589 = vunpack.c.l.b16 %v487
        %v1590 = vunpack.c.h.b16 %v487
        %v1591 = vunpack.c.l.b16 %v488
        %v1592 = vunpack.c.h.b16 %v488
        %v1593 = vunpack.c.l.b16 %v489
        %v1594 = vunpack.c.h.b16 %v489
        %v1595 = vunpack.c.l.b16 %v490
        %v1596 = vunpack.c.h.b16 %v490
        %v1597 = vunpack.c.l.b16 %v491
        %v1598 = vunpack.c.h.b16 %v491
        %v1599 = vunpack.c.l.b16 %v492
        %v1600 = vunpack.c.h.b16 %v492
        %v1601 = vunpack.c.l.b16 %v493
        %v1602 = vunpack.c.h.b16 %v493
        %v1603 = vunpack.c.l.b16 %v494
        %v1604 = vunpack.c.h.b16 %v494
        %v1605 = vunpack.c.l.b16 %v495
        %v1606 = vunpack.c.h.b16 %v495
        %v1607 = vunpack.c.l.b16 %v496
        %v1608 = vunpack.c.h.b16 %v496
        %v1609 = vunpack.c.l.b16 %v497
        %v1610 = vunpack.c.h.b16 %v497
        %v1611 = vunpack.c.l.b16 %v498
        %v1612 = vunpack.c.h.b16 %v498
        %v1613 = vunpack.c.l.b16 %v499
        %v1614 = vunpack.c.h.b16 %v499
        %v1615 = vunpack.c.l.b16 %v500
        %v1616 = vunpack.c.h.b16 %v500
        %v1617 = vunpack.c.l.b16 %v501
        %v1618 = vunpack.c.h.b16 %v501
        %v1619 = vunpack.c.l.b16 %v502
        %v1620 = vunpack.c.h.b16 %v502
        %v1621 = vunpack.c.l.b16 %v503
        %v1622 = vunpack.c.h.b16 %v503
        %v1623 = vunpack.c.l.b16 %v504
        %v1624 = vunpack.c.h.b16 %v504
        %v1625 = vunpack.c.l.b16 %v505
        %v1626 = vunpack.c.h.b16 %v505
        %v1627 = vunpack.c.l.b16 %v506
        %v1628 = vunpack.c.h.b16 %v506
        %v1629 = vunpack.c.l.b16 %v507
        %v1630 = vunpack.c.h.b16 %v507
        %v1631 = vunpack.c.l.b16 %v508
        %v1632 = vunpack.c.h.b16 %v508
        %v1633 = vunpack.c.l.b16 %v509
        %v1634 = vunpack.c.h.b16 %v509
        %v1635 = vunpack.c.l.b16 %v510
        %v1636 = vunpack.c.h.b16 %v510
        %v1637 = vunpack.c.l.b16 %v511
        %v1638 = vunpack.c.h.b16 %v511
        %v1639 = vunpack.c.l.b16 %v512
        %v1640 = vunpack.c.h.b16 %v512
        %v1641 = vunpack.c.l.b16 %v513
        %v1642 = vunpack.c.h.b16 %v513
        %v1643 = vunpack.c.l.b16 %v514
        %v1644 = vunpack.c.h.b16 %v514
        %v1645 = vunpack.c.l.b16 %v515
        %v1646 = vunpack.c.h.b16 %v515
        %v1647 = vunpack.c.l.b16 %v516
        %v1648 = vunpack.c.h.b16 %v516
        %v1649 = vunpack.c.l.b16 %v517
        %v1650 = vunpack.c.h.b16 %v517
        %v1651 = vunpack.c.l.b16 %v518
        %v1652 = vunpack.c.h.b16 %v518
        %v1653 = vunpack.c.l.b16 %v519
        %v1654 = vunpack.c.h.b16 %v519
        %v1655 = vunpack.c.l.b16 %v520
        %v1656 = vunpack.c.h.b16 %v520
        %v1657 = vunpack.c.l.b16 %v521
        %v1658 = vunpack.c.h.b16 %v521
        %v1659 = vunpack.c.l.b16 %v522
        %v1660 = vunpack.c.h.b16 %v522
        %v1661 = vunpack.c.l.b16 %v523
        %v1662 = vunpack.c.h.b16 %v523
        %v1663 = vunpack.c.l.b16 %v524
        %v1664 = vunpack.c.h.b16 %v524
        %v1665 = vunpack.c.l.b16 %v525
        %v1666 = vunpack.c.h.b16 %v525
        %v1667 = vunpack.c.l.b16 %v526
        %v1668 = vunpack.c.h.b16 %v526
        %v1669 = vunpack.c.l.b16 %v527
        %v1670 = vunpack.c.h.b16 %v527
        %v1671 = vunpack.c.l.b16 %v528
        %v1672 = vunpack.c.h.b16 %v528
        %v1673 = vunpack.c.l.b16 %v529
        %v1674 = vunpack.c.h.b16 %v529
        %v1675 = vunpack.c.l.b16 %v530
        %v1676 = vunpack.c.h.b16 %v530
        %v1677 = vunpack.c.l.b16 %v531
        %v1678 = vunpack.c.h.b16 %v531
        %v1679 = vunpack.c.l.b16 %v532
        %v1680 = vunpack.c.h.b16 %v532
        %v1681 = vunpack.c.l.b16 %v533
        %v1682 = vunpack.c.h.b16 %v533
        %v1683 = vunpack.c.l.b16 %v534
        %v1684 = vunpack.c.h.b16 %v534
        %v1685 = vunpack.c.l.b16 %v535
        %v1686 = vunpack.c.h.b16 %v535
        %v1687 = vunpack.c.l.b16 %v536
        %v1688 = vunpack.c.h.b16 %v536
        %v1689 = vunpack.c.l.b16 %v537
        %v1690 = vunpack.c.h.b16 %v537
        %v1691 = vunpack.c.l.b16 %v538
        %v1692 = vunpack.c.h.b16 %v538
        %v1693 = vunpack.c.l.b16 %v539
        %v1694 = vunpack.c.h.b16 %v539
        %v1695 = vunpack.c.l.b16 %v540
        %v1696 = vunpack.c.h.b16 %v540
        %v1697 = vunpack.c.l.b16 %v541
        %v1698 = vunpack.c.h.b16 %v541
        %v1699 = vunpack.c.l.b16 %v542
        %v1700 = vunpack.c.h.b16 %v542
        %v1701 = vunpack.c.l.b16 %v543
        %v1702 = vunpack.c.h.b16 %v543
        %v1703 = vunpack.c.l.b16 %v544
        %v1704 = vunpack.c.h.b16 %v544
        %v1705 = vunpack.c.l.b16 %v545
        %v1706 = vunpack.c.h.b16 %v545
        %v1707 = vunpack.c.l.b16 %v546
        %v1708 = vunpack.c.h.b16 %v546
        %v1709 = vunpack.c.l.b16 %v547
        %v1710 = vunpack.c.h.b16 %v547
        %v1711 = vunpack.c.l.b16 %v548
        %v1712 = vunpack.c.h.b16 %v548
        %v1713 = vunpack.c.l.b16 %v549
        %v1714 = vunpack.c.h.b16 %v549
        %v1715 = vunpack.c.l.b16 %v550
        %v1716 = vunpack.c.h.b16 %v550
        %v1717 = vunpack.c.l.b16 %v551
        %v1718 = vunpack.c.h.b16 %v551
        %v1719 = vunpack.c.l.b16 %v552
        %v1720 = vunpack.c.h.b16 %v552
        %v1721 = vunpack.c.l.b16 %v553
        %v1722 = vunpack.c.h.b16 %v553
        %v1723 = vunpack.c.l.b16 %v554
        %v1724 = vunpack.c.h.b16 %v554
        %v1725 = vunpack.c.l.b16 %v555
        %v1726 = vunpack.c.h.b16 %v555
        %v1727 = vunpack.c.l.b16 %v556
        %v1728 = vunpack.c.h.b16 %v556
        %v1729 = vunpack.c.l.b16 %v557
        %v1730 = vunpack.c.h.b16 %v557
        %v1731 = vunpack.c.l.b16 %v558
        %v1732 = vunpack.c.h.b16 %v558
        %v1733 = vunpack.c.l.b16 %v559
        %v1734 = vunpack.c.h.b16 %v559
        %v1735 = vunpack.c.l.b16 %v560
        %v1736 = vunpack.c.h.b16 %v560
        %v1737 = vunpack.c.l.b16 %v561
        %v1738 = vunpack.c.h.b16 %v561
        %v1739 = vunpack.c.l.b16 %v562
        %v1740 = vunpack.c.h.b16 %v562
        %v1741 = vunpack.c.l.b16 %v563
        %v1742 = vunpack.c.h.b16 %v563
        %v1743 = vunpack.c.l.b16 %v564
        %v1744 = vunpack.c.h.b16 %v564
        %v1745 = vunpack.c.l.b16 %v565
        %v1746 = vunpack.c.h.b16 %v565
        %v1747 = vunpack.c.l.b16 %v566
        %v1748 = vunpack.c.h.b16 %v566
        %v1749 = vunpack.c.l.b16 %v567
        %v1750 = vunpack.c.h.b16 %v567
        %v1751 = vunpack.c.l.b16 %v568
        %v1752 = vunpack.c.h.b16 %v568
        %v1753 = vunpack.c.l.b16 %v569
        %v1754 = vunpack.c.h.b16 %v569
        %v1755 = vunpack.c.l.b16 %v570
        %v1756 = vunpack.c.h.b16 %v570
        %v1757 = vunpack.c.l.b16 %v571
        %v1758 = vunpack.c.h.b16 %v571
        %v1759 = vunpack.c.l.b16 %v572
        %v1760 = vunpack.c.h.b16 %v572
        %v1761 = vunpack.c.l.b16 %v573
        %v1762 = vunpack.c.h.b16 %v573
        %v1763 = vunpack.c.l.b16 %v574
        %v1764 = vunpack.c.h.b16 %v574
        %v1765 = vunpack.c.l.b16 %v575
        %v1766 = vunpack.c.h.b16 %v575
        %v1767 = vunpack.c.l.b16 %v576
        %v1768 = vunpack.c.h.b16 %v576
        %v1769 = vunpack.c.l.b16 %v577
        %v1770 = vunpack.c.h.b16 %v577
        %v1771 = vunpack.c.l.b16 %v578
        %v1772 = vunpack.c.h.b16 %v578
        %v1773 = vunpack.c.l.b16 %v579
        %v1774 = vunpack.c.h.b16 %v579
        %v1775 = vunpack.c.l.b16 %v580
        %v1776 = vunpack.c.h.b16 %v580
        %v1777 = vunpack.c.l.b16 %v581
        %v1778 = vunpack.c.h.b16 %v581
        %v1779 = vunpack.c.l.b16 %v582
        %v1780 = vunpack.c.h.b16 %v582
        %v1781 = vunpack.c.l.b16 %v583
        %v1782 = vunpack.c.h.b16 %v583
        %v1783 = vunpack.c.l.b16 %v584
        %v1784 = vunpack.c.h.b16 %v584
        %v1785 = vunpack.c.l.b16 %v585
        %v1786 = vunpack.c.h.b16 %v585
        %v1787 = vunpack.c.l.b16 %v586
        %v1788 = vunpack.c.h.b16 %v586
        %v1789 = vunpack.c.l.b16 %v587
        %v1790 = vunpack.c.h.b16 %v587
        %v1791 = vunpack.c.l.b16 %v588
        %v1792 = vunpack.c.h.b16 %v588
        %v1793 = vunpack.c.l.b16 %v589
        %v1794 = vunpack.c.h.b16 %v589
        %v1795 = vunpack.c.l.b16 %v590
        %v1796 = vunpack.c.h.b16 %v590
        %v1797 = vunpack.c.l.b16 %v591
        %v1798 = vunpack.c.h.b16 %v591
        %v1799 = vunpack.c.l.b16 %v592
        %v1800 = vunpack.c.h.b16 %v592
        %v1801 = vunpack.c.l.b16 %v593
        %v1802 = vunpack.c.h.b16 %v593
        %v1803 = vunpack.c.l.b16 %v594
        %v1804 = vunpack.c.h.b16 %v594
        %v1805 = vunpack.c.l.b16 %v595
        %v1806 = vunpack.c.h.b16 %v595
        %v1807 = vunpack.c.l.b16 %v596
        %v1808 = vunpack.c.h.b16 %v596
        %v1809 = vunpack.c.l.b16 %v597
        %v1810 = vunpack.c.h.b16 %v597
        %v1811 = vunpack.c.l.b16 %v598
        %v1812 = vunpack.c.h.b16 %v598
        %v1813 = vunpack.c.l.b16 %v599
        %v1814 = vunpack.c.h.b16 %v599
        %v1815 = vunpack.c.l.b16 %v600
        %v1816 = vunpack.c.h.b16 %v600
        %v1817 = vunpack.c.l.b16 %v601
        %v1818 = vunpack.c.h.b16 %v601
        %v1819 = vunpack.c.l.b16 %v602
        %v1820 = vunpack.c.h.b16 %v602
        %v1821 = vunpack.c.l.b16 %v603
        %v1822 = vunpack.c.h.b16 %v603
        %v1823 = vunpack.c.l.b16 %v604
        %v1824 = vunpack.c.h.b16 %v604
        %v1825 = vunpack.c.l.b16 %v605
        %v1826 = vunpack.c.h.b16 %v605
        %v1827 = vunpack.c.l.b16 %v606
        %v1828 = vunpack.c.h.b16 %v606
        %v1829 = vunpack.c.l.b16 %v607
        %v1830 = vunpack.c.h.b16 %v607
        %v1831 = vunpack.c.l.b16 %v608
        %v1832 = vunpack.c.h.b16 %v608
        %v1833 = vunpack.c.l.b16 %v609
        %v1834 = vunpack.c.h.b16 %v609
        %v1835 = vunpack.c.l.b16 %v610
        %v1836 = vunpack.c.h.b16 %v610
        %v1837 = vunpack.c.l.b16 %v611
        %v1838 = vunpack.c.h.b16 %v611
        %v1839 = vunpack.c.l.b16 %v612
        %v1840 = vunpack.c.h.b16 %v612
        %v1841 = vunpack.c.l.b16 %v613
        %v1842 = vunpack.c.h.b16 %v613
        %v1843 = vunpack.c.l.b16 %v614
        %v1844 = vunpack.c.h.b16 %v614
        %v1845 = vunpack.c.l.b16 %v615
        %v1846 = vunpack.c.h.b16 %v615
        %v1847 = vunpack.c.l.b16 %v616
        %v1848 = vunpack.c.h.b16 %v616
        %v1849 = vunpack.c.l.b16 %v617
        %v1850 = vunpack.c.h.b16 %v617
        %v1851 = vunpack.c.l.b16 %v618
        %v1852 = vunpack.c.h.b16 %v618
        %v1853 = vunpack.c.l.b16 %v619
        %v1854 = vunpack.c.h.b16 %v619
        %v1855 = vunpack.c.l.b16 %v620
        %v1856 = vunpack.c.h.b16 %v620
        %v1857 = vunpack.c.l.b16 %v621
        %v1858 = vunpack.c.h.b16 %v621
        %v1859 = vunpack.c.l.b16 %v622
        %v1860 = vunpack.c.h.b16 %v622
        %v1861 = vunpack.c.l.b16 %v623
        %v1862 = vunpack.c.h.b16 %v623
        %v1863 = vunpack.c.l.b16 %v624
        %v1864 = vunpack.c.h.b16 %v624
        %v1865 = vunpack.c.l.b16 %v625
        %v1866 = vunpack.c.h.b16 %v625
        %v1867 = vunpack.c.l.b16 %v626
        %v1868 = vunpack.c.h.b16 %v626
        %v1869 = vunpack.c.l.b16 %v627
        %v1870 = vunpack.c.h.b16 %v627
        %v1871 = vunpack.c.l.b16 %v628
        %v1872 = vunpack.c.h.b16 %v628
        %v1873 = vunpack.c.l.b16 %v629
        %v1874 = vunpack.c.h.b16 %v629
        %v1875 = vunpack.c.l.b16 %v630
        %v1876 = vunpack.c.h.b16 %v630
        %v1877 = vunpack.c.l.b16 %v631
        %v1878 = vunpack.c.h.b16 %v631
        %v1879 = vunpack.c.l.b16 %v632
        %v1880 = vunpack.c.h.b16 %v632
        %v1881 = vunpack.c.l.b16 %v633
        %v1882 = vunpack.c.h.b16 %v633
        %v1883 = vunpack.c.l.b16 %v634
        %v1884 = vunpack.c.h.b16 %v634
        %v1885 = vunpack.c.l.b16 %v635
        %v1886 = vunpack.c.h.b16 %v635
        %v1887 = vunpack.c.l.b16 %v636
        %v1888 = vunpack.c.h.b16 %v636
        %v1889 = vunpack.c.l.b16 %v637
        %v1890 = vunpack.c.h.b16 %v637
        %v1891 = vunpack.c.l.b16 %v638
        %v1892 = vunpack.c.h.b16 %v638
        %v1893 = vunpack.c.l.b16 %v639
        %v1894 = vunpack.c.h.b16 %v639
        %v1895 = vunpack.c.l.b16 %v640
        %v1896 = vunpack.c.h.b16 %v640
        %v1897 = vunpack.c.l.b16 %v641
        %v1898 = vunpack.c.h.b16 %v641
        %v1899 = vunpack.c.l.b16 %v642
        %v1900 = vunpack.c.h.b16 %v642
        %v1901 = vunpack.c.l.b16 %v643
        %v1902 = vunpack.c.h.b16 %v643
        %v1903 = vunpack.c.l.b16 %v644
        %v1904 = vunpack.c.h.b16 %v644
        %v1905 = vunpack.c.l.b16 %v645
        %v1906 = vunpack.c.h.b16 %v645
        %v1907 = vunpack.c.l.b16 %v646
        %v1908 = vunpack.c.h.b16 %v646
        %v1909 = vunpack.c.l.b16 %v647
        %v1910 = vunpack.c.h.b16 %v647
        %v1911 = vunpack.c.l.b16 %v648
        %v1912 = vunpack.c.h.b16 %v648
        %v1913 = vunpack.c.l.b16 %v649
        %v1914 = vunpack.c.h.b16 %v649
        %v1915 = vunpack.c.l.b16 %v650
        %v1916 = vunpack.c.h.b16 %v650
        %v1917 = vunpack.c.l.b16 %v651
        %v1918 = vunpack.c.h.b16 %v651
        %v1919 = vunpack.c.l.b16 %v652
        %v1920 = vunpack.c.h.b16 %v652
        %v1921 = vunpack.c.l.b16 %v653
        %v1922 = vunpack.c.h.b16 %v653
        %v1923 = vunpack.c.l.b16 %v654
        %v1924 = vunpack.c.h.b16 %v654
        %v1925 = vunpack.c.l.b16 %v655
        %v1926 = vunpack.c.h.b16 %v655
        %v1927 = vunpack.c.l.b16 %v656
        %v1928 = vunpack.c.h.b16 %v656
        %v1929 = vunpack.c.l.b16 %v657
        %v1930 = vunpack.c.h.b16 %v657
        %v1931 = vunpack.c.l.b16 %v658
        %v1932 = vunpack.c.h.b16 %v658
        %v1933 = vunpack.c.l.b16 %v659
        %v1934 = vunpack.c.h.b16 %v659
        %v1935 = vunpack.c.l.b16 %v660
        %v1936 = vunpack.c.h.b16 %v660
        %v1937 = vunpack.c.l.b16 %v661
        %v1938 = vunpack.c.h.b16 %v661
        %v1939 = vunpack.c.l.b16 %v662
        %v1940 = vunpack.c.h.b16 %v662
        %v1941 = vunpack.c.l.b16 %v663
        %v1942 = vunpack.c.h.b16 %v663
        %v1943 = vunpack.c.l.b16 %v664
        %v1944 = vunpack.c.h.b16 %v664
        %v1945 = vunpack.c.l.b16 %v665
        %v1946 = vunpack.c.h.b16 %v665
        %v1947 = vunpack.c.l.b16 %v666
        %v1948 = vunpack.c.h.b16 %v666
        %v1949 = vunpack.c.l.b16 %v667
        %v1950 = vunpack.c.h.b16 %v667
        %v1951 = vunpack.c.l.b16 %v668
        %v1952 = vunpack.c.h.b16 %v668
        %v1953 = vunpack.c.l.b16 %v669
        %v1954 = vunpack.c.h.b16 %v669
        %v1955 = vunpack.c.l.b16 %v670
        %v1956 = vunpack.c.h.b16 %v670
        %v1957 = vunpack.c.l.b16 %v671
        %v1958 = vunpack.c.h.b16 %v671
        %v1959 = vunpack.c.l.b16 %v672
        %v1960 = vunpack.c.h.b16 %v672
        %v1961 = vunpack.c.l.b16 %v673
        %v1962 = vunpack.c.h.b16 %v673
        %v1963 = vunpack.c.l.b16 %v674
        %v1964 = vunpack.c.h.b16 %v674
        %v1965 = vunpack.c.l.b16 %v675
        %v1966 = vunpack.c.h.b16 %v675
        %v1967 = vunpack.c.l.b16 %v676
        %v1968 = vunpack.c.h.b16 %v676
        %v1969 = vunpack.c.l.b16 %v677
        %v1970 = vunpack.c.h.b16 %v677
        %v1971 = vunpack.c.l.b16 %v678
        %v1972 = vunpack.c.h.b16 %v678
        %v1973 = vunpack.c.l.b16 %v679
        %v1974 = vunpack.c.h.b16 %v679
        %v1975 = vunpack.c.l.b16 %v680
        %v1976 = vunpack.c.h.b16 %v680
        %v1977 = vunpack.c.l.b16 %v681
        %v1978 = vunpack.c.h.b16 %v681
        %v1979 = vunpack.c.l.b16 %v682
        %v1980 = vunpack.c.h.b16 %v682
        %v1981 = vunpack.c.l.b16 %v683
        %v1982 = vunpack.c.h.b16 %v683
        %v1983 = vunpack.c.l.b16 %v684
        %v1984 = vunpack.c.h.b16 %v684
        %v1985 = vunpack.c.l.b16 %v685
        %v1986 = vunpack.c.h.b16 %v685
        %v1987 = vunpack.c.l.b16 %v686
        %v1988 = vunpack.c.h.b16 %v686
        %v1989 = vunpack.c.l.b16 %v687
        %v1990 = vunpack.c.h.b16 %v687
        %v1991 = vunpack.c.l.b16 %v688
        %v1992 = vunpack.c.h.b16 %v688
        %v1993 = vunpack.c.l.b16 %v689
        %v1994 = vunpack.c.h.b16 %v689
        %v1995 = vunpack.c.l.b16 %v690
        %v1996 = vunpack.c.h.b16 %v690
        %v1997 = vunpack.c.l.b16 %v691
        %v1998 = vunpack.c.h.b16 %v691
        %v1999 = vunpack.c.l.b16 %v692
        %v2000 = vunpack.c.h.b16 %v692
        %v2001 = vunpack.c.l.b16 %v693
        %v2002 = vunpack.c.h.b16 %v693
        %v2003 = vunpack.c.l.b16 %v694
        %v2004 = vunpack.c.h.b16 %v694
        %v2005 = vunpack.c.l.b16 %v695
        %v2006 = vunpack.c.h.b16 %v695
        %v2007 = vunpack.c.l.b16 %v696
        %v2008 = vunpack.c.h.b16 %v696
        %v2009 = vunpack.c.l.b16 %v697
        %v2010 = vunpack.c.h.b16 %v697
        %v2011 = vunpack.c.l.b16 %v698
        %v2012 = vunpack.c.h.b16 %v698
        %v2013 = vunpack.c.l.b16 %v699
        %v2014 = vunpack.c.h.b16 %v699
        %v2015 = vunpack.c.l.b16 %v700
        %v2016 = vunpack.c.h.b16 %v700
        %v2017 = vunpack.c.l.b16 %v701
        %v2018 = vunpack.c.h.b16 %v701
        %v2019 = vunpack.c.l.b16 %v702
        %v2020 = vunpack.c.h.b16 %v702
        %v2021 = vunpack.c.l.b16 %v703
        %v2022 = vunpack.c.h.b16 %v703
        %v2023 = vunpack.c.l.b16 %v704
        %v2024 = vunpack.c.h.b16 %v704
        %v2025 = vunpack.c.l.b16 %v705
        %v2026 = vunpack.c.h.b16 %v705
        %v2027 = vunpack.c.l.b16 %v706
        %v2028 = vunpack.c.h.b16 %v706
        %v2029 = vunpack.c.l.b16 %v707
        %v2030 = vunpack.c.h.b16 %v707
        %v2031 = vunpack.c.l.b16 %v708
        %v2032 = vunpack.c.h.b16 %v708
        %v2033 = vunpack.c.l.b16 %v709
        %v2034 = vunpack.c.h.b16 %v709
        %v2035 = vunpack.c.l.b16 %v710
        %v2036 = vunpack.c.h.b16 %v710
        %v2037 = vunpack.c.l.b16 %v711
        %v2038 = vunpack.c.h.b16 %v711
        %v2039 = vunpack.c.l.b16 %v712
        %v2040 = vunpack.c.h.b16 %v712
        %v2041 = vunpack.c.l.b16 %v713
        %v2042 = vunpack.c.h.b16 %v713
        %v2043 = vunpack.c.l.b16 %v714
        %v2044 = vunpack.c.h.b16 %v714
        %v2045 = vunpack.c.l.b16 %v715
        %v2046 = vunpack.c.h.b16 %v715
        %v2047 = vunpack.c.l.b16 %v716
        %v2048 = vunpack.c.h.b16 %v716
        %v2049 = vunpack.c.l.b16 %v717
        %v2050 = vunpack.c.h.b16 %v717
        %v2051 = vunpack.c.l.b16 %v718
        %v2052 = vunpack.c.h.b16 %v718
        %v2053 = vunpack.c.l.b16 %v719
        %v2054 = vunpack.c.h.b16 %v719
        %v2055 = vunpack.c.l.b16 %v720
        %v2056 = vunpack.c.h.b16 %v720
        %v2057 = vunpack.c.l.b16 %v721
        %v2058 = vunpack.c.h.b16 %v721
        %v2059 = vunpack.c.l.b16 %v722
        %v2060 = vunpack.c.h.b16 %v722
        %v2061 = vunpack.c.l.b16 %v723
        %v2062 = vunpack.c.h.b16 %v723
        %v2063 = vunpack.c.l.b16 %v724
        %v2064 = vunpack.c.h.b16 %v724
        %v2065 = vunpack.c.l.b16 %v725
        %v2066 = vunpack.c.h.b16 %v725
        %v2067 = vunpack.c.l.b16 %v726
        %v2068 = vunpack.c.h.b16 %v726
        %v2069 = vunpack.c.l.b16 %v727
        %v2070 = vunpack.c.h.b16 %v727
        %v2071 = vunpack.c.l.b16 %v728
        %v2072 = vunpack.c.h.b16 %v728
        %v2073 = vunpack.c.l.b16 %v729
        %v2074 = vunpack.c.h.b16 %v729
        %v2075 = vunpack.c.l.b16 %v730
        %v2076 = vunpack.c.h.b16 %v730
        %v2077 = vunpack.c.l.b16 %v731
        %v2078 = vunpack.c.h.b16 %v731
        %v2079 = vunpack.c.l.b16 %v732
        %v2080 = vunpack.c.h.b16 %v732
        %v2081 = vunpack.c.l.b16 %v733
        %v2082 = vunpack.c.h.b16 %v733
        %v2083 = vunpack.c.l.b16 %v734
        %v2084 = vunpack.c.h.b16 %v734
        %v2085 = vunpack.c.l.b16 %v735
        %v2086 = vunpack.c.h.b16 %v735
        %v2087 = vunpack.c.l.b16 %v736
        %v2088 = vunpack.c.h.b16 %v736
        %v2089 = vunpack.c.l.b16 %v737
        %v2090 = vunpack.c.h.b16 %v737
        %v2091 = vunpack.c.l.b16 %v738
        %v2092 = vunpack.c.h.b16 %v738
        %v2093 = vunpack.c.l.b16 %v739
        %v2094 = vunpack.c.h.b16 %v739
        %v2095 = vunpack.c.l.b16 %v740
        %v2096 = vunpack.c.h.b16 %v740
        %v2097 = vunpack.c.l.b16 %v741
        %v2098 = vunpack.c.h.b16 %v741
        %v2099 = vunpack.c.l.b16 %v742
        %v2100 = vunpack.c.h.b16 %v742
        %v2101 = vunpack.c.l.b16 %v743
        %v2102 = vunpack.c.h.b16 %v743
        %v2103 = vunpack.c.l.b16 %v744
        %v2104 = vunpack.c.h.b16 %v744
        %v2105 = vunpack.c.l.b16 %v745
        %v2106 = vunpack.c.h.b16 %v745
        %v2107 = vunpack.c.l.b16 %v746
        %v2108 = vunpack.c.h.b16 %v746
        %v2109 = vunpack.c.l.b16 %v747
        %v2110 = vunpack.c.h.b16 %v747
        %v2111 = vunpack.c.l.b16 %v748
        %v2112 = vunpack.c.h.b16 %v748
        %v2113 = vunpack.c.l.b16 %v749
        %v2114 = vunpack.c.h.b16 %v749
        %v2115 = vunpack.c.l.b16 %v750
        %v2116 = vunpack.c.h.b16 %v750
        %v2117 = vunpack.c.l.b16 %v751
        %v2118 = vunpack.c.h.b16 %v751
        %v2119 = vunpack.c.l.b16 %v752
        %v2120 = vunpack.c.h.b16 %v752
        %v2121 = vunpack.c.l.b16 %v753
        %v2122 = vunpack.c.h.b16 %v753
        %v2123 = vunpack.c.l.b16 %v754
        %v2124 = vunpack.c.h.b16 %v754
        %v2125 = vunpack.c.l.b16 %v755
        %v2126 = vunpack.c.h.b16 %v755
        %v2127 = vunpack.c.l.b16 %v756
        %v2128 = vunpack.c.h.b16 %v756
        %v2129 = vunpack.c.l.b16 %v757
        %v2130 = vunpack.c.h.b16 %v757
        %v2131 = vunpack.c.l.b16 %v758
        %v2132 = vunpack.c.h.b16 %v758
        %v2133 = vunpack.c.l.b16 %v759
        %v2134 = vunpack.c.h.b16 %v759
        %v2135 = vunpack.c.l.b16 %v760
        %v2136 = vunpack.c.h.b16 %v760
        %v2137 = vunpack.c.l.b16 %v761
        %v2138 = vunpack.c.h.b16 %v761
        %v2139 = vunpack.c.l.b16 %v762
        %v2140 = vunpack.c.h.b16 %v762
        %v2141 = vunpack.c.l.b16 %v763
        %v2142 = vunpack.c.h.b16 %v763
        %v2143 = vunpack.c.l.b16 %v764
        %v2144 = vunpack.c.h.b16 %v764
        %v2145 = vunpack.c.l.b16 %v765
        %v2146 = vunpack.c.h.b16 %v765
        %v2147 = vunpack.c.l.b16 %v766
        %v2148 = vunpack.c.h.b16 %v766
        %v2149 = vunpack.c.l.b16 %v767
        %v2150 = vunpack.c.h.b16 %v767
        %v2151 = vunpack.c.l.b16 %v768
        %v2152 = vunpack.c.h.b16 %v768
        %v2153 = vunpack.c.l.b16 %v769
        %v2154 = vunpack.c.h.b16 %v769
        %v2155 = vunpack.c.l.b16 %v770
        %v2156 = vunpack.c.h.b16 %v770
        %v2157 = vunpack.c.l.b16 %v771
        %v2158 = vunpack.c.h.b16 %v771
        %v2159 = vunpack.c.l.b16 %v772
        %v2160 = vunpack.c.h.b16 %v772
        %v2161 = vunpack.c.l.b16 %v773
        %v2162 = vunpack.c.h.b16 %v773
        %v2163 = vunpack.c.l.b16 %v774
        %v2164 = vunpack.c.h.b16 %v774
        %v2165 = vunpack.c.l.b16 %v775
        %v2166 = vunpack.c.h.b16 %v775
        %v2167 = vunpack.c.l.b16 %v776
        %v2168 = vunpack.c.h.b16 %v776
        %v2169 = vunpack.c.l.b16 %v777
        %v2170 = vunpack.c.h.b16 %v777
        %v2171 = vunpack.c.l.b16 %v778
        %v2172 = vunpack.c.h.b16 %v778
        %v2173 = vunpack.c.l.b16 %v779
        %v2174 = vunpack.c.h.b16 %v779
        %v2175 = vunpack.c.l.b16 %v780
        %v2176 = vunpack.c.h.b16 %v780
        %v2177 = vunpack.c.l.b16 %v781
        %v2178 = vunpack.c.h.b16 %v781
        %v2179 = vunpack.c.l.b16 %v782
        %v2180 = vunpack.c.h.b16 %v782
        %v2181 = vunpack.c.l.b16 %v783
        %v2182 = vunpack.c.h.b16 %v783
        %v2183 = vunpack.c.l.b16 %v784
        %v2184 = vunpack.c.h.b16 %v784
        %v2185 = vunpack.c.l.b16 %v785
        %v2186 = vunpack.c.h.b16 %v785
        %v2187 = vunpack.c.l.b16 %v786
        %v2188 = vunpack.c.h.b16 %v786
        %v2189 = vunpack.c.l.b16 %v787
        %v2190 = vunpack.c.h.b16 %v787
        %v2191 = vunpack.c.l.b16 %v788
        %v2192 = vunpack.c.h.b16 %v788
        %v2193 = vunpack.c.l.b16 %v789
        %v2194 = vunpack.c.h.b16 %v789
        %v2195 = vunpack.c.l.b16 %v790
        %v2196 = vunpack.c.h.b16 %v790
        %v2197 = vunpack.c.l.b16 %v791
        %v2198 = vunpack.c.h.b16 %v791
        %v2199 = vunpack.c.l.b16 %v792
        %v2200 = vunpack.c.h.b16 %v792
        %v2201 = vunpack.c.l.b16 %v793
        %v2202 = vunpack.c.h.b16 %v793
        %v2203 = vunpack.c.l.b16 %v794
        %v2204 = vunpack.c.h.b16 %v794
        %v2205 = vunpack.c.l.b16 %v795
        %v2206 = vunpack.c.h.b16 %v795
        %v2207 = vunpack.c.l.b16 %v796
        %v2208 = vunpack.c.h.b16 %v796
        %v2209 = vunpack.c.l.b16 %v797
        %v2210 = vunpack.c.h.b16 %v797
        %v2211 = vunpack.c.l.b16 %v798
        %v2212 = vunpack.c.h.b16 %v798
        %v2213 = vunpack.c.l.b16 %v799
        %v2214 = vunpack.c.h.b16 %v799
        %v2215 = vunpack.c.l.b16 %v800
        %v2216 = vunpack.c.h.b16 %v800
        %v2217 = vunpack.c.l.b16 %v801
        %v2218 = vunpack.c.h.b16 %v801
        %v2219 = vunpack.c.l.b16 %v802
        %v2220 = vunpack.c.h.b16 %v802
        %v2221 = vunpack.c.l.b16 %v803
        %v2222 = vunpack.c.h.b16 %v803
        %v2223 = vunpack.c.l.b16 %v804
        %v2224 = vunpack.c.h.b16 %v804
        %v2225 = vunpack.c.l.b16 %v805
        %v2226 = vunpack.c.h.b16 %v805
        %v2227 = vunpack.c.l.b16 %v806
        %v2228 = vunpack.c.h.b16 %v806
        %v2229 = vunpack.c.l.b16 %v807
        %v2230 = vunpack.c.h.b16 %v807
        %v2231 = vunpack.c.l.b16 %v808
        %v2232 = vunpack.c.h.b16 %v808
        %v2233 = vunpack.c.l.b16 %v809
        %v2234 = vunpack.c.h.b16 %v809
        %v2235 = vunpack.c.l.b16 %v810
        %v2236 = vunpack.c.h.b16 %v810
        %v2237 = vunpack.c.l.b16 %v811
        %v2238 = vunpack.c.h.b16 %v811
        %v2239 = vunpack.c.l.b16 %v812
        %v2240 = vunpack.c.h.b16 %v812
        %v2241 = vunpack.c.l.b16 %v813
        %v2242 = vunpack.c.h.b16 %v813
        %v2243 = vunpack.c.l.b16 %v814
        %v2244 = vunpack.c.h.b16 %v814
        %v2245 = vunpack.c.l.b16 %v815
        %v2246 = vunpack.c.h.b16 %v815
        %v2247 = vunpack.c.l.b16 %v816
        %v2248 = vunpack.c.h.b16 %v816
        %v2249 = vunpack.c.l.b16 %v817
        %v2250 = vunpack.c.h.b16 %v817
        %v2251 = vunpack.c.l.b16 %v818
        %v2252 = vunpack.c.h.b16 %v818
        %v2253 = vunpack.c.l.b16 %v819
        %v2254 = vunpack.c.h.b16 %v819
        %v2255 = vunpack.c.l.b16 %v820
        %v2256 = vunpack.c.h.b16 %v820
        %v2257 = vunpack.c.l.b16 %v821
        %v2258 = vunpack.c.h.b16 %v821
        %v2259 = vunpack.c.l.b16 %v822
        %v2260 = vunpack.c.h.b16 %v822
        %v2261 = vunpack.c.l.b16 %v823
        %v2262 = vunpack.c.h.b16 %v823
        %v2263 = vunpack.c.l.b16 %v824
        %v2264 = vunpack.c.h.b16 %v824
        %v2265 = vunpack.c.l.b16 %v825
        %v2266 = vunpack.c.h.b16 %v825
        %v2267 = vunpack.c.l.b16 %v826
        %v2268 = vunpack.c.h.b16 %v826
        %v2269 = vunpack.c.l.b16 %v827
        %v2270 = vunpack.c.h.b16 %v827
        %v2271 = vunpack.c.l.b16 %v828
        %v2272 = vunpack.c.h.b16 %v828
        %v2273 = vunpack.c.l.b16 %v829
        %v2274 = vunpack.c.h.b16 %v829
        %v2275 = vunpack.c.l.b16 %v830
        %v2276 = vunpack.c.h.b16 %v830
        %v2277 = vunpack.c.l.b16 %v831
        %v2278 = vunpack.c.h.b16 %v831
        %v2279 = vunpack.c.l.b16 %v832
        %v2280 = vunpack.c.h.b16 %v832
        %v2281 = vunpack.c.l.b16 %v833
        %v2282 = vunpack.c.h.b16 %v833
        %v2283 = vunpack.c.l.b16 %v834
        %v2284 = vunpack.c.h.b16 %v834
        %v2285 = vunpack.c.l.b16 %v835
        %v2286 = vunpack.c.h.b16 %v835
        %v2287 = vunpack.c.l.b16 %v836
        %v2288 = vunpack.c.h.b16 %v836
        %v2289 = vunpack.c.l.b16 %v837
        %v2290 = vunpack.c.h.b16 %v837
        %v2291 = vunpack.c.l.b16 %v838
        %v2292 = vunpack.c.h.b16 %v838
        %v2293 = vunpack.c.l.b16 %v839
        %v2294 = vunpack.c.h.b16 %v839
        %v2295 = vunpack.c.l.b16 %v840
        %v2296 = vunpack.c.h.b16 %v840
        %v2297 = vunpack.c.l.b16 %v841
        %v2298 = vunpack.c.h.b16 %v841
        %v2299 = vunpack.c.l.b16 %v842
        %v2300 = vunpack.c.h.b16 %v842
        %v2301 = vunpack.c.l.b16 %v843
        %v2302 = vunpack.c.h.b16 %v843
        %v2303 = vunpack.c.l.b16 %v844
        %v2304 = vunpack.c.h.b16 %v844
        %v2305 = vunpack.c.l.b16 %v845
        %v2306 = vunpack.c.h.b16 %v845
        %v2307 = vunpack.c.l.b16 %v846
        %v2308 = vunpack.c.h.b16 %v846
        %v2309 = vunpack.c.l.b16 %v847
        %v2310 = vunpack.c.h.b16 %v847
        %v2311 = vunpack.c.l.b16 %v848
        %v2312 = vunpack.c.h.b16 %v848
        %v2313 = vunpack.c.l.b16 %v849
        %v2314 = vunpack.c.h.b16 %v849
        %v2315 = vunpack.c.l.b16 %v850
        %v2316 = vunpack.c.h.b16 %v850
        %v2317 = vunpack.c.l.b16 %v851
        %v2318 = vunpack.c.h.b16 %v851
        %v2319 = vunpack.c.l.b16 %v852
        %v2320 = vunpack.c.h.b16 %v852
        %v2321 = vunpack.c.l.b16 %v853
        %v2322 = vunpack.c.h.b16 %v853
        %v2323 = vunpack.c.l.b16 %v854
        %v2324 = vunpack.c.h.b16 %v854
        %v2325 = vunpack.c.l.b16 %v855
        %v2326 = vunpack.c.h.b16 %v855
        %v2327 = vunpack.c.l.b16 %v856
        %v2328 = vunpack.c.h.b16 %v856
        %v2329 = vunpack.c.l.b16 %v857
        %v2330 = vunpack.c.h.b16 %v857
        %v2331 = vunpack.c.l.b16 %v858
        %v2332 = vunpack.c.h.b16 %v858
        %v2333 = vunpack.c.l.b16 %v859
        %v2334 = vunpack.c.h.b16 %v859
        %v2335 = vunpack.c.l.b16 %v860
        %v2336 = vunpack.c.h.b16 %v860
        %v2337 = vunpack.c.l.b16 %v861
        %v2338 = vunpack.c.h.b16 %v861
        %v2339 = vunpack.c.l.b16 %v862
        %v2340 = vunpack.c.h.b16 %v862
        %v2341 = vunpack.c.l.b16 %v863
        %v2342 = vunpack.c.h.b16 %v863
        %v2343 = vunpack.c.l.b16 %v864
        %v2344 = vunpack.c.h.b16 %v864
        %v2345 = vunpack.c.l.b16 %v865
        %v2346 = vunpack.c.h.b16 %v865
        %v2347 = vunpack.c.l.b16 %v866
        %v2348 = vunpack.c.h.b16 %v866
        %v2349 = vunpack.c.l.b16 %v867
        %v2350 = vunpack.c.h.b16 %v867
        %v2351 = vunpack.c.l.b16 %v868
        %v2352 = vunpack.c.h.b16 %v868
        %v2353 = vunpack.c.l.b16 %v869
        %v2354 = vunpack.c.h.b16 %v869
        %v2355 = vunpack.c.l.b16 %v870
        %v2356 = vunpack.c.h.b16 %v870
        %v2357 = vunpack.c.l.b16 %v871
        %v2358 = vunpack.c.h.b16 %v871
        %v2359 = vunpack.c.l.b16 %v872
        %v2360 = vunpack.c.h.b16 %v872
        %v2361 = vunpack.c.l.b16 %v873
        %v2362 = vunpack.c.h.b16 %v873
        %v2363 = vunpack.c.l.b16 %v874
        %v2364 = vunpack.c.h.b16 %v874
        %v2365 = vunpack.c.l.b16 %v875
        %v2366 = vunpack.c.h.b16 %v875
        %v2367 = vunpack.c.l.b16 %v876
        %v2368 = vunpack.c.h.b16 %v876
        %v2369 = vunpack.c.l.b16 %v877
        %v2370 = vunpack.c.h.b16 %v877
        %v2371 = vunpack.c.l.b16 %v878
        %v2372 = vunpack.c.h.b16 %v878
        %v2373 = vunpack.c.l.b16 %v879
        %v2374 = vunpack.c.h.b16 %v879
        %v2375 = vunpack.c.l.b16 %v880
        %v2376 = vunpack.c.h.b16 %v880
        %v2377 = vunpack.c.l.b16 %v881
        %v2378 = vunpack.c.h.b16 %v881
        %v2379 = vunpack.c.l.b16 %v882
        %v2380 = vunpack.c.h.b16 %v882
        %v2381 = vunpack.c.l.b16 %v883
        %v2382 = vunpack.c.h.b16 %v883
        %v2383 = vunpack.c.l.b16 %v884
        %v2384 = vunpack.c.h.b16 %v884
        %v2385 = vunpack.c.l.b16 %v885
        %v2386 = vunpack.c.h.b16 %v885
        %v2387 = vunpack.c.l.b16 %v886
        %v2388 = vunpack.c.h.b16 %v886
        %v2389 = vunpack.c.l.b16 %v887
        %v2390 = vunpack.c.h.b16 %v887
        %v2391 = vunpack.c.l.b16 %v888
        %v2392 = vunpack.c.h.b16 %v888
        %v2393 = vunpack.c.l.b16 %v889
        %v2394 = vunpack.c.h.b16 %v889
        %v2395 = vunpack.c.l.b16 %v890
        %v2396 = vunpack.c.h.b16 %v890
        %v2397 = vunpack.c.l.b16 %v891
        %v2398 = vunpack.c.h.b16 %v891
        %v2399 = vunpack.c.l.b16 %v892
        %v2400 = vunpack.c.h.b16 %v892
        %v2401 = vunpack.c.l.b16 %v893
        %v2402 = vunpack.c.h.b16 %v893
        %v2403 = vunpack.c.l.b16 %v894
        %v2404 = vunpack.c.h.b16 %v894
        %v2405 = vunpack.c.l.b16 %v895
        %v2406 = vunpack.c.h.b16 %v895
        %v2407 = vunpack.c.l.b16 %v896
        %v2408 = vunpack.c.h.b16 %v896
        %v2409 = vunpack.c.l.b16 %v897
        %v2410 = vunpack.c.h.b16 %v897
        %v2411 = vunpack.c.l.b16 %v898
        %v2412 = vunpack.c.h.b16 %v898
        %v2413 = vunpack.c.l.b16 %v899
        %v2414 = vunpack.c.h.b16 %v899
        %v2415 = vunpack.c.l.b16 %v900
        %v2416 = vunpack.c.h.b16 %v900
        %v2417 = vunpack.c.l.b16 %v901
        %v2418 = vunpack.c.h.b16 %v901
        %v2419 = vunpack.c.l.b16 %v902
        %v2420 = vunpack.c.h.b16 %v902
        %v2421 = vunpack.c.l.b16 %v903
        %v2422 = vunpack.c.h.b16 %v903
        %v2423 = vunpack.c.l.b16 %v904
        %v2424 = vunpack.c.h.b16 %v904
        %v2425 = vunpack.c.l.b16 %v905
        %v2426 = vunpack.c.h.b16 %v905
        %v2427 = vunpack.c.l.b16 %v906
        %v2428 = vunpack.c.h.b16 %v906
        %v2429 = vunpack.c.l.b16 %v907
        %v2430 = vunpack.c.h.b16 %v907
        %v2431 = vunpack.c.l.b16 %v908
        %v2432 = vunpack.c.h.b16 %v908
        %v2433 = vunpack.c.l.b16 %v909
        %v2434 = vunpack.c.h.b16 %v909
        %v2435 = vunpack.c.l.b16 %v910
        %v2436 = vunpack.c.h.b16 %v910
        %v2437 = vunpack.c.l.b16 %v911
        %v2438 = vunpack.c.h.b16 %v911
        %v2439 = vunpack.c.l.b16 %v912
        %v2440 = vunpack.c.h.b16 %v912
        %v2441 = vunpack.c.l.b16 %v913
        %v2442 = vunpack.c.h.b16 %v913
        %v2443 = vunpack.c.l.b16 %v914
        %v2444 = vunpack.c.h.b16 %v914
        %v2445 = vunpack.c.l.b16 %v915
        %v2446 = vunpack.c.h.b16 %v915
        %v2447 = vunpack.c.l.b16 %v916
        %v2448 = vunpack.c.h.b16 %v916
        %v2449 = vunpack.c.l.b16 %v917
        %v2450 = vunpack.c.h.b16 %v917
        %v2451 = vunpack.c.l.b16 %v918
        %v2452 = vunpack.c.h.b16 %v918
        %v2453 = vunpack.c.l.b16 %v919
        %v2454 = vunpack.c.h.b16 %v919
        %v2455 = vunpack.c.l.b16 %v920
        %v2456 = vunpack.c.h.b16 %v920
        %v2457 = vunpack.c.l.b16 %v921
        %v2458 = vunpack.c.h.b16 %v921
        %v2459 = vunpack.c.l.b16 %v922
        %v2460 = vunpack.c.h.b16 %v922
        %v2461 = vunpack.c.l.b16 %v923
        %v2462 = vunpack.c.h.b16 %v923
        %v2463 = vunpack.c.l.b16 %v924
        %v2464 = vunpack.c.h.b16 %v924
        %v2465 = vunpack.c.l.b16 %v925
        %v2466 = vunpack.c.h.b16 %v925
        %v2467 = vunpack.c.l.b16 %v926
        %v2468 = vunpack.c.h.b16 %v926
        %v2469 = vunpack.c.l.b16 %v927
        %v2470 = vunpack.c.h.b16 %v927
        %v2471 = vunpack.c.l.b16 %v928
        %v2472 = vunpack.c.h.b16 %v928
        %v2473 = vunpack.c.l.b16 %v929
        %v2474 = vunpack.c.h.b16 %v929
        %v2475 = vunpack.c.l.b16 %v930
        %v2476 = vunpack.c.h.b16 %v930
        %v2477 = vunpack.c.l.b16 %v931
        %v2478 = vunpack.c.h.b16 %v931
        %v2479 = vunpack.c.l.b16 %v932
        %v2480 = vunpack.c.h.b16 %v932
        %v2481 = vunpack.c.l.b16 %v933
        %v2482 = vunpack.c.h.b16 %v933
        %v2483 = vunpack.c.l.b16 %v934
        %v2484 = vunpack.c.h.b16 %v934
        %v2485 = vunpack.c.l.b16 %v935
        %v2486 = vunpack.c.h.b16 %v935
        %v2487 = vunpack.c.l.b16 %v936
        %v2488 = vunpack.c.h.b16 %v936
        %v2489 = vunpack.c.l.b16 %v937
        %v2490 = vunpack.c.h.b16 %v937
        %v2491 = vunpack.c.l.b16 %v938
        %v2492 = vunpack.c.h.b16 %v938
        %v2493 = vunpack.c.l.b16 %v939
        %v2494 = vunpack.c.h.b16 %v939
        %v2495 = vunpack.c.l.b16 %v940
        %v2496 = vunpack.c.h.b16 %v940
        %v2497 = vunpack.c.l.b16 %v941
        %v2498 = vunpack.c.h.b16 %v941
        %v2499 = vunpack.c.l.b16 %v942
        %v2500 = vunpack.c.h.b16 %v942
        %v2501 = vunpack.c.l.b16 %v943
        %v2502 = vunpack.c.h.b16 %v943
        %v2503 = vunpack.c.l.b16 %v944
        %v2504 = vunpack.c.h.b16 %v944
        %v2505 = vunpack.c.l.b16 %v945
        %v2506 = vunpack.c.h.b16 %v945
        %v2507 = vunpack.c.l.b16 %v946
        %v2508 = vunpack.c.h.b16 %v946
        %v2509 = vunpack.c.l.b16 %v947
        %v2510 = vunpack.c.h.b16 %v947
        %v2511 = vunpack.c.l.b16 %v948
        %v2512 = vunpack.c.h.b16 %v948
        %v2513 = vunpack.c.l.b16 %v949
        %v2514 = vunpack.c.h.b16 %v949
        %v2515 = vunpack.c.l.b16 %v950
        %v2516 = vunpack.c.h.b16 %v950
        %v2517 = vunpack.c.l.b16 %v951
        %v2518 = vunpack.c.h.b16 %v951
        %v2519 = vunpack.c.l.b16 %v952
        %v2520 = vunpack.c.h.b16 %v952
        %v2521 = vunpack.c.l.b16 %v953
        %v2522 = vunpack.c.h.b16 %v953
        %v2523 = vunpack.c.l.b16 %v954
        %v2524 = vunpack.c.h.b16 %v954
        %v2525 = vpack.c.b16 %v1517, %v1501
        %v2526 = vpack.c.b16 %v1518, %v1502
        %v2527 = vpack.c.b16 %v1519, %v1503
        %v2528 = vpack.c.b16 %v1520, %v1504
        %v2529 = vpack.c.b16 %v1521, %v1505
        %v2530 = vpack.c.b16 %v1522, %v1506
        %v2531 = vpack.c.b16 %v1523, %v1507
        %v2532 = vpack.c.b16 %v1524, %v1508
        %v2533 = vpack.c.b16 %v1525, %v1509
        %v2534 = vpack.c.b16 %v1526, %v1510
        %v2535 = vpack.c.b16 %v1527, %v1511
        %v2536 = vpack.c.b16 %v1528, %v1512
        %v2537 = vpack.c.b16 %v1529, %v1513
        %v2538 = vpack.c.b16 %v1530, %v1514
        %v2539 = vpack.c.b16 %v1531, %v1515
        %v2540 = vpack.c.b16 %v1532, %v1516
        %v2541 = vpack.c.b16 %v1549, %v1533
        %v2542 = vpack.c.b16 %v1550, %v1534
        %v2543 = vpack.c.b16 %v1551, %v1535
        %v2544 = vpack.c.b16 %v1552, %v1536
        %v2545 = vpack.c.b16 %v1553, %v1537
        %v2546 = vpack.c.b16 %v1554, %v1538
        %v2547 = vpack.c.b16 %v1555, %v1539
        %v2548 = vpack.c.b16 %v1556, %v1540
        %v2549 = vpack.c.b16 %v1557, %v1541
        %v2550 = vpack.c.b16 %v1558, %v1542
        %v2551 = vpack.c.b16 %v1559, %v1543
        %v2552 = vpack.c.b16 %v1560, %v1544
        %v2553 = vpack.c.b16 %v1561, %v1545
        %v2554 = vpack.c.b16 %v1562, %v1546
        %v2555 = vpack.c.b16 %v1563, %v1547
        %v2556 = vpack.c.b16 %v1564, %v1548
        %v2557 = vpack.c.b16 %v1581, %v1565
        %v2558 = vpack.c.b16 %v1582, %v1566
        %v2559 = vpack.c.b16 %v1583, %v1567
        %v2560 = vpack.c.b16 %v1584, %v1568
        %v2561 = vpack.c.b16 %v1585, %v1569
        %v2562 = vpack.c.b16 %v1586, %v1570
        %v2563 = vpack.c.b16 %v1587, %v1571
        %v2564 = vpack.c.b16 %v1588, %v1572
        %v2565 = vpack.c.b16 %v1589, %v1573
        %v2566 = vpack.c.b16 %v1590, %v1574
        %v2567 = vpack.c.b16 %v1591, %v1575
        %v2568 = vpack.c.b16 %v1592, %v1576
        %v2569 = vpack.c.b16 %v1593, %v1577
        %v2570 = vpack.c.b16 %v1594, %v1578
        %v2571 = vpack.c.b16 %v1595, %v1579
        %v2572 = vpack.c.b16 %v1596, %v1580
        %v2573 = vpack.c.b16 %v1613, %v1597
        %v2574 = vpack.c.b16 %v1614, %v1598
        %v2575 = vpack.c.b16 %v1615, %v1599
        %v2576 = vpack.c.b16 %v1616, %v1600
        %v2577 = vpack.c.b16 %v1617, %v1601
        %v2578 = vpack.c.b16 %v1618, %v1602
        %v2579 = vpack.c.b16 %v1619, %v1603
        %v2580 = vpack.c.b16 %v1620, %v1604
        %v2581 = vpack.c.b16 %v1621, %v1605
        %v2582 = vpack.c.b16 %v1622, %v1606
        %v2583 = vpack.c.b16 %v1623, %v1607
        %v2584 = vpack.c.b16 %v1624, %v1608
        %v2585 = vpack.c.b16 %v1625, %v1609
        %v2586 = vpack.c.b16 %v1626, %v1610
        %v2587 = vpack.c.b16 %v1627, %v1611
        %v2588 = vpack.c.b16 %v1628, %v1612
        %v2589 = vpack.c.b16 %v1645, %v1629
        %v2590 = vpack.c.b16 %v1646, %v1630
        %v2591 = vpack.c.b16 %v1647, %v1631
        %v2592 = vpack.c.b16 %v1648, %v1632
        %v2593 = vpack.c.b16 %v1649, %v1633
        %v2594 = vpack.c.b16 %v1650, %v1634
        %v2595 = vpack.c.b16 %v1651, %v1635
        %v2596 = vpack.c.b16 %v1652, %v1636
        %v2597 = vpack.c.b16 %v1653, %v1637
        %v2598 = vpack.c.b16 %v1654, %v1638
        %v2599 = vpack.c.b16 %v1655, %v1639
        %v2600 = vpack.c.b16 %v1656, %v1640
        %v2601 = vpack.c.b16 %v1657, %v1641
        %v2602 = vpack.c.b16 %v1658, %v1642
        %v2603 = vpack.c.b16 %v1659, %v1643
        %v2604 = vpack.c.b16 %v1660, %v1644
        %v2605 = vpack.c.b16 %v1677, %v1661
        %v2606 = vpack.c.b16 %v1678, %v1662
        %v2607 = vpack.c.b16 %v1679, %v1663
        %v2608 = vpack.c.b16 %v1680, %v1664
        %v2609 = vpack.c.b16 %v1681, %v1665
        %v2610 = vpack.c.b16 %v1682, %v1666
        %v2611 = vpack.c.b16 %v1683, %v1667
        %v2612 = vpack.c.b16 %v1684, %v1668
        %v2613 = vpack.c.b16 %v1685, %v1669
        %v2614 = vpack.c.b16 %v1686, %v1670
        %v2615 = vpack.c.b16 %v1687, %v1671
        %v2616 = vpack.c.b16 %v1688, %v1672
        %v2617 = vpack.c.b16 %v1689, %v1673
        %v2618 = vpack.c.b16 %v1690, %v1674
        %v2619 = vpack.c.b16 %v1691, %v1675
        %v2620 = vpack.c.b16 %v1692, %v1676
        %v2621 = vpack.c.b16 %v1709, %v1693
        %v2622 = vpack.c.b16 %v1710, %v1694
        %v2623 = vpack.c.b16 %v1711, %v1695
        %v2624 = vpack.c.b16 %v1712, %v1696
        %v2625 = vpack.c.b16 %v1713, %v1697
        %v2626 = vpack.c.b16 %v1714, %v1698
        %v2627 = vpack.c.b16 %v1715, %v1699
        %v2628 = vpack.c.b16 %v1716, %v1700
        %v2629 = vpack.c.b16 %v1717, %v1701
        %v2630 = vpack.c.b16 %v1718, %v1702
        %v2631 = vpack.c.b16 %v1719, %v1703
        %v2632 = vpack.c.b16 %v1720, %v1704
        %v2633 = vpack.c.b16 %v1721, %v1705
        %v2634 = vpack.c.b16 %v1722, %v1706
        %v2635 = vpack.c.b16 %v1723, %v1707
        %v2636 = vpack.c.b16 %v1724, %v1708
        %v2637 = vpack.c.b16 %v1741, %v1725
        %v2638 = vpack.c.b16 %v1742, %v1726
        %v2639 = vpack.c.b16 %v1743, %v1727
        %v2640 = vpack.c.b16 %v1744, %v1728
        %v2641 = vpack.c.b16 %v1745, %v1729
        %v2642 = vpack.c.b16 %v1746, %v1730
        %v2643 = vpack.c.b16 %v1747, %v1731
        %v2644 = vpack.c.b16 %v1748, %v1732
        %v2645 = vpack.c.b16 %v1749, %v1733
        %v2646 = vpack.c.b16 %v1750, %v1734
        %v2647 = vpack.c.b16 %v1751, %v1735
        %v2648 = vpack.c.b16 %v1752, %v1736
        %v2649 = vpack.c.b16 %v1753, %v1737
        %v2650 = vpack.c.b16 %v1754, %v1738
        %v2651 = vpack.c.b16 %v1755, %v1739
        %v2652 = vpack.c.b16 %v1756, %v1740
        %v2653 = vpack.c.b16 %v1773, %v1757
        %v2654 = vpack.c.b16 %v1774, %v1758
        %v2655 = vpack.c.b16 %v1775, %v1759
        %v2656 = vpack.c.b16 %v1776, %v1760
        %v2657 = vpack.c.b16 %v1777, %v1761
        %v2658 = vpack.c.b16 %v1778, %v1762
        %v2659 = vpack.c.b16 %v1779, %v1763
        %v2660 = vpack.c.b16 %v1780, %v1764
        %v2661 = vpack.c.b16 %v1781, %v1765
        %v2662 = vpack.c.b16 %v1782, %v1766
        %v2663 = vpack.c.b16 %v1783, %v1767
        %v2664 = vpack.c.b16 %v1784, %v1768
        %v2665 = vpack.c.b16 %v1785, %v1769
        %v2666 = vpack.c.b16 %v1786, %v1770
        %v2667 = vpack.c.b16 %v1787, %v1771
        %v2668 = vpack.c.b16 %v1788, %v1772
        %v2669 = vpack.c.b16 %v1805, %v1789
        %v2670 = vpack.c.b16 %v1806, %v1790
        %v2671 = vpack.c.b16 %v1807, %v1791
        %v2672 = vpack.c.b16 %v1808, %v1792
        %v2673 = vpack.c.b16 %v1809, %v1793
        %v2674 = vpack.c.b16 %v1810, %v1794
        %v2675 = vpack.c.b16 %v1811, %v1795
        %v2676 = vpack.c.b16 %v1812, %v1796
        %v2677 = vpack.c.b16 %v1813, %v1797
        %v2678 = vpack.c.b16 %v1814, %v1798
        %v2679 = vpack.c.b16 %v1815, %v1799
        %v2680 = vpack.c.b16 %v1816, %v1800
        %v2681 = vpack.c.b16 %v1817, %v1801
        %v2682 = vpack.c.b16 %v1818, %v1802
        %v2683 = vpack.c.b16 %v1819, %v1803
        %v2684 = vpack.c.b16 %v1820, %v1804
        %v2685 = vpack.c.b16 %v1837, %v1821
        %v2686 = vpack.c.b16 %v1838, %v1822
        %v2687 = vpack.c.b16 %v1839, %v1823
        %v2688 = vpack.c.b16 %v1840, %v1824
        %v2689 = vpack.c.b16 %v1841, %v1825
        %v2690 = vpack.c.b16 %v1842, %v1826
        %v2691 = vpack.c.b16 %v1843, %v1827
        %v2692 = vpack.c.b16 %v1844, %v1828
        %v2693 = vpack.c.b16 %v1845, %v1829
        %v2694 = vpack.c.b16 %v1846, %v1830
        %v2695 = vpack.c.b16 %v1847, %v1831
        %v2696 = vpack.c.b16 %v1848, %v1832
        %v2697 = vpack.c.b16 %v1849, %v1833
        %v2698 = vpack.c.b16 %v1850, %v1834
        %v2699 = vpack.c.b16 %v1851, %v1835
        %v2700 = vpack.c.b16 %v1852, %v1836
        %v2701 = vpack.c.b16 %v1869, %v1853
        %v2702 = vpack.c.b16 %v1870, %v1854
        %v2703 = vpack.c.b16 %v1871, %v1855
        %v2704 = vpack.c.b16 %v1872, %v1856
        %v2705 = vpack.c.b16 %v1873, %v1857
        %v2706 = vpack.c.b16 %v1874, %v1858
        %v2707 = vpack.c.b16 %v1875, %v1859
        %v2708 = vpack.c.b16 %v1876, %v1860
        %v2709 = vpack.c.b16 %v1877, %v1861
        %v2710 = vpack.c.b16 %v1878, %v1862
        %v2711 = vpack.c.b16 %v1879, %v1863
        %v2712 = vpack.c.b16 %v1880, %v1864
        %v2713 = vpack.c.b16 %v1881, %v1865
        %v2714 = vpack.c.b16 %v1882, %v1866
        %v2715 = vpack.c.b16 %v1883, %v1867
        %v2716 = vpack.c.b16 %v1884, %v1868
        %v2717 = vpack.c.b16 %v1901, %v1885
        %v2718 = vpack.c.b16 %v1902, %v1886
        %v2719 = vpack.c.b16 %v1903, %v1887
        %v2720 = vpack.c.b16 %v1904, %v1888
        %v2721 = vpack.c.b16 %v1905, %v1889
        %v2722 = vpack.c.b16 %v1906, %v1890
        %v2723 = vpack.c.b16 %v1907, %v1891
        %v2724 = vpack.c.b16 %v1908, %v1892
        %v2725 = vpack.c.b16 %v1909, %v1893
        %v2726 = vpack.c.b16 %v1910, %v1894
        %v2727 = vpack.c.b16 %v1911, %v1895
        %v2728 = vpack.c.b16 %v1912, %v1896
        %v2729 = vpack.c.b16 %v1913, %v1897
        %v2730 = vpack.c.b16 %v1914, %v1898
        %v2731 = vpack.c.b16 %v1915, %v1899
        %v2732 = vpack.c.b16 %v1916, %v1900
        %v2733 = vpack.c.b16 %v1933, %v1917
        %v2734 = vpack.c.b16 %v1934, %v1918
        %v2735 = vpack.c.b16 %v1935, %v1919
        %v2736 = vpack.c.b16 %v1936, %v1920
        %v2737 = vpack.c.b16 %v1937, %v1921
        %v2738 = vpack.c.b16 %v1938, %v1922
        %v2739 = vpack.c.b16 %v1939, %v1923
        %v2740 = vpack.c.b16 %v1940, %v1924
        %v2741 = vpack.c.b16 %v1941, %v1925
        %v2742 = vpack.c.b16 %v1942, %v1926
        %v2743 = vpack.c.b16 %v1943, %v1927
        %v2744 = vpack.c.b16 %v1944, %v1928
        %v2745 = vpack.c.b16 %v1945, %v1929
        %v2746 = vpack.c.b16 %v1946, %v1930
        %v2747 = vpack.c.b16 %v1947, %v1931
        %v2748 = vpack.c.b16 %v1948, %v1932
        %v2749 = vpack.c.b16 %v1965, %v1949
        %v2750 = vpack.c.b16 %v1966, %v1950
        %v2751 = vpack.c.b16 %v1967, %v1951
        %v2752 = vpack.c.b16 %v1968, %v1952
        %v2753 = vpack.c.b16 %v1969, %v1953
        %v2754 = vpack.c.b16 %v1970, %v1954
        %v2755 = vpack.c.b16 %v1971, %v1955
        %v2756 = vpack.c.b16 %v1972, %v1956
        %v2757 = vpack.c.b16 %v1973, %v1957
        %v2758 = vpack.c.b16 %v1974, %v1958
        %v2759 = vpack.c.b16 %v1975, %v1959
        %v2760 = vpack.c.b16 %v1976, %v1960
        %v2761 = vpack.c.b16 %v1977, %v1961
        %v2762 = vpack.c.b16 %v1978, %v1962
        %v2763 = vpack.c.b16 %v1979, %v1963
        %v2764 = vpack.c.b16 %v1980, %v1964
        %v2765 = vpack.c.b16 %v1997, %v1981
        %v2766 = vpack.c.b16 %v1998, %v1982
        %v2767 = vpack.c.b16 %v1999, %v1983
        %v2768 = vpack.c.b16 %v2000, %v1984
        %v2769 = vpack.c.b16 %v2001, %v1985
        %v2770 = vpack.c.b16 %v2002, %v1986
        %v2771 = vpack.c.b16 %v2003, %v1987
        %v2772 = vpack.c.b16 %v2004, %v1988
        %v2773 = vpack.c.b16 %v2005, %v1989
        %v2774 = vpack.c.b16 %v2006, %v1990
        %v2775 = vpack.c.b16 %v2007, %v1991
        %v2776 = vpack.c.b16 %v2008, %v1992
        %v2777 = vpack.c.b16 %v2009, %v1993
        %v2778 = vpack.c.b16 %v2010, %v1994
        %v2779 = vpack.c.b16 %v2011, %v1995
        %v2780 = vpack.c.b16 %v2012, %v1996
        %v2781 = vpack.c.b16 %v2029, %v2013
        %v2782 = vpack.c.b16 %v2030, %v2014
        %v2783 = vpack.c.b16 %v2031, %v2015
        %v2784 = vpack.c.b16 %v2032, %v2016
        %v2785 = vpack.c.b16 %v2033, %v2017
        %v2786 = vpack.c.b16 %v2034, %v2018
        %v2787 = vpack.c.b16 %v2035, %v2019
        %v2788 = vpack.c.b16 %v2036, %v2020
        %v2789 = vpack.c.b16 %v2037, %v2021
        %v2790 = vpack.c.b16 %v2038, %v2022
        %v2791 = vpack.c.b16 %v2039, %v2023
        %v2792 = vpack.c.b16 %v2040, %v2024
        %v2793 = vpack.c.b16 %v2041, %v2025
        %v2794 = vpack.c.b16 %v2042, %v2026
        %v2795 = vpack.c.b16 %v2043, %v2027
        %v2796 = vpack.c.b16 %v2044, %v2028
        %v2797 = vpack.c.b16 %v2061, %v2045
        %v2798 = vpack.c.b16 %v2062, %v2046
        %v2799 = vpack.c.b16 %v2063, %v2047
        %v2800 = vpack.c.b16 %v2064, %v2048
        %v2801 = vpack.c.b16 %v2065, %v2049
        %v2802 = vpack.c.b16 %v2066, %v2050
        %v2803 = vpack.c.b16 %v2067, %v2051
        %v2804 = vpack.c.b16 %v2068, %v2052
        %v2805 = vpack.c.b16 %v2069, %v2053
        %v2806 = vpack.c.b16 %v2070, %v2054
        %v2807 = vpack.c.b16 %v2071, %v2055
        %v2808 = vpack.c.b16 %v2072, %v2056
        %v2809 = vpack.c.b16 %v2073, %v2057
        %v2810 = vpack.c.b16 %v2074, %v2058
        %v2811 = vpack.c.b16 %v2075, %v2059
        %v2812 = vpack.c.b16 %v2076, %v2060
        %v2813 = vpack.c.b16 %v2093, %v2077
        %v2814 = vpack.c.b16 %v2094, %v2078
        %v2815 = vpack.c.b16 %v2095, %v2079
        %v2816 = vpack.c.b16 %v2096, %v2080
        %v2817 = vpack.c.b16 %v2097, %v2081
        %v2818 = vpack.c.b16 %v2098, %v2082
        %v2819 = vpack.c.b16 %v2099, %v2083
        %v2820 = vpack.c.b16 %v2100, %v2084
        %v2821 = vpack.c.b16 %v2101, %v2085
        %v2822 = vpack.c.b16 %v2102, %v2086
        %v2823 = vpack.c.b16 %v2103, %v2087
        %v2824 = vpack.c.b16 %v2104, %v2088
        %v2825 = vpack.c.b16 %v2105, %v2089
        %v2826 = vpack.c.b16 %v2106, %v2090
        %v2827 = vpack.c.b16 %v2107, %v2091
        %v2828 = vpack.c.b16 %v2108, %v2092
        %v2829 = vpack.c.b16 %v2125, %v2109
        %v2830 = vpack.c.b16 %v2126, %v2110
        %v2831 = vpack.c.b16 %v2127, %v2111
        %v2832 = vpack.c.b16 %v2128, %v2112
        %v2833 = vpack.c.b16 %v2129, %v2113
        %v2834 = vpack.c.b16 %v2130, %v2114
        %v2835 = vpack.c.b16 %v2131, %v2115
        %v2836 = vpack.c.b16 %v2132, %v2116
        %v2837 = vpack.c.b16 %v2133, %v2117
        %v2838 = vpack.c.b16 %v2134, %v2118
        %v2839 = vpack.c.b16 %v2135, %v2119
        %v2840 = vpack.c.b16 %v2136, %v2120
        %v2841 = vpack.c.b16 %v2137, %v2121
        %v2842 = vpack.c.b16 %v2138, %v2122
        %v2843 = vpack.c.b16 %v2139, %v2123
        %v2844 = vpack.c.b16 %v2140, %v2124
        %v2845 = vpack.c.b16 %v2157, %v2141
        %v2846 = vpack.c.b16 %v2158, %v2142
        %v2847 = vpack.c.b16 %v2159, %v2143
        %v2848 = vpack.c.b16 %v2160, %v2144
        %v2849 = vpack.c.b16 %v2161, %v2145
        %v2850 = vpack.c.b16 %v2162, %v2146
        %v2851 = vpack.c.b16 %v2163, %v2147
        %v2852 = vpack.c.b16 %v2164, %v2148
        %v2853 = vpack.c.b16 %v2165, %v2149
        %v2854 = vpack.c.b16 %v2166, %v2150
        %v2855 = vpack.c.b16 %v2167, %v2151
        %v2856 = vpack.c.b16 %v2168, %v2152
        %v2857 = vpack.c.b16 %v2169, %v2153
        %v2858 = vpack.c.b16 %v2170, %v2154
        %v2859 = vpack.c.b16 %v2171, %v2155
        %v2860 = vpack.c.b16 %v2172, %v2156
        %v2861 = vpack.c.b16 %v2189, %v2173
        %v2862 = vpack.c.b16 %v2190, %v2174
        %v2863 = vpack.c.b16 %v2191, %v2175
        %v2864 = vpack.c.b16 %v2192, %v2176
        %v2865 = vpack.c.b16 %v2193, %v2177
        %v2866 = vpack.c.b16 %v2194, %v2178
        %v2867 = vpack.c.b16 %v2195, %v2179
        %v2868 = vpack.c.b16 %v2196, %v2180
        %v2869 = vpack.c.b16 %v2197, %v2181
        %v2870 = vpack.c.b16 %v2198, %v2182
        %v2871 = vpack.c.b16 %v2199, %v2183
        %v2872 = vpack.c.b16 %v2200, %v2184
        %v2873 = vpack.c.b16 %v2201, %v2185
        %v2874 = vpack.c.b16 %v2202, %v2186
        %v2875 = vpack.c.b16 %v2203, %v2187
        %v2876 = vpack.c.b16 %v2204, %v2188
        %v2877 = vpack.c.b16 %v2221, %v2205
        %v2878 = vpack.c.b16 %v2222, %v2206
        %v2879 = vpack.c.b16 %v2223, %v2207
        %v2880 = vpack.c.b16 %v2224, %v2208
        %v2881 = vpack.c.b16 %v2225, %v2209
        %v2882 = vpack.c.b16 %v2226, %v2210
        %v2883 = vpack.c.b16 %v2227, %v2211
        %v2884 = vpack.c.b16 %v2228, %v2212
        %v2885 = vpack.c.b16 %v2229, %v2213
        %v2886 = vpack.c.b16 %v2230, %v2214
        %v2887 = vpack.c.b16 %v2231, %v2215
        %v2888 = vpack.c.b16 %v2232, %v2216
        %v2889 = vpack.c.b16 %v2233, %v2217
        %v2890 = vpack.c.b16 %v2234, %v2218
        %v2891 = vpack.c.b16 %v2235, %v2219
        %v2892 = vpack.c.b16 %v2236, %v2220
        %v2893 = vpack.c.b16 %v2253, %v2237
        %v2894 = vpack.c.b16 %v2254, %v2238
        %v2895 = vpack.c.b16 %v2255, %v2239
        %v2896 = vpack.c.b16 %v2256, %v2240
        %v2897 = vpack.c.b16 %v2257, %v2241
        %v2898 = vpack.c.b16 %v2258, %v2242
        %v2899 = vpack.c.b16 %v2259, %v2243
        %v2900 = vpack.c.b16 %v2260, %v2244
        %v2901 = vpack.c.b16 %v2261, %v2245
        %v2902 = vpack.c.b16 %v2262, %v2246
        %v2903 = vpack.c.b16 %v2263, %v2247
        %v2904 = vpack.c.b16 %v2264, %v2248
        %v2905 = vpack.c.b16 %v2265, %v2249
        %v2906 = vpack.c.b16 %v2266, %v2250
        %v2907 = vpack.c.b16 %v2267, %v2251
        %v2908 = vpack.c.b16 %v2268, %v2252
        %v2909 = vpack.c.b16 %v2285, %v2269
        %v2910 = vpack.c.b16 %v2286, %v2270
        %v2911 = vpack.c.b16 %v2287, %v2271
        %v2912 = vpack.c.b16 %v2288, %v2272
        %v2913 = vpack.c.b16 %v2289, %v2273
        %v2914 = vpack.c.b16 %v2290, %v2274
        %v2915 = vpack.c.b16 %v2291, %v2275
        %v2916 = vpack.c.b16 %v2292, %v2276
        %v2917 = vpack.c.b16 %v2293, %v2277
        %v2918 = vpack.c.b16 %v2294, %v2278
        %v2919 = vpack.c.b16 %v2295, %v2279
        %v2920 = vpack.c.b16 %v2296, %v2280
        %v2921 = vpack.c.b16 %v2297, %v2281
        %v2922 = vpack.c.b16 %v2298, %v2282
        %v2923 = vpack.c.b16 %v2299, %v2283
        %v2924 = vpack.c.b16 %v2300, %v2284
        %v2925 = vpack.c.b16 %v2317, %v2301
        %v2926 = vpack.c.b16 %v2318, %v2302
        %v2927 = vpack.c.b16 %v2319, %v2303
        %v2928 = vpack.c.b16 %v2320, %v2304
        %v2929 = vpack.c.b16 %v2321, %v2305
        %v2930 = vpack.c.b16 %v2322, %v2306
        %v2931 = vpack.c.b16 %v2323, %v2307
        %v2932 = vpack.c.b16 %v2324, %v2308
        %v2933 = vpack.c.b16 %v2325, %v2309
        %v2934 = vpack.c.b16 %v2326, %v2310
        %v2935 = vpack.c.b16 %v2327, %v2311
        %v2936 = vpack.c.b16 %v2328, %v2312
        %v2937 = vpack.c.b16 %v2329, %v2313
        %v2938 = vpack.c.b16 %v2330, %v2314
        %v2939 = vpack.c.b16 %v2331, %v2315
        %v2940 = vpack.c.b16 %v2332, %v2316
        %v2941 = vpack.c.b16 %v2349, %v2333
        %v2942 = vpack.c.b16 %v2350, %v2334
        %v2943 = vpack.c.b16 %v2351, %v2335
        %v2944 = vpack.c.b16 %v2352, %v2336
        %v2945 = vpack.c.b16 %v2353, %v2337
        %v2946 = vpack.c.b16 %v2354, %v2338
        %v2947 = vpack.c.b16 %v2355, %v2339
        %v2948 = vpack.c.b16 %v2356, %v2340
        %v2949 = vpack.c.b16 %v2357, %v2341
        %v2950 = vpack.c.b16 %v2358, %v2342
        %v2951 = vpack.c.b16 %v2359, %v2343
        %v2952 = vpack.c.b16 %v2360, %v2344
        %v2953 = vpack.c.b16 %v2361, %v2345
        %v2954 = vpack.c.b16 %v2362, %v2346
        %v2955 = vpack.c.b16 %v2363, %v2347
        %v2956 = vpack.c.b16 %v2364, %v2348
        %v2957 = vpack.c.b16 %v2381, %v2365
        %v2958 = vpack.c.b16 %v2382, %v2366
        %v2959 = vpack.c.b16 %v2383, %v2367
        %v2960 = vpack.c.b16 %v2384, %v2368
        %v2961 = vpack.c.b16 %v2385, %v2369
        %v2962 = vpack.c.b16 %v2386, %v2370
        %v2963 = vpack.c.b16 %v2387, %v2371
        %v2964 = vpack.c.b16 %v2388, %v2372
        %v2965 = vpack.c.b16 %v2389, %v2373
        %v2966 = vpack.c.b16 %v2390, %v2374
        %v2967 = vpack.c.b16 %v2391, %v2375
        %v2968 = vpack.c.b16 %v2392, %v2376
        %v2969 = vpack.c.b16 %v2393, %v2377
        %v2970 = vpack.c.b16 %v2394, %v2378
        %v2971 = vpack.c.b16 %v2395, %v2379
        %v2972 = vpack.c.b16 %v2396, %v2380
        %v2973 = vpack.c.b16 %v2413, %v2397
        %v2974 = vpack.c.b16 %v2414, %v2398
        %v2975 = vpack.c.b16 %v2415, %v2399
        %v2976 = vpack.c.b16 %v2416, %v2400
        %v2977 = vpack.c.b16 %v2417, %v2401
        %v2978 = vpack.c.b16 %v2418, %v2402
        %v2979 = vpack.c.b16 %v2419, %v2403
        %v2980 = vpack.c.b16 %v2420, %v2404
        %v2981 = vpack.c.b16 %v2421, %v2405
        %v2982 = vpack.c.b16 %v2422, %v2406
        %v2983 = vpack.c.b16 %v2423, %v2407
        %v2984 = vpack.c.b16 %v2424, %v2408
        %v2985 = vpack.c.b16 %v2425, %v2409
        %v2986 = vpack.c.b16 %v2426, %v2410
        %v2987 = vpack.c.b16 %v2427, %v2411
        %v2988 = vpack.c.b16 %v2428, %v2412
        %v2989 = vpack.c.b16 %v2445, %v2429
        %v2990 = vpack.c.b16 %v2446, %v2430
        %v2991 = vpack.c.b16 %v2447, %v2431
        %v2992 = vpack.c.b16 %v2448, %v2432
        %v2993 = vpack.c.b16 %v2449, %v2433
        %v2994 = vpack.c.b16 %v2450, %v2434
        %v2995 = vpack.c.b16 %v2451, %v2435
        %v2996 = vpack.c.b16 %v2452, %v2436
        %v2997 = vpack.c.b16 %v2453, %v2437
        %v2998 = vpack.c.b16 %v2454, %v2438
        %v2999 = vpack.c.b16 %v2455, %v2439
        %v3000 = vpack.c.b16 %v2456, %v2440
        %v3001 = vpack.c.b16 %v2457, %v2441
        %v3002 = vpack.c.b16 %v2458, %v2442
        %v3003 = vpack.c.b16 %v2459, %v2443
        %v3004 = vpack.c.b16 %v2460, %v2444
        %v3005 = vpack.c.b16 %v2477, %v2461
        %v3006 = vpack.c.b16 %v2478, %v2462
        %v3007 = vpack.c.b16 %v2479, %v2463
        %v3008 = vpack.c.b16 %v2480, %v2464
        %v3009 = vpack.c.b16 %v2481, %v2465
        %v3010 = vpack.c.b16 %v2482, %v2466
        %v3011 = vpack.c.b16 %v2483, %v2467
        %v3012 = vpack.c.b16 %v2484, %v2468
        %v3013 = vpack.c.b16 %v2485, %v2469
        %v3014 = vpack.c.b16 %v2486, %v2470
        %v3015 = vpack.c.b16 %v2487, %v2471
        %v3016 = vpack.c.b16 %v2488, %v2472
        %v3017 = vpack.c.b16 %v2489, %v2473
        %v3018 = vpack.c.b16 %v2490, %v2474
        %v3019 = vpack.c.b16 %v2491, %v2475
        %v3020 = vpack.c.b16 %v2492, %v2476
        %v3021 = vpack.c.b16 %v2509, %v2493
        %v3022 = vpack.c.b16 %v2510, %v2494
        %v3023 = vpack.c.b16 %v2511, %v2495
        %v3024 = vpack.c.b16 %v2512, %v2496
        %v3025 = vpack.c.b16 %v2513, %v2497
        %v3026 = vpack.c.b16 %v2514, %v2498
        %v3027 = vpack.c.b16 %v2515, %v2499
        %v3028 = vpack.c.b16 %v2516, %v2500
        %v3029 = vpack.c.b16 %v2517, %v2501
        %v3030 = vpack.c.b16 %v2518, %v2502
        %v3031 = vpack.c.b16 %v2519, %v2503
        %v3032 = vpack.c.b16 %v2520, %v2504
        %v3033 = vpack.c.b16 %v2521, %v2505
        %v3034 = vpack.c.b16 %v2522, %v2506
        %v3035 = vpack.c.b16 %v2523, %v2507
        %v3036 = vpack.c.b16 %v2524, %v2508
        %3549 = vmatprep.subr.bf16.mxu0 %v2526
        %3550 = vmatpush1.bf16.msra.mxu0 %v2525
        %3551 = vmatprep.subr.bf16.mxu0 %v2542
        %3552 = vmatpush1.bf16.msra.mxu0 %v2541
        %3553 = vmatprep.subr.bf16.mxu0 %v2558
        %3554 = vmatpush1.bf16.msra.mxu0 %v2557
        %3555 = vmatprep.subr.bf16.mxu0 %v2574
        %3556 = vmatpush1.bf16.msra.mxu0 %v2573
        %3557 = vmatprep.subr.bf16.mxu0 %v2590
        %3558 = vmatpush1.bf16.msra.mxu0 %v2589
        %3559 = vmatprep.subr.bf16.mxu0 %v2606
        %3560 = vmatpush1.bf16.msra.mxu0 %v2605
        %3561 = vmatprep.subr.bf16.mxu0 %v2622
        %3562 = vmatpush1.bf16.msra.mxu0 %v2621
        %3563 = vmatprep.subr.bf16.mxu0 %v2638
        %3564 = vmatpush1.bf16.msra.mxu0 %v2637
        %3565 = vmatprep.subr.bf16.mxu0 %v2654
        %3566 = vmatpush1.bf16.msra.mxu0 %v2653
        %3567 = vmatprep.subr.bf16.mxu0 %v2670
        %3568 = vmatpush1.bf16.msra.mxu0 %v2669
        %3569 = vmatprep.subr.bf16.mxu0 %v2686
        %3570 = vmatpush1.bf16.msra.mxu0 %v2685
        %3571 = vmatprep.subr.bf16.mxu0 %v2702
        %3572 = vmatpush1.bf16.msra.mxu0 %v2701
        %3573 = vmatprep.subr.bf16.mxu0 %v2718
        %3574 = vmatpush1.bf16.msra.mxu0 %v2717
        %3575 = vmatprep.subr.bf16.mxu0 %v2734
        %3576 = vmatpush1.bf16.msra.mxu0 %v2733
        %3577 = vmatprep.subr.bf16.mxu0 %v2750
        %3578 = vmatpush1.bf16.msra.mxu0 %v2749
        %3579 = vmatprep.subr.bf16.mxu0 %v2766
        %3580 = vmatpush1.bf16.msra.mxu0 %v2765
        %3581 = vmatprep.mubr.bf16.mxu0 %v974
        %3582 = vmatmul.mubr.bf16.gmra.mrb[0].mxu0 %v973
        %v3583 = vpop.f32.mrb[0].mxu0
        %v3584 = vadd.f32 0.0, %v3583
        %v3585 = vpop.f32.mrb[0].mxu0
        %v3586 = vadd.f32 0.0, %v3585
        %v3587 = vpop.f32.mrb[0].mxu0
        %v3588 = vadd.f32 0.0, %v3587
        %v3589 = vpop.f32.mrb[0].mxu0
        %v3590 = vadd.f32 0.0, %v3589
        %3591 = vmatprep.mubr.bf16.mxu0 %v978
        %3592 = vmatmul.mubr.bf16.gmra.mrb[0].mxu0 %v977
        %v3593 = vpop.f32.mrb[0].mxu0
        %v3594 = vadd.f32 0.0, %v3593
        %v3595 = vpop.f32.mrb[0].mxu0
        %v3596 = vadd.f32 0.0, %v3595
        %v3597 = vpop.f32.mrb[0].mxu0
        %v3598 = vpop.f32.mrb[0].mxu0
        %3599 = vdwg.mxu0
        %3600 = vmatprep.subr.bf16.mxu0 %v2782
        %3601 = vmatpush1.bf16.msra.mxu0 %v2781
        %3602 = vmatprep.subr.bf16.mxu0 %v2798
        %3603 = vmatpush1.bf16.msra.mxu0 %v2797
        %3604 = vmatprep.subr.bf16.mxu0 %v2814
        %3605 = vmatpush1.bf16.msra.mxu0 %v2813
        %3606 = vmatprep.subr.bf16.mxu0 %v2830
        %3607 = vmatpush1.bf16.msra.mxu0 %v2829
        %3608 = vmatprep.subr.bf16.mxu0 %v2846
        %3609 = vmatpush1.bf16.msra.mxu0 %v2845
        %3610 = vmatprep.subr.bf16.mxu0 %v2862
        %3611 = vmatpush1.bf16.msra.mxu0 %v2861
        %3612 = vmatprep.subr.bf16.mxu0 %v2878
        %3613 = vmatpush1.bf16.msra.mxu0 %v2877
        %3614 = vmatprep.subr.bf16.mxu0 %v2894
        %3615 = vmatpush1.bf16.msra.mxu0 %v2893
        %3616 = vmatprep.subr.bf16.mxu0 %v2910
        %3617 = vmatpush1.bf16.msra.mxu0 %v2909
        %3618 = vmatprep.subr.bf16.mxu0 %v2926
        %3619 = vmatpush1.bf16.msra.mxu0 %v2925
        %3620 = vmatprep.subr.bf16.mxu0 %v2942
        %3621 = vmatpush1.bf16.msra.mxu0 %v2941
        %3622 = vmatprep.subr.bf16.mxu0 %v2958
        %3623 = vmatpush1.bf16.msra.mxu0 %v2957
        %3624 = vmatprep.subr.bf16.mxu0 %v2974
        %3625 = vmatpush1.bf16.msra.mxu0 %v2973
        %3626 = vmatprep.subr.bf16.mxu0 %v2990
        %3627 = vmatpush1.bf16.msra.mxu0 %v2989
        %3628 = vmatprep.subr.bf16.mxu0 %v3006
        %3629 = vmatpush1.bf16.msra.mxu0 %v3005
        %3630 = vmatprep.subr.bf16.mxu0 %v3022
        %3631 = vmatpush1.bf16.msra.mxu0 %v3021
        %3632 = vmatprep.mubr.bf16.mxu0 %v976
        %3633 = vmatmul.mubr.bf16.gmra.mrb[0].mxu0 %v975
        %v3634 = vpop.f32.mrb[0].mxu0
        %v3635 = vadd.f32 %v3584, %v3634
        %v3636 = vpop.f32.mrb[0].mxu0
        %v3637 = vadd.f32 %v3586, %v3636
        %v3638 = vpop.f32.mrb[0].mxu0
        %v3639 = vadd.f32 %v3588, %v3638
        %v3640 = vpop.f32.mrb[0].mxu0
        %v3641 = vadd.f32 %v3590, %v3640
        %3642 = vmatprep.mubr.bf16.mxu0 %v980
        %3643 = vmatmul.mubr.bf16.gmra.mrb[0].mxu0 %v979
        %v3644 = vpop.f32.mrb[0].mxu0
        %v3645 = vadd.f32 %v3594, %v3644
        %v3646 = vpop.f32.mrb[0].mxu0
        %v3647 = vadd.f32 %v3596, %v3646
        %v3648 = vpop.f32.mrb[0].mxu0
        %v3649 = vpop.f32.mrb[0].mxu0
        %3650 = vdwg.mxu0
        %3651 = vmatprep.subr.bf16.mxu0 %v2528
        %3652 = vmatpush1.bf16.msra.mxu0 %v2527
        %3653 = vmatprep.subr.bf16.mxu0 %v2544
        %3654 = vmatpush1.bf16.msra.mxu0 %v2543
        %3655 = vmatprep.subr.bf16.mxu0 %v2560
        %3656 = vmatpush1.bf16.msra.mxu0 %v2559
        %3657 = vmatprep.subr.bf16.mxu0 %v2576
        %3658 = vmatpush1.bf16.msra.mxu0 %v2575
        %3659 = vmatprep.subr.bf16.mxu0 %v2592
        %3660 = vmatpush1.bf16.msra.mxu0 %v2591
        %3661 = vmatprep.subr.bf16.mxu0 %v2608
        %3662 = vmatpush1.bf16.msra.mxu0 %v2607
        %3663 = vmatprep.subr.bf16.mxu0 %v2624
        %3664 = vmatpush1.bf16.msra.mxu0 %v2623
        %3665 = vmatprep.subr.bf16.mxu0 %v2640
        %3666 = vmatpush1.bf16.msra.mxu0 %v2639
        %3667 = vmatprep.subr.bf16.mxu0 %v2656
        %3668 = vmatpush1.bf16.msra.mxu0 %v2655
        %3669 = vmatprep.subr.bf16.mxu0 %v2672
        %3670 = vmatpush1.bf16.msra.mxu0 %v2671
        %3671 = vmatprep.subr.bf16.mxu0 %v2688
        %3672 = vmatpush1.bf16.msra.mxu0 %v2687
        %3673 = vmatprep.subr.bf16.mxu0 %v2704
        %3674 = vmatpush1.bf16.msra.mxu0 %v2703
        %3675 = vmatprep.subr.bf16.mxu0 %v2720
        %3676 = vmatpush1.bf16.msra.mxu0 %v2719
        %3677 = vmatprep.subr.bf16.mxu0 %v2736
        %3678 = vmatpush1.bf16.msra.mxu0 %v2735
        %3679 = vmatprep.subr.bf16.mxu0 %v2752
        %3680 = vmatpush1.bf16.msra.mxu0 %v2751
        %3681 = vmatprep.subr.bf16.mxu0 %v2768
        %3682 = vmatpush1.bf16.msra.mxu0 %v2767
        %3683 = vmatprep.mubr.bf16.mxu0 %v974
        %3684 = vmatmul.mubr.bf16.gmra.mrb[0].mxu0 %v973
        %v3685 = vpop.f32.mrb[0].mxu0
        %v3686 = vadd.f32 0.0, %v3685
        %v3687 = vpop.f32.mrb[0].mxu0
        %v3688 = vadd.f32 0.0, %v3687
        %v3689 = vpop.f32.mrb[0].mxu0
        %v3690 = vadd.f32 0.0, %v3689
        %v3691 = vpop.f32.mrb[0].mxu0
        %v3692 = vadd.f32 0.0, %v3691
        %3693 = vmatprep.mubr.bf16.mxu0 %v978
        %3694 = vmatmul.mubr.bf16.gmra.mrb[0].mxu0 %v977
        %v3695 = vpop.f32.mrb[0].mxu0
        %v3696 = vadd.f32 0.0, %v3695
        %v3697 = vpop.f32.mrb[0].mxu0
        %v3698 = vadd.f32 0.0, %v3697
        %v3699 = vpop.f32.mrb[0].mxu0
        %v3700 = vpop.f32.mrb[0].mxu0
        %3701 = vdwg.mxu0
        %3702 = vmatprep.subr.bf16.mxu0 %v2784
        %3703 = vmatpush1.bf16.msra.mxu0 %v2783
        %3704 = vmatprep.subr.bf16.mxu0 %v2800
        %3705 = vmatpush1.bf16.msra.mxu0 %v2799
        %3706 = vmatprep.subr.bf16.mxu0 %v2816
        %3707 = vmatpush1.bf16.msra.mxu0 %v2815
        %3708 = vmatprep.subr.bf16.mxu0 %v2832
        %3709 = vmatpush1.bf16.msra.mxu0 %v2831
        %3710 = vmatprep.subr.bf16.mxu0 %v2848
        %3711 = vmatpush1.bf16.msra.mxu0 %v2847
        %3712 = vmatprep.subr.bf16.mxu0 %v2864
        %3713 = vmatpush1.bf16.msra.mxu0 %v2863
        %3714 = vmatprep.subr.bf16.mxu0 %v2880
        %3715 = vmatpush1.bf16.msra.mxu0 %v2879
        %3716 = vmatprep.subr.bf16.mxu0 %v2896
        %3717 = vmatpush1.bf16.msra.mxu0 %v2895
        %3718 = vmatprep.subr.bf16.mxu0 %v2912
        %3719 = vmatpush1.bf16.msra.mxu0 %v2911
        %3720 = vmatprep.subr.bf16.mxu0 %v2928
        %3721 = vmatpush1.bf16.msra.mxu0 %v2927
        %3722 = vmatprep.subr.bf16.mxu0 %v2944
        %3723 = vmatpush1.bf16.msra.mxu0 %v2943
        %3724 = vmatprep.subr.bf16.mxu0 %v2960
        %3725 = vmatpush1.bf16.msra.mxu0 %v2959
        %3726 = vmatprep.subr.bf16.mxu0 %v2976
        %3727 = vmatpush1.bf16.msra.mxu0 %v2975
        %3728 = vmatprep.subr.bf16.mxu0 %v2992
        %3729 = vmatpush1.bf16.msra.mxu0 %v2991
        %3730 = vmatprep.subr.bf16.mxu0 %v3008
        %3731 = vmatpush1.bf16.msra.mxu0 %v3007
        %3732 = vmatprep.subr.bf16.mxu0 %v3024
        %3733 = vmatpush1.bf16.msra.mxu0 %v3023
        %3734 = vmatprep.mubr.bf16.mxu0 %v976
        %3735 = vmatmul.mubr.bf16.gmra.mrb[0].mxu0 %v975
        %v3736 = vpop.f32.mrb[0].mxu0
        %v3737 = vadd.f32 %v3686, %v3736
        %v3738 = vpop.f32.mrb[0].mxu0
        %v3739 = vadd.f32 %v3688, %v3738
        %v3740 = vpop.f32.mrb[0].mxu0
        %v3741 = vadd.f32 %v3690, %v3740
        %v3742 = vpop.f32.mrb[0].mxu0
        %v3743 = vadd.f32 %v3692, %v3742
        %3744 = vmatprep.mubr.bf16.mxu0 %v980
        %3745 = vmatmul.mubr.bf16.gmra.mrb[0].mxu0 %v979
        %v3746 = vpop.f32.mrb[0].mxu0
        %v3747 = vadd.f32 %v3696, %v3746
        %v3748 = vpop.f32.mrb[0].mxu0
        %v3749 = vadd.f32 %v3698, %v3748
        %v3750 = vpop.f32.mrb[0].mxu0
        %v3751 = vpop.f32.mrb[0].mxu0
        %3752 = vdwg.mxu0
        %3753 = vmatprep.subr.bf16.mxu0 %v2530
        %3754 = vmatpush1.bf16.msra.mxu0 %v2529
        %3755 = vmatprep.subr.bf16.mxu0 %v2546
        %3756 = vmatpush1.bf16.msra.mxu0 %v2545
        %3757 = vmatprep.subr.bf16.mxu0 %v2562
        %3758 = vmatpush1.bf16.msra.mxu0 %v2561
        %3759 = vmatprep.subr.bf16.mxu0 %v2578
        %3760 = vmatpush1.bf16.msra.mxu0 %v2577
        %3761 = vmatprep.subr.bf16.mxu0 %v2594
        %3762 = vmatpush1.bf16.msra.mxu0 %v2593
        %3763 = vmatprep.subr.bf16.mxu0 %v2610
        %3764 = vmatpush1.bf16.msra.mxu0 %v2609
        %3765 = vmatprep.subr.bf16.mxu0 %v2626
        %3766 = vmatpush1.bf16.msra.mxu0 %v2625
        %3767 = vmatprep.subr.bf16.mxu0 %v2642
        %3768 = vmatpush1.bf16.msra.mxu0 %v2641
        %3769 = vmatprep.subr.bf16.mxu0 %v2658
        %3770 = vmatpush1.bf16.msra.mxu0 %v2657
        %3771 = vmatprep.subr.bf16.mxu0 %v2674
        %3772 = vmatpush1.bf16.msra.mxu0 %v2673
        %3773 = vmatprep.subr.bf16.mxu0 %v2690
        %3774 = vmatpush1.bf16.msra.mxu0 %v2689
        %3775 = vmatprep.subr.bf16.mxu0 %v2706
        %3776 = vmatpush1.bf16.msra.mxu0 %v2705
        %3777 = vmatprep.subr.bf16.mxu0 %v2722
        %3778 = vmatpush1.bf16.msra.mxu0 %v2721
        %3779 = vmatprep.subr.bf16.mxu0 %v2738
        %3780 = vmatpush1.bf16.msra.mxu0 %v2737
        %3781 = vmatprep.subr.bf16.mxu0 %v2754
        %3782 = vmatpush1.bf16.msra.mxu0 %v2753
        %3783 = vmatprep.subr.bf16.mxu0 %v2770
        %3784 = vmatpush1.bf16.msra.mxu0 %v2769
        %3785 = vmatprep.mubr.bf16.mxu0 %v974
        %3786 = vmatmul.mubr.bf16.gmra.mrb[0].mxu0 %v973
        %v3787 = vpop.f32.mrb[0].mxu0
        %v3788 = vadd.f32 0.0, %v3787
        %v3789 = vpop.f32.mrb[0].mxu0
        %v3790 = vadd.f32 0.0, %v3789
        %v3791 = vpop.f32.mrb[0].mxu0
        %v3792 = vadd.f32 0.0, %v3791
        %v3793 = vpop.f32.mrb[0].mxu0
        %v3794 = vadd.f32 0.0, %v3793
        %3795 = vmatprep.mubr.bf16.mxu0 %v978
        %3796 = vmatmul.mubr.bf16.gmra.mrb[0].mxu0 %v977
        %v3797 = vpop.f32.mrb[0].mxu0
        %v3798 = vadd.f32 0.0, %v3797
        %v3799 = vpop.f32.mrb[0].mxu0
        %v3800 = vadd.f32 0.0, %v3799
        %v3801 = vpop.f32.mrb[0].mxu0
        %v3802 = vpop.f32.mrb[0].mxu0
        %3803 = vdwg.mxu0
        %3804 = vmatprep.subr.bf16.mxu0 %v2786
        %3805 = vmatpush1.bf16.msra.mxu0 %v2785
        %3806 = vmatprep.subr.bf16.mxu0 %v2802
        %3807 = vmatpush1.bf16.msra.mxu0 %v2801
        %3808 = vmatprep.subr.bf16.mxu0 %v2818
        %3809 = vmatpush1.bf16.msra.mxu0 %v2817
        %3810 = vmatprep.subr.bf16.mxu0 %v2834
        %3811 = vmatpush1.bf16.msra.mxu0 %v2833
        %3812 = vmatprep.subr.bf16.mxu0 %v2850
        %3813 = vmatpush1.bf16.msra.mxu0 %v2849
        %3814 = vmatprep.subr.bf16.mxu0 %v2866
        %3815 = vmatpush1.bf16.msra.mxu0 %v2865
        %3816 = vmatprep.subr.bf16.mxu0 %v2882
        %3817 = vmatpush1.bf16.msra.mxu0 %v2881
        %3818 = vmatprep.subr.bf16.mxu0 %v2898
        %3819 = vmatpush1.bf16.msra.mxu0 %v2897
        %3820 = vmatprep.subr.bf16.mxu0 %v2914
        %3821 = vmatpush1.bf16.msra.mxu0 %v2913
        %3822 = vmatprep.subr.bf16.mxu0 %v2930
        %3823 = vmatpush1.bf16.msra.mxu0 %v2929
        %3824 = vmatprep.subr.bf16.mxu0 %v2946
        %3825 = vmatpush1.bf16.msra.mxu0 %v2945
        %3826 = vmatprep.subr.bf16.mxu0 %v2962
        %3827 = vmatpush1.bf16.msra.mxu0 %v2961
        %3828 = vmatprep.subr.bf16.mxu0 %v2978
        %3829 = vmatpush1.bf16.msra.mxu0 %v2977
        %3830 = vmatprep.subr.bf16.mxu0 %v2994
        %3831 = vmatpush1.bf16.msra.mxu0 %v2993
        %3832 = vmatprep.subr.bf16.mxu0 %v3010
        %3833 = vmatpush1.bf16.msra.mxu0 %v3009
        %3834 = vmatprep.subr.bf16.mxu0 %v3026
        %3835 = vmatpush1.bf16.msra.mxu0 %v3025
        %3836 = vmatprep.mubr.bf16.mxu0 %v976
        %3837 = vmatmul.mubr.bf16.gmra.mrb[0].mxu0 %v975
        %v3838 = vpop.f32.mrb[0].mxu0
        %v3839 = vadd.f32 %v3788, %v3838
        %v3840 = vpop.f32.mrb[0].mxu0
        %v3841 = vadd.f32 %v3790, %v3840
        %v3842 = vpop.f32.mrb[0].mxu0
        %v3843 = vadd.f32 %v3792, %v3842
        %v3844 = vpop.f32.mrb[0].mxu0
        %v3845 = vadd.f32 %v3794, %v3844
        %3846 = vmatprep.mubr.bf16.mxu0 %v980
        %3847 = vmatmul.mubr.bf16.gmra.mrb[0].mxu0 %v979
        %v3848 = vpop.f32.mrb[0].mxu0
        %v3849 = vadd.f32 %v3798, %v3848
        %v3850 = vpop.f32.mrb[0].mxu0
        %v3851 = vadd.f32 %v3800, %v3850
        %v3852 = vpop.f32.mrb[0].mxu0
        %v3853 = vpop.f32.mrb[0].mxu0
        %3854 = vdwg.mxu0
        %3855 = vmatprep.subr.bf16.mxu0 %v2532
        %3856 = vmatpush1.bf16.msra.mxu0 %v2531
        %3857 = vmatprep.subr.bf16.mxu0 %v2548
        %3858 = vmatpush1.bf16.msra.mxu0 %v2547
        %3859 = vmatprep.subr.bf16.mxu0 %v2564
        %3860 = vmatpush1.bf16.msra.mxu0 %v2563
        %3861 = vmatprep.subr.bf16.mxu0 %v2580
        %3862 = vmatpush1.bf16.msra.mxu0 %v2579
        %3863 = vmatprep.subr.bf16.mxu0 %v2596
        %3864 = vmatpush1.bf16.msra.mxu0 %v2595
        %3865 = vmatprep.subr.bf16.mxu0 %v2612
        %3866 = vmatpush1.bf16.msra.mxu0 %v2611
        %3867 = vmatprep.subr.bf16.mxu0 %v2628
        %3868 = vmatpush1.bf16.msra.mxu0 %v2627
        %3869 = vmatprep.subr.bf16.mxu0 %v2644
        %3870 = vmatpush1.bf16.msra.mxu0 %v2643
        %3871 = vmatprep.subr.bf16.mxu0 %v2660
        %3872 = vmatpush1.bf16.msra.mxu0 %v2659
        %3873 = vmatprep.subr.bf16.mxu0 %v2676
        %3874 = vmatpush1.bf16.msra.mxu0 %v2675
        %3875 = vmatprep.subr.bf16.mxu0 %v2692
        %3876 = vmatpush1.bf16.msra.mxu0 %v2691
        %3877 = vmatprep.subr.bf16.mxu0 %v2708
        %3878 = vmatpush1.bf16.msra.mxu0 %v2707
        %3879 = vmatprep.subr.bf16.mxu0 %v2724
        %3880 = vmatpush1.bf16.msra.mxu0 %v2723
        %3881 = vmatprep.subr.bf16.mxu0 %v2740
        %3882 = vmatpush1.bf16.msra.mxu0 %v2739
        %3883 = vmatprep.subr.bf16.mxu0 %v2756
        %3884 = vmatpush1.bf16.msra.mxu0 %v2755
        %3885 = vmatprep.subr.bf16.mxu0 %v2772
        %3886 = vmatpush1.bf16.msra.mxu0 %v2771
        %3887 = vmatprep.mubr.bf16.mxu0 %v974
        %3888 = vmatmul.mubr.bf16.gmra.mrb[0].mxu0 %v973
        %v3889 = vpop.f32.mrb[0].mxu0
        %v3890 = vadd.f32 0.0, %v3889
        %v3891 = vpop.f32.mrb[0].mxu0
        %v3892 = vadd.f32 0.0, %v3891
        %v3893 = vpop.f32.mrb[0].mxu0
        %v3894 = vadd.f32 0.0, %v3893
        %v3895 = vpop.f32.mrb[0].mxu0
        %v3896 = vadd.f32 0.0, %v3895
        %3897 = vmatprep.mubr.bf16.mxu0 %v978
        %3898 = vmatmul.mubr.bf16.gmra.mrb[0].mxu0 %v977
        %v3899 = vpop.f32.mrb[0].mxu0
        %v3900 = vadd.f32 0.0, %v3899
        %v3901 = vpop.f32.mrb[0].mxu0
        %v3902 = vadd.f32 0.0, %v3901
        %v3903 = vpop.f32.mrb[0].mxu0
        %v3904 = vpop.f32.mrb[0].mxu0
        %3905 = vdwg.mxu0
        %3906 = vmatprep.subr.bf16.mxu0 %v2788
        %3907 = vmatpush1.bf16.msra.mxu0 %v2787
        %3908 = vmatprep.subr.bf16.mxu0 %v2804
        %3909 = vmatpush1.bf16.msra.mxu0 %v2803
        %3910 = vmatprep.subr.bf16.mxu0 %v2820
        %3911 = vmatpush1.bf16.msra.mxu0 %v2819
        %3912 = vmatprep.subr.bf16.mxu0 %v2836
        %3913 = vmatpush1.bf16.msra.mxu0 %v2835
        %3914 = vmatprep.subr.bf16.mxu0 %v2852
        %3915 = vmatpush1.bf16.msra.mxu0 %v2851
        %3916 = vmatprep.subr.bf16.mxu0 %v2868
        %3917 = vmatpush1.bf16.msra.mxu0 %v2867
        %3918 = vmatprep.subr.bf16.mxu0 %v2884
        %3919 = vmatpush1.bf16.msra.mxu0 %v2883
        %3920 = vmatprep.subr.bf16.mxu0 %v2900
        %3921 = vmatpush1.bf16.msra.mxu0 %v2899
        %3922 = vmatprep.subr.bf16.mxu0 %v2916
        %3923 = vmatpush1.bf16.msra.mxu0 %v2915
        %3924 = vmatprep.subr.bf16.mxu0 %v2932
        %3925 = vmatpush1.bf16.msra.mxu0 %v2931
        %3926 = vmatprep.subr.bf16.mxu0 %v2948
        %3927 = vmatpush1.bf16.msra.mxu0 %v2947
        %3928 = vmatprep.subr.bf16.mxu0 %v2964
        %3929 = vmatpush1.bf16.msra.mxu0 %v2963
        %3930 = vmatprep.subr.bf16.mxu0 %v2980
        %3931 = vmatpush1.bf16.msra.mxu0 %v2979
        %3932 = vmatprep.subr.bf16.mxu0 %v2996
        %3933 = vmatpush1.bf16.msra.mxu0 %v2995
        %3934 = vmatprep.subr.bf16.mxu0 %v3012
        %3935 = vmatpush1.bf16.msra.mxu0 %v3011
        %3936 = vmatprep.subr.bf16.mxu0 %v3028
        %3937 = vmatpush1.bf16.msra.mxu0 %v3027
        %3938 = vmatprep.mubr.bf16.mxu0 %v976
        %3939 = vmatmul.mubr.bf16.gmra.mrb[0].mxu0 %v975
        %v3940 = vpop.f32.mrb[0].mxu0
        %v3941 = vadd.f32 %v3890, %v3940
        %v3942 = vpop.f32.mrb[0].mxu0
        %v3943 = vadd.f32 %v3892, %v3942
        %v3944 = vpop.f32.mrb[0].mxu0
        %v3945 = vadd.f32 %v3894, %v3944
        %v3946 = vpop.f32.mrb[0].mxu0
        %v3947 = vadd.f32 %v3896, %v3946
        %3948 = vmatprep.mubr.bf16.mxu0 %v980
        %3949 = vmatmul.mubr.bf16.gmra.mrb[0].mxu0 %v979
        %v3950 = vpop.f32.mrb[0].mxu0
        %v3951 = vadd.f32 %v3900, %v3950
        %v3952 = vpop.f32.mrb[0].mxu0
        %v3953 = vadd.f32 %v3902, %v3952
        %v3954 = vpop.f32.mrb[0].mxu0
        %v3955 = vpop.f32.mrb[0].mxu0
        %3956 = vdwg.mxu0
        %3957 = vmatprep.subr.bf16.mxu0 %v2534
        %3958 = vmatpush1.bf16.msra.mxu0 %v2533
        %3959 = vmatprep.subr.bf16.mxu0 %v2550
        %3960 = vmatpush1.bf16.msra.mxu0 %v2549
        %3961 = vmatprep.subr.bf16.mxu0 %v2566
        %3962 = vmatpush1.bf16.msra.mxu0 %v2565
        %3963 = vmatprep.subr.bf16.mxu0 %v2582
        %3964 = vmatpush1.bf16.msra.mxu0 %v2581
        %3965 = vmatprep.subr.bf16.mxu0 %v2598
        %3966 = vmatpush1.bf16.msra.mxu0 %v2597
        %3967 = vmatprep.subr.bf16.mxu0 %v2614
        %3968 = vmatpush1.bf16.msra.mxu0 %v2613
        %3969 = vmatprep.subr.bf16.mxu0 %v2630
        %3970 = vmatpush1.bf16.msra.mxu0 %v2629
        %3971 = vmatprep.subr.bf16.mxu0 %v2646
        %3972 = vmatpush1.bf16.msra.mxu0 %v2645
        %3973 = vmatprep.subr.bf16.mxu0 %v2662
        %3974 = vmatpush1.bf16.msra.mxu0 %v2661
        %3975 = vmatprep.subr.bf16.mxu0 %v2678
        %3976 = vmatpush1.bf16.msra.mxu0 %v2677
        %3977 = vmatprep.subr.bf16.mxu0 %v2694
        %3978 = vmatpush1.bf16.msra.mxu0 %v2693
        %3979 = vmatprep.subr.bf16.mxu0 %v2710
        %3980 = vmatpush1.bf16.msra.mxu0 %v2709
        %3981 = vmatprep.subr.bf16.mxu0 %v2726
        %3982 = vmatpush1.bf16.msra.mxu0 %v2725
        %3983 = vmatprep.subr.bf16.mxu0 %v2742
        %3984 = vmatpush1.bf16.msra.mxu0 %v2741
        %3985 = vmatprep.subr.bf16.mxu0 %v2758
        %3986 = vmatpush1.bf16.msra.mxu0 %v2757
        %3987 = vmatprep.subr.bf16.mxu0 %v2774
        %3988 = vmatpush1.bf16.msra.mxu0 %v2773
        %3989 = vmatprep.mubr.bf16.mxu0 %v974
        %3990 = vmatmul.mubr.bf16.gmra.mrb[0].mxu0 %v973
        %v3991 = vpop.f32.mrb[0].mxu0
        %v3992 = vadd.f32 0.0, %v3991
        %v3993 = vpop.f32.mrb[0].mxu0
        %v3994 = vadd.f32 0.0, %v3993
        %v3995 = vpop.f32.mrb[0].mxu0
        %v3996 = vadd.f32 0.0, %v3995
        %v3997 = vpop.f32.mrb[0].mxu0
        %v3998 = vadd.f32 0.0, %v3997
        %3999 = vmatprep.mubr.bf16.mxu0 %v978
        %4000 = vmatmul.mubr.bf16.gmra.mrb[0].mxu0 %v977
        %v4001 = vpop.f32.mrb[0].mxu0
        %v4002 = vadd.f32 0.0, %v4001
        %v4003 = vpop.f32.mrb[0].mxu0
        %v4004 = vadd.f32 0.0, %v4003
        %v4005 = vpop.f32.mrb[0].mxu0
        %v4006 = vpop.f32.mrb[0].mxu0
        %4007 = vdwg.mxu0
        %4008 = vmatprep.subr.bf16.mxu0 %v2790
        %4009 = vmatpush1.bf16.msra.mxu0 %v2789
        %4010 = vmatprep.subr.bf16.mxu0 %v2806
        %4011 = vmatpush1.bf16.msra.mxu0 %v2805
        %4012 = vmatprep.subr.bf16.mxu0 %v2822
        %4013 = vmatpush1.bf16.msra.mxu0 %v2821
        %4014 = vmatprep.subr.bf16.mxu0 %v2838
        %4015 = vmatpush1.bf16.msra.mxu0 %v2837
        %4016 = vmatprep.subr.bf16.mxu0 %v2854
        %4017 = vmatpush1.bf16.msra.mxu0 %v2853
        %4018 = vmatprep.subr.bf16.mxu0 %v2870
        %4019 = vmatpush1.bf16.msra.mxu0 %v2869
        %4020 = vmatprep.subr.bf16.mxu0 %v2886
        %4021 = vmatpush1.bf16.msra.mxu0 %v2885
        %4022 = vmatprep.subr.bf16.mxu0 %v2902
        %4023 = vmatpush1.bf16.msra.mxu0 %v2901
        %4024 = vmatprep.subr.bf16.mxu0 %v2918
        %4025 = vmatpush1.bf16.msra.mxu0 %v2917
        %4026 = vmatprep.subr.bf16.mxu0 %v2934
        %4027 = vmatpush1.bf16.msra.mxu0 %v2933
        %4028 = vmatprep.subr.bf16.mxu0 %v2950
        %4029 = vmatpush1.bf16.msra.mxu0 %v2949
        %4030 = vmatprep.subr.bf16.mxu0 %v2966
        %4031 = vmatpush1.bf16.msra.mxu0 %v2965
        %4032 = vmatprep.subr.bf16.mxu0 %v2982
        %4033 = vmatpush1.bf16.msra.mxu0 %v2981
        %4034 = vmatprep.subr.bf16.mxu0 %v2998
        %4035 = vmatpush1.bf16.msra.mxu0 %v2997
        %4036 = vmatprep.subr.bf16.mxu0 %v3014
        %4037 = vmatpush1.bf16.msra.mxu0 %v3013
        %4038 = vmatprep.subr.bf16.mxu0 %v3030
        %4039 = vmatpush1.bf16.msra.mxu0 %v3029
        %4040 = vmatprep.mubr.bf16.mxu0 %v976
        %4041 = vmatmul.mubr.bf16.gmra.mrb[0].mxu0 %v975
        %v4042 = vpop.f32.mrb[0].mxu0
        %v4043 = vadd.f32 %v3992, %v4042
        %v4044 = vpop.f32.mrb[0].mxu0
        %v4045 = vadd.f32 %v3994, %v4044
        %v4046 = vpop.f32.mrb[0].mxu0
        %v4047 = vadd.f32 %v3996, %v4046
        %v4048 = vpop.f32.mrb[0].mxu0
        %v4049 = vadd.f32 %v3998, %v4048
        %4050 = vmatprep.mubr.bf16.mxu0 %v980
        %4051 = vmatmul.mubr.bf16.gmra.mrb[0].mxu0 %v979
        %v4052 = vpop.f32.mrb[0].mxu0
        %v4053 = vadd.f32 %v4002, %v4052
        %v4054 = vpop.f32.mrb[0].mxu0
        %v4055 = vadd.f32 %v4004, %v4054
        %v4056 = vpop.f32.mrb[0].mxu0
        %v4057 = vpop.f32.mrb[0].mxu0
        %4058 = vdwg.mxu0
        %4059 = vmatprep.subr.bf16.mxu0 %v2536
        %4060 = vmatpush1.bf16.msra.mxu0 %v2535
        %4061 = vmatprep.subr.bf16.mxu0 %v2552
        %4062 = vmatpush1.bf16.msra.mxu0 %v2551
        %4063 = vmatprep.subr.bf16.mxu0 %v2568
        %4064 = vmatpush1.bf16.msra.mxu0 %v2567
        %4065 = vmatprep.subr.bf16.mxu0 %v2584
        %4066 = vmatpush1.bf16.msra.mxu0 %v2583
        %4067 = vmatprep.subr.bf16.mxu0 %v2600
        %4068 = vmatpush1.bf16.msra.mxu0 %v2599
        %4069 = vmatprep.subr.bf16.mxu0 %v2616
        %4070 = vmatpush1.bf16.msra.mxu0 %v2615
        %4071 = vmatprep.subr.bf16.mxu0 %v2632
        %4072 = vmatpush1.bf16.msra.mxu0 %v2631
        %4073 = vmatprep.subr.bf16.mxu0 %v2648
        %4074 = vmatpush1.bf16.msra.mxu0 %v2647
        %4075 = vmatprep.subr.bf16.mxu0 %v2664
        %4076 = vmatpush1.bf16.msra.mxu0 %v2663
        %4077 = vmatprep.subr.bf16.mxu0 %v2680
        %4078 = vmatpush1.bf16.msra.mxu0 %v2679
        %4079 = vmatprep.subr.bf16.mxu0 %v2696
        %4080 = vmatpush1.bf16.msra.mxu0 %v2695
        %4081 = vmatprep.subr.bf16.mxu0 %v2712
        %4082 = vmatpush1.bf16.msra.mxu0 %v2711
        %4083 = vmatprep.subr.bf16.mxu0 %v2728
        %4084 = vmatpush1.bf16.msra.mxu0 %v2727
        %4085 = vmatprep.subr.bf16.mxu0 %v2744
        %4086 = vmatpush1.bf16.msra.mxu0 %v2743
        %4087 = vmatprep.subr.bf16.mxu0 %v2760
        %4088 = vmatpush1.bf16.msra.mxu0 %v2759
        %4089 = vmatprep.subr.bf16.mxu0 %v2776
        %4090 = vmatpush1.bf16.msra.mxu0 %v2775
        %4091 = vmatprep.mubr.bf16.mxu0 %v974
        %4092 = vmatmul.mubr.bf16.gmra.mrb[0].mxu0 %v973
        %v4093 = vpop.f32.mrb[0].mxu0
        %v4094 = vadd.f32 0.0, %v4093
        %v4095 = vpop.f32.mrb[0].mxu0
        %v4096 = vadd.f32 0.0, %v4095
        %v4097 = vpop.f32.mrb[0].mxu0
        %v4098 = vadd.f32 0.0, %v4097
        %v4099 = vpop.f32.mrb[0].mxu0
        %v4100 = vadd.f32 0.0, %v4099
        %4101 = vmatprep.mubr.bf16.mxu0 %v978
        %4102 = vmatmul.mubr.bf16.gmra.mrb[0].mxu0 %v977
        %v4103 = vpop.f32.mrb[0].mxu0
        %v4104 = vadd.f32 0.0, %v4103
        %v4105 = vpop.f32.mrb[0].mxu0
        %v4106 = vadd.f32 0.0, %v4105
        %v4107 = vpop.f32.mrb[0].mxu0
        %v4108 = vpop.f32.mrb[0].mxu0
        %4109 = vdwg.mxu0
        %4110 = vmatprep.subr.bf16.mxu0 %v2792
        %4111 = vmatpush1.bf16.msra.mxu0 %v2791
        %4112 = vmatprep.subr.bf16.mxu0 %v2808
        %4113 = vmatpush1.bf16.msra.mxu0 %v2807
        %4114 = vmatprep.subr.bf16.mxu0 %v2824
        %4115 = vmatpush1.bf16.msra.mxu0 %v2823
        %4116 = vmatprep.subr.bf16.mxu0 %v2840
        %4117 = vmatpush1.bf16.msra.mxu0 %v2839
        %4118 = vmatprep.subr.bf16.mxu0 %v2856
        %4119 = vmatpush1.bf16.msra.mxu0 %v2855
        %4120 = vmatprep.subr.bf16.mxu0 %v2872
        %4121 = vmatpush1.bf16.msra.mxu0 %v2871
        %4122 = vmatprep.subr.bf16.mxu0 %v2888
        %4123 = vmatpush1.bf16.msra.mxu0 %v2887
        %4124 = vmatprep.subr.bf16.mxu0 %v2904
        %4125 = vmatpush1.bf16.msra.mxu0 %v2903
        %4126 = vmatprep.subr.bf16.mxu0 %v2920
        %4127 = vmatpush1.bf16.msra.mxu0 %v2919
        %4128 = vmatprep.subr.bf16.mxu0 %v2936
        %4129 = vmatpush1.bf16.msra.mxu0 %v2935
        %4130 = vmatprep.subr.bf16.mxu0 %v2952
        %4131 = vmatpush1.bf16.msra.mxu0 %v2951
        %4132 = vmatprep.subr.bf16.mxu0 %v2968
        %4133 = vmatpush1.bf16.msra.mxu0 %v2967
        %4134 = vmatprep.subr.bf16.mxu0 %v2984
        %4135 = vmatpush1.bf16.msra.mxu0 %v2983
        %4136 = vmatprep.subr.bf16.mxu0 %v3000
        %4137 = vmatpush1.bf16.msra.mxu0 %v2999
        %4138 = vmatprep.subr.bf16.mxu0 %v3016
        %4139 = vmatpush1.bf16.msra.mxu0 %v3015
        %4140 = vmatprep.subr.bf16.mxu0 %v3032
        %4141 = vmatpush1.bf16.msra.mxu0 %v3031
        %4142 = vmatprep.mubr.bf16.mxu0 %v976
        %4143 = vmatmul.mubr.bf16.gmra.mrb[0].mxu0 %v975
        %v4144 = vpop.f32.mrb[0].mxu0
        %v4145 = vadd.f32 %v4094, %v4144
        %v4146 = vpop.f32.mrb[0].mxu0
        %v4147 = vadd.f32 %v4096, %v4146
        %v4148 = vpop.f32.mrb[0].mxu0
        %v4149 = vadd.f32 %v4098, %v4148
        %v4150 = vpop.f32.mrb[0].mxu0
        %v4151 = vadd.f32 %v4100, %v4150
        %4152 = vmatprep.mubr.bf16.mxu0 %v980
        %4153 = vmatmul.mubr.bf16.gmra.mrb[0].mxu0 %v979
        %v4154 = vpop.f32.mrb[0].mxu0
        %v4155 = vadd.f32 %v4104, %v4154
        %v4156 = vpop.f32.mrb[0].mxu0
        %v4157 = vadd.f32 %v4106, %v4156
        %v4158 = vpop.f32.mrb[0].mxu0
        %v4159 = vpop.f32.mrb[0].mxu0
        %4160 = vdwg.mxu0
        %4161 = vmatprep.subr.bf16.mxu0 %v2538
        %4162 = vmatpush1.bf16.msra.mxu0 %v2537
        %4163 = vmatprep.subr.bf16.mxu0 %v2554
        %4164 = vmatpush1.bf16.msra.mxu0 %v2553
        %4165 = vmatprep.subr.bf16.mxu0 %v2570
        %4166 = vmatpush1.bf16.msra.mxu0 %v2569
        %4167 = vmatprep.subr.bf16.mxu0 %v2586
        %4168 = vmatpush1.bf16.msra.mxu0 %v2585
        %4169 = vmatprep.subr.bf16.mxu0 %v2602
        %4170 = vmatpush1.bf16.msra.mxu0 %v2601
        %4171 = vmatprep.subr.bf16.mxu0 %v2618
        %4172 = vmatpush1.bf16.msra.mxu0 %v2617
        %4173 = vmatprep.subr.bf16.mxu0 %v2634
        %4174 = vmatpush1.bf16.msra.mxu0 %v2633
        %4175 = vmatprep.subr.bf16.mxu0 %v2650
        %4176 = vmatpush1.bf16.msra.mxu0 %v2649
        %4177 = vmatprep.subr.bf16.mxu0 %v2666
        %4178 = vmatpush1.bf16.msra.mxu0 %v2665
        %4179 = vmatprep.subr.bf16.mxu0 %v2682
        %4180 = vmatpush1.bf16.msra.mxu0 %v2681
        %4181 = vmatprep.subr.bf16.mxu0 %v2698
        %4182 = vmatpush1.bf16.msra.mxu0 %v2697
        %4183 = vmatprep.subr.bf16.mxu0 %v2714
        %4184 = vmatpush1.bf16.msra.mxu0 %v2713
        %4185 = vmatprep.subr.bf16.mxu0 %v2730
        %4186 = vmatpush1.bf16.msra.mxu0 %v2729
        %4187 = vmatprep.subr.bf16.mxu0 %v2746
        %4188 = vmatpush1.bf16.msra.mxu0 %v2745
        %4189 = vmatprep.subr.bf16.mxu0 %v2762
        %4190 = vmatpush1.bf16.msra.mxu0 %v2761
        %4191 = vmatprep.subr.bf16.mxu0 %v2778
        %4192 = vmatpush1.bf16.msra.mxu0 %v2777
        %4193 = vmatprep.mubr.bf16.mxu0 %v974
        %4194 = vmatmul.mubr.bf16.gmra.mrb[0].mxu0 %v973
        %v4195 = vpop.f32.mrb[0].mxu0
        %v4196 = vadd.f32 0.0, %v4195
        %v4197 = vpop.f32.mrb[0].mxu0
        %v4198 = vadd.f32 0.0, %v4197
        %v4199 = vpop.f32.mrb[0].mxu0
        %v4200 = vadd.f32 0.0, %v4199
        %v4201 = vpop.f32.mrb[0].mxu0
        %v4202 = vadd.f32 0.0, %v4201
        %4203 = vmatprep.mubr.bf16.mxu0 %v978
        %4204 = vmatmul.mubr.bf16.gmra.mrb[0].mxu0 %v977
        %v4205 = vpop.f32.mrb[0].mxu0
        %v4206 = vadd.f32 0.0, %v4205
        %v4207 = vpop.f32.mrb[0].mxu0
        %v4208 = vadd.f32 0.0, %v4207
        %v4209 = vpop.f32.mrb[0].mxu0
        %v4210 = vpop.f32.mrb[0].mxu0
        %4211 = vdwg.mxu0
        %4212 = vmatprep.subr.bf16.mxu0 %v2794
        %4213 = vmatpush1.bf16.msra.mxu0 %v2793
        %4214 = vmatprep.subr.bf16.mxu0 %v2810
        %4215 = vmatpush1.bf16.msra.mxu0 %v2809
        %4216 = vmatprep.subr.bf16.mxu0 %v2826
        %4217 = vmatpush1.bf16.msra.mxu0 %v2825
        %4218 = vmatprep.subr.bf16.mxu0 %v2842
        %4219 = vmatpush1.bf16.msra.mxu0 %v2841
        %4220 = vmatprep.subr.bf16.mxu0 %v2858
        %4221 = vmatpush1.bf16.msra.mxu0 %v2857
        %4222 = vmatprep.subr.bf16.mxu0 %v2874
        %4223 = vmatpush1.bf16.msra.mxu0 %v2873
        %4224 = vmatprep.subr.bf16.mxu0 %v2890
        %4225 = vmatpush1.bf16.msra.mxu0 %v2889
        %4226 = vmatprep.subr.bf16.mxu0 %v2906
        %4227 = vmatpush1.bf16.msra.mxu0 %v2905
        %4228 = vmatprep.subr.bf16.mxu0 %v2922
        %4229 = vmatpush1.bf16.msra.mxu0 %v2921
        %4230 = vmatprep.subr.bf16.mxu0 %v2938
        %4231 = vmatpush1.bf16.msra.mxu0 %v2937
        %4232 = vmatprep.subr.bf16.mxu0 %v2954
        %4233 = vmatpush1.bf16.msra.mxu0 %v2953
        %4234 = vmatprep.subr.bf16.mxu0 %v2970
        %4235 = vmatpush1.bf16.msra.mxu0 %v2969
        %4236 = vmatprep.subr.bf16.mxu0 %v2986
        %4237 = vmatpush1.bf16.msra.mxu0 %v2985
        %4238 = vmatprep.subr.bf16.mxu0 %v3002
        %4239 = vmatpush1.bf16.msra.mxu0 %v3001
        %4240 = vmatprep.subr.bf16.mxu0 %v3018
        %4241 = vmatpush1.bf16.msra.mxu0 %v3017
        %4242 = vmatprep.subr.bf16.mxu0 %v3034
        %4243 = vmatpush1.bf16.msra.mxu0 %v3033
        %4244 = vmatprep.mubr.bf16.mxu0 %v976
        %4245 = vmatmul.mubr.bf16.gmra.mrb[0].mxu0 %v975
        %v4246 = vpop.f32.mrb[0].mxu0
        %v4247 = vadd.f32 %v4196, %v4246
        %v4248 = vpop.f32.mrb[0].mxu0
        %v4249 = vadd.f32 %v4198, %v4248
        %v4250 = vpop.f32.mrb[0].mxu0
        %v4251 = vadd.f32 %v4200, %v4250
        %v4252 = vpop.f32.mrb[0].mxu0
        %v4253 = vadd.f32 %v4202, %v4252
        %4254 = vmatprep.mubr.bf16.mxu0 %v980
        %4255 = vmatmul.mubr.bf16.gmra.mrb[0].mxu0 %v979
        %v4256 = vpop.f32.mrb[0].mxu0
        %v4257 = vadd.f32 %v4206, %v4256
        %v4258 = vpop.f32.mrb[0].mxu0
        %v4259 = vadd.f32 %v4208, %v4258
        %v4260 = vpop.f32.mrb[0].mxu0
        %v4261 = vpop.f32.mrb[0].mxu0
        %4262 = vdwg.mxu0
        %4263 = vmatprep.subr.bf16.mxu0 %v2540
        %4264 = vmatpush1.bf16.msra.mxu0 %v2539
        %4265 = vmatprep.subr.bf16.mxu0 %v2556
        %4266 = vmatpush1.bf16.msra.mxu0 %v2555
        %4267 = vmatprep.subr.bf16.mxu0 %v2572
        %4268 = vmatpush1.bf16.msra.mxu0 %v2571
        %4269 = vmatprep.subr.bf16.mxu0 %v2588
        %4270 = vmatpush1.bf16.msra.mxu0 %v2587
        %4271 = vmatprep.subr.bf16.mxu0 %v2604
        %4272 = vmatpush1.bf16.msra.mxu0 %v2603
        %4273 = vmatprep.subr.bf16.mxu0 %v2620
        %4274 = vmatpush1.bf16.msra.mxu0 %v2619
        %4275 = vmatprep.subr.bf16.mxu0 %v2636
        %4276 = vmatpush1.bf16.msra.mxu0 %v2635
        %4277 = vmatprep.subr.bf16.mxu0 %v2652
        %4278 = vmatpush1.bf16.msra.mxu0 %v2651
        %4279 = vmatprep.subr.bf16.mxu0 %v2668
        %4280 = vmatpush1.bf16.msra.mxu0 %v2667
        %4281 = vmatprep.subr.bf16.mxu0 %v2684
        %4282 = vmatpush1.bf16.msra.mxu0 %v2683
        %4283 = vmatprep.subr.bf16.mxu0 %v2700
        %4284 = vmatpush1.bf16.msra.mxu0 %v2699
        %4285 = vmatprep.subr.bf16.mxu0 %v2716
        %4286 = vmatpush1.bf16.msra.mxu0 %v2715
        %4287 = vmatprep.subr.bf16.mxu0 %v2732
        %4288 = vmatpush1.bf16.msra.mxu0 %v2731
        %4289 = vmatprep.subr.bf16.mxu0 %v2748
        %4290 = vmatpush1.bf16.msra.mxu0 %v2747
        %4291 = vmatprep.subr.bf16.mxu0 %v2764
        %4292 = vmatpush1.bf16.msra.mxu0 %v2763
        %4293 = vmatprep.subr.bf16.mxu0 %v2780
        %4294 = vmatpush1.bf16.msra.mxu0 %v2779
        %4295 = vmatprep.mubr.bf16.mxu0 %v974
        %4296 = vmatmul.mubr.bf16.gmra.mrb[0].mxu0 %v973
        %v4297 = vpop.f32.mrb[0].mxu0
        %v4298 = vadd.f32 0.0, %v4297
        %v4299 = vpop.f32.mrb[0].mxu0
        %v4300 = vadd.f32 0.0, %v4299
        %v4301 = vpop.f32.mrb[0].mxu0
        %v4302 = vadd.f32 0.0, %v4301
        %v4303 = vpop.f32.mrb[0].mxu0
        %v4304 = vadd.f32 0.0, %v4303
        %4305 = vmatprep.mubr.bf16.mxu0 %v978
        %4306 = vmatmul.mubr.bf16.gmra.mrb[0].mxu0 %v977
        %v4307 = vpop.f32.mrb[0].mxu0
        %v4308 = vadd.f32 0.0, %v4307
        %v4309 = vpop.f32.mrb[0].mxu0
        %v4310 = vadd.f32 0.0, %v4309
        %v4311 = vpop.f32.mrb[0].mxu0
        %v4312 = vpop.f32.mrb[0].mxu0
        %4313 = vdwg.mxu0
        %4314 = vmatprep.subr.bf16.mxu0 %v2796
        %4315 = vmatpush1.bf16.msra.mxu0 %v2795
        %4316 = vmatprep.subr.bf16.mxu0 %v2812
        %4317 = vmatpush1.bf16.msra.mxu0 %v2811
        %4318 = vmatprep.subr.bf16.mxu0 %v2828
        %4319 = vmatpush1.bf16.msra.mxu0 %v2827
        %4320 = vmatprep.subr.bf16.mxu0 %v2844
        %4321 = vmatpush1.bf16.msra.mxu0 %v2843
        %4322 = vmatprep.subr.bf16.mxu0 %v2860
        %4323 = vmatpush1.bf16.msra.mxu0 %v2859
        %4324 = vmatprep.subr.bf16.mxu0 %v2876
        %4325 = vmatpush1.bf16.msra.mxu0 %v2875
        %4326 = vmatprep.subr.bf16.mxu0 %v2892
        %4327 = vmatpush1.bf16.msra.mxu0 %v2891
        %4328 = vmatprep.subr.bf16.mxu0 %v2908
        %4329 = vmatpush1.bf16.msra.mxu0 %v2907
        %4330 = vmatprep.subr.bf16.mxu0 %v2924
        %4331 = vmatpush1.bf16.msra.mxu0 %v2923
        %4332 = vmatprep.subr.bf16.mxu0 %v2940
        %4333 = vmatpush1.bf16.msra.mxu0 %v2939
        %4334 = vmatprep.subr.bf16.mxu0 %v2956
        %4335 = vmatpush1.bf16.msra.mxu0 %v2955
        %4336 = vmatprep.subr.bf16.mxu0 %v2972
        %4337 = vmatpush1.bf16.msra.mxu0 %v2971
        %4338 = vmatprep.subr.bf16.mxu0 %v2988
        %4339 = vmatpush1.bf16.msra.mxu0 %v2987
        %4340 = vmatprep.subr.bf16.mxu0 %v3004
        %4341 = vmatpush1.bf16.msra.mxu0 %v3003
        %4342 = vmatprep.subr.bf16.mxu0 %v3020
        %4343 = vmatpush1.bf16.msra.mxu0 %v3019
        %4344 = vmatprep.subr.bf16.mxu0 %v3036
        %4345 = vmatpush1.bf16.msra.mxu0 %v3035
        %4346 = vmatprep.mubr.bf16.mxu0 %v976
        %4347 = vmatmul.mubr.bf16.gmra.mrb[0].mxu0 %v975
        %v4348 = vpop.f32.mrb[0].mxu0
        %v4349 = vadd.f32 %v4298, %v4348
        %v4350 = vpop.f32.mrb[0].mxu0
        %v4351 = vadd.f32 %v4300, %v4350
        %v4352 = vpop.f32.mrb[0].mxu0
        %v4353 = vadd.f32 %v4302, %v4352
        %v4354 = vpop.f32.mrb[0].mxu0
        %v4355 = vadd.f32 %v4304, %v4354
        %4356 = vmatprep.mubr.bf16.mxu0 %v980
        %4357 = vmatmul.mubr.bf16.gmra.mrb[0].mxu0 %v979
        %v4358 = vpop.f32.mrb[0].mxu0
        %v4359 = vadd.f32 %v4308, %v4358
        %v4360 = vpop.f32.mrb[0].mxu0
        %v4361 = vadd.f32 %v4310, %v4360
        %v4362 = vpop.f32.mrb[0].mxu0
        %v4363 = vpop.f32.mrb[0].mxu0
        %4364 = vdwg.mxu0
        %v4365 = vmax.f32 %v3635, 0.0
        %v4366 = vmax.f32 %v3637, 0.0
        %v4367 = vmax.f32 %v3737, 0.0
        %v4368 = vmax.f32 %v3739, 0.0
        %v4369 = vmax.f32 %v3839, 0.0
        %v4370 = vmax.f32 %v3841, 0.0
        %v4371 = vmax.f32 %v3941, 0.0
        %v4372 = vmax.f32 %v3943, 0.0
        %v4373 = vmax.f32 %v4043, 0.0
        %v4374 = vmax.f32 %v4045, 0.0
        %v4375 = vmax.f32 %v4145, 0.0
        %v4376 = vmax.f32 %v4147, 0.0
        %v4377 = vmax.f32 %v4247, 0.0
        %v4378 = vmax.f32 %v4249, 0.0
        %v4379 = vmax.f32 %v4349, 0.0
        %v4380 = vmax.f32 %v4351, 0.0
        %v4381 = vmax.f32 %v3639, 0.0
        %v4382 = vmax.f32 %v3641, 0.0
        %v4383 = vmax.f32 %v3741, 0.0
        %v4384 = vmax.f32 %v3743, 0.0
        %v4385 = vmax.f32 %v3843, 0.0
        %v4386 = vmax.f32 %v3845, 0.0
        %v4387 = vmax.f32 %v3945, 0.0
        %v4388 = vmax.f32 %v3947, 0.0
        %v4389 = vmax.f32 %v4047, 0.0
        %v4390 = vmax.f32 %v4049, 0.0
        %v4391 = vmax.f32 %v4149, 0.0
        %v4392 = vmax.f32 %v4151, 0.0
        %v4393 = vmax.f32 %v4251, 0.0
        %v4394 = vmax.f32 %v4253, 0.0
        %v4395 = vmax.f32 %v4353, 0.0
        %v4396 = vmax.f32 %v4355, 0.0
        %v4397 = vmax.f32 %v3645, 0.0
        %v4398 = vmax.f32 %v3647, 0.0
        %v4399 = vmax.f32 %v3747, 0.0
        %v4400 = vmax.f32 %v3749, 0.0
        %v4401 = vmax.f32 %v3849, 0.0
        %v4402 = vmax.f32 %v3851, 0.0
        %v4403 = vmax.f32 %v3951, 0.0
        %v4404 = vmax.f32 %v3953, 0.0
        %v4405 = vmax.f32 %v4053, 0.0
        %v4406 = vmax.f32 %v4055, 0.0
        %v4407 = vmax.f32 %v4155, 0.0
        %v4408 = vmax.f32 %v4157, 0.0
        %v4409 = vmax.f32 %v4257, 0.0
        %v4410 = vmax.f32 %v4259, 0.0
        %v4411 = vmax.f32 %v4359, 0.0
        %v4412 = vmax.f32 %v4361, 0.0
        %4413 = vst [vmem:[#allocation2] sm:$0xff] %v4365
        %4414 = vst [vmem:[#allocation2 + $0x8] sm:$0xff] %v4366
        %4415 = vst [vmem:[#allocation2 + $0x10] sm:$0xff] %v4367
        %4416 = vst [vmem:[#allocation2 + $0x18] sm:$0xff] %v4368
        %4417 = vst [vmem:[#allocation2 + $0x20] sm:$0xff] %v4369
        %4418 = vst [vmem:[#allocation2 + $0x28] sm:$0xff] %v4370
        %4419 = vst [vmem:[#allocation2 + $0x30] sm:$0xff] %v4371
        %4420 = vst [vmem:[#allocation2 + $0x38] sm:$0xff] %v4372
        %4421 = vst [vmem:[#allocation2 + $0x40] sm:$0xff] %v4373
        %4422 = vst [vmem:[#allocation2 + $0x48] sm:$0xff] %v4374
        %4423 = vst [vmem:[#allocation2 + $0x50] sm:$0xff] %v4375
        %4424 = vst [vmem:[#allocation2 + $0x58] sm:$0xff] %v4376
        %4425 = vst [vmem:[#allocation2 + $0x60] sm:$0xff] %v4377
        %4426 = vst [vmem:[#allocation2 + $0x68] sm:$0xff] %v4378
        %4427 = vst [vmem:[#allocation2 + $0x70] sm:$0xff] %v4379
        %4428 = vst [vmem:[#allocation2 + $0x78] sm:$0xff] %v4380
        %4429 = vst [vmem:[#allocation2 + $0x80] sm:$0xff] %v4381
        %4430 = vst [vmem:[#allocation2 + $0x88] sm:$0xff] %v4382
        %4431 = vst [vmem:[#allocation2 + $0x90] sm:$0xff] %v4383
        %4432 = vst [vmem:[#allocation2 + $0x98] sm:$0xff] %v4384
        %4433 = vst [vmem:[#allocation2 + $0xa0] sm:$0xff] %v4385
        %4434 = vst [vmem:[#allocation2 + $0xa8] sm:$0xff] %v4386
        %4435 = vst [vmem:[#allocation2 + $0xb0] sm:$0xff] %v4387
        %4436 = vst [vmem:[#allocation2 + $0xb8] sm:$0xff] %v4388
        %4437 = vst [vmem:[#allocation2 + $0xc0] sm:$0xff] %v4389
        %4438 = vst [vmem:[#allocation2 + $0xc8] sm:$0xff] %v4390
        %4439 = vst [vmem:[#allocation2 + $0xd0] sm:$0xff] %v4391
        %4440 = vst [vmem:[#allocation2 + $0xd8] sm:$0xff] %v4392
        %4441 = vst [vmem:[#allocation2 + $0xe0] sm:$0xff] %v4393
        %4442 = vst [vmem:[#allocation2 + $0xe8] sm:$0xff] %v4394
        %4443 = vst [vmem:[#allocation2 + $0xf0] sm:$0xff] %v4395
        %4444 = vst [vmem:[#allocation2 + $0xf8] sm:$0xff] %v4396
        %4445 = vst [vmem:[#allocation2 + $0x100] sm:$0x1] %v4397
        %4446 = vst [vmem:[#allocation2 + $0x108] sm:$0x1] %v4398
        %4447 = vst [vmem:[#allocation2 + $0x110] sm:$0x1] %v4399
        %4448 = vst [vmem:[#allocation2 + $0x118] sm:$0x1] %v4400
        %4449 = vst [vmem:[#allocation2 + $0x120] sm:$0x1] %v4401
        %4450 = vst [vmem:[#allocation2 + $0x128] sm:$0x1] %v4402
        %4451 = vst [vmem:[#allocation2 + $0x130] sm:$0x1] %v4403
        %4452 = vst [vmem:[#allocation2 + $0x138] sm:$0x1] %v4404
        %4453 = vst [vmem:[#allocation2 + $0x140] sm:$0x1] %v4405
        %4454 = vst [vmem:[#allocation2 + $0x148] sm:$0x1] %v4406
        %4455 = vst [vmem:[#allocation2 + $0x150] sm:$0x1] %v4407
        %4456 = vst [vmem:[#allocation2 + $0x158] sm:$0x1] %v4408
        %4457 = vst [vmem:[#allocation2 + $0x160] sm:$0x1] %v4409
        %4458 = vst [vmem:[#allocation2 + $0x168] sm:$0x1] %v4410
        %4459 = vst [vmem:[#allocation2 + $0x170] sm:$0x1] %v4411
        %4460 = vst [vmem:[#allocation2 + $0x178] sm:$0x1] %v4412
        %s4461 = smul.u32 %s28, 4
        %v4462 = vld [vmem:[#allocation2] sm:$0xff]
        %v4463 = vld [vmem:[#allocation2 + $0x8] sm:$0xff]
        %v4464 = vld [vmem:[#allocation2 + $0x10] sm:$0xff]
        %v4465 = vld [vmem:[#allocation2 + $0x18] sm:$0xff]
        %v4466 = vld [vmem:[#allocation2 + $0x80] sm:$0xff]
        %v4467 = vld [vmem:[#allocation2 + $0x88] sm:$0xff]
        %v4468 = vld [vmem:[#allocation2 + $0x90] sm:$0xff]
        %v4469 = vld [vmem:[#allocation2 + $0x98] sm:$0xff]
        %v4470 = vld [vmem:[#allocation2 + $0x100] sm:$0x1]
        %v4471 = vld [vmem:[#allocation2 + $0x108] sm:$0x1]
        %v4472 = vld [vmem:[#allocation2 + $0x110] sm:$0x1]
        %v4473 = vld [vmem:[#allocation2 + $0x118] sm:$0x1]
        %v4474 = vpack.c.bf16 %v4466, %v4462
        %v4475 = vpack.c.bf16 %v4467, %v4463
        %v4476 = vpack.c.bf16 %v4468, %v4464
        %v4477 = vpack.c.bf16 %v4469, %v4465
        %v4478 = vpack.c.bf16 %v4470, %v4470
        %v4479 = vpack.c.bf16 %v4471, %v4471
        %v4480 = vpack.c.bf16 %v4472, %v4472
        %v4481 = vpack.c.bf16 %v4473, %v4473
        %v4482 = vld [vmem:[%s380] sm:$0xff]
        %v4483 = vld [vmem:[%s380 + $0x8] sm:$0xff]
        %v4484 = vld [vmem:[%s380 + $0x10] sm:$0xff]
        %v4485 = vld [vmem:[%s380 + $0x18] sm:$0xff]
        %v4486 = vld [vmem:[%s380 + $0x20] sm:$0xff]
        %v4487 = vld [vmem:[%s380 + $0x28] sm:$0xff]
        %v4488 = vld [vmem:[%s380 + $0x30] sm:$0xff]
        %v4489 = vld [vmem:[%s380 + $0x38] sm:$0xff]
        %v4490 = vld [vmem:[%s380 + $0x40] sm:$0xff]
        %v4491 = vld [vmem:[%s380 + $0x48] sm:$0xff]
        %v4492 = vld [vmem:[%s380 + $0x50] sm:$0xff]
        %v4493 = vld [vmem:[%s380 + $0x58] sm:$0xff]
        %v4494 = vld [vmem:[%s380 + $0x60] sm:$0xff]
        %v4495 = vld [vmem:[%s380 + $0x68] sm:$0xff]
        %v4496 = vld [vmem:[%s380 + $0x70] sm:$0xff]
        %v4497 = vld [vmem:[%s380 + $0x78] sm:$0xff]
        %v4498 = vld [vmem:[%s380 + $0x80] sm:$0xff]
        %v4499 = vld [vmem:[%s380 + $0x88] sm:$0xff]
        %v4500 = vld [vmem:[%s380 + $0x90] sm:$0xff]
        %v4501 = vld [vmem:[%s380 + $0x98] sm:$0xff]
        %v4502 = vld [vmem:[%s380 + $0xa0] sm:$0xff]
        %v4503 = vld [vmem:[%s380 + $0xa8] sm:$0xff]
        %v4504 = vld [vmem:[%s380 + $0xb0] sm:$0xff]
        %v4505 = vld [vmem:[%s380 + $0xb8] sm:$0xff]
        %v4506 = vld [vmem:[%s380 + $0xc0] sm:$0xff]
        %v4507 = vld [vmem:[%s380 + $0xc8] sm:$0xff]
        %v4508 = vld [vmem:[%s380 + $0xd0] sm:$0xff]
        %v4509 = vld [vmem:[%s380 + $0xd8] sm:$0xff]
        %v4510 = vld [vmem:[%s380 + $0xe0] sm:$0xff]
        %v4511 = vld [vmem:[%s380 + $0xe8] sm:$0xff]
        %v4512 = vld [vmem:[%s380 + $0xf0] sm:$0xff]
        %v4513 = vld [vmem:[%s380 + $0xf8] sm:$0xff]
        %v4514 = vld [vmem:[%s380 + $0x100] sm:$0xff]
        %v4515 = vld [vmem:[%s380 + $0x108] sm:$0xff]
        %v4516 = vld [vmem:[%s380 + $0x110] sm:$0xff]
        %v4517 = vld [vmem:[%s380 + $0x118] sm:$0xff]
        %v4518 = vld [vmem:[%s380 + $0x120] sm:$0xff]
        %v4519 = vld [vmem:[%s380 + $0x128] sm:$0xff]
        %v4520 = vld [vmem:[%s380 + $0x130] sm:$0xff]
        %v4521 = vld [vmem:[%s380 + $0x138] sm:$0xff]
        %v4522 = vld [vmem:[%s380 + $0x140] sm:$0xff]
        %v4523 = vld [vmem:[%s380 + $0x148] sm:$0xff]
        %v4524 = vld [vmem:[%s380 + $0x150] sm:$0xff]
        %v4525 = vld [vmem:[%s380 + $0x158] sm:$0xff]
        %v4526 = vld [vmem:[%s380 + $0x160] sm:$0xff]
        %v4527 = vld [vmem:[%s380 + $0x168] sm:$0xff]
        %v4528 = vld [vmem:[%s380 + $0x170] sm:$0xff]
        %v4529 = vld [vmem:[%s380 + $0x178] sm:$0xff]
        %v4530 = vld [vmem:[%s380 + $0x180] sm:$0xff]
        %v4531 = vld [vmem:[%s380 + $0x188] sm:$0xff]
        %v4532 = vld [vmem:[%s380 + $0x190] sm:$0xff]
        %v4533 = vld [vmem:[%s380 + $0x198] sm:$0xff]
        %v4534 = vld [vmem:[%s380 + $0x1a0] sm:$0xff]
        %v4535 = vld [vmem:[%s380 + $0x1a8] sm:$0xff]
        %v4536 = vld [vmem:[%s380 + $0x1b0] sm:$0xff]
        %v4537 = vld [vmem:[%s380 + $0x1b8] sm:$0xff]
        %v4538 = vld [vmem:[%s380 + $0x1c0] sm:$0xff]
        %v4539 = vld [vmem:[%s380 + $0x1c8] sm:$0xff]
        %v4540 = vld [vmem:[%s380 + $0x1d0] sm:$0xff]
        %v4541 = vld [vmem:[%s380 + $0x1d8] sm:$0xff]
        %v4542 = vld [vmem:[%s380 + $0x1e0] sm:$0xff]
        %v4543 = vld [vmem:[%s380 + $0x1e8] sm:$0xff]
        %v4544 = vld [vmem:[%s380 + $0x1f0] sm:$0xff]
        %v4545 = vld [vmem:[%s380 + $0x1f8] sm:$0xff]
        %s4546 = smul.u32 %s4461, 2
        %s4547 = smul.addr %s4546, 4
        %s4548 = scalar_lea.vmem %s5, %s4547
        %v4549 = vld [vmem:[%s4548] sm:$0x77]
        %v4551 = vcombine.high %v4549, %v4549
        %vm4552 = vcmask 23552
        %v4554 = vsel %vm4552, %v440, 0
        %v4557 = vsel %vm4552, %v441, 0
        %v4560 = vsel %vm4552, %v442, 0
        %vm4562 = vcmask 1042432
        %v4563 = vsel %vm4562, %v4549, 0
        %v4565 = vsel %vm4562, %v4551, 0
        %4567 = vmatprep.subr.mxu0 %v4565
        %4568 = vmatpush1.msra.mxu0 %v4563
        %4569 = vmatprep.subr.mxu0 0.0
        %4570 = vmatpush1.msra.mxu0 0.0
        %4571 = vmatprep.subr.mxu0 0.0
        %4572 = vmatpush1.msra.mxu0 0.0
        %4573 = vmatprep.subr.mxu0 0.0
        %4574 = vmatpush1.msra.mxu0 0.0
        %4575 = vmatprep.subr.mxu0 0.0
        %4576 = vmatpush1.msra.mxu0 0.0
        %4577 = vmatprep.subr.mxu0 0.0
        %4578 = vmatpush1.msra.mxu0 0.0
        %4579 = vmatprep.subr.mxu0 0.0
        %4580 = vmatpush1.msra.mxu0 0.0
        %4581 = vmatprep.subr.mxu0 0.0
        %4582 = vmatpush1.msra.mxu0 0.0
        %4583 = vmatprep.subr.mxu0 0.0
        %4584 = vmatpush1.msra.mxu0 0.0
        %4585 = vmatprep.subr.mxu0 0.0
        %4586 = vmatpush1.msra.mxu0 0.0
        %4587 = vmatprep.subr.mxu0 0.0
        %4588 = vmatpush1.msra.mxu0 0.0
        %4589 = vmatprep.subr.mxu0 0.0
        %4590 = vmatpush1.msra.mxu0 0.0
        %4591 = vmatprep.subr.mxu0 0.0
        %4592 = vmatpush1.msra.mxu0 0.0
        %4593 = vmatprep.subr.mxu0 0.0
        %4594 = vmatpush1.msra.mxu0 0.0
        %4595 = vmatprep.subr.mxu0 0.0
        %4596 = vmatpush1.msra.mxu0 0.0
        %4597 = vmatprep.subr.mxu0 0.0
        %4598 = vmatpush1.msra.mxu0 0.0
        %4599 = vmatprep.subr.mxu0 0.0
        %4600 = vmatpush1.msra.mxu0 0.0
        %4601 = vmatprep.subr.mxu0 0.0
        %4602 = vmatpush1.msra.mxu0 0.0
        %4603 = vmatprep.subr.mxu0 0.0
        %4604 = vmatpush1.msra.mxu0 0.0
        %4605 = vmatprep.subr.mxu0 0.0
        %4606 = vmatpush1.msra.mxu0 0.0
        %4607 = vmatprep.subr.mxu0 0.0
        %4608 = vmatpush1.msra.mxu0 0.0
        %4609 = vmatprep.subr.mxu0 0.0
        %4610 = vmatpush1.msra.mxu0 0.0
        %4611 = vmatprep.subr.mxu0 0.0
        %4612 = vmatpush1.msra.mxu0 0.0
        %4613 = vmatprep.subr.mxu0 0.0
        %4614 = vmatpush1.msra.mxu0 0.0
        %4615 = vmatprep.subr.mxu0 0.0
        %4616 = vmatpush1.msra.mxu0 0.0
        %4617 = vmatprep.subr.mxu0 0.0
        %4618 = vmatpush1.msra.mxu0 0.0
        %4619 = vmatprep.subr.mxu0 0.0
        %4620 = vmatpush1.msra.mxu0 0.0
        %4621 = vmatprep.subr.mxu0 0.0
        %4622 = vmatpush1.msra.mxu0 0.0
        %4623 = vmatprep.subr.mxu0 0.0
        %4624 = vmatpush1.msra.mxu0 0.0
        %4625 = vmatprep.subr.mxu0 0.0
        %4626 = vmatpush1.msra.mxu0 0.0
        %4627 = vmatprep.subr.mxu0 0.0
        %4628 = vmatpush1.msra.mxu0 0.0
        %4629 = vmatprep.subr.mxu0 0.0
        %4630 = vmatpush1.msra.mxu0 0.0
        %4631 = vmatprep.mubr.f32.mxu0 0.0
        %4632 = vmatmul.mubr.f32.gmra.mrb[0].mxu0 %v4554
        %v4633 = vpop.f32.mrb[0].mxu0
        %v4634 = vadd.f32 0.0, %v4633
        %v4635 = vpop.f32.mrb[0].mxu0
        %v4636 = vadd.f32 0.0, %v4635
        %4637 = vmatprep.mubr.f32.mxu0 0.0
        %4638 = vmatmul.mubr.f32.gmra.mrb[0].mxu0 %v4557
        %v4639 = vpop.f32.mrb[0].mxu0
        %v4640 = vadd.f32 0.0, %v4639
        %v4641 = vpop.f32.mrb[0].mxu0
        %v4642 = vadd.f32 0.0, %v4641
        %4643 = vmatprep.mubr.f32.mxu0 0.0
        %4644 = vmatmul.mubr.f32.gmra.mrb[0].mxu0 %v4560
        %v4645 = vpop.f32.mrb[0].mxu0
        %v4646 = vadd.f32 0.0, %v4645
        %v4647 = vpop.f32.mrb[0].mxu0
        %v4648 = vadd.f32 0.0, %v4647
        %4649 = vdwg.mxu0
        %v4714 = vunpack.c.l.b16 %v4482
        %v4715 = vunpack.c.h.b16 %v4482
        %v4716 = vunpack.c.l.b16 %v4483
        %v4717 = vunpack.c.h.b16 %v4483
        %v4718 = vunpack.c.l.b16 %v4484
        %v4719 = vunpack.c.h.b16 %v4484
        %v4720 = vunpack.c.l.b16 %v4485
        %v4721 = vunpack.c.h.b16 %v4485
        %v4722 = vunpack.c.l.b16 %v4486
        %v4723 = vunpack.c.h.b16 %v4486
        %v4724 = vunpack.c.l.b16 %v4487
        %v4725 = vunpack.c.h.b16 %v4487
        %v4726 = vunpack.c.l.b16 %v4488
        %v4727 = vunpack.c.h.b16 %v4488
        %v4728 = vunpack.c.l.b16 %v4489
        %v4729 = vunpack.c.h.b16 %v4489
        %v4730 = vunpack.c.l.b16 %v4490
        %v4731 = vunpack.c.h.b16 %v4490
        %v4732 = vunpack.c.l.b16 %v4491
        %v4733 = vunpack.c.h.b16 %v4491
        %v4734 = vunpack.c.l.b16 %v4492
        %v4735 = vunpack.c.h.b16 %v4492
        %v4736 = vunpack.c.l.b16 %v4493
        %v4737 = vunpack.c.h.b16 %v4493
        %v4738 = vunpack.c.l.b16 %v4494
        %v4739 = vunpack.c.h.b16 %v4494
        %v4740 = vunpack.c.l.b16 %v4495
        %v4741 = vunpack.c.h.b16 %v4495
        %v4742 = vunpack.c.l.b16 %v4496
        %v4743 = vunpack.c.h.b16 %v4496
        %v4744 = vunpack.c.l.b16 %v4497
        %v4745 = vunpack.c.h.b16 %v4497
        %v4746 = vunpack.c.l.b16 %v4498
        %v4747 = vunpack.c.h.b16 %v4498
        %v4748 = vunpack.c.l.b16 %v4499
        %v4749 = vunpack.c.h.b16 %v4499
        %v4750 = vunpack.c.l.b16 %v4500
        %v4751 = vunpack.c.h.b16 %v4500
        %v4752 = vunpack.c.l.b16 %v4501
        %v4753 = vunpack.c.h.b16 %v4501
        %v4754 = vunpack.c.l.b16 %v4502
        %v4755 = vunpack.c.h.b16 %v4502
        %v4756 = vunpack.c.l.b16 %v4503
        %v4757 = vunpack.c.h.b16 %v4503
        %v4758 = vunpack.c.l.b16 %v4504
        %v4759 = vunpack.c.h.b16 %v4504
        %v4760 = vunpack.c.l.b16 %v4505
        %v4761 = vunpack.c.h.b16 %v4505
        %v4762 = vunpack.c.l.b16 %v4506
        %v4763 = vunpack.c.h.b16 %v4506
        %v4764 = vunpack.c.l.b16 %v4507
        %v4765 = vunpack.c.h.b16 %v4507
        %v4766 = vunpack.c.l.b16 %v4508
        %v4767 = vunpack.c.h.b16 %v4508
        %v4768 = vunpack.c.l.b16 %v4509
        %v4769 = vunpack.c.h.b16 %v4509
        %v4770 = vunpack.c.l.b16 %v4510
        %v4771 = vunpack.c.h.b16 %v4510
        %v4772 = vunpack.c.l.b16 %v4511
        %v4773 = vunpack.c.h.b16 %v4511
        %v4774 = vunpack.c.l.b16 %v4512
        %v4775 = vunpack.c.h.b16 %v4512
        %v4776 = vunpack.c.l.b16 %v4513
        %v4777 = vunpack.c.h.b16 %v4513
        %v4778 = vunpack.c.l.b16 %v4514
        %v4779 = vunpack.c.h.b16 %v4514
        %v4780 = vunpack.c.l.b16 %v4515
        %v4781 = vunpack.c.h.b16 %v4515
        %v4782 = vunpack.c.l.b16 %v4516
        %v4783 = vunpack.c.h.b16 %v4516
        %v4784 = vunpack.c.l.b16 %v4517
        %v4785 = vunpack.c.h.b16 %v4517
        %v4786 = vunpack.c.l.b16 %v4518
        %v4787 = vunpack.c.h.b16 %v4518
        %v4788 = vunpack.c.l.b16 %v4519
        %v4789 = vunpack.c.h.b16 %v4519
        %v4790 = vunpack.c.l.b16 %v4520
        %v4791 = vunpack.c.h.b16 %v4520
        %v4792 = vunpack.c.l.b16 %v4521
        %v4793 = vunpack.c.h.b16 %v4521
        %v4794 = vunpack.c.l.b16 %v4522
        %v4795 = vunpack.c.h.b16 %v4522
        %v4796 = vunpack.c.l.b16 %v4523
        %v4797 = vunpack.c.h.b16 %v4523
        %v4798 = vunpack.c.l.b16 %v4524
        %v4799 = vunpack.c.h.b16 %v4524
        %v4800 = vunpack.c.l.b16 %v4525
        %v4801 = vunpack.c.h.b16 %v4525
        %v4802 = vunpack.c.l.b16 %v4526
        %v4803 = vunpack.c.h.b16 %v4526
        %v4804 = vunpack.c.l.b16 %v4527
        %v4805 = vunpack.c.h.b16 %v4527
        %v4806 = vunpack.c.l.b16 %v4528
        %v4807 = vunpack.c.h.b16 %v4528
        %v4808 = vunpack.c.l.b16 %v4529
        %v4809 = vunpack.c.h.b16 %v4529
        %v4810 = vunpack.c.l.b16 %v4530
        %v4811 = vunpack.c.h.b16 %v4530
        %v4812 = vunpack.c.l.b16 %v4531
        %v4813 = vunpack.c.h.b16 %v4531
        %v4814 = vunpack.c.l.b16 %v4532
        %v4815 = vunpack.c.h.b16 %v4532
        %v4816 = vunpack.c.l.b16 %v4533
        %v4817 = vunpack.c.h.b16 %v4533
        %v4818 = vunpack.c.l.b16 %v4534
        %v4819 = vunpack.c.h.b16 %v4534
        %v4820 = vunpack.c.l.b16 %v4535
        %v4821 = vunpack.c.h.b16 %v4535
        %v4822 = vunpack.c.l.b16 %v4536
        %v4823 = vunpack.c.h.b16 %v4536
        %v4824 = vunpack.c.l.b16 %v4537
        %v4825 = vunpack.c.h.b16 %v4537
        %v4826 = vunpack.c.l.b16 %v4538
        %v4827 = vunpack.c.h.b16 %v4538
        %v4828 = vunpack.c.l.b16 %v4539
        %v4829 = vunpack.c.h.b16 %v4539
        %v4830 = vunpack.c.l.b16 %v4540
        %v4831 = vunpack.c.h.b16 %v4540
        %v4832 = vunpack.c.l.b16 %v4541
        %v4833 = vunpack.c.h.b16 %v4541
        %v4834 = vunpack.c.l.b16 %v4542
        %v4835 = vunpack.c.h.b16 %v4542
        %v4836 = vunpack.c.l.b16 %v4543
        %v4837 = vunpack.c.h.b16 %v4543
        %v4838 = vunpack.c.l.b16 %v4544
        %v4839 = vunpack.c.h.b16 %v4544
        %v4840 = vunpack.c.l.b16 %v4545
        %v4841 = vunpack.c.h.b16 %v4545
        %v4842 = vpack.c.b16 %v4716, %v4714
        %v4843 = vpack.c.b16 %v4717, %v4715
        %v4844 = vpack.c.b16 %v4720, %v4718
        %v4845 = vpack.c.b16 %v4721, %v4719
        %v4846 = vpack.c.b16 %v4724, %v4722
        %v4847 = vpack.c.b16 %v4725, %v4723
        %v4848 = vpack.c.b16 %v4728, %v4726
        %v4849 = vpack.c.b16 %v4729, %v4727
        %v4850 = vpack.c.b16 %v4732, %v4730
        %v4851 = vpack.c.b16 %v4733, %v4731
        %v4852 = vpack.c.b16 %v4736, %v4734
        %v4853 = vpack.c.b16 %v4737, %v4735
        %v4854 = vpack.c.b16 %v4740, %v4738
        %v4855 = vpack.c.b16 %v4741, %v4739
        %v4856 = vpack.c.b16 %v4744, %v4742
        %v4857 = vpack.c.b16 %v4745, %v4743
        %v4858 = vpack.c.b16 %v4748, %v4746
        %v4859 = vpack.c.b16 %v4749, %v4747
        %v4860 = vpack.c.b16 %v4752, %v4750
        %v4861 = vpack.c.b16 %v4753, %v4751
        %v4862 = vpack.c.b16 %v4756, %v4754
        %v4863 = vpack.c.b16 %v4757, %v4755
        %v4864 = vpack.c.b16 %v4760, %v4758
        %v4865 = vpack.c.b16 %v4761, %v4759
        %v4866 = vpack.c.b16 %v4764, %v4762
        %v4867 = vpack.c.b16 %v4765, %v4763
        %v4868 = vpack.c.b16 %v4768, %v4766
        %v4869 = vpack.c.b16 %v4769, %v4767
        %v4870 = vpack.c.b16 %v4772, %v4770
        %v4871 = vpack.c.b16 %v4773, %v4771
        %v4872 = vpack.c.b16 %v4776, %v4774
        %v4873 = vpack.c.b16 %v4777, %v4775
        %v4874 = vpack.c.b16 %v4780, %v4778
        %v4875 = vpack.c.b16 %v4781, %v4779
        %v4876 = vpack.c.b16 %v4784, %v4782
        %v4877 = vpack.c.b16 %v4785, %v4783
        %v4878 = vpack.c.b16 %v4788, %v4786
        %v4879 = vpack.c.b16 %v4789, %v4787
        %v4880 = vpack.c.b16 %v4792, %v4790
        %v4881 = vpack.c.b16 %v4793, %v4791
        %v4882 = vpack.c.b16 %v4796, %v4794
        %v4883 = vpack.c.b16 %v4797, %v4795
        %v4884 = vpack.c.b16 %v4800, %v4798
        %v4885 = vpack.c.b16 %v4801, %v4799
        %v4886 = vpack.c.b16 %v4804, %v4802
        %v4887 = vpack.c.b16 %v4805, %v4803
        %v4888 = vpack.c.b16 %v4808, %v4806
        %v4889 = vpack.c.b16 %v4809, %v4807
        %v4890 = vpack.c.b16 %v4812, %v4810
        %v4891 = vpack.c.b16 %v4813, %v4811
        %v4892 = vpack.c.b16 %v4816, %v4814
        %v4893 = vpack.c.b16 %v4817, %v4815
        %v4894 = vpack.c.b16 %v4820, %v4818
        %v4895 = vpack.c.b16 %v4821, %v4819
        %v4896 = vpack.c.b16 %v4824, %v4822
        %v4897 = vpack.c.b16 %v4825, %v4823
        %v4898 = vpack.c.b16 %v4828, %v4826
        %v4899 = vpack.c.b16 %v4829, %v4827
        %v4900 = vpack.c.b16 %v4832, %v4830
        %v4901 = vpack.c.b16 %v4833, %v4831
        %v4902 = vpack.c.b16 %v4836, %v4834
        %v4903 = vpack.c.b16 %v4837, %v4835
        %v4904 = vpack.c.b16 %v4840, %v4838
        %v4905 = vpack.c.b16 %v4841, %v4839
        %4970 = vmatprep.subr.bf16.mxu0 %v4843
        %4971 = vmatpush1.bf16.msra.mxu0 %v4842
        %4972 = vmatprep.subr.bf16.mxu0 %v4845
        %4973 = vmatpush1.bf16.msra.mxu0 %v4844
        %4974 = vmatprep.subr.bf16.mxu0 %v4847
        %4975 = vmatpush1.bf16.msra.mxu0 %v4846
        %4976 = vmatprep.subr.bf16.mxu0 %v4849
        %4977 = vmatpush1.bf16.msra.mxu0 %v4848
        %4978 = vmatprep.subr.bf16.mxu0 %v4851
        %4979 = vmatpush1.bf16.msra.mxu0 %v4850
        %4980 = vmatprep.subr.bf16.mxu0 %v4853
        %4981 = vmatpush1.bf16.msra.mxu0 %v4852
        %4982 = vmatprep.subr.bf16.mxu0 %v4855
        %4983 = vmatpush1.bf16.msra.mxu0 %v4854
        %4984 = vmatprep.subr.bf16.mxu0 %v4857
        %4985 = vmatpush1.bf16.msra.mxu0 %v4856
        %4986 = vmatprep.subr.bf16.mxu0 %v4859
        %4987 = vmatpush1.bf16.msra.mxu0 %v4858
        %4988 = vmatprep.subr.bf16.mxu0 %v4861
        %4989 = vmatpush1.bf16.msra.mxu0 %v4860
        %4990 = vmatprep.subr.bf16.mxu0 %v4863
        %4991 = vmatpush1.bf16.msra.mxu0 %v4862
        %4992 = vmatprep.subr.bf16.mxu0 %v4865
        %4993 = vmatpush1.bf16.msra.mxu0 %v4864
        %4994 = vmatprep.subr.bf16.mxu0 %v4867
        %4995 = vmatpush1.bf16.msra.mxu0 %v4866
        %4996 = vmatprep.subr.bf16.mxu0 %v4869
        %4997 = vmatpush1.bf16.msra.mxu0 %v4868
        %4998 = vmatprep.subr.bf16.mxu0 %v4871
        %4999 = vmatpush1.bf16.msra.mxu0 %v4870
        %5000 = vmatprep.subr.bf16.mxu0 %v4873
        %5001 = vmatpush1.bf16.msra.mxu0 %v4872
        %5002 = vmatprep.mubr.bf16.mxu0 %v4475
        %5003 = vmatmul.mubr.bf16.gmra.mrb[0].mxu0 %v4474
        %v5004 = vpop.f32.mrb[0].mxu0
        %v5005 = vadd.f32 %v4634, %v5004
        %v5006 = vpop.f32.mrb[0].mxu0
        %v5007 = vadd.f32 %v4636, %v5006
        %v5008 = vpop.f32.mrb[0].mxu0
        %v5009 = vadd.f32 %v4640, %v5008
        %v5010 = vpop.f32.mrb[0].mxu0
        %v5011 = vadd.f32 %v4642, %v5010
        %5012 = vmatprep.mubr.bf16.mxu0 %v4479
        %5013 = vmatmul.mubr.bf16.gmra.mrb[0].mxu0 %v4478
        %v5014 = vpop.f32.mrb[0].mxu0
        %v5015 = vadd.f32 %v4646, %v5014
        %v5016 = vpop.f32.mrb[0].mxu0
        %v5017 = vadd.f32 %v4648, %v5016
        %v5018 = vpop.f32.mrb[0].mxu0
        %v5019 = vpop.f32.mrb[0].mxu0
        %5020 = vdwg.mxu0
        %5021 = vmatprep.subr.bf16.mxu0 %v4875
        %5022 = vmatpush1.bf16.msra.mxu0 %v4874
        %5023 = vmatprep.subr.bf16.mxu0 %v4877
        %5024 = vmatpush1.bf16.msra.mxu0 %v4876
        %5025 = vmatprep.subr.bf16.mxu0 %v4879
        %5026 = vmatpush1.bf16.msra.mxu0 %v4878
        %5027 = vmatprep.subr.bf16.mxu0 %v4881
        %5028 = vmatpush1.bf16.msra.mxu0 %v4880
        %5029 = vmatprep.subr.bf16.mxu0 %v4883
        %5030 = vmatpush1.bf16.msra.mxu0 %v4882
        %5031 = vmatprep.subr.bf16.mxu0 %v4885
        %5032 = vmatpush1.bf16.msra.mxu0 %v4884
        %5033 = vmatprep.subr.bf16.mxu0 %v4887
        %5034 = vmatpush1.bf16.msra.mxu0 %v4886
        %5035 = vmatprep.subr.bf16.mxu0 %v4889
        %5036 = vmatpush1.bf16.msra.mxu0 %v4888
        %5037 = vmatprep.subr.bf16.mxu0 %v4891
        %5038 = vmatpush1.bf16.msra.mxu0 %v4890
        %5039 = vmatprep.subr.bf16.mxu0 %v4893
        %5040 = vmatpush1.bf16.msra.mxu0 %v4892
        %5041 = vmatprep.subr.bf16.mxu0 %v4895
        %5042 = vmatpush1.bf16.msra.mxu0 %v4894
        %5043 = vmatprep.subr.bf16.mxu0 %v4897
        %5044 = vmatpush1.bf16.msra.mxu0 %v4896
        %5045 = vmatprep.subr.bf16.mxu0 %v4899
        %5046 = vmatpush1.bf16.msra.mxu0 %v4898
        %5047 = vmatprep.subr.bf16.mxu0 %v4901
        %5048 = vmatpush1.bf16.msra.mxu0 %v4900
        %5049 = vmatprep.subr.bf16.mxu0 %v4903
        %5050 = vmatpush1.bf16.msra.mxu0 %v4902
        %5051 = vmatprep.subr.bf16.mxu0 %v4905
        %5052 = vmatpush1.bf16.msra.mxu0 %v4904
        %5053 = vmatprep.mubr.bf16.mxu0 %v4477
        %5054 = vmatmul.mubr.bf16.gmra.mrb[0].mxu0 %v4476
        %v5055 = vpop.f32.mrb[0].mxu0
        %v5056 = vadd.f32 %v5005, %v5055
        %v5057 = vpop.f32.mrb[0].mxu0
        %v5058 = vadd.f32 %v5007, %v5057
        %v5059 = vpop.f32.mrb[0].mxu0
        %v5060 = vadd.f32 %v5009, %v5059
        %v5061 = vpop.f32.mrb[0].mxu0
        %v5062 = vadd.f32 %v5011, %v5061
        %5063 = vmatprep.mubr.bf16.mxu0 %v4481
        %5064 = vmatmul.mubr.bf16.gmra.mrb[0].mxu0 %v4480
        %v5065 = vpop.f32.mrb[0].mxu0
        %v5066 = vadd.f32 %v5015, %v5065
        %v5067 = vpop.f32.mrb[0].mxu0
        %v5068 = vadd.f32 %v5017, %v5067
        %v5069 = vpop.f32.mrb[0].mxu0
        %v5070 = vpop.f32.mrb[0].mxu0
        %5071 = vdwg.mxu0
        %s5072 = scalar_lea.vmem [#allocation9], %s4546
        %v5073 = vld [vmem:[%s5072] sm:$0x3]
        %v5075 = vlaneseq
        %v5076 = vshrl.u32 %v5075, 7
        %v5077 = vsub.s32 0, %v5076
        %v5078 = vrot.slane %v5073, %v5077
        %v5079 = vlaneseq
        %v5080 = vshrl.u32 %v5079, 7
        %v5081 = vsub.s32 1, %v5080
        %v5082 = vrot.slane %v5073, %v5081
        %v5085 = vadd.f32 %v5056, %v5078
        %v5086 = vadd.f32 %v5058, %v5082
        %v5087 = vadd.f32 %v5060, %v5078
        %v5088 = vadd.f32 %v5062, %v5082
        %v5089 = vadd.f32 %v5066, %v5078
        %v5090 = vadd.f32 %v5068, %v5082
        %v5091 = vtanh.pop %v5085
        %v5092 = vtanh.pop %v5086
        %v5093 = vtanh.pop %v5087
        %v5094 = vtanh.pop %v5088
        %v5095 = vtanh.pop %v5089
        %v5096 = vtanh.pop %v5090
        %s5097 = smul.u32 %s4461, 256
        %s5098 = scalar_lea.vmem %s7, %s5097
        %v5099 = vld [vmem:[%s5098] sm:$0xff]
        %v5100 = vld [vmem:[%s5098 + $0x8] sm:$0xff]
        %v5101 = vld [vmem:[%s5098 + $0x10] sm:$0xff]
        %v5102 = vld [vmem:[%s5098 + $0x18] sm:$0xff]
        %v5103 = vld [vmem:[%s5098 + $0x20] sm:$0xff]
        %v5104 = vld [vmem:[%s5098 + $0x28] sm:$0xff]
        %v5105 = vld [vmem:[%s5098 + $0x30] sm:$0xff]
        %v5106 = vld [vmem:[%s5098 + $0x38] sm:$0xff]
        %v5107 = vld [vmem:[%s5098 + $0x40] sm:$0xff]
        %v5108 = vld [vmem:[%s5098 + $0x48] sm:$0xff]
        %v5109 = vld [vmem:[%s5098 + $0x50] sm:$0xff]
        %v5110 = vld [vmem:[%s5098 + $0x58] sm:$0xff]
        %v5111 = vld [vmem:[%s5098 + $0x60] sm:$0xff]
        %v5112 = vld [vmem:[%s5098 + $0x68] sm:$0xff]
        %v5113 = vld [vmem:[%s5098 + $0x70] sm:$0xff]
        %v5114 = vld [vmem:[%s5098 + $0x78] sm:$0xff]
        %v5115 = vld [vmem:[%s5098 + $0x80] sm:$0xff]
        %v5116 = vld [vmem:[%s5098 + $0x88] sm:$0xff]
        %v5117 = vld [vmem:[%s5098 + $0x90] sm:$0xff]
        %v5118 = vld [vmem:[%s5098 + $0x98] sm:$0xff]
        %v5119 = vld [vmem:[%s5098 + $0xa0] sm:$0xff]
        %v5120 = vld [vmem:[%s5098 + $0xa8] sm:$0xff]
        %v5121 = vld [vmem:[%s5098 + $0xb0] sm:$0xff]
        %v5122 = vld [vmem:[%s5098 + $0xb8] sm:$0xff]
        %v5123 = vld [vmem:[%s5098 + $0xc0] sm:$0xff]
        %v5124 = vld [vmem:[%s5098 + $0xc8] sm:$0xff]
        %v5125 = vld [vmem:[%s5098 + $0xd0] sm:$0xff]
        %v5126 = vld [vmem:[%s5098 + $0xd8] sm:$0xff]
        %v5127 = vld [vmem:[%s5098 + $0xe0] sm:$0xff]
        %v5128 = vld [vmem:[%s5098 + $0xe8] sm:$0xff]
        %v5129 = vld [vmem:[%s5098 + $0xf0] sm:$0xff]
        %v5130 = vld [vmem:[%s5098 + $0xf8] sm:$0xff]
        %s5131 = scalar_lea.vmem [#allocation10], %s4461
        %v5132 = vld [vmem:[%s5131] sm:$0x1]
        %v5134 = vlaneseq
        %v5135 = vshrl.u32 %v5134, 7
        %v5136 = vsub.s32 0, %v5135
        %v5137 = vrot.slane %v5132, %v5136
        %5139 = vmatprep.subr.mxu0 0.0
        %5140 = vmatpush1.msra.mxu0 %v5099
        %5141 = vmatprep.subr.mxu0 0.0
        %5142 = vmatpush1.msra.mxu0 %v5100
        %5143 = vmatprep.subr.mxu0 0.0
        %5144 = vmatpush1.msra.mxu0 %v5101
        %5145 = vmatprep.subr.mxu0 0.0
        %5146 = vmatpush1.msra.mxu0 %v5102
        %5147 = vmatprep.subr.mxu0 0.0
        %5148 = vmatpush1.msra.mxu0 %v5103
        %5149 = vmatprep.subr.mxu0 0.0
        %5150 = vmatpush1.msra.mxu0 %v5104
        %5151 = vmatprep.subr.mxu0 0.0
        %5152 = vmatpush1.msra.mxu0 %v5105
        %5153 = vmatprep.subr.mxu0 0.0
        %5154 = vmatpush1.msra.mxu0 %v5106
        %5155 = vmatprep.subr.mxu0 0.0
        %5156 = vmatpush1.msra.mxu0 %v5107
        %5157 = vmatprep.subr.mxu0 0.0
        %5158 = vmatpush1.msra.mxu0 %v5108
        %5159 = vmatprep.subr.mxu0 0.0
        %5160 = vmatpush1.msra.mxu0 %v5109
        %5161 = vmatprep.subr.mxu0 0.0
        %5162 = vmatpush1.msra.mxu0 %v5110
        %5163 = vmatprep.subr.mxu0 0.0
        %5164 = vmatpush1.msra.mxu0 %v5111
        %5165 = vmatprep.subr.mxu0 0.0
        %5166 = vmatpush1.msra.mxu0 %v5112
        %5167 = vmatprep.subr.mxu0 0.0
        %5168 = vmatpush1.msra.mxu0 %v5113
        %5169 = vmatprep.subr.mxu0 0.0
        %5170 = vmatpush1.msra.mxu0 %v5114
        %5171 = vmatprep.subr.mxu0 0.0
        %5172 = vmatpush1.msra.mxu0 %v5115
        %5173 = vmatprep.subr.mxu0 0.0
        %5174 = vmatpush1.msra.mxu0 %v5116
        %5175 = vmatprep.subr.mxu0 0.0
        %5176 = vmatpush1.msra.mxu0 %v5117
        %5177 = vmatprep.subr.mxu0 0.0
        %5178 = vmatpush1.msra.mxu0 %v5118
        %5179 = vmatprep.subr.mxu0 0.0
        %5180 = vmatpush1.msra.mxu0 %v5119
        %5181 = vmatprep.subr.mxu0 0.0
        %5182 = vmatpush1.msra.mxu0 %v5120
        %5183 = vmatprep.subr.mxu0 0.0
        %5184 = vmatpush1.msra.mxu0 %v5121
        %5185 = vmatprep.subr.mxu0 0.0
        %5186 = vmatpush1.msra.mxu0 %v5122
        %5187 = vmatprep.subr.mxu0 0.0
        %5188 = vmatpush1.msra.mxu0 %v5123
        %5189 = vmatprep.subr.mxu0 0.0
        %5190 = vmatpush1.msra.mxu0 %v5124
        %5191 = vmatprep.subr.mxu0 0.0
        %5192 = vmatpush1.msra.mxu0 %v5125
        %5193 = vmatprep.subr.mxu0 0.0
        %5194 = vmatpush1.msra.mxu0 %v5126
        %5195 = vmatprep.subr.mxu0 0.0
        %5196 = vmatpush1.msra.mxu0 %v5127
        %5197 = vmatprep.subr.mxu0 0.0
        %5198 = vmatpush1.msra.mxu0 %v5128
        %5199 = vmatprep.subr.mxu0 0.0
        %5200 = vmatpush1.msra.mxu0 %v5129
        %5201 = vmatprep.subr.mxu0 0.0
        %5202 = vmatpush1.msra.mxu0 %v5130
        %5203 = vmatprep.mubr.f32.mxu0 %v5092
        %5204 = vmatmul.mubr.f32.gmra.mrb[0].mxu0 %v5091
        %v5205 = vpop.f32.mrb[0].mxu0
        %v5206 = vadd.f32 %v5137, %v5205
        %v5207 = vpop.f32.mrb[0].mxu0
        %5208 = vmatprep.mubr.f32.mxu0 %v5094
        %5209 = vmatmul.mubr.f32.gmra.mrb[0].mxu0 %v5093
        %v5210 = vpop.f32.mrb[0].mxu0
        %v5211 = vadd.f32 %v5137, %v5210
        %v5212 = vpop.f32.mrb[0].mxu0
        %5213 = vmatprep.mubr.f32.mxu0 %v5096
        %5214 = vmatmul.mubr.f32.gmra.mrb[0].mxu0 %v5095
        %v5215 = vpop.f32.mrb[0].mxu0
        %v5216 = vadd.f32 %v5137, %v5215
        %v5217 = vpop.f32.mrb[0].mxu0
        %5218 = vdwg.mxu0
        %vm5219 = vcmask 138240
        %v5220 = vsel %vm5219, %v5206, -inf
        %v5221 = vsel %vm5219, %v5211, -inf
        %vm5222 = vcmask 131072
        %v5223 = vsel %vm5222, %v5216, -inf
        %v5224 = vmax.f32 %v5220, %v5221
        %v5225 = vmax.f32 %v5224, %v5223
        %v5226 = vrot.slane %v5225, 4
        %v5227 = vmax.f32 %v5225, %v5226
        %v5228 = vrot.slane %v5227, 2
        %v5229 = vmax.f32 %v5227, %v5228
        %v5230 = vrot.slane %v5229, 1
        %v5231 = vmax.f32 %v5229, %v5230
        %v5232 = vsub.f32 %v5206, %v5231
        %v5233 = vsub.f32 %v5211, %v5231
        %v5234 = vsub.f32 %v5216, %v5231
        %v5235 = vmul.f32 %v5232, 1.442695
        %v5236 = vpow.pop %v5235
        %v5237 = vmul.f32 %v5233, 1.442695
        %v5238 = vpow.pop %v5237
        %v5239 = vmul.f32 %v5234, 1.442695
        %v5240 = vpow.pop %v5239
        %v5241 = vsel %vm5219, %v5236, 0.0
        %v5242 = vsel %vm5219, %v5238, 0.0
        %v5243 = vadd.f32 %v5241, %v5242
        %v5244 = vsel %vm5222, %v5240, 0.0
        %v5245 = vadd.f32 %v5243, %v5244
        %v5246 = vrot.slane %v5245, 4
        %v5247 = vadd.f32 %v5245, %v5246
        %v5248 = vrot.slane %v5247, 2
        %v5249 = vadd.f32 %v5247, %v5248
        %v5250 = vrot.slane %v5249, 1
        %v5251 = vadd.f32 %v5249, %v5250
        %v5252 = vrcp.pop %v5251
        %v5253 = vmul.f32 %v5236, %v5252
        %v5254 = vmul.f32 %v5238, %v5252
        %v5255 = vmul.f32 %v5240, %v5252
        %s5256 = sld [smem:[#allocation3 + %s4461]]
        %v5257 = vstv %s5256
        %v5258 = vmul.f32 %v5253, %v5257
        %v5259 = vmul.f32 %v5254, %v5257
        %v5260 = vmul.f32 %v5255, %v5257
        %s5261 = sadd.s32 %s4461, 1
        %v5262 = vld [vmem:[#allocation2 + $0x20] sm:$0xff]
        %v5263 = vld [vmem:[#allocation2 + $0x28] sm:$0xff]
        %v5264 = vld [vmem:[#allocation2 + $0x30] sm:$0xff]
        %v5265 = vld [vmem:[#allocation2 + $0x38] sm:$0xff]
        %v5266 = vld [vmem:[#allocation2 + $0xa0] sm:$0xff]
        %v5267 = vld [vmem:[#allocation2 + $0xa8] sm:$0xff]
        %v5268 = vld [vmem:[#allocation2 + $0xb0] sm:$0xff]
        %v5269 = vld [vmem:[#allocation2 + $0xb8] sm:$0xff]
        %v5270 = vld [vmem:[#allocation2 + $0x120] sm:$0x1]
        %v5271 = vld [vmem:[#allocation2 + $0x128] sm:$0x1]
        %v5272 = vld [vmem:[#allocation2 + $0x130] sm:$0x1]
        %v5273 = vld [vmem:[#allocation2 + $0x138] sm:$0x1]
        %v5274 = vpack.c.bf16 %v5266, %v5262
        %v5275 = vpack.c.bf16 %v5267, %v5263
        %v5276 = vpack.c.bf16 %v5268, %v5264
        %v5277 = vpack.c.bf16 %v5269, %v5265
        %v5278 = vpack.c.bf16 %v5270, %v5270
        %v5279 = vpack.c.bf16 %v5271, %v5271
        %v5280 = vpack.c.bf16 %v5272, %v5272
        %v5281 = vpack.c.bf16 %v5273, %v5273
        %s5282 = scalar_lea.vmem %s380, 512 [#allocation7]
        %v5283 = vld [vmem:[%s5282] sm:$0xff]
        %v5284 = vld [vmem:[%s5282 + $0x8] sm:$0xff]
        %v5285 = vld [vmem:[%s5282 + $0x10] sm:$0xff]
        %v5286 = vld [vmem:[%s5282 + $0x18] sm:$0xff]
        %v5287 = vld [vmem:[%s5282 + $0x20] sm:$0xff]
        %v5288 = vld [vmem:[%s5282 + $0x28] sm:$0xff]
        %v5289 = vld [vmem:[%s5282 + $0x30] sm:$0xff]
        %v5290 = vld [vmem:[%s5282 + $0x38] sm:$0xff]
        %v5291 = vld [vmem:[%s5282 + $0x40] sm:$0xff]
        %v5292 = vld [vmem:[%s5282 + $0x48] sm:$0xff]
        %v5293 = vld [vmem:[%s5282 + $0x50] sm:$0xff]
        %v5294 = vld [vmem:[%s5282 + $0x58] sm:$0xff]
        %v5295 = vld [vmem:[%s5282 + $0x60] sm:$0xff]
        %v5296 = vld [vmem:[%s5282 + $0x68] sm:$0xff]
        %v5297 = vld [vmem:[%s5282 + $0x70] sm:$0xff]
        %v5298 = vld [vmem:[%s5282 + $0x78] sm:$0xff]
        %v5299 = vld [vmem:[%s5282 + $0x80] sm:$0xff]
        %v5300 = vld [vmem:[%s5282 + $0x88] sm:$0xff]
        %v5301 = vld [vmem:[%s5282 + $0x90] sm:$0xff]
        %v5302 = vld [vmem:[%s5282 + $0x98] sm:$0xff]
        %v5303 = vld [vmem:[%s5282 + $0xa0] sm:$0xff]
        %v5304 = vld [vmem:[%s5282 + $0xa8] sm:$0xff]
        %v5305 = vld [vmem:[%s5282 + $0xb0] sm:$0xff]
        %v5306 = vld [vmem:[%s5282 + $0xb8] sm:$0xff]
        %v5307 = vld [vmem:[%s5282 + $0xc0] sm:$0xff]
        %v5308 = vld [vmem:[%s5282 + $0xc8] sm:$0xff]
        %v5309 = vld [vmem:[%s5282 + $0xd0] sm:$0xff]
        %v5310 = vld [vmem:[%s5282 + $0xd8] sm:$0xff]
        %v5311 = vld [vmem:[%s5282 + $0xe0] sm:$0xff]
        %v5312 = vld [vmem:[%s5282 + $0xe8] sm:$0xff]
        %v5313 = vld [vmem:[%s5282 + $0xf0] sm:$0xff]
        %v5314 = vld [vmem:[%s5282 + $0xf8] sm:$0xff]
        %v5315 = vld [vmem:[%s5282 + $0x100] sm:$0xff]
        %v5316 = vld [vmem:[%s5282 + $0x108] sm:$0xff]
        %v5317 = vld [vmem:[%s5282 + $0x110] sm:$0xff]
        %v5318 = vld [vmem:[%s5282 + $0x118] sm:$0xff]
        %v5319 = vld [vmem:[%s5282 + $0x120] sm:$0xff]
        %v5320 = vld [vmem:[%s5282 + $0x128] sm:$0xff]
        %v5321 = vld [vmem:[%s5282 + $0x130] sm:$0xff]
        %v5322 = vld [vmem:[%s5282 + $0x138] sm:$0xff]
        %v5323 = vld [vmem:[%s5282 + $0x140] sm:$0xff]
        %v5324 = vld [vmem:[%s5282 + $0x148] sm:$0xff]
        %v5325 = vld [vmem:[%s5282 + $0x150] sm:$0xff]
        %v5326 = vld [vmem:[%s5282 + $0x158] sm:$0xff]
        %v5327 = vld [vmem:[%s5282 + $0x160] sm:$0xff]
        %v5328 = vld [vmem:[%s5282 + $0x168] sm:$0xff]
        %v5329 = vld [vmem:[%s5282 + $0x170] sm:$0xff]
        %v5330 = vld [vmem:[%s5282 + $0x178] sm:$0xff]
        %v5331 = vld [vmem:[%s5282 + $0x180] sm:$0xff]
        %v5332 = vld [vmem:[%s5282 + $0x188] sm:$0xff]
        %v5333 = vld [vmem:[%s5282 + $0x190] sm:$0xff]
        %v5334 = vld [vmem:[%s5282 + $0x198] sm:$0xff]
        %v5335 = vld [vmem:[%s5282 + $0x1a0] sm:$0xff]
        %v5336 = vld [vmem:[%s5282 + $0x1a8] sm:$0xff]
        %v5337 = vld [vmem:[%s5282 + $0x1b0] sm:$0xff]
        %v5338 = vld [vmem:[%s5282 + $0x1b8] sm:$0xff]
        %v5339 = vld [vmem:[%s5282 + $0x1c0] sm:$0xff]
        %v5340 = vld [vmem:[%s5282 + $0x1c8] sm:$0xff]
        %v5341 = vld [vmem:[%s5282 + $0x1d0] sm:$0xff]
        %v5342 = vld [vmem:[%s5282 + $0x1d8] sm:$0xff]
        %v5343 = vld [vmem:[%s5282 + $0x1e0] sm:$0xff]
        %v5344 = vld [vmem:[%s5282 + $0x1e8] sm:$0xff]
        %v5345 = vld [vmem:[%s5282 + $0x1f0] sm:$0xff]
        %v5346 = vld [vmem:[%s5282 + $0x1f8] sm:$0xff]
        %s5347 = smul.u32 %s5261, 2
        %s5348 = smul.addr %s5347, 4
        %s5349 = scalar_lea.vmem %s5, %s5348
        %v5350 = vld [vmem:[%s5349] sm:$0x77]
        %v5352 = vcombine.high %v5350, %v5350
        %v5353 = vsel %vm4562, %v5350, 0
        %v5355 = vsel %vm4562, %v5352, 0
        %5357 = vmatprep.subr.mxu0 %v5355
        %5358 = vmatpush1.msra.mxu0 %v5353
        %5359 = vmatprep.subr.mxu0 0.0
        %5360 = vmatpush1.msra.mxu0 0.0
        %5361 = vmatprep.subr.mxu0 0.0
        %5362 = vmatpush1.msra.mxu0 0.0
        %5363 = vmatprep.subr.mxu0 0.0
        %5364 = vmatpush1.msra.mxu0 0.0
        %5365 = vmatprep.subr.mxu0 0.0
        %5366 = vmatpush1.msra.mxu0 0.0
        %5367 = vmatprep.subr.mxu0 0.0
        %5368 = vmatpush1.msra.mxu0 0.0
        %5369 = vmatprep.subr.mxu0 0.0
        %5370 = vmatpush1.msra.mxu0 0.0
        %5371 = vmatprep.subr.mxu0 0.0
        %5372 = vmatpush1.msra.mxu0 0.0
        %5373 = vmatprep.subr.mxu0 0.0
        %5374 = vmatpush1.msra.mxu0 0.0
        %5375 = vmatprep.subr.mxu0 0.0
        %5376 = vmatpush1.msra.mxu0 0.0
        %5377 = vmatprep.subr.mxu0 0.0
        %5378 = vmatpush1.msra.mxu0 0.0
        %5379 = vmatprep.subr.mxu0 0.0
        %5380 = vmatpush1.msra.mxu0 0.0
        %5381 = vmatprep.subr.mxu0 0.0
        %5382 = vmatpush1.msra.mxu0 0.0
        %5383 = vmatprep.subr.mxu0 0.0
        %5384 = vmatpush1.msra.mxu0 0.0
        %5385 = vmatprep.subr.mxu0 0.0
        %5386 = vmatpush1.msra.mxu0 0.0
        %5387 = vmatprep.subr.mxu0 0.0
        %5388 = vmatpush1.msra.mxu0 0.0
        %5389 = vmatprep.subr.mxu0 0.0
        %5390 = vmatpush1.msra.mxu0 0.0
        %5391 = vmatprep.subr.mxu0 0.0
        %5392 = vmatpush1.msra.mxu0 0.0
        %5393 = vmatprep.subr.mxu0 0.0
        %5394 = vmatpush1.msra.mxu0 0.0
        %5395 = vmatprep.subr.mxu0 0.0
        %5396 = vmatpush1.msra.mxu0 0.0
        %5397 = vmatprep.subr.mxu0 0.0
        %5398 = vmatpush1.msra.mxu0 0.0
        %5399 = vmatprep.subr.mxu0 0.0
        %5400 = vmatpush1.msra.mxu0 0.0
        %5401 = vmatprep.subr.mxu0 0.0
        %5402 = vmatpush1.msra.mxu0 0.0
        %5403 = vmatprep.subr.mxu0 0.0
        %5404 = vmatpush1.msra.mxu0 0.0
        %5405 = vmatprep.subr.mxu0 0.0
        %5406 = vmatpush1.msra.mxu0 0.0
        %5407 = vmatprep.subr.mxu0 0.0
        %5408 = vmatpush1.msra.mxu0 0.0
        %5409 = vmatprep.subr.mxu0 0.0
        %5410 = vmatpush1.msra.mxu0 0.0
        %5411 = vmatprep.subr.mxu0 0.0
        %5412 = vmatpush1.msra.mxu0 0.0
        %5413 = vmatprep.subr.mxu0 0.0
        %5414 = vmatpush1.msra.mxu0 0.0
        %5415 = vmatprep.subr.mxu0 0.0
        %5416 = vmatpush1.msra.mxu0 0.0
        %5417 = vmatprep.subr.mxu0 0.0
        %5418 = vmatpush1.msra.mxu0 0.0
        %5419 = vmatprep.subr.mxu0 0.0
        %5420 = vmatpush1.msra.mxu0 0.0
        %5421 = vmatprep.mubr.f32.mxu0 0.0
        %5422 = vmatmul.mubr.f32.gmra.mrb[0].mxu0 %v4554
        %v5423 = vpop.f32.mrb[0].mxu0
        %v5424 = vadd.f32 0.0, %v5423
        %v5425 = vpop.f32.mrb[0].mxu0
        %v5426 = vadd.f32 0.0, %v5425
        %5427 = vmatprep.mubr.f32.mxu0 0.0
        %5428 = vmatmul.mubr.f32.gmra.mrb[0].mxu0 %v4557
        %v5429 = vpop.f32.mrb[0].mxu0
        %v5430 = vadd.f32 0.0, %v5429
        %v5431 = vpop.f32.mrb[0].mxu0
        %v5432 = vadd.f32 0.0, %v5431
        %5433 = vmatprep.mubr.f32.mxu0 0.0
        %5434 = vmatmul.mubr.f32.gmra.mrb[0].mxu0 %v4560
        %v5435 = vpop.f32.mrb[0].mxu0
        %v5436 = vadd.f32 0.0, %v5435
        %v5437 = vpop.f32.mrb[0].mxu0
        %v5438 = vadd.f32 0.0, %v5437
        %5439 = vdwg.mxu0
        %v5504 = vunpack.c.l.b16 %v5283
        %v5505 = vunpack.c.h.b16 %v5283
        %v5506 = vunpack.c.l.b16 %v5284
        %v5507 = vunpack.c.h.b16 %v5284
        %v5508 = vunpack.c.l.b16 %v5285
        %v5509 = vunpack.c.h.b16 %v5285
        %v5510 = vunpack.c.l.b16 %v5286
        %v5511 = vunpack.c.h.b16 %v5286
        %v5512 = vunpack.c.l.b16 %v5287
        %v5513 = vunpack.c.h.b16 %v5287
        %v5514 = vunpack.c.l.b16 %v5288
        %v5515 = vunpack.c.h.b16 %v5288
        %v5516 = vunpack.c.l.b16 %v5289
        %v5517 = vunpack.c.h.b16 %v5289
        %v5518 = vunpack.c.l.b16 %v5290
        %v5519 = vunpack.c.h.b16 %v5290
        %v5520 = vunpack.c.l.b16 %v5291
        %v5521 = vunpack.c.h.b16 %v5291
        %v5522 = vunpack.c.l.b16 %v5292
        %v5523 = vunpack.c.h.b16 %v5292
        %v5524 = vunpack.c.l.b16 %v5293
        %v5525 = vunpack.c.h.b16 %v5293
        %v5526 = vunpack.c.l.b16 %v5294
        %v5527 = vunpack.c.h.b16 %v5294
        %v5528 = vunpack.c.l.b16 %v5295
        %v5529 = vunpack.c.h.b16 %v5295
        %v5530 = vunpack.c.l.b16 %v5296
        %v5531 = vunpack.c.h.b16 %v5296
        %v5532 = vunpack.c.l.b16 %v5297
        %v5533 = vunpack.c.h.b16 %v5297
        %v5534 = vunpack.c.l.b16 %v5298
        %v5535 = vunpack.c.h.b16 %v5298
        %v5536 = vunpack.c.l.b16 %v5299
        %v5537 = vunpack.c.h.b16 %v5299
        %v5538 = vunpack.c.l.b16 %v5300
        %v5539 = vunpack.c.h.b16 %v5300
        %v5540 = vunpack.c.l.b16 %v5301
        %v5541 = vunpack.c.h.b16 %v5301
        %v5542 = vunpack.c.l.b16 %v5302
        %v5543 = vunpack.c.h.b16 %v5302
        %v5544 = vunpack.c.l.b16 %v5303
        %v5545 = vunpack.c.h.b16 %v5303
        %v5546 = vunpack.c.l.b16 %v5304
        %v5547 = vunpack.c.h.b16 %v5304
        %v5548 = vunpack.c.l.b16 %v5305
        %v5549 = vunpack.c.h.b16 %v5305
        %v5550 = vunpack.c.l.b16 %v5306
        %v5551 = vunpack.c.h.b16 %v5306
        %v5552 = vunpack.c.l.b16 %v5307
        %v5553 = vunpack.c.h.b16 %v5307
        %v5554 = vunpack.c.l.b16 %v5308
        %v5555 = vunpack.c.h.b16 %v5308
        %v5556 = vunpack.c.l.b16 %v5309
        %v5557 = vunpack.c.h.b16 %v5309
        %v5558 = vunpack.c.l.b16 %v5310
        %v5559 = vunpack.c.h.b16 %v5310
        %v5560 = vunpack.c.l.b16 %v5311
        %v5561 = vunpack.c.h.b16 %v5311
        %v5562 = vunpack.c.l.b16 %v5312
        %v5563 = vunpack.c.h.b16 %v5312
        %v5564 = vunpack.c.l.b16 %v5313
        %v5565 = vunpack.c.h.b16 %v5313
        %v5566 = vunpack.c.l.b16 %v5314
        %v5567 = vunpack.c.h.b16 %v5314
        %v5568 = vunpack.c.l.b16 %v5315
        %v5569 = vunpack.c.h.b16 %v5315
        %v5570 = vunpack.c.l.b16 %v5316
        %v5571 = vunpack.c.h.b16 %v5316
        %v5572 = vunpack.c.l.b16 %v5317
        %v5573 = vunpack.c.h.b16 %v5317
        %v5574 = vunpack.c.l.b16 %v5318
        %v5575 = vunpack.c.h.b16 %v5318
        %v5576 = vunpack.c.l.b16 %v5319
        %v5577 = vunpack.c.h.b16 %v5319
        %v5578 = vunpack.c.l.b16 %v5320
        %v5579 = vunpack.c.h.b16 %v5320
        %v5580 = vunpack.c.l.b16 %v5321
        %v5581 = vunpack.c.h.b16 %v5321
        %v5582 = vunpack.c.l.b16 %v5322
        %v5583 = vunpack.c.h.b16 %v5322
        %v5584 = vunpack.c.l.b16 %v5323
        %v5585 = vunpack.c.h.b16 %v5323
        %v5586 = vunpack.c.l.b16 %v5324
        %v5587 = vunpack.c.h.b16 %v5324
        %v5588 = vunpack.c.l.b16 %v5325
        %v5589 = vunpack.c.h.b16 %v5325
        %v5590 = vunpack.c.l.b16 %v5326
        %v5591 = vunpack.c.h.b16 %v5326
        %v5592 = vunpack.c.l.b16 %v5327
        %v5593 = vunpack.c.h.b16 %v5327
        %v5594 = vunpack.c.l.b16 %v5328
        %v5595 = vunpack.c.h.b16 %v5328
        %v5596 = vunpack.c.l.b16 %v5329
        %v5597 = vunpack.c.h.b16 %v5329
        %v5598 = vunpack.c.l.b16 %v5330
        %v5599 = vunpack.c.h.b16 %v5330
        %v5600 = vunpack.c.l.b16 %v5331
        %v5601 = vunpack.c.h.b16 %v5331
        %v5602 = vunpack.c.l.b16 %v5332
        %v5603 = vunpack.c.h.b16 %v5332
        %v5604 = vunpack.c.l.b16 %v5333
        %v5605 = vunpack.c.h.b16 %v5333
        %v5606 = vunpack.c.l.b16 %v5334
        %v5607 = vunpack.c.h.b16 %v5334
        %v5608 = vunpack.c.l.b16 %v5335
        %v5609 = vunpack.c.h.b16 %v5335
        %v5610 = vunpack.c.l.b16 %v5336
        %v5611 = vunpack.c.h.b16 %v5336
        %v5612 = vunpack.c.l.b16 %v5337
        %v5613 = vunpack.c.h.b16 %v5337
        %v5614 = vunpack.c.l.b16 %v5338
        %v5615 = vunpack.c.h.b16 %v5338
        %v5616 = vunpack.c.l.b16 %v5339
        %v5617 = vunpack.c.h.b16 %v5339
        %v5618 = vunpack.c.l.b16 %v5340
        %v5619 = vunpack.c.h.b16 %v5340
        %v5620 = vunpack.c.l.b16 %v5341
        %v5621 = vunpack.c.h.b16 %v5341
        %v5622 = vunpack.c.l.b16 %v5342
        %v5623 = vunpack.c.h.b16 %v5342
        %v5624 = vunpack.c.l.b16 %v5343
        %v5625 = vunpack.c.h.b16 %v5343
        %v5626 = vunpack.c.l.b16 %v5344
        %v5627 = vunpack.c.h.b16 %v5344
        %v5628 = vunpack.c.l.b16 %v5345
        %v5629 = vunpack.c.h.b16 %v5345
        %v5630 = vunpack.c.l.b16 %v5346
        %v5631 = vunpack.c.h.b16 %v5346
        %v5632 = vpack.c.b16 %v5506, %v5504
        %v5633 = vpack.c.b16 %v5507, %v5505
        %v5634 = vpack.c.b16 %v5510, %v5508
        %v5635 = vpack.c.b16 %v5511, %v5509
        %v5636 = vpack.c.b16 %v5514, %v5512
        %v5637 = vpack.c.b16 %v5515, %v5513
        %v5638 = vpack.c.b16 %v5518, %v5516
        %v5639 = vpack.c.b16 %v5519, %v5517
        %v5640 = vpack.c.b16 %v5522, %v5520
        %v5641 = vpack.c.b16 %v5523, %v5521
        %v5642 = vpack.c.b16 %v5526, %v5524
        %v5643 = vpack.c.b16 %v5527, %v5525
        %v5644 = vpack.c.b16 %v5530, %v5528
        %v5645 = vpack.c.b16 %v5531, %v5529
        %v5646 = vpack.c.b16 %v5534, %v5532
        %v5647 = vpack.c.b16 %v5535, %v5533
        %v5648 = vpack.c.b16 %v5538, %v5536
        %v5649 = vpack.c.b16 %v5539, %v5537
        %v5650 = vpack.c.b16 %v5542, %v5540
        %v5651 = vpack.c.b16 %v5543, %v5541
        %v5652 = vpack.c.b16 %v5546, %v5544
        %v5653 = vpack.c.b16 %v5547, %v5545
        %v5654 = vpack.c.b16 %v5550, %v5548
        %v5655 = vpack.c.b16 %v5551, %v5549
        %v5656 = vpack.c.b16 %v5554, %v5552
        %v5657 = vpack.c.b16 %v5555, %v5553
        %v5658 = vpack.c.b16 %v5558, %v5556
        %v5659 = vpack.c.b16 %v5559, %v5557
        %v5660 = vpack.c.b16 %v5562, %v5560
        %v5661 = vpack.c.b16 %v5563, %v5561
        %v5662 = vpack.c.b16 %v5566, %v5564
        %v5663 = vpack.c.b16 %v5567, %v5565
        %v5664 = vpack.c.b16 %v5570, %v5568
        %v5665 = vpack.c.b16 %v5571, %v5569
        %v5666 = vpack.c.b16 %v5574, %v5572
        %v5667 = vpack.c.b16 %v5575, %v5573
        %v5668 = vpack.c.b16 %v5578, %v5576
        %v5669 = vpack.c.b16 %v5579, %v5577
        %v5670 = vpack.c.b16 %v5582, %v5580
        %v5671 = vpack.c.b16 %v5583, %v5581
        %v5672 = vpack.c.b16 %v5586, %v5584
        %v5673 = vpack.c.b16 %v5587, %v5585
        %v5674 = vpack.c.b16 %v5590, %v5588
        %v5675 = vpack.c.b16 %v5591, %v5589
        %v5676 = vpack.c.b16 %v5594, %v5592
        %v5677 = vpack.c.b16 %v5595, %v5593
        %v5678 = vpack.c.b16 %v5598, %v5596
        %v5679 = vpack.c.b16 %v5599, %v5597
        %v5680 = vpack.c.b16 %v5602, %v5600
        %v5681 = vpack.c.b16 %v5603, %v5601
        %v5682 = vpack.c.b16 %v5606, %v5604
        %v5683 = vpack.c.b16 %v5607, %v5605
        %v5684 = vpack.c.b16 %v5610, %v5608
        %v5685 = vpack.c.b16 %v5611, %v5609
        %v5686 = vpack.c.b16 %v5614, %v5612
        %v5687 = vpack.c.b16 %v5615, %v5613
        %v5688 = vpack.c.b16 %v5618, %v5616
        %v5689 = vpack.c.b16 %v5619, %v5617
        %v5690 = vpack.c.b16 %v5622, %v5620
        %v5691 = vpack.c.b16 %v5623, %v5621
        %v5692 = vpack.c.b16 %v5626, %v5624
        %v5693 = vpack.c.b16 %v5627, %v5625
        %v5694 = vpack.c.b16 %v5630, %v5628
        %v5695 = vpack.c.b16 %v5631, %v5629
        %5760 = vmatprep.subr.bf16.mxu0 %v5633
        %5761 = vmatpush1.bf16.msra.mxu0 %v5632
        %5762 = vmatprep.subr.bf16.mxu0 %v5635
        %5763 = vmatpush1.bf16.msra.mxu0 %v5634
        %5764 = vmatprep.subr.bf16.mxu0 %v5637
        %5765 = vmatpush1.bf16.msra.mxu0 %v5636
        %5766 = vmatprep.subr.bf16.mxu0 %v5639
        %5767 = vmatpush1.bf16.msra.mxu0 %v5638
        %5768 = vmatprep.subr.bf16.mxu0 %v5641
        %5769 = vmatpush1.bf16.msra.mxu0 %v5640
        %5770 = vmatprep.subr.bf16.mxu0 %v5643
        %5771 = vmatpush1.bf16.msra.mxu0 %v5642
        %5772 = vmatprep.subr.bf16.mxu0 %v5645
        %5773 = vmatpush1.bf16.msra.mxu0 %v5644
        %5774 = vmatprep.subr.bf16.mxu0 %v5647
        %5775 = vmatpush1.bf16.msra.mxu0 %v5646
        %5776 = vmatprep.subr.bf16.mxu0 %v5649
        %5777 = vmatpush1.bf16.msra.mxu0 %v5648
        %5778 = vmatprep.subr.bf16.mxu0 %v5651
        %5779 = vmatpush1.bf16.msra.mxu0 %v5650
        %5780 = vmatprep.subr.bf16.mxu0 %v5653
        %5781 = vmatpush1.bf16.msra.mxu0 %v5652
        %5782 = vmatprep.subr.bf16.mxu0 %v5655
        %5783 = vmatpush1.bf16.msra.mxu0 %v5654
        %5784 = vmatprep.subr.bf16.mxu0 %v5657
        %5785 = vmatpush1.bf16.msra.mxu0 %v5656
        %5786 = vmatprep.subr.bf16.mxu0 %v5659
        %5787 = vmatpush1.bf16.msra.mxu0 %v5658
        %5788 = vmatprep.subr.bf16.mxu0 %v5661
        %5789 = vmatpush1.bf16.msra.mxu0 %v5660
        %5790 = vmatprep.subr.bf16.mxu0 %v5663
        %5791 = vmatpush1.bf16.msra.mxu0 %v5662
        %5792 = vmatprep.mubr.bf16.mxu0 %v5275
        %5793 = vmatmul.mubr.bf16.gmra.mrb[0].mxu0 %v5274
        %v5794 = vpop.f32.mrb[0].mxu0
        %v5795 = vadd.f32 %v5424, %v5794
        %v5796 = vpop.f32.mrb[0].mxu0
        %v5797 = vadd.f32 %v5426, %v5796
        %v5798 = vpop.f32.mrb[0].mxu0
        %v5799 = vadd.f32 %v5430, %v5798
        %v5800 = vpop.f32.mrb[0].mxu0
        %v5801 = vadd.f32 %v5432, %v5800
        %5802 = vmatprep.mubr.bf16.mxu0 %v5279
        %5803 = vmatmul.mubr.bf16.gmra.mrb[0].mxu0 %v5278
        %v5804 = vpop.f32.mrb[0].mxu0
        %v5805 = vadd.f32 %v5436, %v5804
        %v5806 = vpop.f32.mrb[0].mxu0
        %v5807 = vadd.f32 %v5438, %v5806
        %v5808 = vpop.f32.mrb[0].mxu0
        %v5809 = vpop.f32.mrb[0].mxu0
        %5810 = vdwg.mxu0
        %5811 = vmatprep.subr.bf16.mxu0 %v5665
        %5812 = vmatpush1.bf16.msra.mxu0 %v5664
        %5813 = vmatprep.subr.bf16.mxu0 %v5667
        %5814 = vmatpush1.bf16.msra.mxu0 %v5666
        %5815 = vmatprep.subr.bf16.mxu0 %v5669
        %5816 = vmatpush1.bf16.msra.mxu0 %v5668
        %5817 = vmatprep.subr.bf16.mxu0 %v5671
        %5818 = vmatpush1.bf16.msra.mxu0 %v5670
        %5819 = vmatprep.subr.bf16.mxu0 %v5673
        %5820 = vmatpush1.bf16.msra.mxu0 %v5672
        %5821 = vmatprep.subr.bf16.mxu0 %v5675
        %5822 = vmatpush1.bf16.msra.mxu0 %v5674
        %5823 = vmatprep.subr.bf16.mxu0 %v5677
        %5824 = vmatpush1.bf16.msra.mxu0 %v5676
        %5825 = vmatprep.subr.bf16.mxu0 %v5679
        %5826 = vmatpush1.bf16.msra.mxu0 %v5678
        %5827 = vmatprep.subr.bf16.mxu0 %v5681
        %5828 = vmatpush1.bf16.msra.mxu0 %v5680
        %5829 = vmatprep.subr.bf16.mxu0 %v5683
        %5830 = vmatpush1.bf16.msra.mxu0 %v5682
        %5831 = vmatprep.subr.bf16.mxu0 %v5685
        %5832 = vmatpush1.bf16.msra.mxu0 %v5684
        %5833 = vmatprep.subr.bf16.mxu0 %v5687
        %5834 = vmatpush1.bf16.msra.mxu0 %v5686
        %5835 = vmatprep.subr.bf16.mxu0 %v5689
        %5836 = vmatpush1.bf16.msra.mxu0 %v5688
        %5837 = vmatprep.subr.bf16.mxu0 %v5691
        %5838 = vmatpush1.bf16.msra.mxu0 %v5690
        %5839 = vmatprep.subr.bf16.mxu0 %v5693
        %5840 = vmatpush1.bf16.msra.mxu0 %v5692
        %5841 = vmatprep.subr.bf16.mxu0 %v5695
        %5842 = vmatpush1.bf16.msra.mxu0 %v5694
        %5843 = vmatprep.mubr.bf16.mxu0 %v5277
        %5844 = vmatmul.mubr.bf16.gmra.mrb[0].mxu0 %v5276
        %v5845 = vpop.f32.mrb[0].mxu0
        %v5846 = vadd.f32 %v5795, %v5845
        %v5847 = vpop.f32.mrb[0].mxu0
        %v5848 = vadd.f32 %v5797, %v5847
        %v5849 = vpop.f32.mrb[0].mxu0
        %v5850 = vadd.f32 %v5799, %v5849
        %v5851 = vpop.f32.mrb[0].mxu0
        %v5852 = vadd.f32 %v5801, %v5851
        %5853 = vmatprep.mubr.bf16.mxu0 %v5281
        %5854 = vmatmul.mubr.bf16.gmra.mrb[0].mxu0 %v5280
        %v5855 = vpop.f32.mrb[0].mxu0
        %v5856 = vadd.f32 %v5805, %v5855
        %v5857 = vpop.f32.mrb[0].mxu0
        %v5858 = vadd.f32 %v5807, %v5857
        %v5859 = vpop.f32.mrb[0].mxu0
        %v5860 = vpop.f32.mrb[0].mxu0
        %5861 = vdwg.mxu0
        %s5862 = scalar_lea.vmem [#allocation9], %s5347
        %v5863 = vld [vmem:[%s5862] sm:$0x3]
        %v5865 = vlaneseq
        %v5866 = vshrl.u32 %v5865, 7
        %v5867 = vsub.s32 0, %v5866
        %v5868 = vrot.slane %v5863, %v5867
        %v5869 = vlaneseq
        %v5870 = vshrl.u32 %v5869, 7
        %v5871 = vsub.s32 1, %v5870
        %v5872 = vrot.slane %v5863, %v5871
        %v5875 = vadd.f32 %v5846, %v5868
        %v5876 = vadd.f32 %v5848, %v5872
        %v5877 = vadd.f32 %v5850, %v5868
        %v5878 = vadd.f32 %v5852, %v5872
        %v5879 = vadd.f32 %v5856, %v5868
        %v5880 = vadd.f32 %v5858, %v5872
        %v5881 = vtanh.pop %v5875
        %v5882 = vtanh.pop %v5876
        %v5883 = vtanh.pop %v5877
        %v5884 = vtanh.pop %v5878
        %v5885 = vtanh.pop %v5879
        %v5886 = vtanh.pop %v5880
        %s5887 = smul.u32 %s5261, 256
        %s5888 = scalar_lea.vmem %s7, %s5887
        %v5889 = vld [vmem:[%s5888] sm:$0xff]
        %v5890 = vld [vmem:[%s5888 + $0x8] sm:$0xff]
        %v5891 = vld [vmem:[%s5888 + $0x10] sm:$0xff]
        %v5892 = vld [vmem:[%s5888 + $0x18] sm:$0xff]
        %v5893 = vld [vmem:[%s5888 + $0x20] sm:$0xff]
        %v5894 = vld [vmem:[%s5888 + $0x28] sm:$0xff]
        %v5895 = vld [vmem:[%s5888 + $0x30] sm:$0xff]
        %v5896 = vld [vmem:[%s5888 + $0x38] sm:$0xff]
        %v5897 = vld [vmem:[%s5888 + $0x40] sm:$0xff]
        %v5898 = vld [vmem:[%s5888 + $0x48] sm:$0xff]
        %v5899 = vld [vmem:[%s5888 + $0x50] sm:$0xff]
        %v5900 = vld [vmem:[%s5888 + $0x58] sm:$0xff]
        %v5901 = vld [vmem:[%s5888 + $0x60] sm:$0xff]
        %v5902 = vld [vmem:[%s5888 + $0x68] sm:$0xff]
        %v5903 = vld [vmem:[%s5888 + $0x70] sm:$0xff]
        %v5904 = vld [vmem:[%s5888 + $0x78] sm:$0xff]
        %v5905 = vld [vmem:[%s5888 + $0x80] sm:$0xff]
        %v5906 = vld [vmem:[%s5888 + $0x88] sm:$0xff]
        %v5907 = vld [vmem:[%s5888 + $0x90] sm:$0xff]
        %v5908 = vld [vmem:[%s5888 + $0x98] sm:$0xff]
        %v5909 = vld [vmem:[%s5888 + $0xa0] sm:$0xff]
        %v5910 = vld [vmem:[%s5888 + $0xa8] sm:$0xff]
        %v5911 = vld [vmem:[%s5888 + $0xb0] sm:$0xff]
        %v5912 = vld [vmem:[%s5888 + $0xb8] sm:$0xff]
        %v5913 = vld [vmem:[%s5888 + $0xc0] sm:$0xff]
        %v5914 = vld [vmem:[%s5888 + $0xc8] sm:$0xff]
        %v5915 = vld [vmem:[%s5888 + $0xd0] sm:$0xff]
        %v5916 = vld [vmem:[%s5888 + $0xd8] sm:$0xff]
        %v5917 = vld [vmem:[%s5888 + $0xe0] sm:$0xff]
        %v5918 = vld [vmem:[%s5888 + $0xe8] sm:$0xff]
        %v5919 = vld [vmem:[%s5888 + $0xf0] sm:$0xff]
        %v5920 = vld [vmem:[%s5888 + $0xf8] sm:$0xff]
        %s5921 = scalar_lea.vmem [#allocation10], %s5261
        %v5922 = vld [vmem:[%s5921] sm:$0x1]
        %v5924 = vlaneseq
        %v5925 = vshrl.u32 %v5924, 7
        %v5926 = vsub.s32 0, %v5925
        %v5927 = vrot.slane %v5922, %v5926
        %5929 = vmatprep.subr.mxu0 0.0
        %5930 = vmatpush1.msra.mxu0 %v5889
        %5931 = vmatprep.subr.mxu0 0.0
        %5932 = vmatpush1.msra.mxu0 %v5890
        %5933 = vmatprep.subr.mxu0 0.0
        %5934 = vmatpush1.msra.mxu0 %v5891
        %5935 = vmatprep.subr.mxu0 0.0
        %5936 = vmatpush1.msra.mxu0 %v5892
        %5937 = vmatprep.subr.mxu0 0.0
        %5938 = vmatpush1.msra.mxu0 %v5893
        %5939 = vmatprep.subr.mxu0 0.0
        %5940 = vmatpush1.msra.mxu0 %v5894
        %5941 = vmatprep.subr.mxu0 0.0
        %5942 = vmatpush1.msra.mxu0 %v5895
        %5943 = vmatprep.subr.mxu0 0.0
        %5944 = vmatpush1.msra.mxu0 %v5896
        %5945 = vmatprep.subr.mxu0 0.0
        %5946 = vmatpush1.msra.mxu0 %v5897
        %5947 = vmatprep.subr.mxu0 0.0
        %5948 = vmatpush1.msra.mxu0 %v5898
        %5949 = vmatprep.subr.mxu0 0.0
        %5950 = vmatpush1.msra.mxu0 %v5899
        %5951 = vmatprep.subr.mxu0 0.0
        %5952 = vmatpush1.msra.mxu0 %v5900
        %5953 = vmatprep.subr.mxu0 0.0
        %5954 = vmatpush1.msra.mxu0 %v5901
        %5955 = vmatprep.subr.mxu0 0.0
        %5956 = vmatpush1.msra.mxu0 %v5902
        %5957 = vmatprep.subr.mxu0 0.0
        %5958 = vmatpush1.msra.mxu0 %v5903
        %5959 = vmatprep.subr.mxu0 0.0
        %5960 = vmatpush1.msra.mxu0 %v5904
        %5961 = vmatprep.subr.mxu0 0.0
        %5962 = vmatpush1.msra.mxu0 %v5905
        %5963 = vmatprep.subr.mxu0 0.0
        %5964 = vmatpush1.msra.mxu0 %v5906
        %5965 = vmatprep.subr.mxu0 0.0
        %5966 = vmatpush1.msra.mxu0 %v5907
        %5967 = vmatprep.subr.mxu0 0.0
        %5968 = vmatpush1.msra.mxu0 %v5908
        %5969 = vmatprep.subr.mxu0 0.0
        %5970 = vmatpush1.msra.mxu0 %v5909
        %5971 = vmatprep.subr.mxu0 0.0
        %5972 = vmatpush1.msra.mxu0 %v5910
        %5973 = vmatprep.subr.mxu0 0.0
        %5974 = vmatpush1.msra.mxu0 %v5911
        %5975 = vmatprep.subr.mxu0 0.0
        %5976 = vmatpush1.msra.mxu0 %v5912
        %5977 = vmatprep.subr.mxu0 0.0
        %5978 = vmatpush1.msra.mxu0 %v5913
        %5979 = vmatprep.subr.mxu0 0.0
        %5980 = vmatpush1.msra.mxu0 %v5914
        %5981 = vmatprep.subr.mxu0 0.0
        %5982 = vmatpush1.msra.mxu0 %v5915
        %5983 = vmatprep.subr.mxu0 0.0
        %5984 = vmatpush1.msra.mxu0 %v5916
        %5985 = vmatprep.subr.mxu0 0.0
        %5986 = vmatpush1.msra.mxu0 %v5917
        %5987 = vmatprep.subr.mxu0 0.0
        %5988 = vmatpush1.msra.mxu0 %v5918
        %5989 = vmatprep.subr.mxu0 0.0
        %5990 = vmatpush1.msra.mxu0 %v5919
        %5991 = vmatprep.subr.mxu0 0.0
        %5992 = vmatpush1.msra.mxu0 %v5920
        %5993 = vmatprep.mubr.f32.mxu0 %v5882
        %5994 = vmatmul.mubr.f32.gmra.mrb[0].mxu0 %v5881
        %v5995 = vpop.f32.mrb[0].mxu0
        %v5996 = vadd.f32 %v5927, %v5995
        %v5997 = vpop.f32.mrb[0].mxu0
        %5998 = vmatprep.mubr.f32.mxu0 %v5884
        %5999 = vmatmul.mubr.f32.gmra.mrb[0].mxu0 %v5883
        %v6000 = vpop.f32.mrb[0].mxu0
        %v6001 = vadd.f32 %v5927, %v6000
        %v6002 = vpop.f32.mrb[0].mxu0
        %6003 = vmatprep.mubr.f32.mxu0 %v5886
        %6004 = vmatmul.mubr.f32.gmra.mrb[0].mxu0 %v5885
        %v6005 = vpop.f32.mrb[0].mxu0
        %v6006 = vadd.f32 %v5927, %v6005
        %v6007 = vpop.f32.mrb[0].mxu0
        %6008 = vdwg.mxu0
        %v6009 = vsel %vm5219, %v5996, -inf
        %v6010 = vsel %vm5219, %v6001, -inf
        %v6011 = vsel %vm5222, %v6006, -inf
        %v6012 = vmax.f32 %v6009, %v6010
        %v6013 = vmax.f32 %v6012, %v6011
        %v6014 = vrot.slane %v6013, 4
        %v6015 = vmax.f32 %v6013, %v6014
        %v6016 = vrot.slane %v6015, 2
        %v6017 = vmax.f32 %v6015, %v6016
        %v6018 = vrot.slane %v6017, 1
        %v6019 = vmax.f32 %v6017, %v6018
        %v6020 = vsub.f32 %v5996, %v6019
        %v6021 = vsub.f32 %v6001, %v6019
        %v6022 = vsub.f32 %v6006, %v6019
        %v6023 = vmul.f32 %v6020, 1.442695
        %v6024 = vpow.pop %v6023
        %v6025 = vmul.f32 %v6021, 1.442695
        %v6026 = vpow.pop %v6025
        %v6027 = vmul.f32 %v6022, 1.442695
        %v6028 = vpow.pop %v6027
        %v6029 = vsel %vm5219, %v6024, 0.0
        %v6030 = vsel %vm5219, %v6026, 0.0
        %v6031 = vadd.f32 %v6029, %v6030
        %v6032 = vsel %vm5222, %v6028, 0.0
        %v6033 = vadd.f32 %v6031, %v6032
        %v6034 = vrot.slane %v6033, 4
        %v6035 = vadd.f32 %v6033, %v6034
        %v6036 = vrot.slane %v6035, 2
        %v6037 = vadd.f32 %v6035, %v6036
        %v6038 = vrot.slane %v6037, 1
        %v6039 = vadd.f32 %v6037, %v6038
        %v6040 = vrcp.pop %v6039
        %v6041 = vmul.f32 %v6024, %v6040
        %v6042 = vmul.f32 %v6026, %v6040
        %v6043 = vmul.f32 %v6028, %v6040
        %s6044 = sld [smem:[#allocation3 + %s5261]]
        %v6045 = vstv %s6044
        %v6046 = vmul.f32 %v6041, %v6045
        %v6047 = vmul.f32 %v6042, %v6045
        %v6048 = vmul.f32 %v6043, %v6045
        %6049 = vxpose.xlu0.b32.start [1/16] %v6046, 128
        %6050 = vxpose.xlu0.b32.cont [2/16] %v6047, 128
        %6051 = vxpose.xlu0.b32.cont [3/16] %v6048, 128
        %6052 = vxpose.xlu0.b32.cont [4/16] 0.0, 128
        %6053 = vxpose.xlu0.b32.cont [5/16] 0.0, 128
        %6054 = vxpose.xlu0.b32.cont [6/16] 0.0, 128
        %6055 = vxpose.xlu0.b32.cont [7/16] 0.0, 128
        %6056 = vxpose.xlu0.b32.cont [8/16] 0.0, 128
        %6057 = vxpose.xlu0.b32.cont [9/16] 0.0, 128
        %6058 = vxpose.xlu0.b32.cont [10/16] 0.0, 128
        %6059 = vxpose.xlu0.b32.cont [11/16] 0.0, 128
        %6060 = vxpose.xlu0.b32.cont [12/16] 0.0, 128
        %6061 = vxpose.xlu0.b32.cont [13/16] 0.0, 128
        %6062 = vxpose.xlu0.b32.cont [14/16] 0.0, 128
        %6063 = vxpose.xlu0.b32.cont [15/16] 0.0, 128
        %6064 = vxpose.xlu0.b32.end [16/16] 0.0, 128
        %v6065 = vpop.trf.xlu0
        %v6066 = vpop.trf.xlu0
        %v6067 = vpop.trf.xlu0
        %v6068 = vpop.trf.xlu0
        %v6069 = vpop.trf.xlu0
        %v6070 = vpop.trf.xlu0
        %v6071 = vpop.trf.xlu0
        %v6072 = vpop.trf.xlu0
        %v6073 = vpop.trf.xlu0
        %v6074 = vpop.trf.xlu0
        %v6075 = vpop.trf.xlu0
        %v6076 = vpop.trf.xlu0
        %v6077 = vpop.trf.xlu0
        %v6078 = vpop.trf.xlu0
        %v6079 = vpop.trf.xlu0
        %v6080 = vpop.trf.xlu0
        %v6082 = vsel %vm5219, %v6065, 0
        %v6085 = vsel %vm5219, %v6066, 0
        %v6088 = vsel %vm5219, %v6067, 0
        %vm6090 = vcmask 1040384
        %v6092 = vsel %vm6090, %v5270, 0
        %v6095 = vsel %vm6090, %v5271, 0
        %v6098 = vsel %vm6090, %v5272, 0
        %v6101 = vsel %vm6090, %v5273, 0
        %6103 = vmatprep.subr.mxu0 %v5263
        %6104 = vmatpush1.msra.mxu0 %v5262
        %6105 = vmatprep.subr.mxu0 %v5267
        %6106 = vmatpush1.msra.mxu0 %v5266
        %6107 = vmatprep.subr.mxu0 %v6095
        %6108 = vmatpush1.msra.mxu0 %v6092
        %6109 = vmatprep.subr.mxu0 0.0
        %6110 = vmatpush1.msra.mxu0 0.0
        %6111 = vmatprep.subr.mxu0 0.0
        %6112 = vmatpush1.msra.mxu0 0.0
        %6113 = vmatprep.subr.mxu0 0.0
        %6114 = vmatpush1.msra.mxu0 0.0
        %6115 = vmatprep.subr.mxu0 0.0
        %6116 = vmatpush1.msra.mxu0 0.0
        %6117 = vmatprep.subr.mxu0 0.0
        %6118 = vmatpush1.msra.mxu0 0.0
        %6119 = vmatprep.subr.mxu0 0.0
        %6120 = vmatpush1.msra.mxu0 0.0
        %6121 = vmatprep.subr.mxu0 0.0
        %6122 = vmatpush1.msra.mxu0 0.0
        %6123 = vmatprep.subr.mxu0 0.0
        %6124 = vmatpush1.msra.mxu0 0.0
        %6125 = vmatprep.subr.mxu0 0.0
        %6126 = vmatpush1.msra.mxu0 0.0
        %6127 = vmatprep.subr.mxu0 0.0
        %6128 = vmatpush1.msra.mxu0 0.0
        %6129 = vmatprep.subr.mxu0 0.0
        %6130 = vmatpush1.msra.mxu0 0.0
        %6131 = vmatprep.subr.mxu0 0.0
        %6132 = vmatpush1.msra.mxu0 0.0
        %6133 = vmatprep.subr.mxu0 0.0
        %6134 = vmatpush1.msra.mxu0 0.0
        %6135 = vmatprep.subr.mxu0 0.0
        %6136 = vmatpush1.msra.mxu0 0.0
        %6137 = vmatprep.subr.mxu0 0.0
        %6138 = vmatpush1.msra.mxu0 0.0
        %6139 = vmatprep.subr.mxu0 0.0
        %6140 = vmatpush1.msra.mxu0 0.0
        %6141 = vmatprep.subr.mxu0 0.0
        %6142 = vmatpush1.msra.mxu0 0.0
        %6143 = vmatprep.subr.mxu0 0.0
        %6144 = vmatpush1.msra.mxu0 0.0
        %6145 = vmatprep.subr.mxu0 0.0
        %6146 = vmatpush1.msra.mxu0 0.0
        %6147 = vmatprep.subr.mxu0 0.0
        %6148 = vmatpush1.msra.mxu0 0.0
        %6149 = vmatprep.subr.mxu0 0.0
        %6150 = vmatpush1.msra.mxu0 0.0
        %6151 = vmatprep.subr.mxu0 0.0
        %6152 = vmatpush1.msra.mxu0 0.0
        %6153 = vmatprep.subr.mxu0 0.0
        %6154 = vmatpush1.msra.mxu0 0.0
        %6155 = vmatprep.subr.mxu0 0.0
        %6156 = vmatpush1.msra.mxu0 0.0
        %6157 = vmatprep.subr.mxu0 0.0
        %6158 = vmatpush1.msra.mxu0 0.0
        %6159 = vmatprep.subr.mxu0 0.0
        %6160 = vmatpush1.msra.mxu0 0.0
        %6161 = vmatprep.subr.mxu0 0.0
        %6162 = vmatpush1.msra.mxu0 0.0
        %6163 = vmatprep.subr.mxu0 0.0
        %6164 = vmatpush1.msra.mxu0 0.0
        %6165 = vmatprep.subr.mxu0 0.0
        %6166 = vmatpush1.msra.mxu0 0.0
        %6167 = vmatprep.mubr.f32.mxu0 0.0
        %6168 = vmatmul.mubr.f32.gmra.mrb[0].mxu0 %v6082
        %v6169 = vpop.f32.mrb[0].mxu0
        %v6170 = vadd.f32 0.0, %v6169
        %v6171 = vpop.f32.mrb[0].mxu0
        %v6172 = vadd.f32 0.0, %v6171
        %6173 = vmatprep.mubr.f32.mxu0 0.0
        %6174 = vmatmul.mubr.f32.gmra.mrb[0].mxu0 %v6085
        %v6175 = vpop.f32.mrb[0].mxu0
        %v6176 = vadd.f32 0.0, %v6175
        %v6177 = vpop.f32.mrb[0].mxu0
        %v6178 = vadd.f32 0.0, %v6177
        %6179 = vmatprep.mubr.f32.mxu0 0.0
        %6180 = vmatmul.mubr.f32.gmra.mrb[0].mxu0 %v6088
        %v6181 = vpop.f32.mrb[0].mxu0
        %v6182 = vadd.f32 0.0, %v6181
        %v6183 = vpop.f32.mrb[0].mxu0
        %v6184 = vadd.f32 0.0, %v6183
        %6185 = vdwg.mxu0
        %6186 = vmatprep.subr.mxu0 %v5265
        %6187 = vmatpush1.msra.mxu0 %v5264
        %6188 = vmatprep.subr.mxu0 %v5269
        %6189 = vmatpush1.msra.mxu0 %v5268
        %6190 = vmatprep.subr.mxu0 %v6101
        %6191 = vmatpush1.msra.mxu0 %v6098
        %6192 = vmatprep.subr.mxu0 0.0
        %6193 = vmatpush1.msra.mxu0 0.0
        %6194 = vmatprep.subr.mxu0 0.0
        %6195 = vmatpush1.msra.mxu0 0.0
        %6196 = vmatprep.subr.mxu0 0.0
        %6197 = vmatpush1.msra.mxu0 0.0
        %6198 = vmatprep.subr.mxu0 0.0
        %6199 = vmatpush1.msra.mxu0 0.0
        %6200 = vmatprep.subr.mxu0 0.0
        %6201 = vmatpush1.msra.mxu0 0.0
        %6202 = vmatprep.subr.mxu0 0.0
        %6203 = vmatpush1.msra.mxu0 0.0
        %6204 = vmatprep.subr.mxu0 0.0
        %6205 = vmatpush1.msra.mxu0 0.0
        %6206 = vmatprep.subr.mxu0 0.0
        %6207 = vmatpush1.msra.mxu0 0.0
        %6208 = vmatprep.subr.mxu0 0.0
        %6209 = vmatpush1.msra.mxu0 0.0
        %6210 = vmatprep.subr.mxu0 0.0
        %6211 = vmatpush1.msra.mxu0 0.0
        %6212 = vmatprep.subr.mxu0 0.0
        %6213 = vmatpush1.msra.mxu0 0.0
        %6214 = vmatprep.subr.mxu0 0.0
        %6215 = vmatpush1.msra.mxu0 0.0
        %6216 = vmatprep.subr.mxu0 0.0
        %6217 = vmatpush1.msra.mxu0 0.0
        %6218 = vmatprep.subr.mxu0 0.0
        %6219 = vmatpush1.msra.mxu0 0.0
        %6220 = vmatprep.subr.mxu0 0.0
        %6221 = vmatpush1.msra.mxu0 0.0
        %6222 = vmatprep.subr.mxu0 0.0
        %6223 = vmatpush1.msra.mxu0 0.0
        %6224 = vmatprep.subr.mxu0 0.0
        %6225 = vmatpush1.msra.mxu0 0.0
        %6226 = vmatprep.subr.mxu0 0.0
        %6227 = vmatpush1.msra.mxu0 0.0
        %6228 = vmatprep.subr.mxu0 0.0
        %6229 = vmatpush1.msra.mxu0 0.0
        %6230 = vmatprep.subr.mxu0 0.0
        %6231 = vmatpush1.msra.mxu0 0.0
        %6232 = vmatprep.subr.mxu0 0.0
        %6233 = vmatpush1.msra.mxu0 0.0
        %6234 = vmatprep.subr.mxu0 0.0
        %6235 = vmatpush1.msra.mxu0 0.0
        %6236 = vmatprep.subr.mxu0 0.0
        %6237 = vmatpush1.msra.mxu0 0.0
        %6238 = vmatprep.subr.mxu0 0.0
        %6239 = vmatpush1.msra.mxu0 0.0
        %6240 = vmatprep.subr.mxu0 0.0
        %6241 = vmatpush1.msra.mxu0 0.0
        %6242 = vmatprep.subr.mxu0 0.0
        %6243 = vmatpush1.msra.mxu0 0.0
        %6244 = vmatprep.subr.mxu0 0.0
        %6245 = vmatpush1.msra.mxu0 0.0
        %6246 = vmatprep.subr.mxu0 0.0
        %6247 = vmatpush1.msra.mxu0 0.0
        %6248 = vmatprep.subr.mxu0 0.0
        %6249 = vmatpush1.msra.mxu0 0.0
        %6250 = vmatprep.mubr.f32.mxu0 0.0
        %6251 = vmatmul.mubr.f32.gmra.mrb[0].mxu0 %v6082
        %v6252 = vpop.f32.mrb[0].mxu0
        %v6253 = vadd.f32 0.0, %v6252
        %v6254 = vpop.f32.mrb[0].mxu0
        %v6255 = vadd.f32 0.0, %v6254
        %6256 = vmatprep.mubr.f32.mxu0 0.0
        %6257 = vmatmul.mubr.f32.gmra.mrb[0].mxu0 %v6085
        %v6258 = vpop.f32.mrb[0].mxu0
        %v6259 = vadd.f32 0.0, %v6258
        %v6260 = vpop.f32.mrb[0].mxu0
        %v6261 = vadd.f32 0.0, %v6260
        %6262 = vmatprep.mubr.f32.mxu0 0.0
        %6263 = vmatmul.mubr.f32.gmra.mrb[0].mxu0 %v6088
        %v6264 = vpop.f32.mrb[0].mxu0
        %v6265 = vadd.f32 0.0, %v6264
        %v6266 = vpop.f32.mrb[0].mxu0
        %v6267 = vadd.f32 0.0, %v6266
        %6268 = vdwg.mxu0
        %6269 = vxpose.xlu0.b32.start [1/16] %v5258, 128
        %6270 = vxpose.xlu0.b32.cont [2/16] %v5259, 128
        %6271 = vxpose.xlu0.b32.cont [3/16] %v5260, 128
        %6272 = vxpose.xlu0.b32.cont [4/16] 0.0, 128
        %6273 = vxpose.xlu0.b32.cont [5/16] 0.0, 128
        %6274 = vxpose.xlu0.b32.cont [6/16] 0.0, 128
        %6275 = vxpose.xlu0.b32.cont [7/16] 0.0, 128
        %6276 = vxpose.xlu0.b32.cont [8/16] 0.0, 128
        %6277 = vxpose.xlu0.b32.cont [9/16] 0.0, 128
        %6278 = vxpose.xlu0.b32.cont [10/16] 0.0, 128
        %6279 = vxpose.xlu0.b32.cont [11/16] 0.0, 128
        %6280 = vxpose.xlu0.b32.cont [12/16] 0.0, 128
        %6281 = vxpose.xlu0.b32.cont [13/16] 0.0, 128
        %6282 = vxpose.xlu0.b32.cont [14/16] 0.0, 128
        %6283 = vxpose.xlu0.b32.cont [15/16] 0.0, 128
        %6284 = vxpose.xlu0.b32.end [16/16] 0.0, 128
        %v6285 = vpop.trf.xlu0
        %v6286 = vpop.trf.xlu0
        %v6287 = vpop.trf.xlu0
        %v6288 = vpop.trf.xlu0
        %v6289 = vpop.trf.xlu0
        %v6290 = vpop.trf.xlu0
        %v6291 = vpop.trf.xlu0
        %v6292 = vpop.trf.xlu0
        %v6293 = vpop.trf.xlu0
        %v6294 = vpop.trf.xlu0
        %v6295 = vpop.trf.xlu0
        %v6296 = vpop.trf.xlu0
        %v6297 = vpop.trf.xlu0
        %v6298 = vpop.trf.xlu0
        %v6299 = vpop.trf.xlu0
        %v6300 = vpop.trf.xlu0
        %v6302 = vsel %vm5219, %v6285, 0
        %v6305 = vsel %vm5219, %v6286, 0
        %v6308 = vsel %vm5219, %v6287, 0
        %v6311 = vsel %vm6090, %v4470, 0
        %v6314 = vsel %vm6090, %v4471, 0
        %v6317 = vsel %vm6090, %v4472, 0
        %v6320 = vsel %vm6090, %v4473, 0
        %6322 = vmatprep.subr.mxu0 %v4463
        %6323 = vmatpush1.msra.mxu0 %v4462
        %6324 = vmatprep.subr.mxu0 %v4467
        %6325 = vmatpush1.msra.mxu0 %v4466
        %6326 = vmatprep.subr.mxu0 %v6314
        %6327 = vmatpush1.msra.mxu0 %v6311
        %6328 = vmatprep.subr.mxu0 0.0
        %6329 = vmatpush1.msra.mxu0 0.0
        %6330 = vmatprep.subr.mxu0 0.0
        %6331 = vmatpush1.msra.mxu0 0.0
        %6332 = vmatprep.subr.mxu0 0.0
        %6333 = vmatpush1.msra.mxu0 0.0
        %6334 = vmatprep.subr.mxu0 0.0
        %6335 = vmatpush1.msra.mxu0 0.0
        %6336 = vmatprep.subr.mxu0 0.0
        %6337 = vmatpush1.msra.mxu0 0.0
        %6338 = vmatprep.subr.mxu0 0.0
        %6339 = vmatpush1.msra.mxu0 0.0
        %6340 = vmatprep.subr.mxu0 0.0
        %6341 = vmatpush1.msra.mxu0 0.0
        %6342 = vmatprep.subr.mxu0 0.0
        %6343 = vmatpush1.msra.mxu0 0.0
        %6344 = vmatprep.subr.mxu0 0.0
        %6345 = vmatpush1.msra.mxu0 0.0
        %6346 = vmatprep.subr.mxu0 0.0
        %6347 = vmatpush1.msra.mxu0 0.0
        %6348 = vmatprep.subr.mxu0 0.0
        %6349 = vmatpush1.msra.mxu0 0.0
        %6350 = vmatprep.subr.mxu0 0.0
        %6351 = vmatpush1.msra.mxu0 0.0
        %6352 = vmatprep.subr.mxu0 0.0
        %6353 = vmatpush1.msra.mxu0 0.0
        %6354 = vmatprep.subr.mxu0 0.0
        %6355 = vmatpush1.msra.mxu0 0.0
        %6356 = vmatprep.subr.mxu0 0.0
        %6357 = vmatpush1.msra.mxu0 0.0
        %6358 = vmatprep.subr.mxu0 0.0
        %6359 = vmatpush1.msra.mxu0 0.0
        %6360 = vmatprep.subr.mxu0 0.0
        %6361 = vmatpush1.msra.mxu0 0.0
        %6362 = vmatprep.subr.mxu0 0.0
        %6363 = vmatpush1.msra.mxu0 0.0
        %6364 = vmatprep.subr.mxu0 0.0
        %6365 = vmatpush1.msra.mxu0 0.0
        %6366 = vmatprep.subr.mxu0 0.0
        %6367 = vmatpush1.msra.mxu0 0.0
        %6368 = vmatprep.subr.mxu0 0.0
        %6369 = vmatpush1.msra.mxu0 0.0
        %6370 = vmatprep.subr.mxu0 0.0
        %6371 = vmatpush1.msra.mxu0 0.0
        %6372 = vmatprep.subr.mxu0 0.0
        %6373 = vmatpush1.msra.mxu0 0.0
        %6374 = vmatprep.subr.mxu0 0.0
        %6375 = vmatpush1.msra.mxu0 0.0
        %6376 = vmatprep.subr.mxu0 0.0
        %6377 = vmatpush1.msra.mxu0 0.0
        %6378 = vmatprep.subr.mxu0 0.0
        %6379 = vmatpush1.msra.mxu0 0.0
        %6380 = vmatprep.subr.mxu0 0.0
        %6381 = vmatpush1.msra.mxu0 0.0
        %6382 = vmatprep.subr.mxu0 0.0
        %6383 = vmatpush1.msra.mxu0 0.0
        %6384 = vmatprep.subr.mxu0 0.0
        %6385 = vmatpush1.msra.mxu0 0.0
        %6386 = vmatprep.mubr.f32.mxu0 0.0
        %6387 = vmatmul.mubr.f32.gmra.mrb[0].mxu0 %v6302
        %v6388 = vpop.f32.mrb[0].mxu0
        %v6389 = vadd.f32 %v6170, %v6388
        %v6390 = vpop.f32.mrb[0].mxu0
        %v6391 = vadd.f32 %v6172, %v6390
        %6392 = vmatprep.mubr.f32.mxu0 0.0
        %6393 = vmatmul.mubr.f32.gmra.mrb[0].mxu0 %v6305
        %v6394 = vpop.f32.mrb[0].mxu0
        %v6395 = vadd.f32 %v6176, %v6394
        %v6396 = vpop.f32.mrb[0].mxu0
        %v6397 = vadd.f32 %v6178, %v6396
        %6398 = vmatprep.mubr.f32.mxu0 0.0
        %6399 = vmatmul.mubr.f32.gmra.mrb[0].mxu0 %v6308
        %v6400 = vpop.f32.mrb[0].mxu0
        %v6401 = vadd.f32 %v6182, %v6400
        %v6402 = vpop.f32.mrb[0].mxu0
        %v6403 = vadd.f32 %v6184, %v6402
        %6404 = vdwg.mxu0
        %6405 = vmatprep.subr.mxu0 %v4465
        %6406 = vmatpush1.msra.mxu0 %v4464
        %6407 = vmatprep.subr.mxu0 %v4469
        %6408 = vmatpush1.msra.mxu0 %v4468
        %6409 = vmatprep.subr.mxu0 %v6320
        %6410 = vmatpush1.msra.mxu0 %v6317
        %6411 = vmatprep.subr.mxu0 0.0
        %6412 = vmatpush1.msra.mxu0 0.0
        %6413 = vmatprep.subr.mxu0 0.0
        %6414 = vmatpush1.msra.mxu0 0.0
        %6415 = vmatprep.subr.mxu0 0.0
        %6416 = vmatpush1.msra.mxu0 0.0
        %6417 = vmatprep.subr.mxu0 0.0
        %6418 = vmatpush1.msra.mxu0 0.0
        %6419 = vmatprep.subr.mxu0 0.0
        %6420 = vmatpush1.msra.mxu0 0.0
        %6421 = vmatprep.subr.mxu0 0.0
        %6422 = vmatpush1.msra.mxu0 0.0
        %6423 = vmatprep.subr.mxu0 0.0
        %6424 = vmatpush1.msra.mxu0 0.0
        %6425 = vmatprep.subr.mxu0 0.0
        %6426 = vmatpush1.msra.mxu0 0.0
        %6427 = vmatprep.subr.mxu0 0.0
        %6428 = vmatpush1.msra.mxu0 0.0
        %6429 = vmatprep.subr.mxu0 0.0
        %6430 = vmatpush1.msra.mxu0 0.0
        %6431 = vmatprep.subr.mxu0 0.0
        %6432 = vmatpush1.msra.mxu0 0.0
        %6433 = vmatprep.subr.mxu0 0.0
        %6434 = vmatpush1.msra.mxu0 0.0
        %6435 = vmatprep.subr.mxu0 0.0
        %6436 = vmatpush1.msra.mxu0 0.0
        %6437 = vmatprep.subr.mxu0 0.0
        %6438 = vmatpush1.msra.mxu0 0.0
        %6439 = vmatprep.subr.mxu0 0.0
        %6440 = vmatpush1.msra.mxu0 0.0
        %6441 = vmatprep.subr.mxu0 0.0
        %6442 = vmatpush1.msra.mxu0 0.0
        %6443 = vmatprep.subr.mxu0 0.0
        %6444 = vmatpush1.msra.mxu0 0.0
        %6445 = vmatprep.subr.mxu0 0.0
        %6446 = vmatpush1.msra.mxu0 0.0
        %6447 = vmatprep.subr.mxu0 0.0
        %6448 = vmatpush1.msra.mxu0 0.0
        %6449 = vmatprep.subr.mxu0 0.0
        %6450 = vmatpush1.msra.mxu0 0.0
        %6451 = vmatprep.subr.mxu0 0.0
        %6452 = vmatpush1.msra.mxu0 0.0
        %6453 = vmatprep.subr.mxu0 0.0
        %6454 = vmatpush1.msra.mxu0 0.0
        %6455 = vmatprep.subr.mxu0 0.0
        %6456 = vmatpush1.msra.mxu0 0.0
        %6457 = vmatprep.subr.mxu0 0.0
        %6458 = vmatpush1.msra.mxu0 0.0
        %6459 = vmatprep.subr.mxu0 0.0
        %6460 = vmatpush1.msra.mxu0 0.0
        %6461 = vmatprep.subr.mxu0 0.0
        %6462 = vmatpush1.msra.mxu0 0.0
        %6463 = vmatprep.subr.mxu0 0.0
        %6464 = vmatpush1.msra.mxu0 0.0
        %6465 = vmatprep.subr.mxu0 0.0
        %6466 = vmatpush1.msra.mxu0 0.0
        %6467 = vmatprep.subr.mxu0 0.0
        %6468 = vmatpush1.msra.mxu0 0.0
        %6469 = vmatprep.mubr.f32.mxu0 0.0
        %6470 = vmatmul.mubr.f32.gmra.mrb[0].mxu0 %v6302
        %v6471 = vpop.f32.mrb[0].mxu0
        %v6472 = vadd.f32 %v6253, %v6471
        %v6473 = vpop.f32.mrb[0].mxu0
        %v6474 = vadd.f32 %v6255, %v6473
        %6475 = vmatprep.mubr.f32.mxu0 0.0
        %6476 = vmatmul.mubr.f32.gmra.mrb[0].mxu0 %v6305
        %v6477 = vpop.f32.mrb[0].mxu0
        %v6478 = vadd.f32 %v6259, %v6477
        %v6479 = vpop.f32.mrb[0].mxu0
        %v6480 = vadd.f32 %v6261, %v6479
        %6481 = vmatprep.mubr.f32.mxu0 0.0
        %6482 = vmatmul.mubr.f32.gmra.mrb[0].mxu0 %v6308
        %v6483 = vpop.f32.mrb[0].mxu0
        %v6484 = vadd.f32 %v6265, %v6483
        %v6485 = vpop.f32.mrb[0].mxu0
        %v6486 = vadd.f32 %v6267, %v6485
        %6487 = vdwg.mxu0
        %s6488 = sadd.s32 %s4461, 2
        %v6489 = vld [vmem:[#allocation2 + $0x40] sm:$0xff]
        %v6490 = vld [vmem:[#allocation2 + $0x48] sm:$0xff]
        %v6491 = vld [vmem:[#allocation2 + $0x50] sm:$0xff]
        %v6492 = vld [vmem:[#allocation2 + $0x58] sm:$0xff]
        %v6493 = vld [vmem:[#allocation2 + $0xc0] sm:$0xff]
        %v6494 = vld [vmem:[#allocation2 + $0xc8] sm:$0xff]
        %v6495 = vld [vmem:[#allocation2 + $0xd0] sm:$0xff]
        %v6496 = vld [vmem:[#allocation2 + $0xd8] sm:$0xff]
        %v6497 = vld [vmem:[#allocation2 + $0x140] sm:$0x1]
        %v6498 = vld [vmem:[#allocation2 + $0x148] sm:$0x1]
        %v6499 = vld [vmem:[#allocation2 + $0x150] sm:$0x1]
        %v6500 = vld [vmem:[#allocation2 + $0x158] sm:$0x1]
        %v6501 = vpack.c.bf16 %v6493, %v6489
        %v6502 = vpack.c.bf16 %v6494, %v6490
        %v6503 = vpack.c.bf16 %v6495, %v6491
        %v6504 = vpack.c.bf16 %v6496, %v6492
        %v6505 = vpack.c.bf16 %v6497, %v6497
        %v6506 = vpack.c.bf16 %v6498, %v6498
        %v6507 = vpack.c.bf16 %v6499, %v6499
        %v6508 = vpack.c.bf16 %v6500, %v6500
        %s6509 = scalar_lea.vmem %s380, 1024 [#allocation7]
        %v6510 = vld [vmem:[%s6509] sm:$0xff]
        %v6511 = vld [vmem:[%s6509 + $0x8] sm:$0xff]
        %v6512 = vld [vmem:[%s6509 + $0x10] sm:$0xff]
        %v6513 = vld [vmem:[%s6509 + $0x18] sm:$0xff]
        %v6514 = vld [vmem:[%s6509 + $0x20] sm:$0xff]
        %v6515 = vld [vmem:[%s6509 + $0x28] sm:$0xff]
        %v6516 = vld [vmem:[%s6509 + $0x30] sm:$0xff]
        %v6517 = vld [vmem:[%s6509 + $0x38] sm:$0xff]
        %v6518 = vld [vmem:[%s6509 + $0x40] sm:$0xff]
        %v6519 = vld [vmem:[%s6509 + $0x48] sm:$0xff]
        %v6520 = vld [vmem:[%s6509 + $0x50] sm:$0xff]
        %v6521 = vld [vmem:[%s6509 + $0x58] sm:$0xff]
        %v6522 = vld [vmem:[%s6509 + $0x60] sm:$0xff]
        %v6523 = vld [vmem:[%s6509 + $0x68] sm:$0xff]
        %v6524 = vld [vmem:[%s6509 + $0x70] sm:$0xff]
        %v6525 = vld [vmem:[%s6509 + $0x78] sm:$0xff]
        %v6526 = vld [vmem:[%s6509 + $0x80] sm:$0xff]
        %v6527 = vld [vmem:[%s6509 + $0x88] sm:$0xff]
        %v6528 = vld [vmem:[%s6509 + $0x90] sm:$0xff]
        %v6529 = vld [vmem:[%s6509 + $0x98] sm:$0xff]
        %v6530 = vld [vmem:[%s6509 + $0xa0] sm:$0xff]
        %v6531 = vld [vmem:[%s6509 + $0xa8] sm:$0xff]
        %v6532 = vld [vmem:[%s6509 + $0xb0] sm:$0xff]
        %v6533 = vld [vmem:[%s6509 + $0xb8] sm:$0xff]
        %v6534 = vld [vmem:[%s6509 + $0xc0] sm:$0xff]
        %v6535 = vld [vmem:[%s6509 + $0xc8] sm:$0xff]
        %v6536 = vld [vmem:[%s6509 + $0xd0] sm:$0xff]
        %v6537 = vld [vmem:[%s6509 + $0xd8] sm:$0xff]
        %v6538 = vld [vmem:[%s6509 + $0xe0] sm:$0xff]
        %v6539 = vld [vmem:[%s6509 + $0xe8] sm:$0xff]
        %v6540 = vld [vmem:[%s6509 + $0xf0] sm:$0xff]
        %v6541 = vld [vmem:[%s6509 + $0xf8] sm:$0xff]
        %v6542 = vld [vmem:[%s6509 + $0x100] sm:$0xff]
        %v6543 = vld [vmem:[%s6509 + $0x108] sm:$0xff]
        %v6544 = vld [vmem:[%s6509 + $0x110] sm:$0xff]
        %v6545 = vld [vmem:[%s6509 + $0x118] sm:$0xff]
        %v6546 = vld [vmem:[%s6509 + $0x120] sm:$0xff]
        %v6547 = vld [vmem:[%s6509 + $0x128] sm:$0xff]
        %v6548 = vld [vmem:[%s6509 + $0x130] sm:$0xff]
        %v6549 = vld [vmem:[%s6509 + $0x138] sm:$0xff]
        %v6550 = vld [vmem:[%s6509 + $0x140] sm:$0xff]
        %v6551 = vld [vmem:[%s6509 + $0x148] sm:$0xff]
        %v6552 = vld [vmem:[%s6509 + $0x150] sm:$0xff]
        %v6553 = vld [vmem:[%s6509 + $0x158] sm:$0xff]
        %v6554 = vld [vmem:[%s6509 + $0x160] sm:$0xff]
        %v6555 = vld [vmem:[%s6509 + $0x168] sm:$0xff]
        %v6556 = vld [vmem:[%s6509 + $0x170] sm:$0xff]
        %v6557 = vld [vmem:[%s6509 + $0x178] sm:$0xff]
        %v6558 = vld [vmem:[%s6509 + $0x180] sm:$0xff]
        %v6559 = vld [vmem:[%s6509 + $0x188] sm:$0xff]
        %v6560 = vld [vmem:[%s6509 + $0x190] sm:$0xff]
        %v6561 = vld [vmem:[%s6509 + $0x198] sm:$0xff]
        %v6562 = vld [vmem:[%s6509 + $0x1a0] sm:$0xff]
        %v6563 = vld [vmem:[%s6509 + $0x1a8] sm:$0xff]
        %v6564 = vld [vmem:[%s6509 + $0x1b0] sm:$0xff]
        %v6565 = vld [vmem:[%s6509 + $0x1b8] sm:$0xff]
        %v6566 = vld [vmem:[%s6509 + $0x1c0] sm:$0xff]
        %v6567 = vld [vmem:[%s6509 + $0x1c8] sm:$0xff]
        %v6568 = vld [vmem:[%s6509 + $0x1d0] sm:$0xff]
        %v6569 = vld [vmem:[%s6509 + $0x1d8] sm:$0xff]
        %v6570 = vld [vmem:[%s6509 + $0x1e0] sm:$0xff]
        %v6571 = vld [vmem:[%s6509 + $0x1e8] sm:$0xff]
        %v6572 = vld [vmem:[%s6509 + $0x1f0] sm:$0xff]
        %v6573 = vld [vmem:[%s6509 + $0x1f8] sm:$0xff]
        %s6574 = smul.u32 %s6488, 2
        %s6575 = smul.addr %s6574, 4
        %s6576 = scalar_lea.vmem %s5, %s6575
        %v6577 = vld [vmem:[%s6576] sm:$0x77]
        %v6579 = vcombine.high %v6577, %v6577
        %v6580 = vsel %vm4562, %v6577, 0
        %v6582 = vsel %vm4562, %v6579, 0
        %6584 = vmatprep.subr.mxu0 %v6582
        %6585 = vmatpush1.msra.mxu0 %v6580
        %6586 = vmatprep.subr.mxu0 0.0
        %6587 = vmatpush1.msra.mxu0 0.0
        %6588 = vmatprep.subr.mxu0 0.0
        %6589 = vmatpush1.msra.mxu0 0.0
        %6590 = vmatprep.subr.mxu0 0.0
        %6591 = vmatpush1.msra.mxu0 0.0
        %6592 = vmatprep.subr.mxu0 0.0
        %6593 = vmatpush1.msra.mxu0 0.0
        %6594 = vmatprep.subr.mxu0 0.0
        %6595 = vmatpush1.msra.mxu0 0.0
        %6596 = vmatprep.subr.mxu0 0.0
        %6597 = vmatpush1.msra.mxu0 0.0
        %6598 = vmatprep.subr.mxu0 0.0
        %6599 = vmatpush1.msra.mxu0 0.0
        %6600 = vmatprep.subr.mxu0 0.0
        %6601 = vmatpush1.msra.mxu0 0.0
        %6602 = vmatprep.subr.mxu0 0.0
        %6603 = vmatpush1.msra.mxu0 0.0
        %6604 = vmatprep.subr.mxu0 0.0
        %6605 = vmatpush1.msra.mxu0 0.0
        %6606 = vmatprep.subr.mxu0 0.0
        %6607 = vmatpush1.msra.mxu0 0.0
        %6608 = vmatprep.subr.mxu0 0.0
        %6609 = vmatpush1.msra.mxu0 0.0
        %6610 = vmatprep.subr.mxu0 0.0
        %6611 = vmatpush1.msra.mxu0 0.0
        %6612 = vmatprep.subr.mxu0 0.0
        %6613 = vmatpush1.msra.mxu0 0.0
        %6614 = vmatprep.subr.mxu0 0.0
        %6615 = vmatpush1.msra.mxu0 0.0
        %6616 = vmatprep.subr.mxu0 0.0
        %6617 = vmatpush1.msra.mxu0 0.0
        %6618 = vmatprep.subr.mxu0 0.0
        %6619 = vmatpush1.msra.mxu0 0.0
        %6620 = vmatprep.subr.mxu0 0.0
        %6621 = vmatpush1.msra.mxu0 0.0
        %6622 = vmatprep.subr.mxu0 0.0
        %6623 = vmatpush1.msra.mxu0 0.0
        %6624 = vmatprep.subr.mxu0 0.0
        %6625 = vmatpush1.msra.mxu0 0.0
        %6626 = vmatprep.subr.mxu0 0.0
        %6627 = vmatpush1.msra.mxu0 0.0
        %6628 = vmatprep.subr.mxu0 0.0
        %6629 = vmatpush1.msra.mxu0 0.0
        %6630 = vmatprep.subr.mxu0 0.0
        %6631 = vmatpush1.msra.mxu0 0.0
        %6632 = vmatprep.subr.mxu0 0.0
        %6633 = vmatpush1.msra.mxu0 0.0
        %6634 = vmatprep.subr.mxu0 0.0
        %6635 = vmatpush1.msra.mxu0 0.0
        %6636 = vmatprep.subr.mxu0 0.0
        %6637 = vmatpush1.msra.mxu0 0.0
        %6638 = vmatprep.subr.mxu0 0.0
        %6639 = vmatpush1.msra.mxu0 0.0
        %6640 = vmatprep.subr.mxu0 0.0
        %6641 = vmatpush1.msra.mxu0 0.0
        %6642 = vmatprep.subr.mxu0 0.0
        %6643 = vmatpush1.msra.mxu0 0.0
        %6644 = vmatprep.subr.mxu0 0.0
        %6645 = vmatpush1.msra.mxu0 0.0
        %6646 = vmatprep.subr.mxu0 0.0
        %6647 = vmatpush1.msra.mxu0 0.0
        %6648 = vmatprep.mubr.f32.mxu0 0.0
        %6649 = vmatmul.mubr.f32.gmra.mrb[0].mxu0 %v4554
        %v6650 = vpop.f32.mrb[0].mxu0
        %v6651 = vadd.f32 0.0, %v6650
        %v6652 = vpop.f32.mrb[0].mxu0
        %v6653 = vadd.f32 0.0, %v6652
        %6654 = vmatprep.mubr.f32.mxu0 0.0
        %6655 = vmatmul.mubr.f32.gmra.mrb[0].mxu0 %v4557
        %v6656 = vpop.f32.mrb[0].mxu0
        %v6657 = vadd.f32 0.0, %v6656
        %v6658 = vpop.f32.mrb[0].mxu0
        %v6659 = vadd.f32 0.0, %v6658
        %6660 = vmatprep.mubr.f32.mxu0 0.0
        %6661 = vmatmul.mubr.f32.gmra.mrb[0].mxu0 %v4560
        %v6662 = vpop.f32.mrb[0].mxu0
        %v6663 = vadd.f32 0.0, %v6662
        %v6664 = vpop.f32.mrb[0].mxu0
        %v6665 = vadd.f32 0.0, %v6664
        %6666 = vdwg.mxu0
        %v6731 = vunpack.c.l.b16 %v6510
        %v6732 = vunpack.c.h.b16 %v6510
        %v6733 = vunpack.c.l.b16 %v6511
        %v6734 = vunpack.c.h.b16 %v6511
        %v6735 = vunpack.c.l.b16 %v6512
        %v6736 = vunpack.c.h.b16 %v6512
        %v6737 = vunpack.c.l.b16 %v6513
        %v6738 = vunpack.c.h.b16 %v6513
        %v6739 = vunpack.c.l.b16 %v6514
        %v6740 = vunpack.c.h.b16 %v6514
        %v6741 = vunpack.c.l.b16 %v6515
        %v6742 = vunpack.c.h.b16 %v6515
        %v6743 = vunpack.c.l.b16 %v6516
        %v6744 = vunpack.c.h.b16 %v6516
        %v6745 = vunpack.c.l.b16 %v6517
        %v6746 = vunpack.c.h.b16 %v6517
        %v6747 = vunpack.c.l.b16 %v6518
        %v6748 = vunpack.c.h.b16 %v6518
        %v6749 = vunpack.c.l.b16 %v6519
        %v6750 = vunpack.c.h.b16 %v6519
        %v6751 = vunpack.c.l.b16 %v6520
        %v6752 = vunpack.c.h.b16 %v6520
        %v6753 = vunpack.c.l.b16 %v6521
        %v6754 = vunpack.c.h.b16 %v6521
        %v6755 = vunpack.c.l.b16 %v6522
        %v6756 = vunpack.c.h.b16 %v6522
        %v6757 = vunpack.c.l.b16 %v6523
        %v6758 = vunpack.c.h.b16 %v6523
        %v6759 = vunpack.c.l.b16 %v6524
        %v6760 = vunpack.c.h.b16 %v6524
        %v6761 = vunpack.c.l.b16 %v6525
        %v6762 = vunpack.c.h.b16 %v6525
        %v6763 = vunpack.c.l.b16 %v6526
        %v6764 = vunpack.c.h.b16 %v6526
        %v6765 = vunpack.c.l.b16 %v6527
        %v6766 = vunpack.c.h.b16 %v6527
        %v6767 = vunpack.c.l.b16 %v6528
        %v6768 = vunpack.c.h.b16 %v6528
        %v6769 = vunpack.c.l.b16 %v6529
        %v6770 = vunpack.c.h.b16 %v6529
        %v6771 = vunpack.c.l.b16 %v6530
        %v6772 = vunpack.c.h.b16 %v6530
        %v6773 = vunpack.c.l.b16 %v6531
        %v6774 = vunpack.c.h.b16 %v6531
        %v6775 = vunpack.c.l.b16 %v6532
        %v6776 = vunpack.c.h.b16 %v6532
        %v6777 = vunpack.c.l.b16 %v6533
        %v6778 = vunpack.c.h.b16 %v6533
        %v6779 = vunpack.c.l.b16 %v6534
        %v6780 = vunpack.c.h.b16 %v6534
        %v6781 = vunpack.c.l.b16 %v6535
        %v6782 = vunpack.c.h.b16 %v6535
        %v6783 = vunpack.c.l.b16 %v6536
        %v6784 = vunpack.c.h.b16 %v6536
        %v6785 = vunpack.c.l.b16 %v6537
        %v6786 = vunpack.c.h.b16 %v6537
        %v6787 = vunpack.c.l.b16 %v6538
        %v6788 = vunpack.c.h.b16 %v6538
        %v6789 = vunpack.c.l.b16 %v6539
        %v6790 = vunpack.c.h.b16 %v6539
        %v6791 = vunpack.c.l.b16 %v6540
        %v6792 = vunpack.c.h.b16 %v6540
        %v6793 = vunpack.c.l.b16 %v6541
        %v6794 = vunpack.c.h.b16 %v6541
        %v6795 = vunpack.c.l.b16 %v6542
        %v6796 = vunpack.c.h.b16 %v6542
        %v6797 = vunpack.c.l.b16 %v6543
        %v6798 = vunpack.c.h.b16 %v6543
        %v6799 = vunpack.c.l.b16 %v6544
        %v6800 = vunpack.c.h.b16 %v6544
        %v6801 = vunpack.c.l.b16 %v6545
        %v6802 = vunpack.c.h.b16 %v6545
        %v6803 = vunpack.c.l.b16 %v6546
        %v6804 = vunpack.c.h.b16 %v6546
        %v6805 = vunpack.c.l.b16 %v6547
        %v6806 = vunpack.c.h.b16 %v6547
        %v6807 = vunpack.c.l.b16 %v6548
        %v6808 = vunpack.c.h.b16 %v6548
        %v6809 = vunpack.c.l.b16 %v6549
        %v6810 = vunpack.c.h.b16 %v6549
        %v6811 = vunpack.c.l.b16 %v6550
        %v6812 = vunpack.c.h.b16 %v6550
        %v6813 = vunpack.c.l.b16 %v6551
        %v6814 = vunpack.c.h.b16 %v6551
        %v6815 = vunpack.c.l.b16 %v6552
        %v6816 = vunpack.c.h.b16 %v6552
        %v6817 = vunpack.c.l.b16 %v6553
        %v6818 = vunpack.c.h.b16 %v6553
        %v6819 = vunpack.c.l.b16 %v6554
        %v6820 = vunpack.c.h.b16 %v6554
        %v6821 = vunpack.c.l.b16 %v6555
        %v6822 = vunpack.c.h.b16 %v6555
        %v6823 = vunpack.c.l.b16 %v6556
        %v6824 = vunpack.c.h.b16 %v6556
        %v6825 = vunpack.c.l.b16 %v6557
        %v6826 = vunpack.c.h.b16 %v6557
        %v6827 = vunpack.c.l.b16 %v6558
        %v6828 = vunpack.c.h.b16 %v6558
        %v6829 = vunpack.c.l.b16 %v6559
        %v6830 = vunpack.c.h.b16 %v6559
        %v6831 = vunpack.c.l.b16 %v6560
        %v6832 = vunpack.c.h.b16 %v6560
        %v6833 = vunpack.c.l.b16 %v6561
        %v6834 = vunpack.c.h.b16 %v6561
        %v6835 = vunpack.c.l.b16 %v6562
        %v6836 = vunpack.c.h.b16 %v6562
        %v6837 = vunpack.c.l.b16 %v6563
        %v6838 = vunpack.c.h.b16 %v6563
        %v6839 = vunpack.c.l.b16 %v6564
        %v6840 = vunpack.c.h.b16 %v6564
        %v6841 = vunpack.c.l.b16 %v6565
        %v6842 = vunpack.c.h.b16 %v6565
        %v6843 = vunpack.c.l.b16 %v6566
        %v6844 = vunpack.c.h.b16 %v6566
        %v6845 = vunpack.c.l.b16 %v6567
        %v6846 = vunpack.c.h.b16 %v6567
        %v6847 = vunpack.c.l.b16 %v6568
        %v6848 = vunpack.c.h.b16 %v6568
        %v6849 = vunpack.c.l.b16 %v6569
        %v6850 = vunpack.c.h.b16 %v6569
        %v6851 = vunpack.c.l.b16 %v6570
        %v6852 = vunpack.c.h.b16 %v6570
        %v6853 = vunpack.c.l.b16 %v6571
        %v6854 = vunpack.c.h.b16 %v6571
        %v6855 = vunpack.c.l.b16 %v6572
        %v6856 = vunpack.c.h.b16 %v6572
        %v6857 = vunpack.c.l.b16 %v6573
        %v6858 = vunpack.c.h.b16 %v6573
        %v6859 = vpack.c.b16 %v6733, %v6731
        %v6860 = vpack.c.b16 %v6734, %v6732
        %v6861 = vpack.c.b16 %v6737, %v6735
        %v6862 = vpack.c.b16 %v6738, %v6736
        %v6863 = vpack.c.b16 %v6741, %v6739
        %v6864 = vpack.c.b16 %v6742, %v6740
        %v6865 = vpack.c.b16 %v6745, %v6743
        %v6866 = vpack.c.b16 %v6746, %v6744
        %v6867 = vpack.c.b16 %v6749, %v6747
        %v6868 = vpack.c.b16 %v6750, %v6748
        %v6869 = vpack.c.b16 %v6753, %v6751
        %v6870 = vpack.c.b16 %v6754, %v6752
        %v6871 = vpack.c.b16 %v6757, %v6755
        %v6872 = vpack.c.b16 %v6758, %v6756
        %v6873 = vpack.c.b16 %v6761, %v6759
        %v6874 = vpack.c.b16 %v6762, %v6760
        %v6875 = vpack.c.b16 %v6765, %v6763
        %v6876 = vpack.c.b16 %v6766, %v6764
        %v6877 = vpack.c.b16 %v6769, %v6767
        %v6878 = vpack.c.b16 %v6770, %v6768
        %v6879 = vpack.c.b16 %v6773, %v6771
        %v6880 = vpack.c.b16 %v6774, %v6772
        %v6881 = vpack.c.b16 %v6777, %v6775
        %v6882 = vpack.c.b16 %v6778, %v6776
        %v6883 = vpack.c.b16 %v6781, %v6779
        %v6884 = vpack.c.b16 %v6782, %v6780
        %v6885 = vpack.c.b16 %v6785, %v6783
        %v6886 = vpack.c.b16 %v6786, %v6784
        %v6887 = vpack.c.b16 %v6789, %v6787
        %v6888 = vpack.c.b16 %v6790, %v6788
        %v6889 = vpack.c.b16 %v6793, %v6791
        %v6890 = vpack.c.b16 %v6794, %v6792
        %v6891 = vpack.c.b16 %v6797, %v6795
        %v6892 = vpack.c.b16 %v6798, %v6796
        %v6893 = vpack.c.b16 %v6801, %v6799
        %v6894 = vpack.c.b16 %v6802, %v6800
        %v6895 = vpack.c.b16 %v6805, %v6803
        %v6896 = vpack.c.b16 %v6806, %v6804
        %v6897 = vpack.c.b16 %v6809, %v6807
        %v6898 = vpack.c.b16 %v6810, %v6808
        %v6899 = vpack.c.b16 %v6813, %v6811
        %v6900 = vpack.c.b16 %v6814, %v6812
        %v6901 = vpack.c.b16 %v6817, %v6815
        %v6902 = vpack.c.b16 %v6818, %v6816
        %v6903 = vpack.c.b16 %v6821, %v6819
        %v6904 = vpack.c.b16 %v6822, %v6820
        %v6905 = vpack.c.b16 %v6825, %v6823
        %v6906 = vpack.c.b16 %v6826, %v6824
        %v6907 = vpack.c.b16 %v6829, %v6827
        %v6908 = vpack.c.b16 %v6830, %v6828
        %v6909 = vpack.c.b16 %v6833, %v6831
        %v6910 = vpack.c.b16 %v6834, %v6832
        %v6911 = vpack.c.b16 %v6837, %v6835
        %v6912 = vpack.c.b16 %v6838, %v6836
        %v6913 = vpack.c.b16 %v6841, %v6839
        %v6914 = vpack.c.b16 %v6842, %v6840
        %v6915 = vpack.c.b16 %v6845, %v6843
        %v6916 = vpack.c.b16 %v6846, %v6844
        %v6917 = vpack.c.b16 %v6849, %v6847
        %v6918 = vpack.c.b16 %v6850, %v6848
        %v6919 = vpack.c.b16 %v6853, %v6851
        %v6920 = vpack.c.b16 %v6854, %v6852
        %v6921 = vpack.c.b16 %v6857, %v6855
        %v6922 = vpack.c.b16 %v6858, %v6856
        %6987 = vmatprep.subr.bf16.mxu0 %v6860
        %6988 = vmatpush1.bf16.msra.mxu0 %v6859
        %6989 = vmatprep.subr.bf16.mxu0 %v6862
        %6990 = vmatpush1.bf16.msra.mxu0 %v6861
        %6991 = vmatprep.subr.bf16.mxu0 %v6864
        %6992 = vmatpush1.bf16.msra.mxu0 %v6863
        %6993 = vmatprep.subr.bf16.mxu0 %v6866
        %6994 = vmatpush1.bf16.msra.mxu0 %v6865
        %6995 = vmatprep.subr.bf16.mxu0 %v6868
        %6996 = vmatpush1.bf16.msra.mxu0 %v6867
        %6997 = vmatprep.subr.bf16.mxu0 %v6870
        %6998 = vmatpush1.bf16.msra.mxu0 %v6869
        %6999 = vmatprep.subr.bf16.mxu0 %v6872
        %7000 = vmatpush1.bf16.msra.mxu0 %v6871
        %7001 = vmatprep.subr.bf16.mxu0 %v6874
        %7002 = vmatpush1.bf16.msra.mxu0 %v6873
        %7003 = vmatprep.subr.bf16.mxu0 %v6876
        %7004 = vmatpush1.bf16.msra.mxu0 %v6875
        %7005 = vmatprep.subr.bf16.mxu0 %v6878
        %7006 = vmatpush1.bf16.msra.mxu0 %v6877
        %7007 = vmatprep.subr.bf16.mxu0 %v6880
        %7008 = vmatpush1.bf16.msra.mxu0 %v6879
        %7009 = vmatprep.subr.bf16.mxu0 %v6882
        %7010 = vmatpush1.bf16.msra.mxu0 %v6881
        %7011 = vmatprep.subr.bf16.mxu0 %v6884
        %7012 = vmatpush1.bf16.msra.mxu0 %v6883
        %7013 = vmatprep.subr.bf16.mxu0 %v6886
        %7014 = vmatpush1.bf16.msra.mxu0 %v6885
        %7015 = vmatprep.subr.bf16.mxu0 %v6888
        %7016 = vmatpush1.bf16.msra.mxu0 %v6887
        %7017 = vmatprep.subr.bf16.mxu0 %v6890
        %7018 = vmatpush1.bf16.msra.mxu0 %v6889
        %7019 = vmatprep.mubr.bf16.mxu0 %v6502
        %7020 = vmatmul.mubr.bf16.gmra.mrb[0].mxu0 %v6501
        %v7021 = vpop.f32.mrb[0].mxu0
        %v7022 = vadd.f32 %v6651, %v7021
        %v7023 = vpop.f32.mrb[0].mxu0
        %v7024 = vadd.f32 %v6653, %v7023
        %v7025 = vpop.f32.mrb[0].mxu0
        %v7026 = vadd.f32 %v6657, %v7025
        %v7027 = vpop.f32.mrb[0].mxu0
        %v7028 = vadd.f32 %v6659, %v7027
        %7029 = vmatprep.mubr.bf16.mxu0 %v6506
        %7030 = vmatmul.mubr.bf16.gmra.mrb[0].mxu0 %v6505
        %v7031 = vpop.f32.mrb[0].mxu0
        %v7032 = vadd.f32 %v6663, %v7031
        %v7033 = vpop.f32.mrb[0].mxu0
        %v7034 = vadd.f32 %v6665, %v7033
        %v7035 = vpop.f32.mrb[0].mxu0
        %v7036 = vpop.f32.mrb[0].mxu0
        %7037 = vdwg.mxu0
        %7038 = vmatprep.subr.bf16.mxu0 %v6892
        %7039 = vmatpush1.bf16.msra.mxu0 %v6891
        %7040 = vmatprep.subr.bf16.mxu0 %v6894
        %7041 = vmatpush1.bf16.msra.mxu0 %v6893
        %7042 = vmatprep.subr.bf16.mxu0 %v6896
        %7043 = vmatpush1.bf16.msra.mxu0 %v6895
        %7044 = vmatprep.subr.bf16.mxu0 %v6898
        %7045 = vmatpush1.bf16.msra.mxu0 %v6897
        %7046 = vmatprep.subr.bf16.mxu0 %v6900
        %7047 = vmatpush1.bf16.msra.mxu0 %v6899
        %7048 = vmatprep.subr.bf16.mxu0 %v6902
        %7049 = vmatpush1.bf16.msra.mxu0 %v6901
        %7050 = vmatprep.subr.bf16.mxu0 %v6904
        %7051 = vmatpush1.bf16.msra.mxu0 %v6903
        %7052 = vmatprep.subr.bf16.mxu0 %v6906
        %7053 = vmatpush1.bf16.msra.mxu0 %v6905
        %7054 = vmatprep.subr.bf16.mxu0 %v6908
        %7055 = vmatpush1.bf16.msra.mxu0 %v6907
        %7056 = vmatprep.subr.bf16.mxu0 %v6910
        %7057 = vmatpush1.bf16.msra.mxu0 %v6909
        %7058 = vmatprep.subr.bf16.mxu0 %v6912
        %7059 = vmatpush1.bf16.msra.mxu0 %v6911
        %7060 = vmatprep.subr.bf16.mxu0 %v6914
        %7061 = vmatpush1.bf16.msra.mxu0 %v6913
        %7062 = vmatprep.subr.bf16.mxu0 %v6916
        %7063 = vmatpush1.bf16.msra.mxu0 %v6915
        %7064 = vmatprep.subr.bf16.mxu0 %v6918
        %7065 = vmatpush1.bf16.msra.mxu0 %v6917
        %7066 = vmatprep.subr.bf16.mxu0 %v6920
        %7067 = vmatpush1.bf16.msra.mxu0 %v6919
        %7068 = vmatprep.subr.bf16.mxu0 %v6922
        %7069 = vmatpush1.bf16.msra.mxu0 %v6921
        %7070 = vmatprep.mubr.bf16.mxu0 %v6504
        %7071 = vmatmul.mubr.bf16.gmra.mrb[0].mxu0 %v6503
        %v7072 = vpop.f32.mrb[0].mxu0
        %v7073 = vadd.f32 %v7022, %v7072
        %v7074 = vpop.f32.mrb[0].mxu0
        %v7075 = vadd.f32 %v7024, %v7074
        %v7076 = vpop.f32.mrb[0].mxu0
        %v7077 = vadd.f32 %v7026, %v7076
        %v7078 = vpop.f32.mrb[0].mxu0
        %v7079 = vadd.f32 %v7028, %v7078
        %7080 = vmatprep.mubr.bf16.mxu0 %v6508
        %7081 = vmatmul.mubr.bf16.gmra.mrb[0].mxu0 %v6507
        %v7082 = vpop.f32.mrb[0].mxu0
        %v7083 = vadd.f32 %v7032, %v7082
        %v7084 = vpop.f32.mrb[0].mxu0
        %v7085 = vadd.f32 %v7034, %v7084
        %v7086 = vpop.f32.mrb[0].mxu0
        %v7087 = vpop.f32.mrb[0].mxu0
        %7088 = vdwg.mxu0
        %s7089 = scalar_lea.vmem [#allocation9], %s6574
        %v7090 = vld [vmem:[%s7089] sm:$0x3]
        %v7092 = vlaneseq
        %v7093 = vshrl.u32 %v7092, 7
        %v7094 = vsub.s32 0, %v7093
        %v7095 = vrot.slane %v7090, %v7094
        %v7096 = vlaneseq
        %v7097 = vshrl.u32 %v7096, 7
        %v7098 = vsub.s32 1, %v7097
        %v7099 = vrot.slane %v7090, %v7098
        %v7102 = vadd.f32 %v7073, %v7095
        %v7103 = vadd.f32 %v7075, %v7099
        %v7104 = vadd.f32 %v7077, %v7095
        %v7105 = vadd.f32 %v7079, %v7099
        %v7106 = vadd.f32 %v7083, %v7095
        %v7107 = vadd.f32 %v7085, %v7099
        %v7108 = vtanh.pop %v7102
        %v7109 = vtanh.pop %v7103
        %v7110 = vtanh.pop %v7104
        %v7111 = vtanh.pop %v7105
        %v7112 = vtanh.pop %v7106
        %v7113 = vtanh.pop %v7107
        %s7114 = smul.u32 %s6488, 256
        %s7115 = scalar_lea.vmem %s7, %s7114
        %v7116 = vld [vmem:[%s7115] sm:$0xff]
        %v7117 = vld [vmem:[%s7115 + $0x8] sm:$0xff]
        %v7118 = vld [vmem:[%s7115 + $0x10] sm:$0xff]
        %v7119 = vld [vmem:[%s7115 + $0x18] sm:$0xff]
        %v7120 = vld [vmem:[%s7115 + $0x20] sm:$0xff]
        %v7121 = vld [vmem:[%s7115 + $0x28] sm:$0xff]
        %v7122 = vld [vmem:[%s7115 + $0x30] sm:$0xff]
        %v7123 = vld [vmem:[%s7115 + $0x38] sm:$0xff]
        %v7124 = vld [vmem:[%s7115 + $0x40] sm:$0xff]
        %v7125 = vld [vmem:[%s7115 + $0x48] sm:$0xff]
        %v7126 = vld [vmem:[%s7115 + $0x50] sm:$0xff]
        %v7127 = vld [vmem:[%s7115 + $0x58] sm:$0xff]
        %v7128 = vld [vmem:[%s7115 + $0x60] sm:$0xff]
        %v7129 = vld [vmem:[%s7115 + $0x68] sm:$0xff]
        %v7130 = vld [vmem:[%s7115 + $0x70] sm:$0xff]
        %v7131 = vld [vmem:[%s7115 + $0x78] sm:$0xff]
        %v7132 = vld [vmem:[%s7115 + $0x80] sm:$0xff]
        %v7133 = vld [vmem:[%s7115 + $0x88] sm:$0xff]
        %v7134 = vld [vmem:[%s7115 + $0x90] sm:$0xff]
        %v7135 = vld [vmem:[%s7115 + $0x98] sm:$0xff]
        %v7136 = vld [vmem:[%s7115 + $0xa0] sm:$0xff]
        %v7137 = vld [vmem:[%s7115 + $0xa8] sm:$0xff]
        %v7138 = vld [vmem:[%s7115 + $0xb0] sm:$0xff]
        %v7139 = vld [vmem:[%s7115 + $0xb8] sm:$0xff]
        %v7140 = vld [vmem:[%s7115 + $0xc0] sm:$0xff]
        %v7141 = vld [vmem:[%s7115 + $0xc8] sm:$0xff]
        %v7142 = vld [vmem:[%s7115 + $0xd0] sm:$0xff]
        %v7143 = vld [vmem:[%s7115 + $0xd8] sm:$0xff]
        %v7144 = vld [vmem:[%s7115 + $0xe0] sm:$0xff]
        %v7145 = vld [vmem:[%s7115 + $0xe8] sm:$0xff]
        %v7146 = vld [vmem:[%s7115 + $0xf0] sm:$0xff]
        %v7147 = vld [vmem:[%s7115 + $0xf8] sm:$0xff]
        %s7148 = scalar_lea.vmem [#allocation10], %s6488
        %v7149 = vld [vmem:[%s7148] sm:$0x1]
        %v7151 = vlaneseq
        %v7152 = vshrl.u32 %v7151, 7
        %v7153 = vsub.s32 0, %v7152
        %v7154 = vrot.slane %v7149, %v7153
        %7156 = vmatprep.subr.mxu0 0.0
        %7157 = vmatpush1.msra.mxu0 %v7116
        %7158 = vmatprep.subr.mxu0 0.0
        %7159 = vmatpush1.msra.mxu0 %v7117
        %7160 = vmatprep.subr.mxu0 0.0
        %7161 = vmatpush1.msra.mxu0 %v7118
        %7162 = vmatprep.subr.mxu0 0.0
        %7163 = vmatpush1.msra.mxu0 %v7119
        %7164 = vmatprep.subr.mxu0 0.0
        %7165 = vmatpush1.msra.mxu0 %v7120
        %7166 = vmatprep.subr.mxu0 0.0
        %7167 = vmatpush1.msra.mxu0 %v7121
        %7168 = vmatprep.subr.mxu0 0.0
        %7169 = vmatpush1.msra.mxu0 %v7122
        %7170 = vmatprep.subr.mxu0 0.0
        %7171 = vmatpush1.msra.mxu0 %v7123
        %7172 = vmatprep.subr.mxu0 0.0
        %7173 = vmatpush1.msra.mxu0 %v7124
        %7174 = vmatprep.subr.mxu0 0.0
        %7175 = vmatpush1.msra.mxu0 %v7125
        %7176 = vmatprep.subr.mxu0 0.0
        %7177 = vmatpush1.msra.mxu0 %v7126
        %7178 = vmatprep.subr.mxu0 0.0
        %7179 = vmatpush1.msra.mxu0 %v7127
        %7180 = vmatprep.subr.mxu0 0.0
        %7181 = vmatpush1.msra.mxu0 %v7128
        %7182 = vmatprep.subr.mxu0 0.0
        %7183 = vmatpush1.msra.mxu0 %v7129
        %7184 = vmatprep.subr.mxu0 0.0
        %7185 = vmatpush1.msra.mxu0 %v7130
        %7186 = vmatprep.subr.mxu0 0.0
        %7187 = vmatpush1.msra.mxu0 %v7131
        %7188 = vmatprep.subr.mxu0 0.0
        %7189 = vmatpush1.msra.mxu0 %v7132
        %7190 = vmatprep.subr.mxu0 0.0
        %7191 = vmatpush1.msra.mxu0 %v7133
        %7192 = vmatprep.subr.mxu0 0.0
        %7193 = vmatpush1.msra.mxu0 %v7134
        %7194 = vmatprep.subr.mxu0 0.0
        %7195 = vmatpush1.msra.mxu0 %v7135
        %7196 = vmatprep.subr.mxu0 0.0
        %7197 = vmatpush1.msra.mxu0 %v7136
        %7198 = vmatprep.subr.mxu0 0.0
        %7199 = vmatpush1.msra.mxu0 %v7137
        %7200 = vmatprep.subr.mxu0 0.0
        %7201 = vmatpush1.msra.mxu0 %v7138
        %7202 = vmatprep.subr.mxu0 0.0
        %7203 = vmatpush1.msra.mxu0 %v7139
        %7204 = vmatprep.subr.mxu0 0.0
        %7205 = vmatpush1.msra.mxu0 %v7140
        %7206 = vmatprep.subr.mxu0 0.0
        %7207 = vmatpush1.msra.mxu0 %v7141
        %7208 = vmatprep.subr.mxu0 0.0
        %7209 = vmatpush1.msra.mxu0 %v7142
        %7210 = vmatprep.subr.mxu0 0.0
        %7211 = vmatpush1.msra.mxu0 %v7143
        %7212 = vmatprep.subr.mxu0 0.0
        %7213 = vmatpush1.msra.mxu0 %v7144
        %7214 = vmatprep.subr.mxu0 0.0
        %7215 = vmatpush1.msra.mxu0 %v7145
        %7216 = vmatprep.subr.mxu0 0.0
        %7217 = vmatpush1.msra.mxu0 %v7146
        %7218 = vmatprep.subr.mxu0 0.0
        %7219 = vmatpush1.msra.mxu0 %v7147
        %7220 = vmatprep.mubr.f32.mxu0 %v7109
        %7221 = vmatmul.mubr.f32.gmra.mrb[0].mxu0 %v7108
        %v7222 = vpop.f32.mrb[0].mxu0
        %v7223 = vadd.f32 %v7154, %v7222
        %v7224 = vpop.f32.mrb[0].mxu0
        %7225 = vmatprep.mubr.f32.mxu0 %v7111
        %7226 = vmatmul.mubr.f32.gmra.mrb[0].mxu0 %v7110
        %v7227 = vpop.f32.mrb[0].mxu0
        %v7228 = vadd.f32 %v7154, %v7227
        %v7229 = vpop.f32.mrb[0].mxu0
        %7230 = vmatprep.mubr.f32.mxu0 %v7113
        %7231 = vmatmul.mubr.f32.gmra.mrb[0].mxu0 %v7112
        %v7232 = vpop.f32.mrb[0].mxu0
        %v7233 = vadd.f32 %v7154, %v7232
        %v7234 = vpop.f32.mrb[0].mxu0
        %7235 = vdwg.mxu0
        %v7236 = vsel %vm5219, %v7223, -inf
        %v7237 = vsel %vm5219, %v7228, -inf
        %v7238 = vsel %vm5222, %v7233, -inf
        %v7239 = vmax.f32 %v7236, %v7237
        %v7240 = vmax.f32 %v7239, %v7238
        %v7241 = vrot.slane %v7240, 4
        %v7242 = vmax.f32 %v7240, %v7241
        %v7243 = vrot.slane %v7242, 2
        %v7244 = vmax.f32 %v7242, %v7243
        %v7245 = vrot.slane %v7244, 1
        %v7246 = vmax.f32 %v7244, %v7245
        %v7247 = vsub.f32 %v7223, %v7246
        %v7248 = vsub.f32 %v7228, %v7246
        %v7249 = vsub.f32 %v7233, %v7246
        %v7250 = vmul.f32 %v7247, 1.442695
        %v7251 = vpow.pop %v7250
        %v7252 = vmul.f32 %v7248, 1.442695
        %v7253 = vpow.pop %v7252
        %v7254 = vmul.f32 %v7249, 1.442695
        %v7255 = vpow.pop %v7254
        %v7256 = vsel %vm5219, %v7251, 0.0
        %v7257 = vsel %vm5219, %v7253, 0.0
        %v7258 = vadd.f32 %v7256, %v7257
        %v7259 = vsel %vm5222, %v7255, 0.0
        %v7260 = vadd.f32 %v7258, %v7259
        %v7261 = vrot.slane %v7260, 4
        %v7262 = vadd.f32 %v7260, %v7261
        %v7263 = vrot.slane %v7262, 2
        %v7264 = vadd.f32 %v7262, %v7263
        %v7265 = vrot.slane %v7264, 1
        %v7266 = vadd.f32 %v7264, %v7265
        %v7267 = vrcp.pop %v7266
        %v7268 = vmul.f32 %v7251, %v7267
        %v7269 = vmul.f32 %v7253, %v7267
        %v7270 = vmul.f32 %v7255, %v7267
        %s7271 = sld [smem:[#allocation3 + %s6488]]
        %v7272 = vstv %s7271
        %v7273 = vmul.f32 %v7268, %v7272
        %v7274 = vmul.f32 %v7269, %v7272
        %v7275 = vmul.f32 %v7270, %v7272
        %7276 = vxpose.xlu0.b32.start [1/16] %v7273, 128
        %7277 = vxpose.xlu0.b32.cont [2/16] %v7274, 128
        %7278 = vxpose.xlu0.b32.cont [3/16] %v7275, 128
        %7279 = vxpose.xlu0.b32.cont [4/16] 0.0, 128
        %7280 = vxpose.xlu0.b32.cont [5/16] 0.0, 128
        %7281 = vxpose.xlu0.b32.cont [6/16] 0.0, 128
        %7282 = vxpose.xlu0.b32.cont [7/16] 0.0, 128
        %7283 = vxpose.xlu0.b32.cont [8/16] 0.0, 128
        %7284 = vxpose.xlu0.b32.cont [9/16] 0.0, 128
        %7285 = vxpose.xlu0.b32.cont [10/16] 0.0, 128
        %7286 = vxpose.xlu0.b32.cont [11/16] 0.0, 128
        %7287 = vxpose.xlu0.b32.cont [12/16] 0.0, 128
        %7288 = vxpose.xlu0.b32.cont [13/16] 0.0, 128
        %7289 = vxpose.xlu0.b32.cont [14/16] 0.0, 128
        %7290 = vxpose.xlu0.b32.cont [15/16] 0.0, 128
        %7291 = vxpose.xlu0.b32.end [16/16] 0.0, 128
        %v7292 = vpop.trf.xlu0
        %v7293 = vpop.trf.xlu0
        %v7294 = vpop.trf.xlu0
        %v7295 = vpop.trf.xlu0
        %v7296 = vpop.trf.xlu0
        %v7297 = vpop.trf.xlu0
        %v7298 = vpop.trf.xlu0
        %v7299 = vpop.trf.xlu0
        %v7300 = vpop.trf.xlu0
        %v7301 = vpop.trf.xlu0
        %v7302 = vpop.trf.xlu0
        %v7303 = vpop.trf.xlu0
        %v7304 = vpop.trf.xlu0
        %v7305 = vpop.trf.xlu0
        %v7306 = vpop.trf.xlu0
        %v7307 = vpop.trf.xlu0
        %v7309 = vsel %vm5219, %v7292, 0
        %v7312 = vsel %vm5219, %v7293, 0
        %v7315 = vsel %vm5219, %v7294, 0
        %v7318 = vsel %vm6090, %v6497, 0
        %v7321 = vsel %vm6090, %v6498, 0
        %v7324 = vsel %vm6090, %v6499, 0
        %v7327 = vsel %vm6090, %v6500, 0
        %7329 = vmatprep.subr.mxu0 %v6490
        %7330 = vmatpush1.msra.mxu0 %v6489
        %7331 = vmatprep.subr.mxu0 %v6494
        %7332 = vmatpush1.msra.mxu0 %v6493
        %7333 = vmatprep.subr.mxu0 %v7321
        %7334 = vmatpush1.msra.mxu0 %v7318
        %7335 = vmatprep.subr.mxu0 0.0
        %7336 = vmatpush1.msra.mxu0 0.0
        %7337 = vmatprep.subr.mxu0 0.0
        %7338 = vmatpush1.msra.mxu0 0.0
        %7339 = vmatprep.subr.mxu0 0.0
        %7340 = vmatpush1.msra.mxu0 0.0
        %7341 = vmatprep.subr.mxu0 0.0
        %7342 = vmatpush1.msra.mxu0 0.0
        %7343 = vmatprep.subr.mxu0 0.0
        %7344 = vmatpush1.msra.mxu0 0.0
        %7345 = vmatprep.subr.mxu0 0.0
        %7346 = vmatpush1.msra.mxu0 0.0
        %7347 = vmatprep.subr.mxu0 0.0
        %7348 = vmatpush1.msra.mxu0 0.0
        %7349 = vmatprep.subr.mxu0 0.0
        %7350 = vmatpush1.msra.mxu0 0.0
        %7351 = vmatprep.subr.mxu0 0.0
        %7352 = vmatpush1.msra.mxu0 0.0
        %7353 = vmatprep.subr.mxu0 0.0
        %7354 = vmatpush1.msra.mxu0 0.0
        %7355 = vmatprep.subr.mxu0 0.0
        %7356 = vmatpush1.msra.mxu0 0.0
        %7357 = vmatprep.subr.mxu0 0.0
        %7358 = vmatpush1.msra.mxu0 0.0
        %7359 = vmatprep.subr.mxu0 0.0
        %7360 = vmatpush1.msra.mxu0 0.0
        %7361 = vmatprep.subr.mxu0 0.0
        %7362 = vmatpush1.msra.mxu0 0.0
        %7363 = vmatprep.subr.mxu0 0.0
        %7364 = vmatpush1.msra.mxu0 0.0
        %7365 = vmatprep.subr.mxu0 0.0
        %7366 = vmatpush1.msra.mxu0 0.0
        %7367 = vmatprep.subr.mxu0 0.0
        %7368 = vmatpush1.msra.mxu0 0.0
        %7369 = vmatprep.subr.mxu0 0.0
        %7370 = vmatpush1.msra.mxu0 0.0
        %7371 = vmatprep.subr.mxu0 0.0
        %7372 = vmatpush1.msra.mxu0 0.0
        %7373 = vmatprep.subr.mxu0 0.0
        %7374 = vmatpush1.msra.mxu0 0.0
        %7375 = vmatprep.subr.mxu0 0.0
        %7376 = vmatpush1.msra.mxu0 0.0
        %7377 = vmatprep.subr.mxu0 0.0
        %7378 = vmatpush1.msra.mxu0 0.0
        %7379 = vmatprep.subr.mxu0 0.0
        %7380 = vmatpush1.msra.mxu0 0.0
        %7381 = vmatprep.subr.mxu0 0.0
        %7382 = vmatpush1.msra.mxu0 0.0
        %7383 = vmatprep.subr.mxu0 0.0
        %7384 = vmatpush1.msra.mxu0 0.0
        %7385 = vmatprep.subr.mxu0 0.0
        %7386 = vmatpush1.msra.mxu0 0.0
        %7387 = vmatprep.subr.mxu0 0.0
        %7388 = vmatpush1.msra.mxu0 0.0
        %7389 = vmatprep.subr.mxu0 0.0
        %7390 = vmatpush1.msra.mxu0 0.0
        %7391 = vmatprep.subr.mxu0 0.0
        %7392 = vmatpush1.msra.mxu0 0.0
        %7393 = vmatprep.mubr.f32.mxu0 0.0
        %7394 = vmatmul.mubr.f32.gmra.mrb[0].mxu0 %v7309
        %v7395 = vpop.f32.mrb[0].mxu0
        %v7396 = vadd.f32 0.0, %v7395
        %v7397 = vpop.f32.mrb[0].mxu0
        %v7398 = vadd.f32 0.0, %v7397
        %7399 = vmatprep.mubr.f32.mxu0 0.0
        %7400 = vmatmul.mubr.f32.gmra.mrb[0].mxu0 %v7312
        %v7401 = vpop.f32.mrb[0].mxu0
        %v7402 = vadd.f32 0.0, %v7401
        %v7403 = vpop.f32.mrb[0].mxu0
        %v7404 = vadd.f32 0.0, %v7403
        %7405 = vmatprep.mubr.f32.mxu0 0.0
        %7406 = vmatmul.mubr.f32.gmra.mrb[0].mxu0 %v7315
        %v7407 = vpop.f32.mrb[0].mxu0
        %v7408 = vadd.f32 0.0, %v7407
        %v7409 = vpop.f32.mrb[0].mxu0
        %v7410 = vadd.f32 0.0, %v7409
        %7411 = vdwg.mxu0
        %7412 = vmatprep.subr.mxu0 %v6492
        %7413 = vmatpush1.msra.mxu0 %v6491
        %7414 = vmatprep.subr.mxu0 %v6496
        %7415 = vmatpush1.msra.mxu0 %v6495
        %7416 = vmatprep.subr.mxu0 %v7327
        %7417 = vmatpush1.msra.mxu0 %v7324
        %7418 = vmatprep.subr.mxu0 0.0
        %7419 = vmatpush1.msra.mxu0 0.0
        %7420 = vmatprep.subr.mxu0 0.0
        %7421 = vmatpush1.msra.mxu0 0.0
        %7422 = vmatprep.subr.mxu0 0.0
        %7423 = vmatpush1.msra.mxu0 0.0
        %7424 = vmatprep.subr.mxu0 0.0
        %7425 = vmatpush1.msra.mxu0 0.0
        %7426 = vmatprep.subr.mxu0 0.0
        %7427 = vmatpush1.msra.mxu0 0.0
        %7428 = vmatprep.subr.mxu0 0.0
        %7429 = vmatpush1.msra.mxu0 0.0
        %7430 = vmatprep.subr.mxu0 0.0
        %7431 = vmatpush1.msra.mxu0 0.0
        %7432 = vmatprep.subr.mxu0 0.0
        %7433 = vmatpush1.msra.mxu0 0.0
        %7434 = vmatprep.subr.mxu0 0.0
        %7435 = vmatpush1.msra.mxu0 0.0
        %7436 = vmatprep.subr.mxu0 0.0
        %7437 = vmatpush1.msra.mxu0 0.0
        %7438 = vmatprep.subr.mxu0 0.0
        %7439 = vmatpush1.msra.mxu0 0.0
        %7440 = vmatprep.subr.mxu0 0.0
        %7441 = vmatpush1.msra.mxu0 0.0
        %7442 = vmatprep.subr.mxu0 0.0
        %7443 = vmatpush1.msra.mxu0 0.0
        %7444 = vmatprep.subr.mxu0 0.0
        %7445 = vmatpush1.msra.mxu0 0.0
        %7446 = vmatprep.subr.mxu0 0.0
        %7447 = vmatpush1.msra.mxu0 0.0
        %7448 = vmatprep.subr.mxu0 0.0
        %7449 = vmatpush1.msra.mxu0 0.0
        %7450 = vmatprep.subr.mxu0 0.0
        %7451 = vmatpush1.msra.mxu0 0.0
        %7452 = vmatprep.subr.mxu0 0.0
        %7453 = vmatpush1.msra.mxu0 0.0
        %7454 = vmatprep.subr.mxu0 0.0
        %7455 = vmatpush1.msra.mxu0 0.0
        %7456 = vmatprep.subr.mxu0 0.0
        %7457 = vmatpush1.msra.mxu0 0.0
        %7458 = vmatprep.subr.mxu0 0.0
        %7459 = vmatpush1.msra.mxu0 0.0
        %7460 = vmatprep.subr.mxu0 0.0
        %7461 = vmatpush1.msra.mxu0 0.0
        %7462 = vmatprep.subr.mxu0 0.0
        %7463 = vmatpush1.msra.mxu0 0.0
        %7464 = vmatprep.subr.mxu0 0.0
        %7465 = vmatpush1.msra.mxu0 0.0
        %7466 = vmatprep.subr.mxu0 0.0
        %7467 = vmatpush1.msra.mxu0 0.0
        %7468 = vmatprep.subr.mxu0 0.0
        %7469 = vmatpush1.msra.mxu0 0.0
        %7470 = vmatprep.subr.mxu0 0.0
        %7471 = vmatpush1.msra.mxu0 0.0
        %7472 = vmatprep.subr.mxu0 0.0
        %7473 = vmatpush1.msra.mxu0 0.0
        %7474 = vmatprep.subr.mxu0 0.0
        %7475 = vmatpush1.msra.mxu0 0.0
        %7476 = vmatprep.mubr.f32.mxu0 0.0
        %7477 = vmatmul.mubr.f32.gmra.mrb[0].mxu0 %v7309
        %v7478 = vpop.f32.mrb[0].mxu0
        %v7479 = vadd.f32 0.0, %v7478
        %v7480 = vpop.f32.mrb[0].mxu0
        %v7481 = vadd.f32 0.0, %v7480
        %7482 = vmatprep.mubr.f32.mxu0 0.0
        %7483 = vmatmul.mubr.f32.gmra.mrb[0].mxu0 %v7312
        %v7484 = vpop.f32.mrb[0].mxu0
        %v7485 = vadd.f32 0.0, %v7484
        %v7486 = vpop.f32.mrb[0].mxu0
        %v7487 = vadd.f32 0.0, %v7486
        %7488 = vmatprep.mubr.f32.mxu0 0.0
        %7489 = vmatmul.mubr.f32.gmra.mrb[0].mxu0 %v7315
        %v7490 = vpop.f32.mrb[0].mxu0
        %v7491 = vadd.f32 0.0, %v7490
        %v7492 = vpop.f32.mrb[0].mxu0
        %v7493 = vadd.f32 0.0, %v7492
        %7494 = vdwg.mxu0
        %v7495 = vadd.f32 %v6389, %v7396
        %v7496 = vadd.f32 %v6391, %v7398
        %v7497 = vadd.f32 %v6472, %v7479
        %v7498 = vadd.f32 %v6474, %v7481
        %v7499 = vadd.f32 %v6395, %v7402
        %v7500 = vadd.f32 %v6397, %v7404
        %v7501 = vadd.f32 %v6478, %v7485
        %v7502 = vadd.f32 %v6480, %v7487
        %v7503 = vadd.f32 %v6401, %v7408
        %v7504 = vadd.f32 %v6403, %v7410
        %v7505 = vadd.f32 %v6484, %v7491
        %v7506 = vadd.f32 %v6486, %v7493
        %s7507 = sadd.s32 %s4461, 3
        %v7508 = vld [vmem:[#allocation2 + $0x60] sm:$0xff]
        %v7509 = vld [vmem:[#allocation2 + $0x68] sm:$0xff]
        %v7510 = vld [vmem:[#allocation2 + $0x70] sm:$0xff]
        %v7511 = vld [vmem:[#allocation2 + $0x78] sm:$0xff]
        %v7512 = vld [vmem:[#allocation2 + $0xe0] sm:$0xff]
        %v7513 = vld [vmem:[#allocation2 + $0xe8] sm:$0xff]
        %v7514 = vld [vmem:[#allocation2 + $0xf0] sm:$0xff]
        %v7515 = vld [vmem:[#allocation2 + $0xf8] sm:$0xff]
        %v7516 = vld [vmem:[#allocation2 + $0x160] sm:$0x1]
        %v7517 = vld [vmem:[#allocation2 + $0x168] sm:$0x1]
        %v7518 = vld [vmem:[#allocation2 + $0x170] sm:$0x1]
        %v7519 = vld [vmem:[#allocation2 + $0x178] sm:$0x1]
        %v7520 = vpack.c.bf16 %v7512, %v7508
        %v7521 = vpack.c.bf16 %v7513, %v7509
        %v7522 = vpack.c.bf16 %v7514, %v7510
        %v7523 = vpack.c.bf16 %v7515, %v7511
        %v7524 = vpack.c.bf16 %v7516, %v7516
        %v7525 = vpack.c.bf16 %v7517, %v7517
        %v7526 = vpack.c.bf16 %v7518, %v7518
        %v7527 = vpack.c.bf16 %v7519, %v7519
        %s7528 = scalar_lea.vmem %s380, 1536 [#allocation7]
        %v7529 = vld [vmem:[%s7528] sm:$0xff]
        %v7530 = vld [vmem:[%s7528 + $0x8] sm:$0xff]
        %v7531 = vld [vmem:[%s7528 + $0x10] sm:$0xff]
        %v7532 = vld [vmem:[%s7528 + $0x18] sm:$0xff]
        %v7533 = vld [vmem:[%s7528 + $0x20] sm:$0xff]
        %v7534 = vld [vmem:[%s7528 + $0x28] sm:$0xff]
        %v7535 = vld [vmem:[%s7528 + $0x30] sm:$0xff]
        %v7536 = vld [vmem:[%s7528 + $0x38] sm:$0xff]
        %v7537 = vld [vmem:[%s7528 + $0x40] sm:$0xff]
        %v7538 = vld [vmem:[%s7528 + $0x48] sm:$0xff]
        %v7539 = vld [vmem:[%s7528 + $0x50] sm:$0xff]
        %v7540 = vld [vmem:[%s7528 + $0x58] sm:$0xff]
        %v7541 = vld [vmem:[%s7528 + $0x60] sm:$0xff]
        %v7542 = vld [vmem:[%s7528 + $0x68] sm:$0xff]
        %v7543 = vld [vmem:[%s7528 + $0x70] sm:$0xff]
        %v7544 = vld [vmem:[%s7528 + $0x78] sm:$0xff]
        %v7545 = vld [vmem:[%s7528 + $0x80] sm:$0xff]
        %v7546 = vld [vmem:[%s7528 + $0x88] sm:$0xff]
        %v7547 = vld [vmem:[%s7528 + $0x90] sm:$0xff]
        %v7548 = vld [vmem:[%s7528 + $0x98] sm:$0xff]
        %v7549 = vld [vmem:[%s7528 + $0xa0] sm:$0xff]
        %v7550 = vld [vmem:[%s7528 + $0xa8] sm:$0xff]
        %v7551 = vld [vmem:[%s7528 + $0xb0] sm:$0xff]
        %v7552 = vld [vmem:[%s7528 + $0xb8] sm:$0xff]
        %v7553 = vld [vmem:[%s7528 + $0xc0] sm:$0xff]
        %v7554 = vld [vmem:[%s7528 + $0xc8] sm:$0xff]
        %v7555 = vld [vmem:[%s7528 + $0xd0] sm:$0xff]
        %v7556 = vld [vmem:[%s7528 + $0xd8] sm:$0xff]
        %v7557 = vld [vmem:[%s7528 + $0xe0] sm:$0xff]
        %v7558 = vld [vmem:[%s7528 + $0xe8] sm:$0xff]
        %v7559 = vld [vmem:[%s7528 + $0xf0] sm:$0xff]
        %v7560 = vld [vmem:[%s7528 + $0xf8] sm:$0xff]
        %v7561 = vld [vmem:[%s7528 + $0x100] sm:$0xff]
        %v7562 = vld [vmem:[%s7528 + $0x108] sm:$0xff]
        %v7563 = vld [vmem:[%s7528 + $0x110] sm:$0xff]
        %v7564 = vld [vmem:[%s7528 + $0x118] sm:$0xff]
        %v7565 = vld [vmem:[%s7528 + $0x120] sm:$0xff]
        %v7566 = vld [vmem:[%s7528 + $0x128] sm:$0xff]
        %v7567 = vld [vmem:[%s7528 + $0x130] sm:$0xff]
        %v7568 = vld [vmem:[%s7528 + $0x138] sm:$0xff]
        %v7569 = vld [vmem:[%s7528 + $0x140] sm:$0xff]
        %v7570 = vld [vmem:[%s7528 + $0x148] sm:$0xff]
        %v7571 = vld [vmem:[%s7528 + $0x150] sm:$0xff]
        %v7572 = vld [vmem:[%s7528 + $0x158] sm:$0xff]
        %v7573 = vld [vmem:[%s7528 + $0x160] sm:$0xff]
        %v7574 = vld [vmem:[%s7528 + $0x168] sm:$0xff]
        %v7575 = vld [vmem:[%s7528 + $0x170] sm:$0xff]
        %v7576 = vld [vmem:[%s7528 + $0x178] sm:$0xff]
        %v7577 = vld [vmem:[%s7528 + $0x180] sm:$0xff]
        %v7578 = vld [vmem:[%s7528 + $0x188] sm:$0xff]
        %v7579 = vld [vmem:[%s7528 + $0x190] sm:$0xff]
        %v7580 = vld [vmem:[%s7528 + $0x198] sm:$0xff]
        %v7581 = vld [vmem:[%s7528 + $0x1a0] sm:$0xff]
        %v7582 = vld [vmem:[%s7528 + $0x1a8] sm:$0xff]
        %v7583 = vld [vmem:[%s7528 + $0x1b0] sm:$0xff]
        %v7584 = vld [vmem:[%s7528 + $0x1b8] sm:$0xff]
        %v7585 = vld [vmem:[%s7528 + $0x1c0] sm:$0xff]
        %v7586 = vld [vmem:[%s7528 + $0x1c8] sm:$0xff]
        %v7587 = vld [vmem:[%s7528 + $0x1d0] sm:$0xff]
        %v7588 = vld [vmem:[%s7528 + $0x1d8] sm:$0xff]
        %v7589 = vld [vmem:[%s7528 + $0x1e0] sm:$0xff]
        %v7590 = vld [vmem:[%s7528 + $0x1e8] sm:$0xff]
        %v7591 = vld [vmem:[%s7528 + $0x1f0] sm:$0xff]
        %v7592 = vld [vmem:[%s7528 + $0x1f8] sm:$0xff]
        %s7593 = smul.u32 %s7507, 2
        %s7594 = smul.addr %s7593, 4
        %s7595 = scalar_lea.vmem %s5, %s7594
        %v7596 = vld [vmem:[%s7595] sm:$0x77]
        %v7598 = vcombine.high %v7596, %v7596
        %v7599 = vsel %vm4562, %v7596, 0
        %v7601 = vsel %vm4562, %v7598, 0
        %7603 = vmatprep.subr.mxu0 %v7601
        %7604 = vmatpush1.msra.mxu0 %v7599
        %7605 = vmatprep.subr.mxu0 0.0
        %7606 = vmatpush1.msra.mxu0 0.0
        %7607 = vmatprep.subr.mxu0 0.0
        %7608 = vmatpush1.msra.mxu0 0.0
        %7609 = vmatprep.subr.mxu0 0.0
        %7610 = vmatpush1.msra.mxu0 0.0
        %7611 = vmatprep.subr.mxu0 0.0
        %7612 = vmatpush1.msra.mxu0 0.0
        %7613 = vmatprep.subr.mxu0 0.0
        %7614 = vmatpush1.msra.mxu0 0.0
        %7615 = vmatprep.subr.mxu0 0.0
        %7616 = vmatpush1.msra.mxu0 0.0
        %7617 = vmatprep.subr.mxu0 0.0
        %7618 = vmatpush1.msra.mxu0 0.0
        %7619 = vmatprep.subr.mxu0 0.0
        %7620 = vmatpush1.msra.mxu0 0.0
        %7621 = vmatprep.subr.mxu0 0.0
        %7622 = vmatpush1.msra.mxu0 0.0
        %7623 = vmatprep.subr.mxu0 0.0
        %7624 = vmatpush1.msra.mxu0 0.0
        %7625 = vmatprep.subr.mxu0 0.0
        %7626 = vmatpush1.msra.mxu0 0.0
        %7627 = vmatprep.subr.mxu0 0.0
        %7628 = vmatpush1.msra.mxu0 0.0
        %7629 = vmatprep.subr.mxu0 0.0
        %7630 = vmatpush1.msra.mxu0 0.0
        %7631 = vmatprep.subr.mxu0 0.0
        %7632 = vmatpush1.msra.mxu0 0.0
        %7633 = vmatprep.subr.mxu0 0.0
        %7634 = vmatpush1.msra.mxu0 0.0
        %7635 = vmatprep.subr.mxu0 0.0
        %7636 = vmatpush1.msra.mxu0 0.0
        %7637 = vmatprep.subr.mxu0 0.0
        %7638 = vmatpush1.msra.mxu0 0.0
        %7639 = vmatprep.subr.mxu0 0.0
        %7640 = vmatpush1.msra.mxu0 0.0
        %7641 = vmatprep.subr.mxu0 0.0
        %7642 = vmatpush1.msra.mxu0 0.0
        %7643 = vmatprep.subr.mxu0 0.0
        %7644 = vmatpush1.msra.mxu0 0.0
        %7645 = vmatprep.subr.mxu0 0.0
        %7646 = vmatpush1.msra.mxu0 0.0
        %7647 = vmatprep.subr.mxu0 0.0
        %7648 = vmatpush1.msra.mxu0 0.0
        %7649 = vmatprep.subr.mxu0 0.0
        %7650 = vmatpush1.msra.mxu0 0.0
        %7651 = vmatprep.subr.mxu0 0.0
        %7652 = vmatpush1.msra.mxu0 0.0
        %7653 = vmatprep.subr.mxu0 0.0
        %7654 = vmatpush1.msra.mxu0 0.0
        %7655 = vmatprep.subr.mxu0 0.0
        %7656 = vmatpush1.msra.mxu0 0.0
        %7657 = vmatprep.subr.mxu0 0.0
        %7658 = vmatpush1.msra.mxu0 0.0
        %7659 = vmatprep.subr.mxu0 0.0
        %7660 = vmatpush1.msra.mxu0 0.0
        %7661 = vmatprep.subr.mxu0 0.0
        %7662 = vmatpush1.msra.mxu0 0.0
        %7663 = vmatprep.subr.mxu0 0.0
        %7664 = vmatpush1.msra.mxu0 0.0
        %7665 = vmatprep.subr.mxu0 0.0
        %7666 = vmatpush1.msra.mxu0 0.0
        %7667 = vmatprep.mubr.f32.mxu0 0.0
        %7668 = vmatmul.mubr.f32.gmra.mrb[0].mxu0 %v4554
        %v7669 = vpop.f32.mrb[0].mxu0
        %v7670 = vadd.f32 0.0, %v7669
        %v7671 = vpop.f32.mrb[0].mxu0
        %v7672 = vadd.f32 0.0, %v7671
        %7673 = vmatprep.mubr.f32.mxu0 0.0
        %7674 = vmatmul.mubr.f32.gmra.mrb[0].mxu0 %v4557
        %v7675 = vpop.f32.mrb[0].mxu0
        %v7676 = vadd.f32 0.0, %v7675
        %v7677 = vpop.f32.mrb[0].mxu0
        %v7678 = vadd.f32 0.0, %v7677
        %7679 = vmatprep.mubr.f32.mxu0 0.0
        %7680 = vmatmul.mubr.f32.gmra.mrb[0].mxu0 %v4560
        %v7681 = vpop.f32.mrb[0].mxu0
        %v7682 = vadd.f32 0.0, %v7681
        %v7683 = vpop.f32.mrb[0].mxu0
        %v7684 = vadd.f32 0.0, %v7683
        %7685 = vdwg.mxu0
        %v7750 = vunpack.c.l.b16 %v7529
        %v7751 = vunpack.c.h.b16 %v7529
        %v7752 = vunpack.c.l.b16 %v7530
        %v7753 = vunpack.c.h.b16 %v7530
        %v7754 = vunpack.c.l.b16 %v7531
        %v7755 = vunpack.c.h.b16 %v7531
        %v7756 = vunpack.c.l.b16 %v7532
        %v7757 = vunpack.c.h.b16 %v7532
        %v7758 = vunpack.c.l.b16 %v7533
        %v7759 = vunpack.c.h.b16 %v7533
        %v7760 = vunpack.c.l.b16 %v7534
        %v7761 = vunpack.c.h.b16 %v7534
        %v7762 = vunpack.c.l.b16 %v7535
        %v7763 = vunpack.c.h.b16 %v7535
        %v7764 = vunpack.c.l.b16 %v7536
        %v7765 = vunpack.c.h.b16 %v7536
        %v7766 = vunpack.c.l.b16 %v7537
        %v7767 = vunpack.c.h.b16 %v7537
        %v7768 = vunpack.c.l.b16 %v7538
        %v7769 = vunpack.c.h.b16 %v7538
        %v7770 = vunpack.c.l.b16 %v7539
        %v7771 = vunpack.c.h.b16 %v7539
        %v7772 = vunpack.c.l.b16 %v7540
        %v7773 = vunpack.c.h.b16 %v7540
        %v7774 = vunpack.c.l.b16 %v7541
        %v7775 = vunpack.c.h.b16 %v7541
        %v7776 = vunpack.c.l.b16 %v7542
        %v7777 = vunpack.c.h.b16 %v7542
        %v7778 = vunpack.c.l.b16 %v7543
        %v7779 = vunpack.c.h.b16 %v7543
        %v7780 = vunpack.c.l.b16 %v7544
        %v7781 = vunpack.c.h.b16 %v7544
        %v7782 = vunpack.c.l.b16 %v7545
        %v7783 = vunpack.c.h.b16 %v7545
        %v7784 = vunpack.c.l.b16 %v7546
        %v7785 = vunpack.c.h.b16 %v7546
        %v7786 = vunpack.c.l.b16 %v7547
        %v7787 = vunpack.c.h.b16 %v7547
        %v7788 = vunpack.c.l.b16 %v7548
        %v7789 = vunpack.c.h.b16 %v7548
        %v7790 = vunpack.c.l.b16 %v7549
        %v7791 = vunpack.c.h.b16 %v7549
        %v7792 = vunpack.c.l.b16 %v7550
        %v7793 = vunpack.c.h.b16 %v7550
        %v7794 = vunpack.c.l.b16 %v7551
        %v7795 = vunpack.c.h.b16 %v7551
        %v7796 = vunpack.c.l.b16 %v7552
        %v7797 = vunpack.c.h.b16 %v7552
        %v7798 = vunpack.c.l.b16 %v7553
        %v7799 = vunpack.c.h.b16 %v7553
        %v7800 = vunpack.c.l.b16 %v7554
        %v7801 = vunpack.c.h.b16 %v7554
        %v7802 = vunpack.c.l.b16 %v7555
        %v7803 = vunpack.c.h.b16 %v7555
        %v7804 = vunpack.c.l.b16 %v7556
        %v7805 = vunpack.c.h.b16 %v7556
        %v7806 = vunpack.c.l.b16 %v7557
        %v7807 = vunpack.c.h.b16 %v7557
        %v7808 = vunpack.c.l.b16 %v7558
        %v7809 = vunpack.c.h.b16 %v7558
        %v7810 = vunpack.c.l.b16 %v7559
        %v7811 = vunpack.c.h.b16 %v7559
        %v7812 = vunpack.c.l.b16 %v7560
        %v7813 = vunpack.c.h.b16 %v7560
        %v7814 = vunpack.c.l.b16 %v7561
        %v7815 = vunpack.c.h.b16 %v7561
        %v7816 = vunpack.c.l.b16 %v7562
        %v7817 = vunpack.c.h.b16 %v7562
        %v7818 = vunpack.c.l.b16 %v7563
        %v7819 = vunpack.c.h.b16 %v7563
        %v7820 = vunpack.c.l.b16 %v7564
        %v7821 = vunpack.c.h.b16 %v7564
        %v7822 = vunpack.c.l.b16 %v7565
        %v7823 = vunpack.c.h.b16 %v7565
        %v7824 = vunpack.c.l.b16 %v7566
        %v7825 = vunpack.c.h.b16 %v7566
        %v7826 = vunpack.c.l.b16 %v7567
        %v7827 = vunpack.c.h.b16 %v7567
        %v7828 = vunpack.c.l.b16 %v7568
        %v7829 = vunpack.c.h.b16 %v7568
        %v7830 = vunpack.c.l.b16 %v7569
        %v7831 = vunpack.c.h.b16 %v7569
        %v7832 = vunpack.c.l.b16 %v7570
        %v7833 = vunpack.c.h.b16 %v7570
        %v7834 = vunpack.c.l.b16 %v7571
        %v7835 = vunpack.c.h.b16 %v7571
        %v7836 = vunpack.c.l.b16 %v7572
        %v7837 = vunpack.c.h.b16 %v7572
        %v7838 = vunpack.c.l.b16 %v7573
        %v7839 = vunpack.c.h.b16 %v7573
        %v7840 = vunpack.c.l.b16 %v7574
        %v7841 = vunpack.c.h.b16 %v7574
        %v7842 = vunpack.c.l.b16 %v7575
        %v7843 = vunpack.c.h.b16 %v7575
        %v7844 = vunpack.c.l.b16 %v7576
        %v7845 = vunpack.c.h.b16 %v7576
        %v7846 = vunpack.c.l.b16 %v7577
        %v7847 = vunpack.c.h.b16 %v7577
        %v7848 = vunpack.c.l.b16 %v7578
        %v7849 = vunpack.c.h.b16 %v7578
        %v7850 = vunpack.c.l.b16 %v7579
        %v7851 = vunpack.c.h.b16 %v7579
        %v7852 = vunpack.c.l.b16 %v7580
        %v7853 = vunpack.c.h.b16 %v7580
        %v7854 = vunpack.c.l.b16 %v7581
        %v7855 = vunpack.c.h.b16 %v7581
        %v7856 = vunpack.c.l.b16 %v7582
        %v7857 = vunpack.c.h.b16 %v7582
        %v7858 = vunpack.c.l.b16 %v7583
        %v7859 = vunpack.c.h.b16 %v7583
        %v7860 = vunpack.c.l.b16 %v7584
        %v7861 = vunpack.c.h.b16 %v7584
        %v7862 = vunpack.c.l.b16 %v7585
        %v7863 = vunpack.c.h.b16 %v7585
        %v7864 = vunpack.c.l.b16 %v7586
        %v7865 = vunpack.c.h.b16 %v7586
        %v7866 = vunpack.c.l.b16 %v7587
        %v7867 = vunpack.c.h.b16 %v7587
        %v7868 = vunpack.c.l.b16 %v7588
        %v7869 = vunpack.c.h.b16 %v7588
        %v7870 = vunpack.c.l.b16 %v7589
        %v7871 = vunpack.c.h.b16 %v7589
        %v7872 = vunpack.c.l.b16 %v7590
        %v7873 = vunpack.c.h.b16 %v7590
        %v7874 = vunpack.c.l.b16 %v7591
        %v7875 = vunpack.c.h.b16 %v7591
        %v7876 = vunpack.c.l.b16 %v7592
        %v7877 = vunpack.c.h.b16 %v7592
        %v7878 = vpack.c.b16 %v7752, %v7750
        %v7879 = vpack.c.b16 %v7753, %v7751
        %v7880 = vpack.c.b16 %v7756, %v7754
        %v7881 = vpack.c.b16 %v7757, %v7755
        %v7882 = vpack.c.b16 %v7760, %v7758
        %v7883 = vpack.c.b16 %v7761, %v7759
        %v7884 = vpack.c.b16 %v7764, %v7762
        %v7885 = vpack.c.b16 %v7765, %v7763
        %v7886 = vpack.c.b16 %v7768, %v7766
        %v7887 = vpack.c.b16 %v7769, %v7767
        %v7888 = vpack.c.b16 %v7772, %v7770
        %v7889 = vpack.c.b16 %v7773, %v7771
        %v7890 = vpack.c.b16 %v7776, %v7774
        %v7891 = vpack.c.b16 %v7777, %v7775
        %v7892 = vpack.c.b16 %v7780, %v7778
        %v7893 = vpack.c.b16 %v7781, %v7779
        %v7894 = vpack.c.b16 %v7784, %v7782
        %v7895 = vpack.c.b16 %v7785, %v7783
        %v7896 = vpack.c.b16 %v7788, %v7786
        %v7897 = vpack.c.b16 %v7789, %v7787
        %v7898 = vpack.c.b16 %v7792, %v7790
        %v7899 = vpack.c.b16 %v7793, %v7791
        %v7900 = vpack.c.b16 %v7796, %v7794
        %v7901 = vpack.c.b16 %v7797, %v7795
        %v7902 = vpack.c.b16 %v7800, %v7798
        %v7903 = vpack.c.b16 %v7801, %v7799
        %v7904 = vpack.c.b16 %v7804, %v7802
        %v7905 = vpack.c.b16 %v7805, %v7803
        %v7906 = vpack.c.b16 %v7808, %v7806
        %v7907 = vpack.c.b16 %v7809, %v7807
        %v7908 = vpack.c.b16 %v7812, %v7810
        %v7909 = vpack.c.b16 %v7813, %v7811
        %v7910 = vpack.c.b16 %v7816, %v7814
        %v7911 = vpack.c.b16 %v7817, %v7815
        %v7912 = vpack.c.b16 %v7820, %v7818
        %v7913 = vpack.c.b16 %v7821, %v7819
        %v7914 = vpack.c.b16 %v7824, %v7822
        %v7915 = vpack.c.b16 %v7825, %v7823
        %v7916 = vpack.c.b16 %v7828, %v7826
        %v7917 = vpack.c.b16 %v7829, %v7827
        %v7918 = vpack.c.b16 %v7832, %v7830
        %v7919 = vpack.c.b16 %v7833, %v7831
        %v7920 = vpack.c.b16 %v7836, %v7834
        %v7921 = vpack.c.b16 %v7837, %v7835
        %v7922 = vpack.c.b16 %v7840, %v7838
        %v7923 = vpack.c.b16 %v7841, %v7839
        %v7924 = vpack.c.b16 %v7844, %v7842
        %v7925 = vpack.c.b16 %v7845, %v7843
        %v7926 = vpack.c.b16 %v7848, %v7846
        %v7927 = vpack.c.b16 %v7849, %v7847
        %v7928 = vpack.c.b16 %v7852, %v7850
        %v7929 = vpack.c.b16 %v7853, %v7851
        %v7930 = vpack.c.b16 %v7856, %v7854
        %v7931 = vpack.c.b16 %v7857, %v7855
        %v7932 = vpack.c.b16 %v7860, %v7858
        %v7933 = vpack.c.b16 %v7861, %v7859
        %v7934 = vpack.c.b16 %v7864, %v7862
        %v7935 = vpack.c.b16 %v7865, %v7863
        %v7936 = vpack.c.b16 %v7868, %v7866
        %v7937 = vpack.c.b16 %v7869, %v7867
        %v7938 = vpack.c.b16 %v7872, %v7870
        %v7939 = vpack.c.b16 %v7873, %v7871
        %v7940 = vpack.c.b16 %v7876, %v7874
        %v7941 = vpack.c.b16 %v7877, %v7875
        %8006 = vmatprep.subr.bf16.mxu0 %v7879
        %8007 = vmatpush1.bf16.msra.mxu0 %v7878
        %8008 = vmatprep.subr.bf16.mxu0 %v7881
        %8009 = vmatpush1.bf16.msra.mxu0 %v7880
        %8010 = vmatprep.subr.bf16.mxu0 %v7883
        %8011 = vmatpush1.bf16.msra.mxu0 %v7882
        %8012 = vmatprep.subr.bf16.mxu0 %v7885
        %8013 = vmatpush1.bf16.msra.mxu0 %v7884
        %8014 = vmatprep.subr.bf16.mxu0 %v7887
        %8015 = vmatpush1.bf16.msra.mxu0 %v7886
        %8016 = vmatprep.subr.bf16.mxu0 %v7889
        %8017 = vmatpush1.bf16.msra.mxu0 %v7888
        %8018 = vmatprep.subr.bf16.mxu0 %v7891
        %8019 = vmatpush1.bf16.msra.mxu0 %v7890
        %8020 = vmatprep.subr.bf16.mxu0 %v7893
        %8021 = vmatpush1.bf16.msra.mxu0 %v7892
        %8022 = vmatprep.subr.bf16.mxu0 %v7895
        %8023 = vmatpush1.bf16.msra.mxu0 %v7894
        %8024 = vmatprep.subr.bf16.mxu0 %v7897
        %8025 = vmatpush1.bf16.msra.mxu0 %v7896
        %8026 = vmatprep.subr.bf16.mxu0 %v7899
        %8027 = vmatpush1.bf16.msra.mxu0 %v7898
        %8028 = vmatprep.subr.bf16.mxu0 %v7901
        %8029 = vmatpush1.bf16.msra.mxu0 %v7900
        %8030 = vmatprep.subr.bf16.mxu0 %v7903
        %8031 = vmatpush1.bf16.msra.mxu0 %v7902
        %8032 = vmatprep.subr.bf16.mxu0 %v7905
        %8033 = vmatpush1.bf16.msra.mxu0 %v7904
        %8034 = vmatprep.subr.bf16.mxu0 %v7907
        %8035 = vmatpush1.bf16.msra.mxu0 %v7906
        %8036 = vmatprep.subr.bf16.mxu0 %v7909
        %8037 = vmatpush1.bf16.msra.mxu0 %v7908
        %8038 = vmatprep.mubr.bf16.mxu0 %v7521
        %8039 = vmatmul.mubr.bf16.gmra.mrb[0].mxu0 %v7520
        %v8040 = vpop.f32.mrb[0].mxu0
        %v8041 = vadd.f32 %v7670, %v8040
        %v8042 = vpop.f32.mrb[0].mxu0
        %v8043 = vadd.f32 %v7672, %v8042
        %v8044 = vpop.f32.mrb[0].mxu0
        %v8045 = vadd.f32 %v7676, %v8044
        %v8046 = vpop.f32.mrb[0].mxu0
        %v8047 = vadd.f32 %v7678, %v8046
        %8048 = vmatprep.mubr.bf16.mxu0 %v7525
        %8049 = vmatmul.mubr.bf16.gmra.mrb[0].mxu0 %v7524
        %v8050 = vpop.f32.mrb[0].mxu0
        %v8051 = vadd.f32 %v7682, %v8050
        %v8052 = vpop.f32.mrb[0].mxu0
        %v8053 = vadd.f32 %v7684, %v8052
        %v8054 = vpop.f32.mrb[0].mxu0
        %v8055 = vpop.f32.mrb[0].mxu0
        %8056 = vdwg.mxu0
        %8057 = vmatprep.subr.bf16.mxu0 %v7911
        %8058 = vmatpush1.bf16.msra.mxu0 %v7910
        %8059 = vmatprep.subr.bf16.mxu0 %v7913
        %8060 = vmatpush1.bf16.msra.mxu0 %v7912
        %8061 = vmatprep.subr.bf16.mxu0 %v7915
        %8062 = vmatpush1.bf16.msra.mxu0 %v7914
        %8063 = vmatprep.subr.bf16.mxu0 %v7917
        %8064 = vmatpush1.bf16.msra.mxu0 %v7916
        %8065 = vmatprep.subr.bf16.mxu0 %v7919
        %8066 = vmatpush1.bf16.msra.mxu0 %v7918
        %8067 = vmatprep.subr.bf16.mxu0 %v7921
        %8068 = vmatpush1.bf16.msra.mxu0 %v7920
        %8069 = vmatprep.subr.bf16.mxu0 %v7923
        %8070 = vmatpush1.bf16.msra.mxu0 %v7922
        %8071 = vmatprep.subr.bf16.mxu0 %v7925
        %8072 = vmatpush1.bf16.msra.mxu0 %v7924
        %8073 = vmatprep.subr.bf16.mxu0 %v7927
        %8074 = vmatpush1.bf16.msra.mxu0 %v7926
        %8075 = vmatprep.subr.bf16.mxu0 %v7929
        %8076 = vmatpush1.bf16.msra.mxu0 %v7928
        %8077 = vmatprep.subr.bf16.mxu0 %v7931
        %8078 = vmatpush1.bf16.msra.mxu0 %v7930
        %8079 = vmatprep.subr.bf16.mxu0 %v7933
        %8080 = vmatpush1.bf16.msra.mxu0 %v7932
        %8081 = vmatprep.subr.bf16.mxu0 %v7935
        %8082 = vmatpush1.bf16.msra.mxu0 %v7934
        %8083 = vmatprep.subr.bf16.mxu0 %v7937
        %8084 = vmatpush1.bf16.msra.mxu0 %v7936
        %8085 = vmatprep.subr.bf16.mxu0 %v7939
        %8086 = vmatpush1.bf16.msra.mxu0 %v7938
        %8087 = vmatprep.subr.bf16.mxu0 %v7941
        %8088 = vmatpush1.bf16.msra.mxu0 %v7940
        %8089 = vmatprep.mubr.bf16.mxu0 %v7523
        %8090 = vmatmul.mubr.bf16.gmra.mrb[0].mxu0 %v7522
        %v8091 = vpop.f32.mrb[0].mxu0
        %v8092 = vadd.f32 %v8041, %v8091
        %v8093 = vpop.f32.mrb[0].mxu0
        %v8094 = vadd.f32 %v8043, %v8093
        %v8095 = vpop.f32.mrb[0].mxu0
        %v8096 = vadd.f32 %v8045, %v8095
        %v8097 = vpop.f32.mrb[0].mxu0
        %v8098 = vadd.f32 %v8047, %v8097
        %8099 = vmatprep.mubr.bf16.mxu0 %v7527
        %8100 = vmatmul.mubr.bf16.gmra.mrb[0].mxu0 %v7526
        %v8101 = vpop.f32.mrb[0].mxu0
        %v8102 = vadd.f32 %v8051, %v8101
        %v8103 = vpop.f32.mrb[0].mxu0
        %v8104 = vadd.f32 %v8053, %v8103
        %v8105 = vpop.f32.mrb[0].mxu0
        %v8106 = vpop.f32.mrb[0].mxu0
        %8107 = vdwg.mxu0
        %s8108 = scalar_lea.vmem [#allocation9], %s7593
        %v8109 = vld [vmem:[%s8108] sm:$0x3]
        %v8111 = vlaneseq
        %v8112 = vshrl.u32 %v8111, 7
        %v8113 = vsub.s32 0, %v8112
        %v8114 = vrot.slane %v8109, %v8113
        %v8115 = vlaneseq
        %v8116 = vshrl.u32 %v8115, 7
        %v8117 = vsub.s32 1, %v8116
        %v8118 = vrot.slane %v8109, %v8117
        %v8121 = vadd.f32 %v8092, %v8114
        %v8122 = vadd.f32 %v8094, %v8118
        %v8123 = vadd.f32 %v8096, %v8114
        %v8124 = vadd.f32 %v8098, %v8118
        %v8125 = vadd.f32 %v8102, %v8114
        %v8126 = vadd.f32 %v8104, %v8118
        %v8127 = vtanh.pop %v8121
        %v8128 = vtanh.pop %v8122
        %v8129 = vtanh.pop %v8123
        %v8130 = vtanh.pop %v8124
        %v8131 = vtanh.pop %v8125
        %v8132 = vtanh.pop %v8126
        %s8133 = smul.u32 %s7507, 256
        %s8134 = scalar_lea.vmem %s7, %s8133
        %v8135 = vld [vmem:[%s8134] sm:$0xff]
        %v8136 = vld [vmem:[%s8134 + $0x8] sm:$0xff]
        %v8137 = vld [vmem:[%s8134 + $0x10] sm:$0xff]
        %v8138 = vld [vmem:[%s8134 + $0x18] sm:$0xff]
        %v8139 = vld [vmem:[%s8134 + $0x20] sm:$0xff]
        %v8140 = vld [vmem:[%s8134 + $0x28] sm:$0xff]
        %v8141 = vld [vmem:[%s8134 + $0x30] sm:$0xff]
        %v8142 = vld [vmem:[%s8134 + $0x38] sm:$0xff]
        %v8143 = vld [vmem:[%s8134 + $0x40] sm:$0xff]
        %v8144 = vld [vmem:[%s8134 + $0x48] sm:$0xff]
        %v8145 = vld [vmem:[%s8134 + $0x50] sm:$0xff]
        %v8146 = vld [vmem:[%s8134 + $0x58] sm:$0xff]
        %v8147 = vld [vmem:[%s8134 + $0x60] sm:$0xff]
        %v8148 = vld [vmem:[%s8134 + $0x68] sm:$0xff]
        %v8149 = vld [vmem:[%s8134 + $0x70] sm:$0xff]
        %v8150 = vld [vmem:[%s8134 + $0x78] sm:$0xff]
        %v8151 = vld [vmem:[%s8134 + $0x80] sm:$0xff]
        %v8152 = vld [vmem:[%s8134 + $0x88] sm:$0xff]
        %v8153 = vld [vmem:[%s8134 + $0x90] sm:$0xff]
        %v8154 = vld [vmem:[%s8134 + $0x98] sm:$0xff]
        %v8155 = vld [vmem:[%s8134 + $0xa0] sm:$0xff]
        %v8156 = vld [vmem:[%s8134 + $0xa8] sm:$0xff]
        %v8157 = vld [vmem:[%s8134 + $0xb0] sm:$0xff]
        %v8158 = vld [vmem:[%s8134 + $0xb8] sm:$0xff]
        %v8159 = vld [vmem:[%s8134 + $0xc0] sm:$0xff]
        %v8160 = vld [vmem:[%s8134 + $0xc8] sm:$0xff]
        %v8161 = vld [vmem:[%s8134 + $0xd0] sm:$0xff]
        %v8162 = vld [vmem:[%s8134 + $0xd8] sm:$0xff]
        %v8163 = vld [vmem:[%s8134 + $0xe0] sm:$0xff]
        %v8164 = vld [vmem:[%s8134 + $0xe8] sm:$0xff]
        %v8165 = vld [vmem:[%s8134 + $0xf0] sm:$0xff]
        %v8166 = vld [vmem:[%s8134 + $0xf8] sm:$0xff]
        %s8167 = scalar_lea.vmem [#allocation10], %s7507
        %v8168 = vld [vmem:[%s8167] sm:$0x1]
        %v8170 = vlaneseq
        %v8171 = vshrl.u32 %v8170, 7
        %v8172 = vsub.s32 0, %v8171
        %v8173 = vrot.slane %v8168, %v8172
        %8175 = vmatprep.subr.mxu0 0.0
        %8176 = vmatpush1.msra.mxu0 %v8135
        %8177 = vmatprep.subr.mxu0 0.0
        %8178 = vmatpush1.msra.mxu0 %v8136
        %8179 = vmatprep.subr.mxu0 0.0
        %8180 = vmatpush1.msra.mxu0 %v8137
        %8181 = vmatprep.subr.mxu0 0.0
        %8182 = vmatpush1.msra.mxu0 %v8138
        %8183 = vmatprep.subr.mxu0 0.0
        %8184 = vmatpush1.msra.mxu0 %v8139
        %8185 = vmatprep.subr.mxu0 0.0
        %8186 = vmatpush1.msra.mxu0 %v8140
        %8187 = vmatprep.subr.mxu0 0.0
        %8188 = vmatpush1.msra.mxu0 %v8141
        %8189 = vmatprep.subr.mxu0 0.0
        %8190 = vmatpush1.msra.mxu0 %v8142
        %8191 = vmatprep.subr.mxu0 0.0
        %8192 = vmatpush1.msra.mxu0 %v8143
        %8193 = vmatprep.subr.mxu0 0.0
        %8194 = vmatpush1.msra.mxu0 %v8144
        %8195 = vmatprep.subr.mxu0 0.0
        %8196 = vmatpush1.msra.mxu0 %v8145
        %8197 = vmatprep.subr.mxu0 0.0
        %8198 = vmatpush1.msra.mxu0 %v8146
        %8199 = vmatprep.subr.mxu0 0.0
        %8200 = vmatpush1.msra.mxu0 %v8147
        %8201 = vmatprep.subr.mxu0 0.0
        %8202 = vmatpush1.msra.mxu0 %v8148
        %8203 = vmatprep.subr.mxu0 0.0
        %8204 = vmatpush1.msra.mxu0 %v8149
        %8205 = vmatprep.subr.mxu0 0.0
        %8206 = vmatpush1.msra.mxu0 %v8150
        %8207 = vmatprep.subr.mxu0 0.0
        %8208 = vmatpush1.msra.mxu0 %v8151
        %8209 = vmatprep.subr.mxu0 0.0
        %8210 = vmatpush1.msra.mxu0 %v8152
        %8211 = vmatprep.subr.mxu0 0.0
        %8212 = vmatpush1.msra.mxu0 %v8153
        %8213 = vmatprep.subr.mxu0 0.0
        %8214 = vmatpush1.msra.mxu0 %v8154
        %8215 = vmatprep.subr.mxu0 0.0
        %8216 = vmatpush1.msra.mxu0 %v8155
        %8217 = vmatprep.subr.mxu0 0.0
        %8218 = vmatpush1.msra.mxu0 %v8156
        %8219 = vmatprep.subr.mxu0 0.0
        %8220 = vmatpush1.msra.mxu0 %v8157
        %8221 = vmatprep.subr.mxu0 0.0
        %8222 = vmatpush1.msra.mxu0 %v8158
        %8223 = vmatprep.subr.mxu0 0.0
        %8224 = vmatpush1.msra.mxu0 %v8159
        %8225 = vmatprep.subr.mxu0 0.0
        %8226 = vmatpush1.msra.mxu0 %v8160
        %8227 = vmatprep.subr.mxu0 0.0
        %8228 = vmatpush1.msra.mxu0 %v8161
        %8229 = vmatprep.subr.mxu0 0.0
        %8230 = vmatpush1.msra.mxu0 %v8162
        %8231 = vmatprep.subr.mxu0 0.0
        %8232 = vmatpush1.msra.mxu0 %v8163
        %8233 = vmatprep.subr.mxu0 0.0
        %8234 = vmatpush1.msra.mxu0 %v8164
        %8235 = vmatprep.subr.mxu0 0.0
        %8236 = vmatpush1.msra.mxu0 %v8165
        %8237 = vmatprep.subr.mxu0 0.0
        %8238 = vmatpush1.msra.mxu0 %v8166
        %8239 = vmatprep.mubr.f32.mxu0 %v8128
        %8240 = vmatmul.mubr.f32.gmra.mrb[0].mxu0 %v8127
        %v8241 = vpop.f32.mrb[0].mxu0
        %v8242 = vadd.f32 %v8173, %v8241
        %v8243 = vpop.f32.mrb[0].mxu0
        %8244 = vmatprep.mubr.f32.mxu0 %v8130
        %8245 = vmatmul.mubr.f32.gmra.mrb[0].mxu0 %v8129
        %v8246 = vpop.f32.mrb[0].mxu0
        %v8247 = vadd.f32 %v8173, %v8246
        %v8248 = vpop.f32.mrb[0].mxu0
        %8249 = vmatprep.mubr.f32.mxu0 %v8132
        %8250 = vmatmul.mubr.f32.gmra.mrb[0].mxu0 %v8131
        %v8251 = vpop.f32.mrb[0].mxu0
        %v8252 = vadd.f32 %v8173, %v8251
        %v8253 = vpop.f32.mrb[0].mxu0
        %8254 = vdwg.mxu0
        %v8255 = vsel %vm5219, %v8242, -inf
        %v8256 = vsel %vm5219, %v8247, -inf
        %v8257 = vsel %vm5222, %v8252, -inf
        %v8258 = vmax.f32 %v8255, %v8256
        %v8259 = vmax.f32 %v8258, %v8257
        %v8260 = vrot.slane %v8259, 4
        %v8261 = vmax.f32 %v8259, %v8260
        %v8262 = vrot.slane %v8261, 2
        %v8263 = vmax.f32 %v8261, %v8262
        %v8264 = vrot.slane %v8263, 1
        %v8265 = vmax.f32 %v8263, %v8264
        %v8266 = vsub.f32 %v8242, %v8265
        %v8267 = vsub.f32 %v8247, %v8265
        %v8268 = vsub.f32 %v8252, %v8265
        %v8269 = vmul.f32 %v8266, 1.442695
        %v8270 = vpow.pop %v8269
        %v8271 = vmul.f32 %v8267, 1.442695
        %v8272 = vpow.pop %v8271
        %v8273 = vmul.f32 %v8268, 1.442695
        %v8274 = vpow.pop %v8273
        %v8275 = vsel %vm5219, %v8270, 0.0
        %v8276 = vsel %vm5219, %v8272, 0.0
        %v8277 = vadd.f32 %v8275, %v8276
        %v8278 = vsel %vm5222, %v8274, 0.0
        %v8279 = vadd.f32 %v8277, %v8278
        %v8280 = vrot.slane %v8279, 4
        %v8281 = vadd.f32 %v8279, %v8280
        %v8282 = vrot.slane %v8281, 2
        %v8283 = vadd.f32 %v8281, %v8282
        %v8284 = vrot.slane %v8283, 1
        %v8285 = vadd.f32 %v8283, %v8284
        %v8286 = vrcp.pop %v8285
        %v8287 = vmul.f32 %v8270, %v8286
        %v8288 = vmul.f32 %v8272, %v8286
        %v8289 = vmul.f32 %v8274, %v8286
        %s8290 = sld [smem:[#allocation3 + %s7507]]
        %v8291 = vstv %s8290
        %v8292 = vmul.f32 %v8287, %v8291
        %v8293 = vmul.f32 %v8288, %v8291
        %v8294 = vmul.f32 %v8289, %v8291
        %8295 = vxpose.xlu0.b32.start [1/16] %v8292, 128
        %8296 = vxpose.xlu0.b32.cont [2/16] %v8293, 128
        %8297 = vxpose.xlu0.b32.cont [3/16] %v8294, 128
        %8298 = vxpose.xlu0.b32.cont [4/16] 0.0, 128
        %8299 = vxpose.xlu0.b32.cont [5/16] 0.0, 128
        %8300 = vxpose.xlu0.b32.cont [6/16] 0.0, 128
        %8301 = vxpose.xlu0.b32.cont [7/16] 0.0, 128
        %8302 = vxpose.xlu0.b32.cont [8/16] 0.0, 128
        %8303 = vxpose.xlu0.b32.cont [9/16] 0.0, 128
        %8304 = vxpose.xlu0.b32.cont [10/16] 0.0, 128
        %8305 = vxpose.xlu0.b32.cont [11/16] 0.0, 128
        %8306 = vxpose.xlu0.b32.cont [12/16] 0.0, 128
        %8307 = vxpose.xlu0.b32.cont [13/16] 0.0, 128
        %8308 = vxpose.xlu0.b32.cont [14/16] 0.0, 128
        %8309 = vxpose.xlu0.b32.cont [15/16] 0.0, 128
        %8310 = vxpose.xlu0.b32.end [16/16] 0.0, 128
        %v8311 = vpop.trf.xlu0
        %v8312 = vpop.trf.xlu0
        %v8313 = vpop.trf.xlu0
        %v8314 = vpop.trf.xlu0
        %v8315 = vpop.trf.xlu0
        %v8316 = vpop.trf.xlu0
        %v8317 = vpop.trf.xlu0
        %v8318 = vpop.trf.xlu0
        %v8319 = vpop.trf.xlu0
        %v8320 = vpop.trf.xlu0
        %v8321 = vpop.trf.xlu0
        %v8322 = vpop.trf.xlu0
        %v8323 = vpop.trf.xlu0
        %v8324 = vpop.trf.xlu0
        %v8325 = vpop.trf.xlu0
        %v8326 = vpop.trf.xlu0
        %v8328 = vsel %vm5219, %v8311, 0
        %v8331 = vsel %vm5219, %v8312, 0
        %v8334 = vsel %vm5219, %v8313, 0
        %v8337 = vsel %vm6090, %v7516, 0
        %v8340 = vsel %vm6090, %v7517, 0
        %v8343 = vsel %vm6090, %v7518, 0
        %v8346 = vsel %vm6090, %v7519, 0
        %8348 = vmatprep.subr.mxu0 %v7509
        %8349 = vmatpush1.msra.mxu0 %v7508
        %8350 = vmatprep.subr.mxu0 %v7513
        %8351 = vmatpush1.msra.mxu0 %v7512
        %8352 = vmatprep.subr.mxu0 %v8340
        %8353 = vmatpush1.msra.mxu0 %v8337
        %8354 = vmatprep.subr.mxu0 0.0
        %8355 = vmatpush1.msra.mxu0 0.0
        %8356 = vmatprep.subr.mxu0 0.0
        %8357 = vmatpush1.msra.mxu0 0.0
        %8358 = vmatprep.subr.mxu0 0.0
        %8359 = vmatpush1.msra.mxu0 0.0
        %8360 = vmatprep.subr.mxu0 0.0
        %8361 = vmatpush1.msra.mxu0 0.0
        %8362 = vmatprep.subr.mxu0 0.0
        %8363 = vmatpush1.msra.mxu0 0.0
        %8364 = vmatprep.subr.mxu0 0.0
        %8365 = vmatpush1.msra.mxu0 0.0
        %8366 = vmatprep.subr.mxu0 0.0
        %8367 = vmatpush1.msra.mxu0 0.0
        %8368 = vmatprep.subr.mxu0 0.0
        %8369 = vmatpush1.msra.mxu0 0.0
        %8370 = vmatprep.subr.mxu0 0.0
        %8371 = vmatpush1.msra.mxu0 0.0
        %8372 = vmatprep.subr.mxu0 0.0
        %8373 = vmatpush1.msra.mxu0 0.0
        %8374 = vmatprep.subr.mxu0 0.0
        %8375 = vmatpush1.msra.mxu0 0.0
        %8376 = vmatprep.subr.mxu0 0.0
        %8377 = vmatpush1.msra.mxu0 0.0
        %8378 = vmatprep.subr.mxu0 0.0
        %8379 = vmatpush1.msra.mxu0 0.0
        %8380 = vmatprep.subr.mxu0 0.0
        %8381 = vmatpush1.msra.mxu0 0.0
        %8382 = vmatprep.subr.mxu0 0.0
        %8383 = vmatpush1.msra.mxu0 0.0
        %8384 = vmatprep.subr.mxu0 0.0
        %8385 = vmatpush1.msra.mxu0 0.0
        %8386 = vmatprep.subr.mxu0 0.0
        %8387 = vmatpush1.msra.mxu0 0.0
        %8388 = vmatprep.subr.mxu0 0.0
        %8389 = vmatpush1.msra.mxu0 0.0
        %8390 = vmatprep.subr.mxu0 0.0
        %8391 = vmatpush1.msra.mxu0 0.0
        %8392 = vmatprep.subr.mxu0 0.0
        %8393 = vmatpush1.msra.mxu0 0.0
        %8394 = vmatprep.subr.mxu0 0.0
        %8395 = vmatpush1.msra.mxu0 0.0
        %8396 = vmatprep.subr.mxu0 0.0
        %8397 = vmatpush1.msra.mxu0 0.0
        %8398 = vmatprep.subr.mxu0 0.0
        %8399 = vmatpush1.msra.mxu0 0.0
        %8400 = vmatprep.subr.mxu0 0.0
        %8401 = vmatpush1.msra.mxu0 0.0
        %8402 = vmatprep.subr.mxu0 0.0
        %8403 = vmatpush1.msra.mxu0 0.0
        %8404 = vmatprep.subr.mxu0 0.0
        %8405 = vmatpush1.msra.mxu0 0.0
        %8406 = vmatprep.subr.mxu0 0.0
        %8407 = vmatpush1.msra.mxu0 0.0
        %8408 = vmatprep.subr.mxu0 0.0
        %8409 = vmatpush1.msra.mxu0 0.0
        %8410 = vmatprep.subr.mxu0 0.0
        %8411 = vmatpush1.msra.mxu0 0.0
        %8412 = vmatprep.mubr.f32.mxu0 0.0
        %8413 = vmatmul.mubr.f32.gmra.mrb[0].mxu0 %v8328
        %v8414 = vpop.f32.mrb[0].mxu0
        %v8415 = vadd.f32 0.0, %v8414
        %v8416 = vpop.f32.mrb[0].mxu0
        %v8417 = vadd.f32 0.0, %v8416
        %8418 = vmatprep.mubr.f32.mxu0 0.0
        %8419 = vmatmul.mubr.f32.gmra.mrb[0].mxu0 %v8331
        %v8420 = vpop.f32.mrb[0].mxu0
        %v8421 = vadd.f32 0.0, %v8420
        %v8422 = vpop.f32.mrb[0].mxu0
        %v8423 = vadd.f32 0.0, %v8422
        %8424 = vmatprep.mubr.f32.mxu0 0.0
        %8425 = vmatmul.mubr.f32.gmra.mrb[0].mxu0 %v8334
        %v8426 = vpop.f32.mrb[0].mxu0
        %v8427 = vadd.f32 0.0, %v8426
        %v8428 = vpop.f32.mrb[0].mxu0
        %v8429 = vadd.f32 0.0, %v8428
        %8430 = vdwg.mxu0
        %8431 = vmatprep.subr.mxu0 %v7511
        %8432 = vmatpush1.msra.mxu0 %v7510
        %8433 = vmatprep.subr.mxu0 %v7515
        %8434 = vmatpush1.msra.mxu0 %v7514
        %8435 = vmatprep.subr.mxu0 %v8346
        %8436 = vmatpush1.msra.mxu0 %v8343
        %8437 = vmatprep.subr.mxu0 0.0
        %8438 = vmatpush1.msra.mxu0 0.0
        %8439 = vmatprep.subr.mxu0 0.0
        %8440 = vmatpush1.msra.mxu0 0.0
        %8441 = vmatprep.subr.mxu0 0.0
        %8442 = vmatpush1.msra.mxu0 0.0
        %8443 = vmatprep.subr.mxu0 0.0
        %8444 = vmatpush1.msra.mxu0 0.0
        %8445 = vmatprep.subr.mxu0 0.0
        %8446 = vmatpush1.msra.mxu0 0.0
        %8447 = vmatprep.subr.mxu0 0.0
        %8448 = vmatpush1.msra.mxu0 0.0
        %8449 = vmatprep.subr.mxu0 0.0
        %8450 = vmatpush1.msra.mxu0 0.0
        %8451 = vmatprep.subr.mxu0 0.0
        %8452 = vmatpush1.msra.mxu0 0.0
        %8453 = vmatprep.subr.mxu0 0.0
        %8454 = vmatpush1.msra.mxu0 0.0
        %8455 = vmatprep.subr.mxu0 0.0
        %8456 = vmatpush1.msra.mxu0 0.0
        %8457 = vmatprep.subr.mxu0 0.0
        %8458 = vmatpush1.msra.mxu0 0.0
        %8459 = vmatprep.subr.mxu0 0.0
        %8460 = vmatpush1.msra.mxu0 0.0
        %8461 = vmatprep.subr.mxu0 0.0
        %8462 = vmatpush1.msra.mxu0 0.0
        %8463 = vmatprep.subr.mxu0 0.0
        %8464 = vmatpush1.msra.mxu0 0.0
        %8465 = vmatprep.subr.mxu0 0.0
        %8466 = vmatpush1.msra.mxu0 0.0
        %8467 = vmatprep.subr.mxu0 0.0
        %8468 = vmatpush1.msra.mxu0 0.0
        %8469 = vmatprep.subr.mxu0 0.0
        %8470 = vmatpush1.msra.mxu0 0.0
        %8471 = vmatprep.subr.mxu0 0.0
        %8472 = vmatpush1.msra.mxu0 0.0
        %8473 = vmatprep.subr.mxu0 0.0
        %8474 = vmatpush1.msra.mxu0 0.0
        %8475 = vmatprep.subr.mxu0 0.0
        %8476 = vmatpush1.msra.mxu0 0.0
        %8477 = vmatprep.subr.mxu0 0.0
        %8478 = vmatpush1.msra.mxu0 0.0
        %8479 = vmatprep.subr.mxu0 0.0
        %8480 = vmatpush1.msra.mxu0 0.0
        %8481 = vmatprep.subr.mxu0 0.0
        %8482 = vmatpush1.msra.mxu0 0.0
        %8483 = vmatprep.subr.mxu0 0.0
        %8484 = vmatpush1.msra.mxu0 0.0
        %8485 = vmatprep.subr.mxu0 0.0
        %8486 = vmatpush1.msra.mxu0 0.0
        %8487 = vmatprep.subr.mxu0 0.0
        %8488 = vmatpush1.msra.mxu0 0.0
        %8489 = vmatprep.subr.mxu0 0.0
        %8490 = vmatpush1.msra.mxu0 0.0
        %8491 = vmatprep.subr.mxu0 0.0
        %8492 = vmatpush1.msra.mxu0 0.0
        %8493 = vmatprep.subr.mxu0 0.0
        %8494 = vmatpush1.msra.mxu0 0.0
        %8495 = vmatprep.mubr.f32.mxu0 0.0
        %8496 = vmatmul.mubr.f32.gmra.mrb[0].mxu0 %v8328
        %v8497 = vpop.f32.mrb[0].mxu0
        %v8498 = vadd.f32 0.0, %v8497
        %v8499 = vpop.f32.mrb[0].mxu0
        %v8500 = vadd.f32 0.0, %v8499
        %8501 = vmatprep.mubr.f32.mxu0 0.0
        %8502 = vmatmul.mubr.f32.gmra.mrb[0].mxu0 %v8331
        %v8503 = vpop.f32.mrb[0].mxu0
        %v8504 = vadd.f32 0.0, %v8503
        %v8505 = vpop.f32.mrb[0].mxu0
        %v8506 = vadd.f32 0.0, %v8505
        %8507 = vmatprep.mubr.f32.mxu0 0.0
        %8508 = vmatmul.mubr.f32.gmra.mrb[0].mxu0 %v8334
        %v8509 = vpop.f32.mrb[0].mxu0
        %v8510 = vadd.f32 0.0, %v8509
        %v8511 = vpop.f32.mrb[0].mxu0
        %v8512 = vadd.f32 0.0, %v8511
        %8513 = vdwg.mxu0
        %v8514 = vadd.f32 %v7495, %v8415
        %v8515 = vadd.f32 %v7496, %v8417
        %v8516 = vadd.f32 %v7497, %v8498
        %v8517 = vadd.f32 %v7498, %v8500
        %v8518 = vadd.f32 %v7499, %v8421
        %v8519 = vadd.f32 %v7500, %v8423
        %v8520 = vadd.f32 %v7501, %v8504
        %v8521 = vadd.f32 %v7502, %v8506
        %v8522 = vadd.f32 %v7503, %v8427
        %v8523 = vadd.f32 %v7504, %v8429
        %v8524 = vadd.f32 %v7505, %v8510
        %v8525 = vadd.f32 %v7506, %v8512
        %8526 = vst [vmem:[%s433] sm:$0xff] %v8514
        %8527 = vst [vmem:[%s433 + $0x8] sm:$0xff] %v8515
        %8528 = vst [vmem:[%s433 + $0x10] sm:$0xff] %v8516
        %8529 = vst [vmem:[%s433 + $0x18] sm:$0xff] %v8517
        %8530 = vst [vmem:[%s433 + $0x20] sm:$0xff] %v8518
        %8531 = vst [vmem:[%s433 + $0x28] sm:$0xff] %v8519
        %8532 = vst [vmem:[%s433 + $0x30] sm:$0xff] %v8520
        %8533 = vst [vmem:[%s433 + $0x38] sm:$0xff] %v8521
        %8534 = vst [vmem:[%s433 + $0x40] sm:$0x1] %v8522
        %8535 = vst [vmem:[%s433 + $0x48] sm:$0x1] %v8523
        %8536 = vst [vmem:[%s433 + $0x50] sm:$0x1] %v8524
        %8537 = vst [vmem:[%s433 + $0x58] sm:$0x1] %v8525
        %p8538 = scmp.lt.s32.totalorder %s28, 1
        %s8539 = scalar_select %p8538, %s28, 1
        %s8540 = smul.addr %s8539, 12
        %s8541 = smul.addr %s8540, 8
        %s8542 = scalar_lea.vmem %s9, %s8541
        // Predicated region
        $region77: #{_fused_forward.1} parent=55 // pred_check
          %p8543 = pneg %p245
        $region78: #{_fused_forward.1} parent=55 // pred_check_branch
          %8545 = sbr.rel (%p8543) target = $region80
        $region79: #{_fused_forward.1} parent=55 // pred_region
          _
        $region80: #{_fused_forward.1} parent=55 // pred_fallthru
          _
      $region56: #{_fused_forward.1} parent=5 // pred_fallthru
        _
      %p8546 = scmp.le.s32.totalorder 2, %s23
      // Predicated region
      $region81: #{_fused_forward.1} parent=5 // pred_check
        %p8547 = pneg %p8546
      $region82: #{_fused_forward.1} parent=5 // pred_check_branch
        %8549 = sbr.rel (%p8547) target = $region84
      $region83: #{_fused_forward.1} parent=5 // pred_region
        %s8550 = ssub.s32 %s23, 2
        // Predicated region
        $region85: #{_fused_forward.1} parent=83 // pred_check
          %p8551 = pneg %p251
        $region86: #{_fused_forward.1} parent=83 // pred_check_branch
          %8553 = sbr.rel (%p8551) target = $region88
        $region87: #{_fused_forward.1} parent=83 // pred_region
          %p8554 = scmp.lt.s32.totalorder %s29, 1
          %s8555 = scalar_select %p8554, %s29, 1
          %s8556 = smul.addr %s8555, 12
          %s8557 = smul.addr %s8556, 8
          %s8558 = scalar_lea.vmem %s9, %s8557
        $region88: #{_fused_forward.1} parent=83 // pred_fallthru
          _
      $region84: #{_fused_forward.1} parent=5 // pred_fallthru
        _
    $region6: #{_fused_forward.1} parent=1 // loop_footer
      %s27 = sadd.s32 1, %s23
    $region7: #{_fused_forward.1} parent=1 // loop_footer_branch
      %22 = sbr.rel target = $region3
    $region8: #{_fused_forward.1} parent=1 // loop_exit
      _
    %8559 = vsyncpa [#allocation4], 1
    %s8560 = scalar_lea.sflag [#allocation4], 1
    %8561 = vsyncpa %s8560, 1
    %8562 = vsyncpa [#allocation8], 1
    %s8563 = scalar_lea.sflag [#allocation8], 1
    %8564 = vsyncpa %s8563, 1
    %8565 = vsyncpa [#allocation11], 1
    %8566 = vsyncpa [#allocation5], 1
    %s8567 = scalar_lea.sflag [#allocation5], 1
    %8568 = vsyncpa %s8567, 1

</llo_original>
